<compile_context>
chip_gen: v5e
topology: v5e:2x2
jax: 0.10.0
libtpu: 0.0.40
codegen_flags: <defaults>
</compile_context>

<pallas_src>
import math
import functools

import jax
import jax.numpy as jnp
from jax.experimental import pallas as pl
from jax.experimental.pallas import tpu as pltpu


# Above v5e's 16 MiB scoped default, comfortably inside v7x's 64 MiB physical.
_VMEM_LIMIT = 48 * 1024 * 1024


def _cparams(n_parallel_axes):
    return pltpu.CompilerParams(
        dimension_semantics=("parallel",) * n_parallel_axes,
        vmem_limit_bytes=_VMEM_LIMIT)


def _row_tile(rows):
    """Largest sublane-aligned row tile dividing `rows`, else the full extent."""
    for t in (512, 256, 128, 64, 32, 16, 8):
        if rows % t == 0:
            return t
    return rows


def _col_tile(cols):
    """Lane-dense (multiple of 128) tile along an output feature/vocab dim."""
    for t in (2048, 1024, 512, 256, 128):
        if cols % t == 0:
            return t
    return cols


# ----------------------------------------------------------------------------
# Pallas kernels
# ----------------------------------------------------------------------------

def _attention_core(x_q_f32, kvp_f32, wo_ref, bo_ref, ctx_sc, nhead, d_model):
    """Shared per-head attention + single wide output projection.

    x_q_f32 : (Sq, D) f32 query-side projection input already projected to q
              (i.e. this is q = x @ wq + bq) -- see callers.
    kvp_f32 : (Sk, 2D) f32 concatenated [k | v] projections.
    Returns attn output (Sq, D) f32 (before residual/LN).
    """
    D = d_model
    hd = D // nhead
    scale = 1.0 / math.sqrt(hd)

    # nhead is tiny (2 in the reference module) -> static unroll is fine.
    for h in range(nhead):
        qs = slice(h * hd, (h + 1) * hd)
        ks = slice(h * hd, (h + 1) * hd)
        vs = slice(D + h * hd, D + (h + 1) * hd)
        qh = (x_q_f32[:, qs] * scale).astype(jnp.bfloat16)       # fold 1/sqrt(hd)
        kh = kvp_f32[:, ks].astype(jnp.bfloat16)
        vh = kvp_f32[:, vs].astype(jnp.bfloat16)
        # Contract last dims directly -- no kh.T (no XLU transpose).
        s = jax.lax.dot_general(qh, kh, (((1,), (1,)), ((), ())),
                                preferred_element_type=jnp.float32)   # (Sq, Sk)
        m = jnp.max(s, axis=-1, keepdims=True)
        p = jnp.exp(s - m)
        denom = jnp.sum(p, axis=-1, keepdims=True)
        oh = jnp.dot(p.astype(jnp.bfloat16), vh,
                     preferred_element_type=jnp.float32)              # (Sq, hd)
        # Normalize AFTER the PV matmul: (Sq,hd) multiply instead of (Sq,Sk).
        oh = oh * pl.reciprocal(denom, approx=True)
        ctx_sc[:, qs] = oh                                            # static column slice

    # One full-width (Sq,D)@(D,D) output projection instead of per-head K=hd folds.
    return (jnp.dot(ctx_sc[...].astype(jnp.bfloat16), wo_ref[...],
                    preferred_element_type=jnp.float32) + bo_ref[...])


def _residual_ln(x_f32, delta_f32, g_ref, b_ref, eps):
    y = x_f32 + delta_f32
    mean = jnp.mean(y, axis=-1, keepdims=True)
    var = jnp.mean(jnp.square(y - mean), axis=-1, keepdims=True)
    return (y - mean) * jax.lax.rsqrt(var + eps) * g_ref[...] + b_ref[...]


def _self_attn_ln_kernel(*refs, nhead, eps, emb_scale, has_prologue):
    """One batch slab: LayerNorm(x + SelfAttn(x)), optionally with the
    embedding-scale + positional-encoding prologue fused in front."""
    if has_prologue:
        (x_ref, pe_ref, wqkv_ref, bqkv_ref, wo_ref, bo_ref,
         g_ref, beta_ref, o_ref, ctx_sc) = refs
    else:
        (x_ref, wqkv_ref, bqkv_ref, wo_ref, bo_ref,
         g_ref, beta_ref, o_ref, ctx_sc) = refs

    x = x_ref[0]                                    # (S, D) f32 (also the residual)
    if has_prologue:
        # x * sqrt(d_model) + pe[batch]   (pe broadcast over seq: reference quirk)
        x = x * emb_scale + pe_ref[0]

    D = x.shape[-1]

    # Fused (D, 3D) QKV projection: one wide matmul.
    qkv = (jnp.dot(x.astype(jnp.bfloat16), wqkv_ref[...],
                   preferred_element_type=jnp.float32) + bqkv_ref[...])   # (S, 3D)
    q = qkv[:, :D]
    kvp = qkv[:, D:]                                 # (S, 2D) = [k | v]

    attn = _attention_core(q, kvp, wo_ref, bo_ref, ctx_sc, nhead, D)
    o_ref[0] = _residual_ln(x, attn, g_ref, beta_ref, eps).astype(o_ref.dtype)


def _cross_attn_ln_kernel(q_ref, kv_ref, wq_ref, bq_ref, wkv_ref, bkv_ref,
                          wo_ref, bo_ref, g_ref, beta_ref, o_ref, ctx_sc,
                          *, nhead, eps):
    """One batch slab: LayerNorm(x + CrossAttn(x, memory))."""
    x = q_ref[0]                                     # (Sq, D) f32 residual branch
    mem = kv_ref[0]                                  # (Sk, D) f32
    D = x.shape[-1]

    q = (jnp.dot(x.astype(jnp.bfloat16), wq_ref[...],
                 preferred_element_type=jnp.float32) + bq_ref[...])        # (Sq, D)
    kvp = (jnp.dot(mem.astype(jnp.bfloat16), wkv_ref[...],
                   preferred_element_type=jnp.float32) + bkv_ref[...])     # (Sk, 2D)

    attn = _attention_core(q, kvp, wo_ref, bo_ref, ctx_sc, nhead, D)
    o_ref[0] = _residual_ln(x, attn, g_ref, beta_ref, eps).astype(o_ref.dtype)


def _ffn_ln_kernel(*refs, eps, extra_ln):
    """Row tile: LayerNorm(x + W2 relu(W1 x + b1) + b2); optionally followed by
    the stack-final LayerNorm (encoder.norm / decoder.norm) fused in."""
    if extra_ln:
        (x_ref, w1_ref, b1_ref, w2_ref, b2_ref, g_ref, beta_ref,
         g2_ref, beta2_ref, o_ref) = refs
    else:
        (x_ref, w1_ref, b1_ref, w2_ref, b2_ref, g_ref, beta_ref, o_ref) = refs

    x = x_ref[...]                                                    # (TR, D) f32
    h = (jnp.dot(x.astype(jnp.bfloat16), w1_ref[...],
                 preferred_element_type=jnp.float32) + b1_ref[...])
    h = jnp.maximum(h, 0.0)
    y = (jnp.dot(h.astype(jnp.bfloat16), w2_ref[...],
                 preferred_element_type=jnp.float32) + b2_ref[...])

    out = _residual_ln(x, y, g_ref, beta_ref, eps)
    if extra_ln:
        mean = jnp.mean(out, axis=-1, keepdims=True)
        var = jnp.mean(jnp.square(out - mean), axis=-1, keepdims=True)
        out = (out - mean) * jax.lax.rsqrt(var + eps) * g2_ref[...] + beta2_ref[...]
    o_ref[...] = out.astype(o_ref.dtype)


def _proj_kernel(x_ref, w_ref, b_ref, o_ref):
    # Output projection tile into a lane-dense (128-multiple) vocab slice.
    o_ref[...] = (jnp.dot(x_ref[...].astype(jnp.bfloat16), w_ref[...],
                          preferred_element_type=jnp.float32)
                  + b_ref[...]).astype(o_ref.dtype)


# ----------------------------------------------------------------------------
# pallas_call wrappers
# ----------------------------------------------------------------------------

def fused_self_attn_ln(x, ap, gamma, beta, nhead, pe=None, emb_scale=1.0, eps=1e-5):
    B, S, D = x.shape
    has_prologue = pe is not None
    kernel = functools.partial(_self_attn_ln_kernel, nhead=nhead, eps=eps,
                               emb_scale=float(emb_scale), has_prologue=has_prologue)

    in_specs = [pl.BlockSpec((1, S, D), lambda b: (b, 0, 0))]   # x: residual + Q/K/V (once)
    args = [x]
    if has_prologue:
        in_specs.append(pl.BlockSpec((1, 1, D), lambda b: (b, 0, 0)))
        args.append(pe)
    in_specs += [
        pl.BlockSpec((D, 3 * D), lambda b: (0, 0)),   # wqkv = [wq | wk | wv] (bf16)
        pl.BlockSpec((1, 3 * D), lambda b: (0, 0)),   # bqkv
        pl.BlockSpec((D, D), lambda b: (0, 0)),       # wo (bf16)
        pl.BlockSpec((1, D), lambda b: (0, 0)),       # bo
        pl.BlockSpec((1, D), lambda b: (0, 0)),       # ln gamma
        pl.BlockSpec((1, D), lambda b: (0, 0)),       # ln beta
    ]
    args += [ap["wqkv"], ap["bqkv"], ap["wo"], ap["bo"], gamma, beta]

    return pl.pallas_call(
        kernel,
        out_shape=jax.ShapeDtypeStruct((B, S, D), jnp.float32),
        grid=(B,),
        in_specs=in_specs,
        out_specs=pl.BlockSpec((1, S, D), lambda b: (b, 0, 0)),
        scratch_shapes=[pltpu.VMEM((S, D), jnp.float32)],   # per-head context slab
        compiler_params=_cparams(1),
    )(*args)


def fused_cross_attn_ln(x, mem, ap, gamma, beta, nhead, eps=1e-5):
    B, Sq, D = x.shape
    Sk = mem.shape[1]
    return pl.pallas_call(
        functools.partial(_cross_attn_ln_kernel, nhead=nhead, eps=eps),
        out_shape=jax.ShapeDtypeStruct((B, Sq, D), jnp.float32),
        grid=(B,),
        in_specs=[
            pl.BlockSpec((1, Sq, D), lambda b: (b, 0, 0)),   # decoder activation
            pl.BlockSpec((1, Sk, D), lambda b: (b, 0, 0)),   # encoder memory
            pl.BlockSpec((D, D), lambda b: (0, 0)),          # wq (bf16)
            pl.BlockSpec((1, D), lambda b: (0, 0)),          # bq
            pl.BlockSpec((D, 2 * D), lambda b: (0, 0)),      # wkv = [wk | wv] (bf16)
            pl.BlockSpec((1, 2 * D), lambda b: (0, 0)),      # bkv
            pl.BlockSpec((D, D), lambda b: (0, 0)),          # wo (bf16)
            pl.BlockSpec((1, D), lambda b: (0, 0)),          # bo
            pl.BlockSpec((1, D), lambda b: (0, 0)),          # ln gamma
            pl.BlockSpec((1, D), lambda b: (0, 0)),          # ln beta
        ],
        out_specs=pl.BlockSpec((1, Sq, D), lambda b: (b, 0, 0)),
        scratch_shapes=[pltpu.VMEM((Sq, D), jnp.float32)],
        compiler_params=_cparams(1),
    )(x, mem, ap["wq"], ap["bq"], ap["wkv"], ap["bkv"], ap["wo"], ap["bo"],
      gamma, beta)


def fused_ffn_ln(x, w1, b1, w2, b2, gamma, beta, gamma2=None, beta2=None, eps=1e-5):
    B, S, D = x.shape
    FF = w1.shape[1]
    R = B * S
    TR = _row_tile(R)
    xr = x.reshape(R, D)
    extra_ln = gamma2 is not None

    in_specs = [
        pl.BlockSpec((TR, D), lambda r: (r, 0)),
        pl.BlockSpec((D, FF), lambda r: (0, 0)),
        pl.BlockSpec((1, FF), lambda r: (0, 0)),
        pl.BlockSpec((FF, D), lambda r: (0, 0)),
        pl.BlockSpec((1, D), lambda r: (0, 0)),
        pl.BlockSpec((1, D), lambda r: (0, 0)),
        pl.BlockSpec((1, D), lambda r: (0, 0)),
    ]
    args = [xr, w1, b1, w2, b2, gamma, beta]
    if extra_ln:
        in_specs += [pl.BlockSpec((1, D), lambda r: (0, 0)),
                     pl.BlockSpec((1, D), lambda r: (0, 0))]
        args += [gamma2, beta2]

    out = pl.pallas_call(
        functools.partial(_ffn_ln_kernel, eps=eps, extra_ln=extra_ln),
        out_shape=jax.ShapeDtypeStruct((R, D), jnp.float32),
        grid=(R // TR,),
        in_specs=in_specs,
        out_specs=pl.BlockSpec((TR, D), lambda r: (r, 0)),
        compiler_params=_cparams(1),
    )(*args)
    return out.reshape(B, S, D)


def pallas_out_proj(x, w_pad, b_pad):
    B, S, D = x.shape
    N = w_pad.shape[1]                 # lane-dense padded vocab (multiple of 128)
    R = B * S
    TR = _row_tile(R)
    TN = _col_tile(N)
    xr = x.reshape(R, D)

    out = pl.pallas_call(
        _proj_kernel,
        out_shape=jax.ShapeDtypeStruct((R, N), jnp.float32),
        grid=(R // TR, N // TN),       # vocab tiled -> weight slabs pipeline
        in_specs=[
            pl.BlockSpec((TR, D), lambda r, j: (r, 0)),
            pl.BlockSpec((D, TN), lambda r, j: (0, j)),
            pl.BlockSpec((1, TN), lambda r, j: (0, j)),
        ],
        out_specs=pl.BlockSpec((TR, TN), lambda r, j: (r, j)),
        compiler_params=_cparams(2),
    )(xr, w_pad, b_pad)
    return out.reshape(B, S, N)


# ----------------------------------------------------------------------------
# Forward pass
# ----------------------------------------------------------------------------

def translation_transformer_forward(params, src_ids, tgt_ids, *, nhead, d_model, tgt_vocab):
    D = d_model
    emb_scale = math.sqrt(D)

    # Slice the decoder ids BEFORE the embedding gather (skips the dropped token's
    # embedding/prologue work; pe broadcasts over seq so ordering is equivalent).
    tgt_in_ids = tgt_ids[:, :-1]

    # TODO(synk): token-id embedding gather stays in plain JAX (data-dependent
    # gather; a DMA-gather kernel is not worthwhile at these sizes).
    src = jnp.take(params["src_emb"], src_ids, axis=0)      # (B, Ss, D)
    tgt = jnp.take(params["tgt_emb"], tgt_in_ids, axis=0)   # (B, St-1, D)

    B = src.shape[0]
    # PositionalEncoding: x + pe[:x.size(0)] with batch-first x -> indexes the
    # BATCH dim and broadcasts over seq (faithful reproduction of the reference).
    pe_b = params["pe"][:B].reshape(B, 1, D)
    # dropout == identity (eval mode)

    # Encoder (post-norm layers, no masks); prologue fused into layer 0,
    # encoder-final LayerNorm fused into the last layer's FFN kernel.
    enc_layers = params["enc_layers"]
    mem = src
    for i, lp in enumerate(enc_layers):
        mem = fused_self_attn_ln(
            mem, lp["self_attn"], lp["ln1_g"], lp["ln1_b"], nhead,
            pe=pe_b if i == 0 else None, emb_scale=emb_scale)
        last = (i == len(enc_layers) - 1)
        mem = fused_ffn_ln(mem, lp["w1"], lp["b1"], lp["w2"], lp["b2"],
                           lp["ln2_g"], lp["ln2_b"],
                           gamma2=params["enc_norm_g"] if last else None,
                           beta2=params["enc_norm_b"] if last else None)

    # Decoder (post-norm layers, no masks — faithful to reference); prologue fused
    # into layer 0, decoder-final LayerNorm fused into the last layer's FFN kernel.
    dec_layers = params["dec_layers"]
    out = tgt
    for i, lp in enumerate(dec_layers):
        out = fused_self_attn_ln(
            out, lp["self_attn"], lp["ln1_g"], lp["ln1_b"], nhead,
            pe=pe_b if i == 0 else None, emb_scale=emb_scale)
        out = fused_cross_attn_ln(out, mem, lp["cross_attn"],
                                  lp["ln2_g"], lp["ln2_b"], nhead)
        last = (i == len(dec_layers) - 1)
        out = fused_ffn_ln(out, lp["w1"], lp["b1"], lp["w2"], lp["b2"],
                           lp["ln3_g"], lp["ln3_b"],
                           gamma2=params["dec_norm_g"] if last else None,
                           beta2=params["dec_norm_b"] if last else None)

    # Output projection over a lane-dense padded + tiled vocab dim; slice back.
    logits_pad = pallas_out_proj(out, params["out_w_pad"], params["out_b_pad"])
    return logits_pad[..., :tgt_vocab]


# ----------------------------------------------------------------------------
# Deterministic parameter construction (matmul weights stored in bf16)
# ----------------------------------------------------------------------------

def _make_pe_table(d_model, max_len=5000):
    position = jnp.arange(max_len, dtype=jnp.float32)[:, None]
    div_term = jnp.exp(jnp.arange(0, d_model, 2, dtype=jnp.float32)
                       * -(math.log(10000.0) / d_model))
    pe = jnp.zeros((max_len, d_model), dtype=jnp.float32)
    pe = pe.at[:, 0::2].set(jnp.sin(position * div_term))
    pe = pe.at[:, 1::2].set(jnp.cos(position * div_term))
    return pe


def _bf16_w(key, shape, scale=0.02):
    return (scale * jax.random.normal(key, shape, jnp.float32)).astype(jnp.bfloat16)


def _self_attn_params(key, d_model):
    k1, k2 = jax.random.split(key)
    return {
        # q, k, v projection weights pre-concatenated -> one wide matmul in-kernel.
        "wqkv": _bf16_w(k1, (d_model, 3 * d_model)),
        "bqkv": jnp.zeros((1, 3 * d_model), jnp.float32),
        "wo": _bf16_w(k2, (d_model, d_model)),
        "bo": jnp.zeros((1, d_model), jnp.float32),
    }


def _cross_attn_params(key, d_model):
    k1, k2, k3 = jax.random.split(key, 3)
    return {
        "wq": _bf16_w(k1, (d_model, d_model)),
        "bq": jnp.zeros((1, d_model), jnp.float32),
        # k and v projection weights pre-concatenated -> one wide matmul in-kernel.
        "wkv": _bf16_w(k2, (d_model, 2 * d_model)),
        "bkv": jnp.zeros((1, 2 * d_model), jnp.float32),
        "wo": _bf16_w(k3, (d_model, d_model)),
        "bo": jnp.zeros((1, d_model), jnp.float32),
    }


def _ln_pair(d_model):
    return jnp.ones((1, d_model), jnp.float32), jnp.zeros((1, d_model), jnp.float32)


def _enc_layer_params(key, d_model, dim_ff):
    ks = jax.random.split(key, 3)
    g1, b1 = _ln_pair(d_model)
    g2, b2 = _ln_pair(d_model)
    return {
        "self_attn": _self_attn_params(ks[0], d_model),
        "w1": _bf16_w(ks[1], (d_model, dim_ff)),
        "b1": jnp.zeros((1, dim_ff), jnp.float32),
        "w2": _bf16_w(ks[2], (dim_ff, d_model)),
        "b2": jnp.zeros((1, d_model), jnp.float32),
        "ln1_g": g1, "ln1_b": b1, "ln2_g": g2, "ln2_b": b2,
    }


def _dec_layer_params(key, d_model, dim_ff):
    ks = jax.random.split(key, 4)
    g1, b1 = _ln_pair(d_model)
    g2, b2 = _ln_pair(d_model)
    g3, b3 = _ln_pair(d_model)
    return {
        "self_attn": _self_attn_params(ks[0], d_model),
        "cross_attn": _cross_attn_params(ks[1], d_model),
        "w1": _bf16_w(ks[2], (d_model, dim_ff)),
        "b1": jnp.zeros((1, dim_ff), jnp.float32),
        "w2": _bf16_w(ks[3], (dim_ff, d_model)),
        "b2": jnp.zeros((1, d_model), jnp.float32),
        "ln1_g": g1, "ln1_b": b1, "ln2_g": g2, "ln2_b": b2, "ln3_g": g3, "ln3_b": b3,
    }


def make_params(key, src_vocab, tgt_vocab, d_model, num_enc, num_dec, dim_ff):
    keys = jax.random.split(key, 4 + num_enc + num_dec)
    s = 0.02

    # Output projection padded to a lane-dense multiple of 128 along vocab.
    n_pad = ((tgt_vocab + 127) // 128) * 128
    out_w = s * jax.random.normal(keys[2], (d_model, tgt_vocab), jnp.float32)
    out_w_pad = (jnp.zeros((d_model, n_pad), jnp.float32)
                 .at[:, :tgt_vocab].set(out_w)).astype(jnp.bfloat16)
    out_b_pad = jnp.zeros((1, n_pad), jnp.float32)

    enc_g, enc_b = _ln_pair(d_model)
    dec_g, dec_b = _ln_pair(d_model)
    return {
        "src_emb": s * jax.random.normal(keys[0], (src_vocab, d_model), jnp.float32),
        "tgt_emb": s * jax.random.normal(keys[1], (tgt_vocab, d_model), jnp.float32),
        "pe": _make_pe_table(d_model),
        "out_w_pad": out_w_pad,
        "out_b_pad": out_b_pad,
        "enc_norm_g": enc_g, "enc_norm_b": enc_b,
        "dec_norm_g": dec_g, "dec_norm_b": dec_b,
        "enc_layers": [_enc_layer_params(keys[4 + i], d_model, dim_ff)
                       for i in range(num_enc)],
        "dec_layers": [_dec_layer_params(keys[4 + num_enc + i], d_model, dim_ff)
                       for i in range(num_dec)],
    }


# ----------------------------------------------------------------------------
# Main
# ----------------------------------------------------------------------------

if __name__ == "__main__":
    # Small shapes consistent with the module.
    SRC_VOCAB, TGT_VOCAB = 50, 60
    D_MODEL, NHEAD = 32, 2
    NUM_ENC, NUM_DEC = 2, 2
    DIM_FF = 64
    B, S_SRC, S_TGT = 2, 8, 8

    key = jax.random.PRNGKey(0)
    k_params, k_src, k_tgt = jax.random.split(key, 3)

    params = make_params(k_params, SRC_VOCAB, TGT_VOCAB, D_MODEL, NUM_ENC, NUM_DEC, DIM_FF)
    src_ids = jax.random.randint(k_src, (B, S_SRC), 0, SRC_VOCAB, dtype=jnp.int32)
    tgt_ids = jax.random.randint(k_tgt, (B, S_TGT), 0, TGT_VOCAB, dtype=jnp.int32)

    fwd = jax.jit(functools.partial(
        translation_transformer_forward,
        nhead=NHEAD, d_model=D_MODEL, tgt_vocab=TGT_VOCAB))

    logits = fwd(params, src_ids, tgt_ids)
    jax.block_until_ready(logits)

    assert logits.shape == (B, S_TGT - 1, TGT_VOCAB), logits.shape
    assert bool(jnp.all(jnp.isfinite(logits)))
    print("KERNEL_OK")
</pallas_src>

<mosaic_0001>
module attributes {stable_mosaic.version = 11 : i64} {
  func.func @_self_attn_ln_kernel(%arg0: i32, %arg1: memref<1x7x32xf32, #tpu.memory_space<vmem>>, %arg2: memref<1x1x32xf32, #tpu.memory_space<vmem>>, %arg3: memref<32x96xbf16, #tpu.memory_space<vmem>>, %arg4: memref<1x96xf32, #tpu.memory_space<vmem>>, %arg5: memref<32x32xbf16, #tpu.memory_space<vmem>>, %arg6: memref<1x32xf32, #tpu.memory_space<vmem>>, %arg7: memref<1x32xf32, #tpu.memory_space<vmem>>, %arg8: memref<1x32xf32, #tpu.memory_space<vmem>>, %arg9: memref<1x7x32xf32, #tpu.memory_space<vmem>>, %arg10: memref<7x32xf32, #tpu.memory_space<vmem>>) attributes {dimension_semantics = [#tpu.dimension_semantics<parallel>], iteration_bounds = array<i64: 2>, scalar_prefetch = 0 : i64, scratch_operands = 1 : i64, tpu.core_type = #tpu.core_type<tc>, window_params = [{transform_indices = @transform_0, window_bounds = array<i64: 1, 7, 32>}, {transform_indices = @transform_1, window_bounds = array<i64: 1, 1, 32>}, {pipeline_mode = #tpu.pipeline_mode<synchronous>, transform_indices = @transform_2, window_bounds = array<i64: 32, 96>}, {pipeline_mode = #tpu.pipeline_mode<synchronous>, transform_indices = @transform_3, window_bounds = array<i64: 1, 96>}, {pipeline_mode = #tpu.pipeline_mode<synchronous>, transform_indices = @transform_4, window_bounds = array<i64: 32, 32>}, {pipeline_mode = #tpu.pipeline_mode<synchronous>, transform_indices = @transform_5, window_bounds = array<i64: 1, 32>}, {pipeline_mode = #tpu.pipeline_mode<synchronous>, transform_indices = @transform_6, window_bounds = array<i64: 1, 32>}, {pipeline_mode = #tpu.pipeline_mode<synchronous>, transform_indices = @transform_7, window_bounds = array<i64: 1, 32>}, {transform_indices = @transform_8, window_bounds = array<i64: 1, 7, 32>}]} {
    %c0 = arith.constant 0 : index
    %c0_0 = arith.constant 0 : index
    %c0_1 = arith.constant 0 : index
    %0 = vector.load %arg1[%c0, %c0_0, %c0_1] : memref<1x7x32xf32, #tpu.memory_space<vmem>>, vector<1x7x32xf32>
    %1 = vector.shape_cast %0 : vector<1x7x32xf32> to vector<7x32xf32>
    %cst = arith.constant 5.65685415 : f32
    %2 = vector.broadcast %cst : f32 to vector<7x32xf32>
    %3 = arith.mulf %1, %2 : vector<7x32xf32>
    %c0_2 = arith.constant 0 : index
    %c0_3 = arith.constant 0 : index
    %c0_4 = arith.constant 0 : index
    %4 = vector.load %arg2[%c0_2, %c0_3, %c0_4] : memref<1x1x32xf32, #tpu.memory_space<vmem>>, vector<1x1x32xf32>
    %5 = vector.shape_cast %4 : vector<1x1x32xf32> to vector<1x32xf32>
    %6 = vector.broadcast %5 : vector<1x32xf32> to vector<7x32xf32>
    %7 = arith.addf %3, %6 : vector<7x32xf32>
    %8 = arith.truncf %7 : vector<7x32xf32> to vector<7x32xbf16>
    %c0_5 = arith.constant 0 : index
    %c0_6 = arith.constant 0 : index
    %9 = vector.load %arg3[%c0_5, %c0_6] : memref<32x96xbf16, #tpu.memory_space<vmem>>, vector<32x96xbf16>
    %cst_7 = arith.constant dense<0.000000e+00> : vector<7x96xf32>
    %10 = tpu.matmul %8, %9, %cst_7 {dimension_numbers = #tpu.dot_dimension_numbers<[1], [0], [0], [1], [0, 0, 1, 1], [], []>} : vector<7x32xbf16>, vector<32x96xbf16>, vector<7x96xf32> -> vector<7x96xf32>
    %c0_8 = arith.constant 0 : index
    %c0_9 = arith.constant 0 : index
    %11 = vector.load %arg4[%c0_8, %c0_9] : memref<1x96xf32, #tpu.memory_space<vmem>>, vector<1x96xf32>
    %12 = vector.broadcast %11 : vector<1x96xf32> to vector<7x96xf32>
    %13 = arith.addf %10, %12 : vector<7x96xf32>
    %14 = vector.extract_strided_slice %13 {offsets = [0, 0], sizes = [7, 32], strides = [1, 1]} : vector<7x96xf32> to vector<7x32xf32>
    %15 = vector.extract_strided_slice %13 {offsets = [0, 32], sizes = [7, 64], strides = [1, 1]} : vector<7x96xf32> to vector<7x64xf32>
    %16 = vector.extract_strided_slice %14 {offsets = [0, 0], sizes = [7, 16], strides = [1, 1]} : vector<7x32xf32> to vector<7x16xf32>
    %cst_10 = arith.constant 2.500000e-01 : f32
    %17 = vector.broadcast %cst_10 : f32 to vector<7x16xf32>
    %18 = arith.mulf %16, %17 : vector<7x16xf32>
    %19 = arith.truncf %18 : vector<7x16xf32> to vector<7x16xbf16>
    %20 = vector.extract_strided_slice %15 {offsets = [0, 0], sizes = [7, 16], strides = [1, 1]} : vector<7x64xf32> to vector<7x16xf32>
    %21 = arith.truncf %20 : vector<7x16xf32> to vector<7x16xbf16>
    %22 = vector.extract_strided_slice %15 {offsets = [0, 32], sizes = [7, 16], strides = [1, 1]} : vector<7x64xf32> to vector<7x16xf32>
    %23 = arith.truncf %22 : vector<7x16xf32> to vector<7x16xbf16>
    %cst_11 = arith.constant dense<0.000000e+00> : vector<7x7xf32>
    %24 = tpu.matmul %19, %21, %cst_11 {dimension_numbers = #tpu.dot_dimension_numbers<[1], [1], [0], [0], [0, 0, 1, 0], [], []>} : vector<7x16xbf16>, vector<7x16xbf16>, vector<7x7xf32> -> vector<7x7xf32>
    %cst_12 = arith.constant dense<0xFF800000> : vector<7xf32>
    %25 = vector.multi_reduction <maximumf>, %24, %cst_12 [1] : vector<7x7xf32> to vector<7xf32>
    %26 = vector.shape_cast %25 : vector<7xf32> to vector<7x1xf32>
    %27 = vector.broadcast %26 : vector<7x1xf32> to vector<7x7xf32>
    %28 = arith.subf %24, %27 : vector<7x7xf32>
    %29 = math.exp %28 : vector<7x7xf32>
    %cst_13 = arith.constant dense<0.000000e+00> : vector<7xf32>
    %30 = vector.multi_reduction <add>, %29, %cst_13 [1] : vector<7x7xf32> to vector<7xf32>
    %31 = vector.shape_cast %30 : vector<7xf32> to vector<7x1xf32>
    %32 = arith.truncf %29 : vector<7x7xf32> to vector<7x7xbf16>
    %cst_14 = arith.constant dense<0.000000e+00> : vector<7x16xf32>
    %33 = tpu.matmul %32, %23, %cst_14 {dimension_numbers = #tpu.dot_dimension_numbers<[1], [0], [0], [1], [0, 0, 1, 1], [], []>} : vector<7x7xbf16>, vector<7x16xbf16>, vector<7x16xf32> -> vector<7x16xf32>
    %34 = tpu.reciprocal %31 {approx = true} : vector<7x1xf32> -> vector<7x1xf32>
    %35 = vector.broadcast %34 : vector<7x1xf32> to vector<7x16xf32>
    %36 = arith.mulf %33, %35 : vector<7x16xf32>
    %c0_15 = arith.constant 0 : index
    %c0_16 = arith.constant 0 : index
    %37 = vector.load %arg10[%c0_15, %c0_16] : memref<7x32xf32, #tpu.memory_space<vmem>>, vector<7x16xf32>
    tpu.vector_store %arg10[%c0_15, %c0_16], %36 {strides = array<i32>} : memref<7x32xf32, #tpu.memory_space<vmem>>, vector<7x16xf32>,
    %38 = vector.extract_strided_slice %14 {offsets = [0, 16], sizes = [7, 16], strides = [1, 1]} : vector<7x32xf32> to vector<7x16xf32>
    %cst_17 = arith.constant 2.500000e-01 : f32
    %39 = vector.broadcast %cst_17 : f32 to vector<7x16xf32>
    %40 = arith.mulf %38, %39 : vector<7x16xf32>
    %41 = arith.truncf %40 : vector<7x16xf32> to vector<7x16xbf16>
    %42 = vector.extract_strided_slice %15 {offsets = [0, 16], sizes = [7, 16], strides = [1, 1]} : vector<7x64xf32> to vector<7x16xf32>
    %43 = arith.truncf %42 : vector<7x16xf32> to vector<7x16xbf16>
    %44 = vector.extract_strided_slice %15 {offsets = [0, 48], sizes = [7, 16], strides = [1, 1]} : vector<7x64xf32> to vector<7x16xf32>
    %45 = arith.truncf %44 : vector<7x16xf32> to vector<7x16xbf16>
    %cst_18 = arith.constant dense<0.000000e+00> : vector<7x7xf32>
    %46 = tpu.matmul %41, %43, %cst_18 {dimension_numbers = #tpu.dot_dimension_numbers<[1], [1], [0], [0], [0, 0, 1, 0], [], []>} : vector<7x16xbf16>, vector<7x16xbf16>, vector<7x7xf32> -> vector<7x7xf32>
    %cst_19 = arith.constant dense<0xFF800000> : vector<7xf32>
    %47 = vector.multi_reduction <maximumf>, %46, %cst_19 [1] : vector<7x7xf32> to vector<7xf32>
    %48 = vector.shape_cast %47 : vector<7xf32> to vector<7x1xf32>
    %49 = vector.broadcast %48 : vector<7x1xf32> to vector<7x7xf32>
    %50 = arith.subf %46, %49 : vector<7x7xf32>
    %51 = math.exp %50 : vector<7x7xf32>
    %cst_20 = arith.constant dense<0.000000e+00> : vector<7xf32>
    %52 = vector.multi_reduction <add>, %51, %cst_20 [1] : vector<7x7xf32> to vector<7xf32>
    %53 = vector.shape_cast %52 : vector<7xf32> to vector<7x1xf32>
    %54 = arith.truncf %51 : vector<7x7xf32> to vector<7x7xbf16>
    %cst_21 = arith.constant dense<0.000000e+00> : vector<7x16xf32>
    %55 = tpu.matmul %54, %45, %cst_21 {dimension_numbers = #tpu.dot_dimension_numbers<[1], [0], [0], [1], [0, 0, 1, 1], [], []>} : vector<7x7xbf16>, vector<7x16xbf16>, vector<7x16xf32> -> vector<7x16xf32>
    %56 = tpu.reciprocal %53 {approx = true} : vector<7x1xf32> -> vector<7x1xf32>
    %57 = vector.broadcast %56 : vector<7x1xf32> to vector<7x16xf32>
    %58 = arith.mulf %55, %57 : vector<7x16xf32>
    %c0_22 = arith.constant 0 : index
    %c16 = arith.constant 16 : index
    %59 = vector.load %arg10[%c0_22, %c16] : memref<7x32xf32, #tpu.memory_space<vmem>>, vector<7x16xf32>
    tpu.vector_store %arg10[%c0_22, %c16], %58 {strides = array<i32>} : memref<7x32xf32, #tpu.memory_space<vmem>>, vector<7x16xf32>,
    %c0_23 = arith.constant 0 : index
    %c0_24 = arith.constant 0 : index
    %60 = vector.load %arg10[%c0_23, %c0_24] : memref<7x32xf32, #tpu.memory_space<vmem>>, vector<7x32xf32>
    %61 = arith.truncf %60 : vector<7x32xf32> to vector<7x32xbf16>
    %c0_25 = arith.constant 0 : index
    %c0_26 = arith.constant 0 : index
    %62 = vector.load %arg5[%c0_25, %c0_26] : memref<32x32xbf16, #tpu.memory_space<vmem>>, vector<32x32xbf16>
    %cst_27 = arith.constant dense<0.000000e+00> : vector<7x32xf32>
    %63 = tpu.matmul %61, %62, %cst_27 {dimension_numbers = #tpu.dot_dimension_numbers<[1], [0], [0], [1], [0, 0, 1, 1], [], []>} : vector<7x32xbf16>, vector<32x32xbf16>, vector<7x32xf32> -> vector<7x32xf32>
    %c0_28 = arith.constant 0 : index
    %c0_29 = arith.constant 0 : index
    %64 = vector.load %arg6[%c0_28, %c0_29] : memref<1x32xf32, #tpu.memory_space<vmem>>, vector<1x32xf32>
    %65 = vector.broadcast %64 : vector<1x32xf32> to vector<7x32xf32>
    %66 = arith.addf %63, %65 : vector<7x32xf32>
    %67 = arith.addf %7, %66 : vector<7x32xf32>
    %cst_30 = arith.constant dense<0.000000e+00> : vector<7xf32>
    %68 = vector.multi_reduction <add>, %67, %cst_30 [1] : vector<7x32xf32> to vector<7xf32>
    %69 = vector.shape_cast %68 : vector<7xf32> to vector<7x1xf32>
    %cst_31 = arith.constant 3.200000e+01 : f32
    %70 = vector.broadcast %cst_31 : f32 to vector<7x1xf32>
    %71 = arith.divf %69, %70 : vector<7x1xf32>
    %72 = vector.broadcast %71 : vector<7x1xf32> to vector<7x32xf32>
    %73 = arith.subf %67, %72 : vector<7x32xf32>
    %74 = arith.mulf %73, %73 : vector<7x32xf32>
    %cst_32 = arith.constant dense<0.000000e+00> : vector<7xf32>
    %75 = vector.multi_reduction <add>, %74, %cst_32 [1] : vector<7x32xf32> to vector<7xf32>
    %76 = vector.shape_cast %75 : vector<7xf32> to vector<7x1xf32>
    %cst_33 = arith.constant 3.200000e+01 : f32
    %77 = vector.broadcast %cst_33 : f32 to vector<7x1xf32>
    %78 = arith.divf %76, %77 : vector<7x1xf32>
    %79 = vector.broadcast %71 : vector<7x1xf32> to vector<7x32xf32>
    %80 = arith.subf %67, %79 : vector<7x32xf32>
    %cst_34 = arith.constant 9.99999974E-6 : f32
    %81 = vector.broadcast %cst_34 : f32 to vector<7x1xf32>
    %82 = arith.addf %78, %81 : vector<7x1xf32>
    %83 = math.rsqrt %82 : vector<7x1xf32>
    %84 = vector.broadcast %83 : vector<7x1xf32> to vector<7x32xf32>
    %85 = arith.mulf %80, %84 : vector<7x32xf32>
    %c0_35 = arith.constant 0 : index
    %c0_36 = arith.constant 0 : index
    %86 = vector.load %arg7[%c0_35, %c0_36] : memref<1x32xf32, #tpu.memory_space<vmem>>, vector<1x32xf32>
    %87 = vector.broadcast %86 : vector<1x32xf32> to vector<7x32xf32>
    %88 = arith.mulf %85, %87 : vector<7x32xf32>
    %c0_37 = arith.constant 0 : index
    %c0_38 = arith.constant 0 : index
    %89 = vector.load %arg8[%c0_37, %c0_38] : memref<1x32xf32, #tpu.memory_space<vmem>>, vector<1x32xf32>
    %90 = vector.broadcast %89 : vector<1x32xf32> to vector<7x32xf32>
    %91 = arith.addf %88, %90 : vector<7x32xf32>
    %c0_39 = arith.constant 0 : index
    %c0_40 = arith.constant 0 : index
    %c0_41 = arith.constant 0 : index
    %92 = vector.load %arg9[%c0_39, %c0_40, %c0_41] : memref<1x7x32xf32, #tpu.memory_space<vmem>>, vector<1x7x32xf32>
    %93 = vector.shape_cast %92 : vector<1x7x32xf32> to vector<7x32xf32>
    %94 = vector.shape_cast %91 : vector<7x32xf32> to vector<1x7x32xf32>
    tpu.vector_store %arg9[%c0_39, %c0_40, %c0_41], %94 {strides = array<i32>} : memref<1x7x32xf32, #tpu.memory_space<vmem>>, vector<1x7x32xf32>,
    return
  }
  func.func @transform_0(%arg0: i32) -> (i32, i32, i32) {
    %c0_i32 = arith.constant 0 : i32
    %c0_i32_0 = arith.constant 0 : i32
    %c0_i32_1 = arith.constant 0 : i32
    return %arg0, %c0_i32, %c0_i32_0 : i32, i32, i32
  }
  func.func @transform_1(%arg0: i32) -> (i32, i32, i32) {
    %c0_i32 = arith.constant 0 : i32
    %c0_i32_0 = arith.constant 0 : i32
    %c0_i32_1 = arith.constant 0 : i32
    return %arg0, %c0_i32, %c0_i32_0 : i32, i32, i32
  }
  func.func @transform_2(%arg0: i32) -> (i32, i32) {
    %c0_i32 = arith.constant 0 : i32
    %c0_i32_0 = arith.constant 0 : i32
    %c0_i32_1 = arith.constant 0 : i32
    return %c0_i32, %c0_i32_0 : i32, i32
  }
  func.func @transform_3(%arg0: i32) -> (i32, i32) {
    %c0_i32 = arith.constant 0 : i32
    %c0_i32_0 = arith.constant 0 : i32
    %c0_i32_1 = arith.constant 0 : i32
    return %c0_i32, %c0_i32_0 : i32, i32
  }
  func.func @transform_4(%arg0: i32) -> (i32, i32) {
    %c0_i32 = arith.constant 0 : i32
    %c0_i32_0 = arith.constant 0 : i32
    %c0_i32_1 = arith.constant 0 : i32
    return %c0_i32, %c0_i32_0 : i32, i32
  }
  func.func @transform_5(%arg0: i32) -> (i32, i32) {
    %c0_i32 = arith.constant 0 : i32
    %c0_i32_0 = arith.constant 0 : i32
    %c0_i32_1 = arith.constant 0 : i32
    return %c0_i32, %c0_i32_0 : i32, i32
  }
  func.func @transform_6(%arg0: i32) -> (i32, i32) {
    %c0_i32 = arith.constant 0 : i32
    %c0_i32_0 = arith.constant 0 : i32
    %c0_i32_1 = arith.constant 0 : i32
    return %c0_i32, %c0_i32_0 : i32, i32
  }
  func.func @transform_7(%arg0: i32) -> (i32, i32) {
    %c0_i32 = arith.constant 0 : i32
    %c0_i32_0 = arith.constant 0 : i32
    %c0_i32_1 = arith.constant 0 : i32
    return %c0_i32, %c0_i32_0 : i32, i32
  }
  func.func @transform_8(%arg0: i32) -> (i32, i32, i32) {
    %c0_i32 = arith.constant 0 : i32
    %c0_i32_0 = arith.constant 0 : i32
    %c0_i32_1 = arith.constant 0 : i32
    return %arg0, %c0_i32, %c0_i32_0 : i32, i32, i32
  }
}

module attributes {stable_mosaic.version = 11 : i64} {
  func.func @_ffn_ln_kernel(%arg0: i32, %arg1: memref<16x32xf32, #tpu.memory_space<vmem>>, %arg2: memref<32x64xbf16, #tpu.memory_space<vmem>>, %arg3: memref<1x64xf32, #tpu.memory_space<vmem>>, %arg4: memref<64x32xbf16, #tpu.memory_space<vmem>>, %arg5: memref<1x32xf32, #tpu.memory_space<vmem>>, %arg6: memref<1x32xf32, #tpu.memory_space<vmem>>, %arg7: memref<1x32xf32, #tpu.memory_space<vmem>>, %arg8: memref<16x32xf32, #tpu.memory_space<vmem>>) attributes {dimension_semantics = [#tpu.dimension_semantics<parallel>], iteration_bounds = array<i64: 1>, scalar_prefetch = 0 : i64, scratch_operands = 0 : i64, tpu.core_type = #tpu.core_type<tc>, window_params = [{transform_indices = @transform_0, window_bounds = array<i64: 16, 32>}, {pipeline_mode = #tpu.pipeline_mode<synchronous>, transform_indices = @transform_1, window_bounds = array<i64: 32, 64>}, {pipeline_mode = #tpu.pipeline_mode<synchronous>, transform_indices = @transform_2, window_bounds = array<i64: 1, 64>}, {pipeline_mode = #tpu.pipeline_mode<synchronous>, transform_indices = @transform_3, window_bounds = array<i64: 64, 32>}, {pipeline_mode = #tpu.pipeline_mode<synchronous>, transform_indices = @transform_4, window_bounds = array<i64: 1, 32>}, {pipeline_mode = #tpu.pipeline_mode<synchronous>, transform_indices = @transform_5, window_bounds = array<i64: 1, 32>}, {pipeline_mode = #tpu.pipeline_mode<synchronous>, transform_indices = @transform_6, window_bounds = array<i64: 1, 32>}, {transform_indices = @transform_7, window_bounds = array<i64: 16, 32>}]} {
    %c0 = arith.constant 0 : index
    %c0_0 = arith.constant 0 : index
    %0 = vector.load %arg1[%c0, %c0_0] : memref<16x32xf32, #tpu.memory_space<vmem>>, vector<16x32xf32>
    %1 = arith.truncf %0 : vector<16x32xf32> to vector<16x32xbf16>
    %c0_1 = arith.constant 0 : index
    %c0_2 = arith.constant 0 : index
    %2 = vector.load %arg2[%c0_1, %c0_2] : memref<32x64xbf16, #tpu.memory_space<vmem>>, vector<32x64xbf16>
    %cst = arith.constant dense<0.000000e+00> : vector<16x64xf32>
    %3 = tpu.matmul %1, %2, %cst {dimension_numbers = #tpu.dot_dimension_numbers<[1], [0], [0], [1], [0, 0, 1, 1], [], []>} : vector<16x32xbf16>, vector<32x64xbf16>, vector<16x64xf32> -> vector<16x64xf32>
    %c0_3 = arith.constant 0 : index
    %c0_4 = arith.constant 0 : index
    %4 = vector.load %arg3[%c0_3, %c0_4] : memref<1x64xf32, #tpu.memory_space<vmem>>, vector<1x64xf32>
    %5 = vector.broadcast %4 : vector<1x64xf32> to vector<16x64xf32>
    %6 = arith.addf %3, %5 : vector<16x64xf32>
    %cst_5 = arith.constant 0.000000e+00 : f32
    %7 = vector.broadcast %cst_5 : f32 to vector<16x64xf32>
    %8 = arith.maximumf %6, %7 : vector<16x64xf32>
    %9 = arith.truncf %8 : vector<16x64xf32> to vector<16x64xbf16>
    %c0_6 = arith.constant 0 : index
    %c0_7 = arith.constant 0 : index
    %10 = vector.load %arg4[%c0_6, %c0_7] : memref<64x32xbf16, #tpu.memory_space<vmem>>, vector<64x32xbf16>
    %cst_8 = arith.constant dense<0.000000e+00> : vector<16x32xf32>
    %11 = tpu.matmul %9, %10, %cst_8 {dimension_numbers = #tpu.dot_dimension_numbers<[1], [0], [0], [1], [0, 0, 1, 1], [], []>} : vector<16x64xbf16>, vector<64x32xbf16>, vector<16x32xf32> -> vector<16x32xf32>
    %c0_9 = arith.constant 0 : index
    %c0_10 = arith.constant 0 : index
    %12 = vector.load %arg5[%c0_9, %c0_10] : memref<1x32xf32, #tpu.memory_space<vmem>>, vector<1x32xf32>
    %13 = vector.broadcast %12 : vector<1x32xf32> to vector<16x32xf32>
    %14 = arith.addf %11, %13 : vector<16x32xf32>
    %15 = arith.addf %0, %14 : vector<16x32xf32>
    %cst_11 = arith.constant dense<0.000000e+00> : vector<16xf32>
    %16 = vector.multi_reduction <add>, %15, %cst_11 [1] : vector<16x32xf32> to vector<16xf32>
    %17 = vector.shape_cast %16 : vector<16xf32> to vector<16x1xf32>
    %cst_12 = arith.constant 3.200000e+01 : f32
    %18 = vector.broadcast %cst_12 : f32 to vector<16x1xf32>
    %19 = arith.divf %17, %18 : vector<16x1xf32>
    %20 = vector.broadcast %19 : vector<16x1xf32> to vector<16x32xf32>
    %21 = arith.subf %15, %20 : vector<16x32xf32>
    %22 = arith.mulf %21, %21 : vector<16x32xf32>
    %cst_13 = arith.constant dense<0.000000e+00> : vector<16xf32>
    %23 = vector.multi_reduction <add>, %22, %cst_13 [1] : vector<16x32xf32> to vector<16xf32>
    %24 = vector.shape_cast %23 : vector<16xf32> to vector<16x1xf32>
    %cst_14 = arith.constant 3.200000e+01 : f32
    %25 = vector.broadcast %cst_14 : f32 to vector<16x1xf32>
    %26 = arith.divf %24, %25 : vector<16x1xf32>
    %27 = vector.broadcast %19 : vector<16x1xf32> to vector<16x32xf32>
    %28 = arith.subf %15, %27 : vector<16x32xf32>
    %cst_15 = arith.constant 9.99999974E-6 : f32
    %29 = vector.broadcast %cst_15 : f32 to vector<16x1xf32>
    %30 = arith.addf %26, %29 : vector<16x1xf32>
    %31 = math.rsqrt %30 : vector<16x1xf32>
    %32 = vector.broadcast %31 : vector<16x1xf32> to vector<16x32xf32>
    %33 = arith.mulf %28, %32 : vector<16x32xf32>
    %c0_16 = arith.constant 0 : index
    %c0_17 = arith.constant 0 : index
    %34 = vector.load %arg6[%c0_16, %c0_17] : memref<1x32xf32, #tpu.memory_space<vmem>>, vector<1x32xf32>
    %35 = vector.broadcast %34 : vector<1x32xf32> to vector<16x32xf32>
    %36 = arith.mulf %33, %35 : vector<16x32xf32>
    %c0_18 = arith.constant 0 : index
    %c0_19 = arith.constant 0 : index
    %37 = vector.load %arg7[%c0_18, %c0_19] : memref<1x32xf32, #tpu.memory_space<vmem>>, vector<1x32xf32>
    %38 = vector.broadcast %37 : vector<1x32xf32> to vector<16x32xf32>
    %39 = arith.addf %36, %38 : vector<16x32xf32>
    %c0_20 = arith.constant 0 : index
    %c0_21 = arith.constant 0 : index
    %40 = vector.load %arg8[%c0_20, %c0_21] : memref<16x32xf32, #tpu.memory_space<vmem>>, vector<16x32xf32>
    tpu.vector_store %arg8[%c0_20, %c0_21], %39 {strides = array<i32>} : memref<16x32xf32, #tpu.memory_space<vmem>>, vector<16x32xf32>,
    return
  }
  func.func @transform_0(%arg0: i32) -> (i32, i32) {
    %c0_i32 = arith.constant 0 : i32
    %c0_i32_0 = arith.constant 0 : i32
    return %arg0, %c0_i32 : i32, i32
  }
  func.func @transform_1(%arg0: i32) -> (i32, i32) {
    %c0_i32 = arith.constant 0 : i32
    %c0_i32_0 = arith.constant 0 : i32
    %c0_i32_1 = arith.constant 0 : i32
    return %c0_i32, %c0_i32_0 : i32, i32
  }
  func.func @transform_2(%arg0: i32) -> (i32, i32) {
    %c0_i32 = arith.constant 0 : i32
    %c0_i32_0 = arith.constant 0 : i32
    %c0_i32_1 = arith.constant 0 : i32
    return %c0_i32, %c0_i32_0 : i32, i32
  }
  func.func @transform_3(%arg0: i32) -> (i32, i32) {
    %c0_i32 = arith.constant 0 : i32
    %c0_i32_0 = arith.constant 0 : i32
    %c0_i32_1 = arith.constant 0 : i32
    return %c0_i32, %c0_i32_0 : i32, i32
  }
  func.func @transform_4(%arg0: i32) -> (i32, i32) {
    %c0_i32 = arith.constant 0 : i32
    %c0_i32_0 = arith.constant 0 : i32
    %c0_i32_1 = arith.constant 0 : i32
    return %c0_i32, %c0_i32_0 : i32, i32
  }
  func.func @transform_5(%arg0: i32) -> (i32, i32) {
    %c0_i32 = arith.constant 0 : i32
    %c0_i32_0 = arith.constant 0 : i32
    %c0_i32_1 = arith.constant 0 : i32
    return %c0_i32, %c0_i32_0 : i32, i32
  }
  func.func @transform_6(%arg0: i32) -> (i32, i32) {
    %c0_i32 = arith.constant 0 : i32
    %c0_i32_0 = arith.constant 0 : i32
    %c0_i32_1 = arith.constant 0 : i32
    return %c0_i32, %c0_i32_0 : i32, i32
  }
  func.func @transform_7(%arg0: i32) -> (i32, i32) {
    %c0_i32 = arith.constant 0 : i32
    %c0_i32_0 = arith.constant 0 : i32
    return %arg0, %c0_i32 : i32, i32
  }
}

module attributes {stable_mosaic.version = 11 : i64} {
  func.func @_self_attn_ln_kernel(%arg0: i32, %arg1: memref<1x8x32xf32, #tpu.memory_space<vmem>>, %arg2: memref<1x1x32xf32, #tpu.memory_space<vmem>>, %arg3: memref<32x96xbf16, #tpu.memory_space<vmem>>, %arg4: memref<1x96xf32, #tpu.memory_space<vmem>>, %arg5: memref<32x32xbf16, #tpu.memory_space<vmem>>, %arg6: memref<1x32xf32, #tpu.memory_space<vmem>>, %arg7: memref<1x32xf32, #tpu.memory_space<vmem>>, %arg8: memref<1x32xf32, #tpu.memory_space<vmem>>, %arg9: memref<1x8x32xf32, #tpu.memory_space<vmem>>, %arg10: memref<8x32xf32, #tpu.memory_space<vmem>>) attributes {dimension_semantics = [#tpu.dimension_semantics<parallel>], iteration_bounds = array<i64: 2>, scalar_prefetch = 0 : i64, scratch_operands = 1 : i64, tpu.core_type = #tpu.core_type<tc>, window_params = [{transform_indices = @transform_0, window_bounds = array<i64: 1, 8, 32>}, {transform_indices = @transform_1, window_bounds = array<i64: 1, 1, 32>}, {pipeline_mode = #tpu.pipeline_mode<synchronous>, transform_indices = @transform_2, window_bounds = array<i64: 32, 96>}, {pipeline_mode = #tpu.pipeline_mode<synchronous>, transform_indices = @transform_3, window_bounds = array<i64: 1, 96>}, {pipeline_mode = #tpu.pipeline_mode<synchronous>, transform_indices = @transform_4, window_bounds = array<i64: 32, 32>}, {pipeline_mode = #tpu.pipeline_mode<synchronous>, transform_indices = @transform_5, window_bounds = array<i64: 1, 32>}, {pipeline_mode = #tpu.pipeline_mode<synchronous>, transform_indices = @transform_6, window_bounds = array<i64: 1, 32>}, {pipeline_mode = #tpu.pipeline_mode<synchronous>, transform_indices = @transform_7, window_bounds = array<i64: 1, 32>}, {transform_indices = @transform_8, window_bounds = array<i64: 1, 8, 32>}]} {
    %c0 = arith.constant 0 : index
    %c0_0 = arith.constant 0 : index
    %c0_1 = arith.constant 0 : index
    %0 = vector.load %arg1[%c0, %c0_0, %c0_1] : memref<1x8x32xf32, #tpu.memory_space<vmem>>, vector<1x8x32xf32>
    %1 = vector.shape_cast %0 : vector<1x8x32xf32> to vector<8x32xf32>
    %cst = arith.constant 5.65685415 : f32
    %2 = vector.broadcast %cst : f32 to vector<8x32xf32>
    %3 = arith.mulf %1, %2 : vector<8x32xf32>
    %c0_2 = arith.constant 0 : index
    %c0_3 = arith.constant 0 : index
    %c0_4 = arith.constant 0 : index
    %4 = vector.load %arg2[%c0_2, %c0_3, %c0_4] : memref<1x1x32xf32, #tpu.memory_space<vmem>>, vector<1x1x32xf32>
    %5 = vector.shape_cast %4 : vector<1x1x32xf32> to vector<1x32xf32>
    %6 = vector.broadcast %5 : vector<1x32xf32> to vector<8x32xf32>
    %7 = arith.addf %3, %6 : vector<8x32xf32>
    %8 = arith.truncf %7 : vector<8x32xf32> to vector<8x32xbf16>
    %c0_5 = arith.constant 0 : index
    %c0_6 = arith.constant 0 : index
    %9 = vector.load %arg3[%c0_5, %c0_6] : memref<32x96xbf16, #tpu.memory_space<vmem>>, vector<32x96xbf16>
    %cst_7 = arith.constant dense<0.000000e+00> : vector<8x96xf32>
    %10 = tpu.matmul %8, %9, %cst_7 {dimension_numbers = #tpu.dot_dimension_numbers<[1], [0], [0], [1], [0, 0, 1, 1], [], []>} : vector<8x32xbf16>, vector<32x96xbf16>, vector<8x96xf32> -> vector<8x96xf32>
    %c0_8 = arith.constant 0 : index
    %c0_9 = arith.constant 0 : index
    %11 = vector.load %arg4[%c0_8, %c0_9] : memref<1x96xf32, #tpu.memory_space<vmem>>, vector<1x96xf32>
    %12 = vector.broadcast %11 : vector<1x96xf32> to vector<8x96xf32>
    %13 = arith.addf %10, %12 : vector<8x96xf32>
    %14 = vector.extract_strided_slice %13 {offsets = [0, 0], sizes = [8, 32], strides = [1, 1]} : vector<8x96xf32> to vector<8x32xf32>
    %15 = vector.extract_strided_slice %13 {offsets = [0, 32], sizes = [8, 64], strides = [1, 1]} : vector<8x96xf32> to vector<8x64xf32>
    %16 = vector.extract_strided_slice %14 {offsets = [0, 0], sizes = [8, 16], strides = [1, 1]} : vector<8x32xf32> to vector<8x16xf32>
    %cst_10 = arith.constant 2.500000e-01 : f32
    %17 = vector.broadcast %cst_10 : f32 to vector<8x16xf32>
    %18 = arith.mulf %16, %17 : vector<8x16xf32>
    %19 = arith.truncf %18 : vector<8x16xf32> to vector<8x16xbf16>
    %20 = vector.extract_strided_slice %15 {offsets = [0, 0], sizes = [8, 16], strides = [1, 1]} : vector<8x64xf32> to vector<8x16xf32>
    %21 = arith.truncf %20 : vector<8x16xf32> to vector<8x16xbf16>
    %22 = vector.extract_strided_slice %15 {offsets = [0, 32], sizes = [8, 16], strides = [1, 1]} : vector<8x64xf32> to vector<8x16xf32>
    %23 = arith.truncf %22 : vector<8x16xf32> to vector<8x16xbf16>
    %cst_11 = arith.constant dense<0.000000e+00> : vector<8x8xf32>
    %24 = tpu.matmul %19, %21, %cst_11 {dimension_numbers = #tpu.dot_dimension_numbers<[1], [1], [0], [0], [0, 0, 1, 0], [], []>} : vector<8x16xbf16>, vector<8x16xbf16>, vector<8x8xf32> -> vector<8x8xf32>
    %cst_12 = arith.constant dense<0xFF800000> : vector<8xf32>
    %25 = vector.multi_reduction <maximumf>, %24, %cst_12 [1] : vector<8x8xf32> to vector<8xf32>
    %26 = vector.shape_cast %25 : vector<8xf32> to vector<8x1xf32>
    %27 = vector.broadcast %26 : vector<8x1xf32> to vector<8x8xf32>
    %28 = arith.subf %24, %27 : vector<8x8xf32>
    %29 = math.exp %28 : vector<8x8xf32>
    %cst_13 = arith.constant dense<0.000000e+00> : vector<8xf32>
    %30 = vector.multi_reduction <add>, %29, %cst_13 [1] : vector<8x8xf32> to vector<8xf32>
    %31 = vector.shape_cast %30 : vector<8xf32> to vector<8x1xf32>
    %32 = arith.truncf %29 : vector<8x8xf32> to vector<8x8xbf16>
    %cst_14 = arith.constant dense<0.000000e+00> : vector<8x16xf32>
    %33 = tpu.matmul %32, %23, %cst_14 {dimension_numbers = #tpu.dot_dimension_numbers<[1], [0], [0], [1], [0, 0, 1, 1], [], []>} : vector<8x8xbf16>, vector<8x16xbf16>, vector<8x16xf32> -> vector<8x16xf32>
    %34 = tpu.reciprocal %31 {approx = true} : vector<8x1xf32> -> vector<8x1xf32>
    %35 = vector.broadcast %34 : vector<8x1xf32> to vector<8x16xf32>
    %36 = arith.mulf %33, %35 : vector<8x16xf32>
    %c0_15 = arith.constant 0 : index
    %c0_16 = arith.constant 0 : index
    %37 = vector.load %arg10[%c0_15, %c0_16] : memref<8x32xf32, #tpu.memory_space<vmem>>, vector<8x16xf32>
    tpu.vector_store %arg10[%c0_15, %c0_16], %36 {strides = array<i32>} : memref<8x32xf32, #tpu.memory_space<vmem>>, vector<8x16xf32>,
    %38 = vector.extract_strided_slice %14 {offsets = [0, 16], sizes = [8, 16], strides = [1, 1]} : vector<8x32xf32> to vector<8x16xf32>
    %cst_17 = arith.constant 2.500000e-01 : f32
    %39 = vector.broadcast %cst_17 : f32 to vector<8x16xf32>
    %40 = arith.mulf %38, %39 : vector<8x16xf32>
    %41 = arith.truncf %40 : vector<8x16xf32> to vector<8x16xbf16>
    %42 = vector.extract_strided_slice %15 {offsets = [0, 16], sizes = [8, 16], strides = [1, 1]} : vector<8x64xf32> to vector<8x16xf32>
    %43 = arith.truncf %42 : vector<8x16xf32> to vector<8x16xbf16>
    %44 = vector.extract_strided_slice %15 {offsets = [0, 48], sizes = [8, 16], strides = [1, 1]} : vector<8x64xf32> to vector<8x16xf32>
    %45 = arith.truncf %44 : vector<8x16xf32> to vector<8x16xbf16>
    %cst_18 = arith.constant dense<0.000000e+00> : vector<8x8xf32>
    %46 = tpu.matmul %41, %43, %cst_18 {dimension_numbers = #tpu.dot_dimension_numbers<[1], [1], [0], [0], [0, 0, 1, 0], [], []>} : vector<8x16xbf16>, vector<8x16xbf16>, vector<8x8xf32> -> vector<8x8xf32>
    %cst_19 = arith.constant dense<0xFF800000> : vector<8xf32>
    %47 = vector.multi_reduction <maximumf>, %46, %cst_19 [1] : vector<8x8xf32> to vector<8xf32>
    %48 = vector.shape_cast %47 : vector<8xf32> to vector<8x1xf32>
    %49 = vector.broadcast %48 : vector<8x1xf32> to vector<8x8xf32>
    %50 = arith.subf %46, %49 : vector<8x8xf32>
    %51 = math.exp %50 : vector<8x8xf32>
    %cst_20 = arith.constant dense<0.000000e+00> : vector<8xf32>
    %52 = vector.multi_reduction <add>, %51, %cst_20 [1] : vector<8x8xf32> to vector<8xf32>
    %53 = vector.shape_cast %52 : vector<8xf32> to vector<8x1xf32>
    %54 = arith.truncf %51 : vector<8x8xf32> to vector<8x8xbf16>
    %cst_21 = arith.constant dense<0.000000e+00> : vector<8x16xf32>
    %55 = tpu.matmul %54, %45, %cst_21 {dimension_numbers = #tpu.dot_dimension_numbers<[1], [0], [0], [1], [0, 0, 1, 1], [], []>} : vector<8x8xbf16>, vector<8x16xbf16>, vector<8x16xf32> -> vector<8x16xf32>
    %56 = tpu.reciprocal %53 {approx = true} : vector<8x1xf32> -> vector<8x1xf32>
    %57 = vector.broadcast %56 : vector<8x1xf32> to vector<8x16xf32>
    %58 = arith.mulf %55, %57 : vector<8x16xf32>
    %c0_22 = arith.constant 0 : index
    %c16 = arith.constant 16 : index
    %59 = vector.load %arg10[%c0_22, %c16] : memref<8x32xf32, #tpu.memory_space<vmem>>, vector<8x16xf32>
    tpu.vector_store %arg10[%c0_22, %c16], %58 {strides = array<i32>} : memref<8x32xf32, #tpu.memory_space<vmem>>, vector<8x16xf32>,
    %c0_23 = arith.constant 0 : index
    %c0_24 = arith.constant 0 : index
    %60 = vector.load %arg10[%c0_23, %c0_24] : memref<8x32xf32, #tpu.memory_space<vmem>>, vector<8x32xf32>
    %61 = arith.truncf %60 : vector<8x32xf32> to vector<8x32xbf16>
    %c0_25 = arith.constant 0 : index
    %c0_26 = arith.constant 0 : index
    %62 = vector.load %arg5[%c0_25, %c0_26] : memref<32x32xbf16, #tpu.memory_space<vmem>>, vector<32x32xbf16>
    %cst_27 = arith.constant dense<0.000000e+00> : vector<8x32xf32>
    %63 = tpu.matmul %61, %62, %cst_27 {dimension_numbers = #tpu.dot_dimension_numbers<[1], [0], [0], [1], [0, 0, 1, 1], [], []>} : vector<8x32xbf16>, vector<32x32xbf16>, vector<8x32xf32> -> vector<8x32xf32>
    %c0_28 = arith.constant 0 : index
    %c0_29 = arith.constant 0 : index
    %64 = vector.load %arg6[%c0_28, %c0_29] : memref<1x32xf32, #tpu.memory_space<vmem>>, vector<1x32xf32>
    %65 = vector.broadcast %64 : vector<1x32xf32> to vector<8x32xf32>
    %66 = arith.addf %63, %65 : vector<8x32xf32>
    %67 = arith.addf %7, %66 : vector<8x32xf32>
    %cst_30 = arith.constant dense<0.000000e+00> : vector<8xf32>
    %68 = vector.multi_reduction <add>, %67, %cst_30 [1] : vector<8x32xf32> to vector<8xf32>
    %69 = vector.shape_cast %68 : vector<8xf32> to vector<8x1xf32>
    %cst_31 = arith.constant 3.200000e+01 : f32
    %70 = vector.broadcast %cst_31 : f32 to vector<8x1xf32>
    %71 = arith.divf %69, %70 : vector<8x1xf32>
    %72 = vector.broadcast %71 : vector<8x1xf32> to vector<8x32xf32>
    %73 = arith.subf %67, %72 : vector<8x32xf32>
    %74 = arith.mulf %73, %73 : vector<8x32xf32>
    %cst_32 = arith.constant dense<0.000000e+00> : vector<8xf32>
    %75 = vector.multi_reduction <add>, %74, %cst_32 [1] : vector<8x32xf32> to vector<8xf32>
    %76 = vector.shape_cast %75 : vector<8xf32> to vector<8x1xf32>
    %cst_33 = arith.constant 3.200000e+01 : f32
    %77 = vector.broadcast %cst_33 : f32 to vector<8x1xf32>
    %78 = arith.divf %76, %77 : vector<8x1xf32>
    %79 = vector.broadcast %71 : vector<8x1xf32> to vector<8x32xf32>
    %80 = arith.subf %67, %79 : vector<8x32xf32>
    %cst_34 = arith.constant 9.99999974E-6 : f32
    %81 = vector.broadcast %cst_34 : f32 to vector<8x1xf32>
    %82 = arith.addf %78, %81 : vector<8x1xf32>
    %83 = math.rsqrt %82 : vector<8x1xf32>
    %84 = vector.broadcast %83 : vector<8x1xf32> to vector<8x32xf32>
    %85 = arith.mulf %80, %84 : vector<8x32xf32>
    %c0_35 = arith.constant 0 : index
    %c0_36 = arith.constant 0 : index
    %86 = vector.load %arg7[%c0_35, %c0_36] : memref<1x32xf32, #tpu.memory_space<vmem>>, vector<1x32xf32>
    %87 = vector.broadcast %86 : vector<1x32xf32> to vector<8x32xf32>
    %88 = arith.mulf %85, %87 : vector<8x32xf32>
    %c0_37 = arith.constant 0 : index
    %c0_38 = arith.constant 0 : index
    %89 = vector.load %arg8[%c0_37, %c0_38] : memref<1x32xf32, #tpu.memory_space<vmem>>, vector<1x32xf32>
    %90 = vector.broadcast %89 : vector<1x32xf32> to vector<8x32xf32>
    %91 = arith.addf %88, %90 : vector<8x32xf32>
    %c0_39 = arith.constant 0 : index
    %c0_40 = arith.constant 0 : index
    %c0_41 = arith.constant 0 : index
    %92 = vector.load %arg9[%c0_39, %c0_40, %c0_41] : memref<1x8x32xf32, #tpu.memory_space<vmem>>, vector<1x8x32xf32>
    %93 = vector.shape_cast %92 : vector<1x8x32xf32> to vector<8x32xf32>
    %94 = vector.shape_cast %91 : vector<8x32xf32> to vector<1x8x32xf32>
    tpu.vector_store %arg9[%c0_39, %c0_40, %c0_41], %94 {strides = array<i32>} : memref<1x8x32xf32, #tpu.memory_space<vmem>>, vector<1x8x32xf32>,
    return
  }
  func.func @transform_0(%arg0: i32) -> (i32, i32, i32) {
    %c0_i32 = arith.constant 0 : i32
    %c0_i32_0 = arith.constant 0 : i32
    %c0_i32_1 = arith.constant 0 : i32
    return %arg0, %c0_i32, %c0_i32_0 : i32, i32, i32
  }
  func.func @transform_1(%arg0: i32) -> (i32, i32, i32) {
    %c0_i32 = arith.constant 0 : i32
    %c0_i32_0 = arith.constant 0 : i32
    %c0_i32_1 = arith.constant 0 : i32
    return %arg0, %c0_i32, %c0_i32_0 : i32, i32, i32
  }
  func.func @transform_2(%arg0: i32) -> (i32, i32) {
    %c0_i32 = arith.constant 0 : i32
    %c0_i32_0 = arith.constant 0 : i32
    %c0_i32_1 = arith.constant 0 : i32
    return %c0_i32, %c0_i32_0 : i32, i32
  }
  func.func @transform_3(%arg0: i32) -> (i32, i32) {
    %c0_i32 = arith.constant 0 : i32
    %c0_i32_0 = arith.constant 0 : i32
    %c0_i32_1 = arith.constant 0 : i32
    return %c0_i32, %c0_i32_0 : i32, i32
  }
  func.func @transform_4(%arg0: i32) -> (i32, i32) {
    %c0_i32 = arith.constant 0 : i32
    %c0_i32_0 = arith.constant 0 : i32
    %c0_i32_1 = arith.constant 0 : i32
    return %c0_i32, %c0_i32_0 : i32, i32
  }
  func.func @transform_5(%arg0: i32) -> (i32, i32) {
    %c0_i32 = arith.constant 0 : i32
    %c0_i32_0 = arith.constant 0 : i32
    %c0_i32_1 = arith.constant 0 : i32
    return %c0_i32, %c0_i32_0 : i32, i32
  }
  func.func @transform_6(%arg0: i32) -> (i32, i32) {
    %c0_i32 = arith.constant 0 : i32
    %c0_i32_0 = arith.constant 0 : i32
    %c0_i32_1 = arith.constant 0 : i32
    return %c0_i32, %c0_i32_0 : i32, i32
  }
  func.func @transform_7(%arg0: i32) -> (i32, i32) {
    %c0_i32 = arith.constant 0 : i32
    %c0_i32_0 = arith.constant 0 : i32
    %c0_i32_1 = arith.constant 0 : i32
    return %c0_i32, %c0_i32_0 : i32, i32
  }
  func.func @transform_8(%arg0: i32) -> (i32, i32, i32) {
    %c0_i32 = arith.constant 0 : i32
    %c0_i32_0 = arith.constant 0 : i32
    %c0_i32_1 = arith.constant 0 : i32
    return %arg0, %c0_i32, %c0_i32_0 : i32, i32, i32
  }
}

module attributes {stable_mosaic.version = 11 : i64} {
  func.func @_self_attn_ln_kernel(%arg0: i32, %arg1: memref<1x8x32xf32, #tpu.memory_space<vmem>>, %arg2: memref<32x96xbf16, #tpu.memory_space<vmem>>, %arg3: memref<1x96xf32, #tpu.memory_space<vmem>>, %arg4: memref<32x32xbf16, #tpu.memory_space<vmem>>, %arg5: memref<1x32xf32, #tpu.memory_space<vmem>>, %arg6: memref<1x32xf32, #tpu.memory_space<vmem>>, %arg7: memref<1x32xf32, #tpu.memory_space<vmem>>, %arg8: memref<1x8x32xf32, #tpu.memory_space<vmem>>, %arg9: memref<8x32xf32, #tpu.memory_space<vmem>>) attributes {dimension_semantics = [#tpu.dimension_semantics<parallel>], iteration_bounds = array<i64: 2>, scalar_prefetch = 0 : i64, scratch_operands = 1 : i64, tpu.core_type = #tpu.core_type<tc>, window_params = [{transform_indices = @transform_0, window_bounds = array<i64: 1, 8, 32>}, {pipeline_mode = #tpu.pipeline_mode<synchronous>, transform_indices = @transform_1, window_bounds = array<i64: 32, 96>}, {pipeline_mode = #tpu.pipeline_mode<synchronous>, transform_indices = @transform_2, window_bounds = array<i64: 1, 96>}, {pipeline_mode = #tpu.pipeline_mode<synchronous>, transform_indices = @transform_3, window_bounds = array<i64: 32, 32>}, {pipeline_mode = #tpu.pipeline_mode<synchronous>, transform_indices = @transform_4, window_bounds = array<i64: 1, 32>}, {pipeline_mode = #tpu.pipeline_mode<synchronous>, transform_indices = @transform_5, window_bounds = array<i64: 1, 32>}, {pipeline_mode = #tpu.pipeline_mode<synchronous>, transform_indices = @transform_6, window_bounds = array<i64: 1, 32>}, {transform_indices = @transform_7, window_bounds = array<i64: 1, 8, 32>}]} {
    %c0 = arith.constant 0 : index
    %c0_0 = arith.constant 0 : index
    %c0_1 = arith.constant 0 : index
    %0 = vector.load %arg1[%c0, %c0_0, %c0_1] : memref<1x8x32xf32, #tpu.memory_space<vmem>>, vector<1x8x32xf32>
    %1 = vector.shape_cast %0 : vector<1x8x32xf32> to vector<8x32xf32>
    %2 = arith.truncf %1 : vector<8x32xf32> to vector<8x32xbf16>
    %c0_2 = arith.constant 0 : index
    %c0_3 = arith.constant 0 : index
    %3 = vector.load %arg2[%c0_2, %c0_3] : memref<32x96xbf16, #tpu.memory_space<vmem>>, vector<32x96xbf16>
    %cst = arith.constant dense<0.000000e+00> : vector<8x96xf32>
    %4 = tpu.matmul %2, %3, %cst {dimension_numbers = #tpu.dot_dimension_numbers<[1], [0], [0], [1], [0, 0, 1, 1], [], []>} : vector<8x32xbf16>, vector<32x96xbf16>, vector<8x96xf32> -> vector<8x96xf32>
    %c0_4 = arith.constant 0 : index
    %c0_5 = arith.constant 0 : index
    %5 = vector.load %arg3[%c0_4, %c0_5] : memref<1x96xf32, #tpu.memory_space<vmem>>, vector<1x96xf32>
    %6 = vector.broadcast %5 : vector<1x96xf32> to vector<8x96xf32>
    %7 = arith.addf %4, %6 : vector<8x96xf32>
    %8 = vector.extract_strided_slice %7 {offsets = [0, 0], sizes = [8, 32], strides = [1, 1]} : vector<8x96xf32> to vector<8x32xf32>
    %9 = vector.extract_strided_slice %7 {offsets = [0, 32], sizes = [8, 64], strides = [1, 1]} : vector<8x96xf32> to vector<8x64xf32>
    %10 = vector.extract_strided_slice %8 {offsets = [0, 0], sizes = [8, 16], strides = [1, 1]} : vector<8x32xf32> to vector<8x16xf32>
    %cst_6 = arith.constant 2.500000e-01 : f32
    %11 = vector.broadcast %cst_6 : f32 to vector<8x16xf32>
    %12 = arith.mulf %10, %11 : vector<8x16xf32>
    %13 = arith.truncf %12 : vector<8x16xf32> to vector<8x16xbf16>
    %14 = vector.extract_strided_slice %9 {offsets = [0, 0], sizes = [8, 16], strides = [1, 1]} : vector<8x64xf32> to vector<8x16xf32>
    %15 = arith.truncf %14 : vector<8x16xf32> to vector<8x16xbf16>
    %16 = vector.extract_strided_slice %9 {offsets = [0, 32], sizes = [8, 16], strides = [1, 1]} : vector<8x64xf32> to vector<8x16xf32>
    %17 = arith.truncf %16 : vector<8x16xf32> to vector<8x16xbf16>
    %cst_7 = arith.constant dense<0.000000e+00> : vector<8x8xf32>
    %18 = tpu.matmul %13, %15, %cst_7 {dimension_numbers = #tpu.dot_dimension_numbers<[1], [1], [0], [0], [0, 0, 1, 0], [], []>} : vector<8x16xbf16>, vector<8x16xbf16>, vector<8x8xf32> -> vector<8x8xf32>
    %cst_8 = arith.constant dense<0xFF800000> : vector<8xf32>
    %19 = vector.multi_reduction <maximumf>, %18, %cst_8 [1] : vector<8x8xf32> to vector<8xf32>
    %20 = vector.shape_cast %19 : vector<8xf32> to vector<8x1xf32>
    %21 = vector.broadcast %20 : vector<8x1xf32> to vector<8x8xf32>
    %22 = arith.subf %18, %21 : vector<8x8xf32>
    %23 = math.exp %22 : vector<8x8xf32>
    %cst_9 = arith.constant dense<0.000000e+00> : vector<8xf32>
    %24 = vector.multi_reduction <add>, %23, %cst_9 [1] : vector<8x8xf32> to vector<8xf32>
    %25 = vector.shape_cast %24 : vector<8xf32> to vector<8x1xf32>
    %26 = arith.truncf %23 : vector<8x8xf32> to vector<8x8xbf16>
    %cst_10 = arith.constant dense<0.000000e+00> : vector<8x16xf32>
    %27 = tpu.matmul %26, %17, %cst_10 {dimension_numbers = #tpu.dot_dimension_numbers<[1], [0], [0], [1], [0, 0, 1, 1], [], []>} : vector<8x8xbf16>, vector<8x16xbf16>, vector<8x16xf32> -> vector<8x16xf32>
    %28 = tpu.reciprocal %25 {approx = true} : vector<8x1xf32> -> vector<8x1xf32>
    %29 = vector.broadcast %28 : vector<8x1xf32> to vector<8x16xf32>
    %30 = arith.mulf %27, %29 : vector<8x16xf32>
    %c0_11 = arith.constant 0 : index
    %c0_12 = arith.constant 0 : index
    %31 = vector.load %arg9[%c0_11, %c0_12] : memref<8x32xf32, #tpu.memory_space<vmem>>, vector<8x16xf32>
    tpu.vector_store %arg9[%c0_11, %c0_12], %30 {strides = array<i32>} : memref<8x32xf32, #tpu.memory_space<vmem>>, vector<8x16xf32>,
    %32 = vector.extract_strided_slice %8 {offsets = [0, 16], sizes = [8, 16], strides = [1, 1]} : vector<8x32xf32> to vector<8x16xf32>
    %cst_13 = arith.constant 2.500000e-01 : f32
    %33 = vector.broadcast %cst_13 : f32 to vector<8x16xf32>
    %34 = arith.mulf %32, %33 : vector<8x16xf32>
    %35 = arith.truncf %34 : vector<8x16xf32> to vector<8x16xbf16>
    %36 = vector.extract_strided_slice %9 {offsets = [0, 16], sizes = [8, 16], strides = [1, 1]} : vector<8x64xf32> to vector<8x16xf32>
    %37 = arith.truncf %36 : vector<8x16xf32> to vector<8x16xbf16>
    %38 = vector.extract_strided_slice %9 {offsets = [0, 48], sizes = [8, 16], strides = [1, 1]} : vector<8x64xf32> to vector<8x16xf32>
    %39 = arith.truncf %38 : vector<8x16xf32> to vector<8x16xbf16>
    %cst_14 = arith.constant dense<0.000000e+00> : vector<8x8xf32>
    %40 = tpu.matmul %35, %37, %cst_14 {dimension_numbers = #tpu.dot_dimension_numbers<[1], [1], [0], [0], [0, 0, 1, 0], [], []>} : vector<8x16xbf16>, vector<8x16xbf16>, vector<8x8xf32> -> vector<8x8xf32>
    %cst_15 = arith.constant dense<0xFF800000> : vector<8xf32>
    %41 = vector.multi_reduction <maximumf>, %40, %cst_15 [1] : vector<8x8xf32> to vector<8xf32>
    %42 = vector.shape_cast %41 : vector<8xf32> to vector<8x1xf32>
    %43 = vector.broadcast %42 : vector<8x1xf32> to vector<8x8xf32>
    %44 = arith.subf %40, %43 : vector<8x8xf32>
    %45 = math.exp %44 : vector<8x8xf32>
    %cst_16 = arith.constant dense<0.000000e+00> : vector<8xf32>
    %46 = vector.multi_reduction <add>, %45, %cst_16 [1] : vector<8x8xf32> to vector<8xf32>
    %47 = vector.shape_cast %46 : vector<8xf32> to vector<8x1xf32>
    %48 = arith.truncf %45 : vector<8x8xf32> to vector<8x8xbf16>
    %cst_17 = arith.constant dense<0.000000e+00> : vector<8x16xf32>
    %49 = tpu.matmul %48, %39, %cst_17 {dimension_numbers = #tpu.dot_dimension_numbers<[1], [0], [0], [1], [0, 0, 1, 1], [], []>} : vector<8x8xbf16>, vector<8x16xbf16>, vector<8x16xf32> -> vector<8x16xf32>
    %50 = tpu.reciprocal %47 {approx = true} : vector<8x1xf32> -> vector<8x1xf32>
    %51 = vector.broadcast %50 : vector<8x1xf32> to vector<8x16xf32>
    %52 = arith.mulf %49, %51 : vector<8x16xf32>
    %c0_18 = arith.constant 0 : index
    %c16 = arith.constant 16 : index
    %53 = vector.load %arg9[%c0_18, %c16] : memref<8x32xf32, #tpu.memory_space<vmem>>, vector<8x16xf32>
    tpu.vector_store %arg9[%c0_18, %c16], %52 {strides = array<i32>} : memref<8x32xf32, #tpu.memory_space<vmem>>, vector<8x16xf32>,
    %c0_19 = arith.constant 0 : index
    %c0_20 = arith.constant 0 : index
    %54 = vector.load %arg9[%c0_19, %c0_20] : memref<8x32xf32, #tpu.memory_space<vmem>>, vector<8x32xf32>
    %55 = arith.truncf %54 : vector<8x32xf32> to vector<8x32xbf16>
    %c0_21 = arith.constant 0 : index
    %c0_22 = arith.constant 0 : index
    %56 = vector.load %arg4[%c0_21, %c0_22] : memref<32x32xbf16, #tpu.memory_space<vmem>>, vector<32x32xbf16>
    %cst_23 = arith.constant dense<0.000000e+00> : vector<8x32xf32>
    %57 = tpu.matmul %55, %56, %cst_23 {dimension_numbers = #tpu.dot_dimension_numbers<[1], [0], [0], [1], [0, 0, 1, 1], [], []>} : vector<8x32xbf16>, vector<32x32xbf16>, vector<8x32xf32> -> vector<8x32xf32>
    %c0_24 = arith.constant 0 : index
    %c0_25 = arith.constant 0 : index
    %58 = vector.load %arg5[%c0_24, %c0_25] : memref<1x32xf32, #tpu.memory_space<vmem>>, vector<1x32xf32>
    %59 = vector.broadcast %58 : vector<1x32xf32> to vector<8x32xf32>
    %60 = arith.addf %57, %59 : vector<8x32xf32>
    %61 = arith.addf %1, %60 : vector<8x32xf32>
    %cst_26 = arith.constant dense<0.000000e+00> : vector<8xf32>
    %62 = vector.multi_reduction <add>, %61, %cst_26 [1] : vector<8x32xf32> to vector<8xf32>
    %63 = vector.shape_cast %62 : vector<8xf32> to vector<8x1xf32>
    %cst_27 = arith.constant 3.200000e+01 : f32
    %64 = vector.broadcast %cst_27 : f32 to vector<8x1xf32>
    %65 = arith.divf %63, %64 : vector<8x1xf32>
    %66 = vector.broadcast %65 : vector<8x1xf32> to vector<8x32xf32>
    %67 = arith.subf %61, %66 : vector<8x32xf32>
    %68 = arith.mulf %67, %67 : vector<8x32xf32>
    %cst_28 = arith.constant dense<0.000000e+00> : vector<8xf32>
    %69 = vector.multi_reduction <add>, %68, %cst_28 [1] : vector<8x32xf32> to vector<8xf32>
    %70 = vector.shape_cast %69 : vector<8xf32> to vector<8x1xf32>
    %cst_29 = arith.constant 3.200000e+01 : f32
    %71 = vector.broadcast %cst_29 : f32 to vector<8x1xf32>
    %72 = arith.divf %70, %71 : vector<8x1xf32>
    %73 = vector.broadcast %65 : vector<8x1xf32> to vector<8x32xf32>
    %74 = arith.subf %61, %73 : vector<8x32xf32>
    %cst_30 = arith.constant 9.99999974E-6 : f32
    %75 = vector.broadcast %cst_30 : f32 to vector<8x1xf32>
    %76 = arith.addf %72, %75 : vector<8x1xf32>
    %77 = math.rsqrt %76 : vector<8x1xf32>
    %78 = vector.broadcast %77 : vector<8x1xf32> to vector<8x32xf32>
    %79 = arith.mulf %74, %78 : vector<8x32xf32>
    %c0_31 = arith.constant 0 : index
    %c0_32 = arith.constant 0 : index
    %80 = vector.load %arg6[%c0_31, %c0_32] : memref<1x32xf32, #tpu.memory_space<vmem>>, vector<1x32xf32>
    %81 = vector.broadcast %80 : vector<1x32xf32> to vector<8x32xf32>
    %82 = arith.mulf %79, %81 : vector<8x32xf32>
    %c0_33 = arith.constant 0 : index
    %c0_34 = arith.constant 0 : index
    %83 = vector.load %arg7[%c0_33, %c0_34] : memref<1x32xf32, #tpu.memory_space<vmem>>, vector<1x32xf32>
    %84 = vector.broadcast %83 : vector<1x32xf32> to vector<8x32xf32>
    %85 = arith.addf %82, %84 : vector<8x32xf32>
    %c0_35 = arith.constant 0 : index
    %c0_36 = arith.constant 0 : index
    %c0_37 = arith.constant 0 : index
    %86 = vector.load %arg8[%c0_35, %c0_36, %c0_37] : memref<1x8x32xf32, #tpu.memory_space<vmem>>, vector<1x8x32xf32>
    %87 = vector.shape_cast %86 : vector<1x8x32xf32> to vector<8x32xf32>
    %88 = vector.shape_cast %85 : vector<8x32xf32> to vector<1x8x32xf32>
    tpu.vector_store %arg8[%c0_35, %c0_36, %c0_37], %88 {strides = array<i32>} : memref<1x8x32xf32, #tpu.memory_space<vmem>>, vector<1x8x32xf32>,
    return
  }
  func.func @transform_0(%arg0: i32) -> (i32, i32, i32) {
    %c0_i32 = arith.constant 0 : i32
    %c0_i32_0 = arith.constant 0 : i32
    %c0_i32_1 = arith.constant 0 : i32
    return %arg0, %c0_i32, %c0_i32_0 : i32, i32, i32
  }
  func.func @transform_1(%arg0: i32) -> (i32, i32) {
    %c0_i32 = arith.constant 0 : i32
    %c0_i32_0 = arith.constant 0 : i32
    %c0_i32_1 = arith.constant 0 : i32
    return %c0_i32, %c0_i32_0 : i32, i32
  }
  func.func @transform_2(%arg0: i32) -> (i32, i32) {
    %c0_i32 = arith.constant 0 : i32
    %c0_i32_0 = arith.constant 0 : i32
    %c0_i32_1 = arith.constant 0 : i32
    return %c0_i32, %c0_i32_0 : i32, i32
  }
  func.func @transform_3(%arg0: i32) -> (i32, i32) {
    %c0_i32 = arith.constant 0 : i32
    %c0_i32_0 = arith.constant 0 : i32
    %c0_i32_1 = arith.constant 0 : i32
    return %c0_i32, %c0_i32_0 : i32, i32
  }
  func.func @transform_4(%arg0: i32) -> (i32, i32) {
    %c0_i32 = arith.constant 0 : i32
    %c0_i32_0 = arith.constant 0 : i32
    %c0_i32_1 = arith.constant 0 : i32
    return %c0_i32, %c0_i32_0 : i32, i32
  }
  func.func @transform_5(%arg0: i32) -> (i32, i32) {
    %c0_i32 = arith.constant 0 : i32
    %c0_i32_0 = arith.constant 0 : i32
    %c0_i32_1 = arith.constant 0 : i32
    return %c0_i32, %c0_i32_0 : i32, i32
  }
  func.func @transform_6(%arg0: i32) -> (i32, i32) {
    %c0_i32 = arith.constant 0 : i32
    %c0_i32_0 = arith.constant 0 : i32
    %c0_i32_1 = arith.constant 0 : i32
    return %c0_i32, %c0_i32_0 : i32, i32
  }
  func.func @transform_7(%arg0: i32) -> (i32, i32, i32) {
    %c0_i32 = arith.constant 0 : i32
    %c0_i32_0 = arith.constant 0 : i32
    %c0_i32_1 = arith.constant 0 : i32
    return %arg0, %c0_i32, %c0_i32_0 : i32, i32, i32
  }
}

module attributes {stable_mosaic.version = 11 : i64} {
  func.func @_ffn_ln_kernel(%arg0: i32, %arg1: memref<14x32xf32, #tpu.memory_space<vmem>>, %arg2: memref<32x64xbf16, #tpu.memory_space<vmem>>, %arg3: memref<1x64xf32, #tpu.memory_space<vmem>>, %arg4: memref<64x32xbf16, #tpu.memory_space<vmem>>, %arg5: memref<1x32xf32, #tpu.memory_space<vmem>>, %arg6: memref<1x32xf32, #tpu.memory_space<vmem>>, %arg7: memref<1x32xf32, #tpu.memory_space<vmem>>, %arg8: memref<14x32xf32, #tpu.memory_space<vmem>>) attributes {dimension_semantics = [#tpu.dimension_semantics<parallel>], iteration_bounds = array<i64: 1>, scalar_prefetch = 0 : i64, scratch_operands = 0 : i64, tpu.core_type = #tpu.core_type<tc>, window_params = [{transform_indices = @transform_0, window_bounds = array<i64: 14, 32>}, {pipeline_mode = #tpu.pipeline_mode<synchronous>, transform_indices = @transform_1, window_bounds = array<i64: 32, 64>}, {pipeline_mode = #tpu.pipeline_mode<synchronous>, transform_indices = @transform_2, window_bounds = array<i64: 1, 64>}, {pipeline_mode = #tpu.pipeline_mode<synchronous>, transform_indices = @transform_3, window_bounds = array<i64: 64, 32>}, {pipeline_mode = #tpu.pipeline_mode<synchronous>, transform_indices = @transform_4, window_bounds = array<i64: 1, 32>}, {pipeline_mode = #tpu.pipeline_mode<synchronous>, transform_indices = @transform_5, window_bounds = array<i64: 1, 32>}, {pipeline_mode = #tpu.pipeline_mode<synchronous>, transform_indices = @transform_6, window_bounds = array<i64: 1, 32>}, {transform_indices = @transform_7, window_bounds = array<i64: 14, 32>}]} {
    %c0 = arith.constant 0 : index
    %c0_0 = arith.constant 0 : index
    %0 = vector.load %arg1[%c0, %c0_0] : memref<14x32xf32, #tpu.memory_space<vmem>>, vector<14x32xf32>
    %1 = arith.truncf %0 : vector<14x32xf32> to vector<14x32xbf16>
    %c0_1 = arith.constant 0 : index
    %c0_2 = arith.constant 0 : index
    %2 = vector.load %arg2[%c0_1, %c0_2] : memref<32x64xbf16, #tpu.memory_space<vmem>>, vector<32x64xbf16>
    %cst = arith.constant dense<0.000000e+00> : vector<14x64xf32>
    %3 = tpu.matmul %1, %2, %cst {dimension_numbers = #tpu.dot_dimension_numbers<[1], [0], [0], [1], [0, 0, 1, 1], [], []>} : vector<14x32xbf16>, vector<32x64xbf16>, vector<14x64xf32> -> vector<14x64xf32>
    %c0_3 = arith.constant 0 : index
    %c0_4 = arith.constant 0 : index
    %4 = vector.load %arg3[%c0_3, %c0_4] : memref<1x64xf32, #tpu.memory_space<vmem>>, vector<1x64xf32>
    %5 = vector.broadcast %4 : vector<1x64xf32> to vector<14x64xf32>
    %6 = arith.addf %3, %5 : vector<14x64xf32>
    %cst_5 = arith.constant 0.000000e+00 : f32
    %7 = vector.broadcast %cst_5 : f32 to vector<14x64xf32>
    %8 = arith.maximumf %6, %7 : vector<14x64xf32>
    %9 = arith.truncf %8 : vector<14x64xf32> to vector<14x64xbf16>
    %c0_6 = arith.constant 0 : index
    %c0_7 = arith.constant 0 : index
    %10 = vector.load %arg4[%c0_6, %c0_7] : memref<64x32xbf16, #tpu.memory_space<vmem>>, vector<64x32xbf16>
    %cst_8 = arith.constant dense<0.000000e+00> : vector<14x32xf32>
    %11 = tpu.matmul %9, %10, %cst_8 {dimension_numbers = #tpu.dot_dimension_numbers<[1], [0], [0], [1], [0, 0, 1, 1], [], []>} : vector<14x64xbf16>, vector<64x32xbf16>, vector<14x32xf32> -> vector<14x32xf32>
    %c0_9 = arith.constant 0 : index
    %c0_10 = arith.constant 0 : index
    %12 = vector.load %arg5[%c0_9, %c0_10] : memref<1x32xf32, #tpu.memory_space<vmem>>, vector<1x32xf32>
    %13 = vector.broadcast %12 : vector<1x32xf32> to vector<14x32xf32>
    %14 = arith.addf %11, %13 : vector<14x32xf32>
    %15 = arith.addf %0, %14 : vector<14x32xf32>
    %cst_11 = arith.constant dense<0.000000e+00> : vector<14xf32>
    %16 = vector.multi_reduction <add>, %15, %cst_11 [1] : vector<14x32xf32> to vector<14xf32>
    %17 = vector.shape_cast %16 : vector<14xf32> to vector<14x1xf32>
    %cst_12 = arith.constant 3.200000e+01 : f32
    %18 = vector.broadcast %cst_12 : f32 to vector<14x1xf32>
    %19 = arith.divf %17, %18 : vector<14x1xf32>
    %20 = vector.broadcast %19 : vector<14x1xf32> to vector<14x32xf32>
    %21 = arith.subf %15, %20 : vector<14x32xf32>
    %22 = arith.mulf %21, %21 : vector<14x32xf32>
    %cst_13 = arith.constant dense<0.000000e+00> : vector<14xf32>
    %23 = vector.multi_reduction <add>, %22, %cst_13 [1] : vector<14x32xf32> to vector<14xf32>
    %24 = vector.shape_cast %23 : vector<14xf32> to vector<14x1xf32>
    %cst_14 = arith.constant 3.200000e+01 : f32
    %25 = vector.broadcast %cst_14 : f32 to vector<14x1xf32>
    %26 = arith.divf %24, %25 : vector<14x1xf32>
    %27 = vector.broadcast %19 : vector<14x1xf32> to vector<14x32xf32>
    %28 = arith.subf %15, %27 : vector<14x32xf32>
    %cst_15 = arith.constant 9.99999974E-6 : f32
    %29 = vector.broadcast %cst_15 : f32 to vector<14x1xf32>
    %30 = arith.addf %26, %29 : vector<14x1xf32>
    %31 = math.rsqrt %30 : vector<14x1xf32>
    %32 = vector.broadcast %31 : vector<14x1xf32> to vector<14x32xf32>
    %33 = arith.mulf %28, %32 : vector<14x32xf32>
    %c0_16 = arith.constant 0 : index
    %c0_17 = arith.constant 0 : index
    %34 = vector.load %arg6[%c0_16, %c0_17] : memref<1x32xf32, #tpu.memory_space<vmem>>, vector<1x32xf32>
    %35 = vector.broadcast %34 : vector<1x32xf32> to vector<14x32xf32>
    %36 = arith.mulf %33, %35 : vector<14x32xf32>
    %c0_18 = arith.constant 0 : index
    %c0_19 = arith.constant 0 : index
    %37 = vector.load %arg7[%c0_18, %c0_19] : memref<1x32xf32, #tpu.memory_space<vmem>>, vector<1x32xf32>
    %38 = vector.broadcast %37 : vector<1x32xf32> to vector<14x32xf32>
    %39 = arith.addf %36, %38 : vector<14x32xf32>
    %c0_20 = arith.constant 0 : index
    %c0_21 = arith.constant 0 : index
    %40 = vector.load %arg8[%c0_20, %c0_21] : memref<14x32xf32, #tpu.memory_space<vmem>>, vector<14x32xf32>
    tpu.vector_store %arg8[%c0_20, %c0_21], %39 {strides = array<i32>} : memref<14x32xf32, #tpu.memory_space<vmem>>, vector<14x32xf32>,
    return
  }
  func.func @transform_0(%arg0: i32) -> (i32, i32) {
    %c0_i32 = arith.constant 0 : i32
    %c0_i32_0 = arith.constant 0 : i32
    return %arg0, %c0_i32 : i32, i32
  }
  func.func @transform_1(%arg0: i32) -> (i32, i32) {
    %c0_i32 = arith.constant 0 : i32
    %c0_i32_0 = arith.constant 0 : i32
    %c0_i32_1 = arith.constant 0 : i32
    return %c0_i32, %c0_i32_0 : i32, i32
  }
  func.func @transform_2(%arg0: i32) -> (i32, i32) {
    %c0_i32 = arith.constant 0 : i32
    %c0_i32_0 = arith.constant 0 : i32
    %c0_i32_1 = arith.constant 0 : i32
    return %c0_i32, %c0_i32_0 : i32, i32
  }
  func.func @transform_3(%arg0: i32) -> (i32, i32) {
    %c0_i32 = arith.constant 0 : i32
    %c0_i32_0 = arith.constant 0 : i32
    %c0_i32_1 = arith.constant 0 : i32
    return %c0_i32, %c0_i32_0 : i32, i32
  }
  func.func @transform_4(%arg0: i32) -> (i32, i32) {
    %c0_i32 = arith.constant 0 : i32
    %c0_i32_0 = arith.constant 0 : i32
    %c0_i32_1 = arith.constant 0 : i32
    return %c0_i32, %c0_i32_0 : i32, i32
  }
  func.func @transform_5(%arg0: i32) -> (i32, i32) {
    %c0_i32 = arith.constant 0 : i32
    %c0_i32_0 = arith.constant 0 : i32
    %c0_i32_1 = arith.constant 0 : i32
    return %c0_i32, %c0_i32_0 : i32, i32
  }
  func.func @transform_6(%arg0: i32) -> (i32, i32) {
    %c0_i32 = arith.constant 0 : i32
    %c0_i32_0 = arith.constant 0 : i32
    %c0_i32_1 = arith.constant 0 : i32
    return %c0_i32, %c0_i32_0 : i32, i32
  }
  func.func @transform_7(%arg0: i32) -> (i32, i32) {
    %c0_i32 = arith.constant 0 : i32
    %c0_i32_0 = arith.constant 0 : i32
    return %arg0, %c0_i32 : i32, i32
  }
}

module attributes {stable_mosaic.version = 11 : i64} {
  func.func @_cross_attn_ln_kernel(%arg0: i32, %arg1: memref<1x7x32xf32, #tpu.memory_space<vmem>>, %arg2: memref<1x8x32xf32, #tpu.memory_space<vmem>>, %arg3: memref<32x32xbf16, #tpu.memory_space<vmem>>, %arg4: memref<1x32xf32, #tpu.memory_space<vmem>>, %arg5: memref<32x64xbf16, #tpu.memory_space<vmem>>, %arg6: memref<1x64xf32, #tpu.memory_space<vmem>>, %arg7: memref<32x32xbf16, #tpu.memory_space<vmem>>, %arg8: memref<1x32xf32, #tpu.memory_space<vmem>>, %arg9: memref<1x32xf32, #tpu.memory_space<vmem>>, %arg10: memref<1x32xf32, #tpu.memory_space<vmem>>, %arg11: memref<1x7x32xf32, #tpu.memory_space<vmem>>, %arg12: memref<7x32xf32, #tpu.memory_space<vmem>>) attributes {dimension_semantics = [#tpu.dimension_semantics<parallel>], iteration_bounds = array<i64: 2>, scalar_prefetch = 0 : i64, scratch_operands = 1 : i64, tpu.core_type = #tpu.core_type<tc>, window_params = [{transform_indices = @transform_0, window_bounds = array<i64: 1, 7, 32>}, {transform_indices = @transform_1, window_bounds = array<i64: 1, 8, 32>}, {pipeline_mode = #tpu.pipeline_mode<synchronous>, transform_indices = @transform_2, window_bounds = array<i64: 32, 32>}, {pipeline_mode = #tpu.pipeline_mode<synchronous>, transform_indices = @transform_3, window_bounds = array<i64: 1, 32>}, {pipeline_mode = #tpu.pipeline_mode<synchronous>, transform_indices = @transform_4, window_bounds = array<i64: 32, 64>}, {pipeline_mode = #tpu.pipeline_mode<synchronous>, transform_indices = @transform_5, window_bounds = array<i64: 1, 64>}, {pipeline_mode = #tpu.pipeline_mode<synchronous>, transform_indices = @transform_6, window_bounds = array<i64: 32, 32>}, {pipeline_mode = #tpu.pipeline_mode<synchronous>, transform_indices = @transform_7, window_bounds = array<i64: 1, 32>}, {pipeline_mode = #tpu.pipeline_mode<synchronous>, transform_indices = @transform_8, window_bounds = array<i64: 1, 32>}, {pipeline_mode = #tpu.pipeline_mode<synchronous>, transform_indices = @transform_9, window_bounds = array<i64: 1, 32>}, {transform_indices = @transform_10, window_bounds = array<i64: 1, 7, 32>}]} {
    %c0 = arith.constant 0 : index
    %c0_0 = arith.constant 0 : index
    %c0_1 = arith.constant 0 : index
    %0 = vector.load %arg1[%c0, %c0_0, %c0_1] : memref<1x7x32xf32, #tpu.memory_space<vmem>>, vector<1x7x32xf32>
    %1 = vector.shape_cast %0 : vector<1x7x32xf32> to vector<7x32xf32>
    %c0_2 = arith.constant 0 : index
    %c0_3 = arith.constant 0 : index
    %c0_4 = arith.constant 0 : index
    %2 = vector.load %arg2[%c0_2, %c0_3, %c0_4] : memref<1x8x32xf32, #tpu.memory_space<vmem>>, vector<1x8x32xf32>
    %3 = vector.shape_cast %2 : vector<1x8x32xf32> to vector<8x32xf32>
    %4 = arith.truncf %1 : vector<7x32xf32> to vector<7x32xbf16>
    %c0_5 = arith.constant 0 : index
    %c0_6 = arith.constant 0 : index
    %5 = vector.load %arg3[%c0_5, %c0_6] : memref<32x32xbf16, #tpu.memory_space<vmem>>, vector<32x32xbf16>
    %cst = arith.constant dense<0.000000e+00> : vector<7x32xf32>
    %6 = tpu.matmul %4, %5, %cst {dimension_numbers = #tpu.dot_dimension_numbers<[1], [0], [0], [1], [0, 0, 1, 1], [], []>} : vector<7x32xbf16>, vector<32x32xbf16>, vector<7x32xf32> -> vector<7x32xf32>
    %c0_7 = arith.constant 0 : index
    %c0_8 = arith.constant 0 : index
    %7 = vector.load %arg4[%c0_7, %c0_8] : memref<1x32xf32, #tpu.memory_space<vmem>>, vector<1x32xf32>
    %8 = vector.broadcast %7 : vector<1x32xf32> to vector<7x32xf32>
    %9 = arith.addf %6, %8 : vector<7x32xf32>
    %10 = arith.truncf %3 : vector<8x32xf32> to vector<8x32xbf16>
    %c0_9 = arith.constant 0 : index
    %c0_10 = arith.constant 0 : index
    %11 = vector.load %arg5[%c0_9, %c0_10] : memref<32x64xbf16, #tpu.memory_space<vmem>>, vector<32x64xbf16>
    %cst_11 = arith.constant dense<0.000000e+00> : vector<8x64xf32>
    %12 = tpu.matmul %10, %11, %cst_11 {dimension_numbers = #tpu.dot_dimension_numbers<[1], [0], [0], [1], [0, 0, 1, 1], [], []>} : vector<8x32xbf16>, vector<32x64xbf16>, vector<8x64xf32> -> vector<8x64xf32>
    %c0_12 = arith.constant 0 : index
    %c0_13 = arith.constant 0 : index
    %13 = vector.load %arg6[%c0_12, %c0_13] : memref<1x64xf32, #tpu.memory_space<vmem>>, vector<1x64xf32>
    %14 = vector.broadcast %13 : vector<1x64xf32> to vector<8x64xf32>
    %15 = arith.addf %12, %14 : vector<8x64xf32>
    %16 = vector.extract_strided_slice %9 {offsets = [0, 0], sizes = [7, 16], strides = [1, 1]} : vector<7x32xf32> to vector<7x16xf32>
    %cst_14 = arith.constant 2.500000e-01 : f32
    %17 = vector.broadcast %cst_14 : f32 to vector<7x16xf32>
    %18 = arith.mulf %16, %17 : vector<7x16xf32>
    %19 = arith.truncf %18 : vector<7x16xf32> to vector<7x16xbf16>
    %20 = vector.extract_strided_slice %15 {offsets = [0, 0], sizes = [8, 16], strides = [1, 1]} : vector<8x64xf32> to vector<8x16xf32>
    %21 = arith.truncf %20 : vector<8x16xf32> to vector<8x16xbf16>
    %22 = vector.extract_strided_slice %15 {offsets = [0, 32], sizes = [8, 16], strides = [1, 1]} : vector<8x64xf32> to vector<8x16xf32>
    %23 = arith.truncf %22 : vector<8x16xf32> to vector<8x16xbf16>
    %cst_15 = arith.constant dense<0.000000e+00> : vector<7x8xf32>
    %24 = tpu.matmul %19, %21, %cst_15 {dimension_numbers = #tpu.dot_dimension_numbers<[1], [1], [0], [0], [0, 0, 1, 0], [], []>} : vector<7x16xbf16>, vector<8x16xbf16>, vector<7x8xf32> -> vector<7x8xf32>
    %cst_16 = arith.constant dense<0xFF800000> : vector<7xf32>
    %25 = vector.multi_reduction <maximumf>, %24, %cst_16 [1] : vector<7x8xf32> to vector<7xf32>
    %26 = vector.shape_cast %25 : vector<7xf32> to vector<7x1xf32>
    %27 = vector.broadcast %26 : vector<7x1xf32> to vector<7x8xf32>
    %28 = arith.subf %24, %27 : vector<7x8xf32>
    %29 = math.exp %28 : vector<7x8xf32>
    %cst_17 = arith.constant dense<0.000000e+00> : vector<7xf32>
    %30 = vector.multi_reduction <add>, %29, %cst_17 [1] : vector<7x8xf32> to vector<7xf32>
    %31 = vector.shape_cast %30 : vector<7xf32> to vector<7x1xf32>
    %32 = arith.truncf %29 : vector<7x8xf32> to vector<7x8xbf16>
    %cst_18 = arith.constant dense<0.000000e+00> : vector<7x16xf32>
    %33 = tpu.matmul %32, %23, %cst_18 {dimension_numbers = #tpu.dot_dimension_numbers<[1], [0], [0], [1], [0, 0, 1, 1], [], []>} : vector<7x8xbf16>, vector<8x16xbf16>, vector<7x16xf32> -> vector<7x16xf32>
    %34 = tpu.reciprocal %31 {approx = true} : vector<7x1xf32> -> vector<7x1xf32>
    %35 = vector.broadcast %34 : vector<7x1xf32> to vector<7x16xf32>
    %36 = arith.mulf %33, %35 : vector<7x16xf32>
    %c0_19 = arith.constant 0 : index
    %c0_20 = arith.constant 0 : index
    %37 = vector.load %arg12[%c0_19, %c0_20] : memref<7x32xf32, #tpu.memory_space<vmem>>, vector<7x16xf32>
    tpu.vector_store %arg12[%c0_19, %c0_20], %36 {strides = array<i32>} : memref<7x32xf32, #tpu.memory_space<vmem>>, vector<7x16xf32>,
    %38 = vector.extract_strided_slice %9 {offsets = [0, 16], sizes = [7, 16], strides = [1, 1]} : vector<7x32xf32> to vector<7x16xf32>
    %cst_21 = arith.constant 2.500000e-01 : f32
    %39 = vector.broadcast %cst_21 : f32 to vector<7x16xf32>
    %40 = arith.mulf %38, %39 : vector<7x16xf32>
    %41 = arith.truncf %40 : vector<7x16xf32> to vector<7x16xbf16>
    %42 = vector.extract_strided_slice %15 {offsets = [0, 16], sizes = [8, 16], strides = [1, 1]} : vector<8x64xf32> to vector<8x16xf32>
    %43 = arith.truncf %42 : vector<8x16xf32> to vector<8x16xbf16>
    %44 = vector.extract_strided_slice %15 {offsets = [0, 48], sizes = [8, 16], strides = [1, 1]} : vector<8x64xf32> to vector<8x16xf32>
    %45 = arith.truncf %44 : vector<8x16xf32> to vector<8x16xbf16>
    %cst_22 = arith.constant dense<0.000000e+00> : vector<7x8xf32>
    %46 = tpu.matmul %41, %43, %cst_22 {dimension_numbers = #tpu.dot_dimension_numbers<[1], [1], [0], [0], [0, 0, 1, 0], [], []>} : vector<7x16xbf16>, vector<8x16xbf16>, vector<7x8xf32> -> vector<7x8xf32>
    %cst_23 = arith.constant dense<0xFF800000> : vector<7xf32>
    %47 = vector.multi_reduction <maximumf>, %46, %cst_23 [1] : vector<7x8xf32> to vector<7xf32>
    %48 = vector.shape_cast %47 : vector<7xf32> to vector<7x1xf32>
    %49 = vector.broadcast %48 : vector<7x1xf32> to vector<7x8xf32>
    %50 = arith.subf %46, %49 : vector<7x8xf32>
    %51 = math.exp %50 : vector<7x8xf32>
    %cst_24 = arith.constant dense<0.000000e+00> : vector<7xf32>
    %52 = vector.multi_reduction <add>, %51, %cst_24 [1] : vector<7x8xf32> to vector<7xf32>
    %53 = vector.shape_cast %52 : vector<7xf32> to vector<7x1xf32>
    %54 = arith.truncf %51 : vector<7x8xf32> to vector<7x8xbf16>
    %cst_25 = arith.constant dense<0.000000e+00> : vector<7x16xf32>
    %55 = tpu.matmul %54, %45, %cst_25 {dimension_numbers = #tpu.dot_dimension_numbers<[1], [0], [0], [1], [0, 0, 1, 1], [], []>} : vector<7x8xbf16>, vector<8x16xbf16>, vector<7x16xf32> -> vector<7x16xf32>
    %56 = tpu.reciprocal %53 {approx = true} : vector<7x1xf32> -> vector<7x1xf32>
    %57 = vector.broadcast %56 : vector<7x1xf32> to vector<7x16xf32>
    %58 = arith.mulf %55, %57 : vector<7x16xf32>
    %c0_26 = arith.constant 0 : index
    %c16 = arith.constant 16 : index
    %59 = vector.load %arg12[%c0_26, %c16] : memref<7x32xf32, #tpu.memory_space<vmem>>, vector<7x16xf32>
    tpu.vector_store %arg12[%c0_26, %c16], %58 {strides = array<i32>} : memref<7x32xf32, #tpu.memory_space<vmem>>, vector<7x16xf32>,
    %c0_27 = arith.constant 0 : index
    %c0_28 = arith.constant 0 : index
    %60 = vector.load %arg12[%c0_27, %c0_28] : memref<7x32xf32, #tpu.memory_space<vmem>>, vector<7x32xf32>
    %61 = arith.truncf %60 : vector<7x32xf32> to vector<7x32xbf16>
    %c0_29 = arith.constant 0 : index
    %c0_30 = arith.constant 0 : index
    %62 = vector.load %arg7[%c0_29, %c0_30] : memref<32x32xbf16, #tpu.memory_space<vmem>>, vector<32x32xbf16>
    %cst_31 = arith.constant dense<0.000000e+00> : vector<7x32xf32>
    %63 = tpu.matmul %61, %62, %cst_31 {dimension_numbers = #tpu.dot_dimension_numbers<[1], [0], [0], [1], [0, 0, 1, 1], [], []>} : vector<7x32xbf16>, vector<32x32xbf16>, vector<7x32xf32> -> vector<7x32xf32>
    %c0_32 = arith.constant 0 : index
    %c0_33 = arith.constant 0 : index
    %64 = vector.load %arg8[%c0_32, %c0_33] : memref<1x32xf32, #tpu.memory_space<vmem>>, vector<1x32xf32>
    %65 = vector.broadcast %64 : vector<1x32xf32> to vector<7x32xf32>
    %66 = arith.addf %63, %65 : vector<7x32xf32>
    %67 = arith.addf %1, %66 : vector<7x32xf32>
    %cst_34 = arith.constant dense<0.000000e+00> : vector<7xf32>
    %68 = vector.multi_reduction <add>, %67, %cst_34 [1] : vector<7x32xf32> to vector<7xf32>
    %69 = vector.shape_cast %68 : vector<7xf32> to vector<7x1xf32>
    %cst_35 = arith.constant 3.200000e+01 : f32
    %70 = vector.broadcast %cst_35 : f32 to vector<7x1xf32>
    %71 = arith.divf %69, %70 : vector<7x1xf32>
    %72 = vector.broadcast %71 : vector<7x1xf32> to vector<7x32xf32>
    %73 = arith.subf %67, %72 : vector<7x32xf32>
    %74 = arith.mulf %73, %73 : vector<7x32xf32>
    %cst_36 = arith.constant dense<0.000000e+00> : vector<7xf32>
    %75 = vector.multi_reduction <add>, %74, %cst_36 [1] : vector<7x32xf32> to vector<7xf32>
    %76 = vector.shape_cast %75 : vector<7xf32> to vector<7x1xf32>
    %cst_37 = arith.constant 3.200000e+01 : f32
    %77 = vector.broadcast %cst_37 : f32 to vector<7x1xf32>
    %78 = arith.divf %76, %77 : vector<7x1xf32>
    %79 = vector.broadcast %71 : vector<7x1xf32> to vector<7x32xf32>
    %80 = arith.subf %67, %79 : vector<7x32xf32>
    %cst_38 = arith.constant 9.99999974E-6 : f32
    %81 = vector.broadcast %cst_38 : f32 to vector<7x1xf32>
    %82 = arith.addf %78, %81 : vector<7x1xf32>
    %83 = math.rsqrt %82 : vector<7x1xf32>
    %84 = vector.broadcast %83 : vector<7x1xf32> to vector<7x32xf32>
    %85 = arith.mulf %80, %84 : vector<7x32xf32>
    %c0_39 = arith.constant 0 : index
    %c0_40 = arith.constant 0 : index
    %86 = vector.load %arg9[%c0_39, %c0_40] : memref<1x32xf32, #tpu.memory_space<vmem>>, vector<1x32xf32>
    %87 = vector.broadcast %86 : vector<1x32xf32> to vector<7x32xf32>
    %88 = arith.mulf %85, %87 : vector<7x32xf32>
    %c0_41 = arith.constant 0 : index
    %c0_42 = arith.constant 0 : index
    %89 = vector.load %arg10[%c0_41, %c0_42] : memref<1x32xf32, #tpu.memory_space<vmem>>, vector<1x32xf32>
    %90 = vector.broadcast %89 : vector<1x32xf32> to vector<7x32xf32>
    %91 = arith.addf %88, %90 : vector<7x32xf32>
    %c0_43 = arith.constant 0 : index
    %c0_44 = arith.constant 0 : index
    %c0_45 = arith.constant 0 : index
    %92 = vector.load %arg11[%c0_43, %c0_44, %c0_45] : memref<1x7x32xf32, #tpu.memory_space<vmem>>, vector<1x7x32xf32>
    %93 = vector.shape_cast %92 : vector<1x7x32xf32> to vector<7x32xf32>
    %94 = vector.shape_cast %91 : vector<7x32xf32> to vector<1x7x32xf32>
    tpu.vector_store %arg11[%c0_43, %c0_44, %c0_45], %94 {strides = array<i32>} : memref<1x7x32xf32, #tpu.memory_space<vmem>>, vector<1x7x32xf32>,
    return
  }
  func.func @transform_0(%arg0: i32) -> (i32, i32, i32) {
    %c0_i32 = arith.constant 0 : i32
    %c0_i32_0 = arith.constant 0 : i32
    %c0_i32_1 = arith.constant 0 : i32
    return %arg0, %c0_i32, %c0_i32_0 : i32, i32, i32
  }
  func.func @transform_1(%arg0: i32) -> (i32, i32, i32) {
    %c0_i32 = arith.constant 0 : i32
    %c0_i32_0 = arith.constant 0 : i32
    %c0_i32_1 = arith.constant 0 : i32
    return %arg0, %c0_i32, %c0_i32_0 : i32, i32, i32
  }
  func.func @transform_2(%arg0: i32) -> (i32, i32) {
    %c0_i32 = arith.constant 0 : i32
    %c0_i32_0 = arith.constant 0 : i32
    %c0_i32_1 = arith.constant 0 : i32
    return %c0_i32, %c0_i32_0 : i32, i32
  }
  func.func @transform_3(%arg0: i32) -> (i32, i32) {
    %c0_i32 = arith.constant 0 : i32
    %c0_i32_0 = arith.constant 0 : i32
    %c0_i32_1 = arith.constant 0 : i32
    return %c0_i32, %c0_i32_0 : i32, i32
  }
  func.func @transform_4(%arg0: i32) -> (i32, i32) {
    %c0_i32 = arith.constant 0 : i32
    %c0_i32_0 = arith.constant 0 : i32
    %c0_i32_1 = arith.constant 0 : i32
    return %c0_i32, %c0_i32_0 : i32, i32
  }
  func.func @transform_5(%arg0: i32) -> (i32, i32) {
    %c0_i32 = arith.constant 0 : i32
    %c0_i32_0 = arith.constant 0 : i32
    %c0_i32_1 = arith.constant 0 : i32
    return %c0_i32, %c0_i32_0 : i32, i32
  }
  func.func @transform_6(%arg0: i32) -> (i32, i32) {
    %c0_i32 = arith.constant 0 : i32
    %c0_i32_0 = arith.constant 0 : i32
    %c0_i32_1 = arith.constant 0 : i32
    return %c0_i32, %c0_i32_0 : i32, i32
  }
  func.func @transform_7(%arg0: i32) -> (i32, i32) {
    %c0_i32 = arith.constant 0 : i32
    %c0_i32_0 = arith.constant 0 : i32
    %c0_i32_1 = arith.constant 0 : i32
    return %c0_i32, %c0_i32_0 : i32, i32
  }
  func.func @transform_8(%arg0: i32) -> (i32, i32) {
    %c0_i32 = arith.constant 0 : i32
    %c0_i32_0 = arith.constant 0 : i32
    %c0_i32_1 = arith.constant 0 : i32
    return %c0_i32, %c0_i32_0 : i32, i32
  }
  func.func @transform_9(%arg0: i32) -> (i32, i32) {
    %c0_i32 = arith.constant 0 : i32
    %c0_i32_0 = arith.constant 0 : i32
    %c0_i32_1 = arith.constant 0 : i32
    return %c0_i32, %c0_i32_0 : i32, i32
  }
  func.func @transform_10(%arg0: i32) -> (i32, i32, i32) {
    %c0_i32 = arith.constant 0 : i32
    %c0_i32_0 = arith.constant 0 : i32
    %c0_i32_1 = arith.constant 0 : i32
    return %arg0, %c0_i32, %c0_i32_0 : i32, i32, i32
  }
}

module attributes {stable_mosaic.version = 11 : i64} {
  func.func @_ffn_ln_kernel(%arg0: i32, %arg1: memref<16x32xf32, #tpu.memory_space<vmem>>, %arg2: memref<32x64xbf16, #tpu.memory_space<vmem>>, %arg3: memref<1x64xf32, #tpu.memory_space<vmem>>, %arg4: memref<64x32xbf16, #tpu.memory_space<vmem>>, %arg5: memref<1x32xf32, #tpu.memory_space<vmem>>, %arg6: memref<1x32xf32, #tpu.memory_space<vmem>>, %arg7: memref<1x32xf32, #tpu.memory_space<vmem>>, %arg8: memref<1x32xf32, #tpu.memory_space<vmem>>, %arg9: memref<1x32xf32, #tpu.memory_space<vmem>>, %arg10: memref<16x32xf32, #tpu.memory_space<vmem>>) attributes {dimension_semantics = [#tpu.dimension_semantics<parallel>], iteration_bounds = array<i64: 1>, scalar_prefetch = 0 : i64, scratch_operands = 0 : i64, tpu.core_type = #tpu.core_type<tc>, window_params = [{transform_indices = @transform_0, window_bounds = array<i64: 16, 32>}, {pipeline_mode = #tpu.pipeline_mode<synchronous>, transform_indices = @transform_1, window_bounds = array<i64: 32, 64>}, {pipeline_mode = #tpu.pipeline_mode<synchronous>, transform_indices = @transform_2, window_bounds = array<i64: 1, 64>}, {pipeline_mode = #tpu.pipeline_mode<synchronous>, transform_indices = @transform_3, window_bounds = array<i64: 64, 32>}, {pipeline_mode = #tpu.pipeline_mode<synchronous>, transform_indices = @transform_4, window_bounds = array<i64: 1, 32>}, {pipeline_mode = #tpu.pipeline_mode<synchronous>, transform_indices = @transform_5, window_bounds = array<i64: 1, 32>}, {pipeline_mode = #tpu.pipeline_mode<synchronous>, transform_indices = @transform_6, window_bounds = array<i64: 1, 32>}, {pipeline_mode = #tpu.pipeline_mode<synchronous>, transform_indices = @transform_7, window_bounds = array<i64: 1, 32>}, {pipeline_mode = #tpu.pipeline_mode<synchronous>, transform_indices = @transform_8, window_bounds = array<i64: 1, 32>}, {transform_indices = @transform_9, window_bounds = array<i64: 16, 32>}]} {
    %c0 = arith.constant 0 : index
    %c0_0 = arith.constant 0 : index
    %0 = vector.load %arg1[%c0, %c0_0] : memref<16x32xf32, #tpu.memory_space<vmem>>, vector<16x32xf32>
    %1 = arith.truncf %0 : vector<16x32xf32> to vector<16x32xbf16>
    %c0_1 = arith.constant 0 : index
    %c0_2 = arith.constant 0 : index
    %2 = vector.load %arg2[%c0_1, %c0_2] : memref<32x64xbf16, #tpu.memory_space<vmem>>, vector<32x64xbf16>
    %cst = arith.constant dense<0.000000e+00> : vector<16x64xf32>
    %3 = tpu.matmul %1, %2, %cst {dimension_numbers = #tpu.dot_dimension_numbers<[1], [0], [0], [1], [0, 0, 1, 1], [], []>} : vector<16x32xbf16>, vector<32x64xbf16>, vector<16x64xf32> -> vector<16x64xf32>
    %c0_3 = arith.constant 0 : index
    %c0_4 = arith.constant 0 : index
    %4 = vector.load %arg3[%c0_3, %c0_4] : memref<1x64xf32, #tpu.memory_space<vmem>>, vector<1x64xf32>
    %5 = vector.broadcast %4 : vector<1x64xf32> to vector<16x64xf32>
    %6 = arith.addf %3, %5 : vector<16x64xf32>
    %cst_5 = arith.constant 0.000000e+00 : f32
    %7 = vector.broadcast %cst_5 : f32 to vector<16x64xf32>
    %8 = arith.maximumf %6, %7 : vector<16x64xf32>
    %9 = arith.truncf %8 : vector<16x64xf32> to vector<16x64xbf16>
    %c0_6 = arith.constant 0 : index
    %c0_7 = arith.constant 0 : index
    %10 = vector.load %arg4[%c0_6, %c0_7] : memref<64x32xbf16, #tpu.memory_space<vmem>>, vector<64x32xbf16>
    %cst_8 = arith.constant dense<0.000000e+00> : vector<16x32xf32>
    %11 = tpu.matmul %9, %10, %cst_8 {dimension_numbers = #tpu.dot_dimension_numbers<[1], [0], [0], [1], [0, 0, 1, 1], [], []>} : vector<16x64xbf16>, vector<64x32xbf16>, vector<16x32xf32> -> vector<16x32xf32>
    %c0_9 = arith.constant 0 : index
    %c0_10 = arith.constant 0 : index
    %12 = vector.load %arg5[%c0_9, %c0_10] : memref<1x32xf32, #tpu.memory_space<vmem>>, vector<1x32xf32>
    %13 = vector.broadcast %12 : vector<1x32xf32> to vector<16x32xf32>
    %14 = arith.addf %11, %13 : vector<16x32xf32>
    %15 = arith.addf %0, %14 : vector<16x32xf32>
    %cst_11 = arith.constant dense<0.000000e+00> : vector<16xf32>
    %16 = vector.multi_reduction <add>, %15, %cst_11 [1] : vector<16x32xf32> to vector<16xf32>
    %17 = vector.shape_cast %16 : vector<16xf32> to vector<16x1xf32>
    %cst_12 = arith.constant 3.200000e+01 : f32
    %18 = vector.broadcast %cst_12 : f32 to vector<16x1xf32>
    %19 = arith.divf %17, %18 : vector<16x1xf32>
    %20 = vector.broadcast %19 : vector<16x1xf32> to vector<16x32xf32>
    %21 = arith.subf %15, %20 : vector<16x32xf32>
    %22 = arith.mulf %21, %21 : vector<16x32xf32>
    %cst_13 = arith.constant dense<0.000000e+00> : vector<16xf32>
    %23 = vector.multi_reduction <add>, %22, %cst_13 [1] : vector<16x32xf32> to vector<16xf32>
    %24 = vector.shape_cast %23 : vector<16xf32> to vector<16x1xf32>
    %cst_14 = arith.constant 3.200000e+01 : f32
    %25 = vector.broadcast %cst_14 : f32 to vector<16x1xf32>
    %26 = arith.divf %24, %25 : vector<16x1xf32>
    %27 = vector.broadcast %19 : vector<16x1xf32> to vector<16x32xf32>
    %28 = arith.subf %15, %27 : vector<16x32xf32>
    %cst_15 = arith.constant 9.99999974E-6 : f32
    %29 = vector.broadcast %cst_15 : f32 to vector<16x1xf32>
    %30 = arith.addf %26, %29 : vector<16x1xf32>
    %31 = math.rsqrt %30 : vector<16x1xf32>
    %32 = vector.broadcast %31 : vector<16x1xf32> to vector<16x32xf32>
    %33 = arith.mulf %28, %32 : vector<16x32xf32>
    %c0_16 = arith.constant 0 : index
    %c0_17 = arith.constant 0 : index
    %34 = vector.load %arg6[%c0_16, %c0_17] : memref<1x32xf32, #tpu.memory_space<vmem>>, vector<1x32xf32>
    %35 = vector.broadcast %34 : vector<1x32xf32> to vector<16x32xf32>
    %36 = arith.mulf %33, %35 : vector<16x32xf32>
    %c0_18 = arith.constant 0 : index
    %c0_19 = arith.constant 0 : index
    %37 = vector.load %arg7[%c0_18, %c0_19] : memref<1x32xf32, #tpu.memory_space<vmem>>, vector<1x32xf32>
    %38 = vector.broadcast %37 : vector<1x32xf32> to vector<16x32xf32>
    %39 = arith.addf %36, %38 : vector<16x32xf32>
    %cst_20 = arith.constant dense<0.000000e+00> : vector<16xf32>
    %40 = vector.multi_reduction <add>, %39, %cst_20 [1] : vector<16x32xf32> to vector<16xf32>
    %41 = vector.shape_cast %40 : vector<16xf32> to vector<16x1xf32>
    %cst_21 = arith.constant 3.200000e+01 : f32
    %42 = vector.broadcast %cst_21 : f32 to vector<16x1xf32>
    %43 = arith.divf %41, %42 : vector<16x1xf32>
    %44 = vector.broadcast %43 : vector<16x1xf32> to vector<16x32xf32>
    %45 = arith.subf %39, %44 : vector<16x32xf32>
    %46 = arith.mulf %45, %45 : vector<16x32xf32>
    %cst_22 = arith.constant dense<0.000000e+00> : vector<16xf32>
    %47 = vector.multi_reduction <add>, %46, %cst_22 [1] : vector<16x32xf32> to vector<16xf32>
    %48 = vector.shape_cast %47 : vector<16xf32> to vector<16x1xf32>
    %cst_23 = arith.constant 3.200000e+01 : f32
    %49 = vector.broadcast %cst_23 : f32 to vector<16x1xf32>
    %50 = arith.divf %48, %49 : vector<16x1xf32>
    %51 = vector.broadcast %43 : vector<16x1xf32> to vector<16x32xf32>
    %52 = arith.subf %39, %51 : vector<16x32xf32>
    %cst_24 = arith.constant 9.99999974E-6 : f32
    %53 = vector.broadcast %cst_24 : f32 to vector<16x1xf32>
    %54 = arith.addf %50, %53 : vector<16x1xf32>
    %55 = math.rsqrt %54 : vector<16x1xf32>
    %56 = vector.broadcast %55 : vector<16x1xf32> to vector<16x32xf32>
    %57 = arith.mulf %52, %56 : vector<16x32xf32>
    %c0_25 = arith.constant 0 : index
    %c0_26 = arith.constant 0 : index
    %58 = vector.load %arg8[%c0_25, %c0_26] : memref<1x32xf32, #tpu.memory_space<vmem>>, vector<1x32xf32>
    %59 = vector.broadcast %58 : vector<1x32xf32> to vector<16x32xf32>
    %60 = arith.mulf %57, %59 : vector<16x32xf32>
    %c0_27 = arith.constant 0 : index
    %c0_28 = arith.constant 0 : index
    %61 = vector.load %arg9[%c0_27, %c0_28] : memref<1x32xf32, #tpu.memory_space<vmem>>, vector<1x32xf32>
    %62 = vector.broadcast %61 : vector<1x32xf32> to vector<16x32xf32>
    %63 = arith.addf %60, %62 : vector<16x32xf32>
    %c0_29 = arith.constant 0 : index
    %c0_30 = arith.constant 0 : index
    %64 = vector.load %arg10[%c0_29, %c0_30] : memref<16x32xf32, #tpu.memory_space<vmem>>, vector<16x32xf32>
    tpu.vector_store %arg10[%c0_29, %c0_30], %63 {strides = array<i32>} : memref<16x32xf32, #tpu.memory_space<vmem>>, vector<16x32xf32>,
    return
  }
  func.func @transform_0(%arg0: i32) -> (i32, i32) {
    %c0_i32 = arith.constant 0 : i32
    %c0_i32_0 = arith.constant 0 : i32
    return %arg0, %c0_i32 : i32, i32
  }
  func.func @transform_1(%arg0: i32) -> (i32, i32) {
    %c0_i32 = arith.constant 0 : i32
    %c0_i32_0 = arith.constant 0 : i32
    %c0_i32_1 = arith.constant 0 : i32
    return %c0_i32, %c0_i32_0 : i32, i32
  }
  func.func @transform_2(%arg0: i32) -> (i32, i32) {
    %c0_i32 = arith.constant 0 : i32
    %c0_i32_0 = arith.constant 0 : i32
    %c0_i32_1 = arith.constant 0 : i32
    return %c0_i32, %c0_i32_0 : i32, i32
  }
  func.func @transform_3(%arg0: i32) -> (i32, i32) {
    %c0_i32 = arith.constant 0 : i32
    %c0_i32_0 = arith.constant 0 : i32
    %c0_i32_1 = arith.constant 0 : i32
    return %c0_i32, %c0_i32_0 : i32, i32
  }
  func.func @transform_4(%arg0: i32) -> (i32, i32) {
    %c0_i32 = arith.constant 0 : i32
    %c0_i32_0 = arith.constant 0 : i32
    %c0_i32_1 = arith.constant 0 : i32
    return %c0_i32, %c0_i32_0 : i32, i32
  }
  func.func @transform_5(%arg0: i32) -> (i32, i32) {
    %c0_i32 = arith.constant 0 : i32
    %c0_i32_0 = arith.constant 0 : i32
    %c0_i32_1 = arith.constant 0 : i32
    return %c0_i32, %c0_i32_0 : i32, i32
  }
  func.func @transform_6(%arg0: i32) -> (i32, i32) {
    %c0_i32 = arith.constant 0 : i32
    %c0_i32_0 = arith.constant 0 : i32
    %c0_i32_1 = arith.constant 0 : i32
    return %c0_i32, %c0_i32_0 : i32, i32
  }
  func.func @transform_7(%arg0: i32) -> (i32, i32) {
    %c0_i32 = arith.constant 0 : i32
    %c0_i32_0 = arith.constant 0 : i32
    %c0_i32_1 = arith.constant 0 : i32
    return %c0_i32, %c0_i32_0 : i32, i32
  }
  func.func @transform_8(%arg0: i32) -> (i32, i32) {
    %c0_i32 = arith.constant 0 : i32
    %c0_i32_0 = arith.constant 0 : i32
    %c0_i32_1 = arith.constant 0 : i32
    return %c0_i32, %c0_i32_0 : i32, i32
  }
  func.func @transform_9(%arg0: i32) -> (i32, i32) {
    %c0_i32 = arith.constant 0 : i32
    %c0_i32_0 = arith.constant 0 : i32
    return %arg0, %c0_i32 : i32, i32
  }
}

module attributes {stable_mosaic.version = 11 : i64} {
  func.func @_self_attn_ln_kernel(%arg0: i32, %arg1: memref<1x7x32xf32, #tpu.memory_space<vmem>>, %arg2: memref<32x96xbf16, #tpu.memory_space<vmem>>, %arg3: memref<1x96xf32, #tpu.memory_space<vmem>>, %arg4: memref<32x32xbf16, #tpu.memory_space<vmem>>, %arg5: memref<1x32xf32, #tpu.memory_space<vmem>>, %arg6: memref<1x32xf32, #tpu.memory_space<vmem>>, %arg7: memref<1x32xf32, #tpu.memory_space<vmem>>, %arg8: memref<1x7x32xf32, #tpu.memory_space<vmem>>, %arg9: memref<7x32xf32, #tpu.memory_space<vmem>>) attributes {dimension_semantics = [#tpu.dimension_semantics<parallel>], iteration_bounds = array<i64: 2>, scalar_prefetch = 0 : i64, scratch_operands = 1 : i64, tpu.core_type = #tpu.core_type<tc>, window_params = [{transform_indices = @transform_0, window_bounds = array<i64: 1, 7, 32>}, {pipeline_mode = #tpu.pipeline_mode<synchronous>, transform_indices = @transform_1, window_bounds = array<i64: 32, 96>}, {pipeline_mode = #tpu.pipeline_mode<synchronous>, transform_indices = @transform_2, window_bounds = array<i64: 1, 96>}, {pipeline_mode = #tpu.pipeline_mode<synchronous>, transform_indices = @transform_3, window_bounds = array<i64: 32, 32>}, {pipeline_mode = #tpu.pipeline_mode<synchronous>, transform_indices = @transform_4, window_bounds = array<i64: 1, 32>}, {pipeline_mode = #tpu.pipeline_mode<synchronous>, transform_indices = @transform_5, window_bounds = array<i64: 1, 32>}, {pipeline_mode = #tpu.pipeline_mode<synchronous>, transform_indices = @transform_6, window_bounds = array<i64: 1, 32>}, {transform_indices = @transform_7, window_bounds = array<i64: 1, 7, 32>}]} {
    %c0 = arith.constant 0 : index
    %c0_0 = arith.constant 0 : index
    %c0_1 = arith.constant 0 : index
    %0 = vector.load %arg1[%c0, %c0_0, %c0_1] : memref<1x7x32xf32, #tpu.memory_space<vmem>>, vector<1x7x32xf32>
    %1 = vector.shape_cast %0 : vector<1x7x32xf32> to vector<7x32xf32>
    %2 = arith.truncf %1 : vector<7x32xf32> to vector<7x32xbf16>
    %c0_2 = arith.constant 0 : index
    %c0_3 = arith.constant 0 : index
    %3 = vector.load %arg2[%c0_2, %c0_3] : memref<32x96xbf16, #tpu.memory_space<vmem>>, vector<32x96xbf16>
    %cst = arith.constant dense<0.000000e+00> : vector<7x96xf32>
    %4 = tpu.matmul %2, %3, %cst {dimension_numbers = #tpu.dot_dimension_numbers<[1], [0], [0], [1], [0, 0, 1, 1], [], []>} : vector<7x32xbf16>, vector<32x96xbf16>, vector<7x96xf32> -> vector<7x96xf32>
    %c0_4 = arith.constant 0 : index
    %c0_5 = arith.constant 0 : index
    %5 = vector.load %arg3[%c0_4, %c0_5] : memref<1x96xf32, #tpu.memory_space<vmem>>, vector<1x96xf32>
    %6 = vector.broadcast %5 : vector<1x96xf32> to vector<7x96xf32>
    %7 = arith.addf %4, %6 : vector<7x96xf32>
    %8 = vector.extract_strided_slice %7 {offsets = [0, 0], sizes = [7, 32], strides = [1, 1]} : vector<7x96xf32> to vector<7x32xf32>
    %9 = vector.extract_strided_slice %7 {offsets = [0, 32], sizes = [7, 64], strides = [1, 1]} : vector<7x96xf32> to vector<7x64xf32>
    %10 = vector.extract_strided_slice %8 {offsets = [0, 0], sizes = [7, 16], strides = [1, 1]} : vector<7x32xf32> to vector<7x16xf32>
    %cst_6 = arith.constant 2.500000e-01 : f32
    %11 = vector.broadcast %cst_6 : f32 to vector<7x16xf32>
    %12 = arith.mulf %10, %11 : vector<7x16xf32>
    %13 = arith.truncf %12 : vector<7x16xf32> to vector<7x16xbf16>
    %14 = vector.extract_strided_slice %9 {offsets = [0, 0], sizes = [7, 16], strides = [1, 1]} : vector<7x64xf32> to vector<7x16xf32>
    %15 = arith.truncf %14 : vector<7x16xf32> to vector<7x16xbf16>
    %16 = vector.extract_strided_slice %9 {offsets = [0, 32], sizes = [7, 16], strides = [1, 1]} : vector<7x64xf32> to vector<7x16xf32>
    %17 = arith.truncf %16 : vector<7x16xf32> to vector<7x16xbf16>
    %cst_7 = arith.constant dense<0.000000e+00> : vector<7x7xf32>
    %18 = tpu.matmul %13, %15, %cst_7 {dimension_numbers = #tpu.dot_dimension_numbers<[1], [1], [0], [0], [0, 0, 1, 0], [], []>} : vector<7x16xbf16>, vector<7x16xbf16>, vector<7x7xf32> -> vector<7x7xf32>
    %cst_8 = arith.constant dense<0xFF800000> : vector<7xf32>
    %19 = vector.multi_reduction <maximumf>, %18, %cst_8 [1] : vector<7x7xf32> to vector<7xf32>
    %20 = vector.shape_cast %19 : vector<7xf32> to vector<7x1xf32>
    %21 = vector.broadcast %20 : vector<7x1xf32> to vector<7x7xf32>
    %22 = arith.subf %18, %21 : vector<7x7xf32>
    %23 = math.exp %22 : vector<7x7xf32>
    %cst_9 = arith.constant dense<0.000000e+00> : vector<7xf32>
    %24 = vector.multi_reduction <add>, %23, %cst_9 [1] : vector<7x7xf32> to vector<7xf32>
    %25 = vector.shape_cast %24 : vector<7xf32> to vector<7x1xf32>
    %26 = arith.truncf %23 : vector<7x7xf32> to vector<7x7xbf16>
    %cst_10 = arith.constant dense<0.000000e+00> : vector<7x16xf32>
    %27 = tpu.matmul %26, %17, %cst_10 {dimension_numbers = #tpu.dot_dimension_numbers<[1], [0], [0], [1], [0, 0, 1, 1], [], []>} : vector<7x7xbf16>, vector<7x16xbf16>, vector<7x16xf32> -> vector<7x16xf32>
    %28 = tpu.reciprocal %25 {approx = true} : vector<7x1xf32> -> vector<7x1xf32>
    %29 = vector.broadcast %28 : vector<7x1xf32> to vector<7x16xf32>
    %30 = arith.mulf %27, %29 : vector<7x16xf32>
    %c0_11 = arith.constant 0 : index
    %c0_12 = arith.constant 0 : index
    %31 = vector.load %arg9[%c0_11, %c0_12] : memref<7x32xf32, #tpu.memory_space<vmem>>, vector<7x16xf32>
    tpu.vector_store %arg9[%c0_11, %c0_12], %30 {strides = array<i32>} : memref<7x32xf32, #tpu.memory_space<vmem>>, vector<7x16xf32>,
    %32 = vector.extract_strided_slice %8 {offsets = [0, 16], sizes = [7, 16], strides = [1, 1]} : vector<7x32xf32> to vector<7x16xf32>
    %cst_13 = arith.constant 2.500000e-01 : f32
    %33 = vector.broadcast %cst_13 : f32 to vector<7x16xf32>
    %34 = arith.mulf %32, %33 : vector<7x16xf32>
    %35 = arith.truncf %34 : vector<7x16xf32> to vector<7x16xbf16>
    %36 = vector.extract_strided_slice %9 {offsets = [0, 16], sizes = [7, 16], strides = [1, 1]} : vector<7x64xf32> to vector<7x16xf32>
    %37 = arith.truncf %36 : vector<7x16xf32> to vector<7x16xbf16>
    %38 = vector.extract_strided_slice %9 {offsets = [0, 48], sizes = [7, 16], strides = [1, 1]} : vector<7x64xf32> to vector<7x16xf32>
    %39 = arith.truncf %38 : vector<7x16xf32> to vector<7x16xbf16>
    %cst_14 = arith.constant dense<0.000000e+00> : vector<7x7xf32>
    %40 = tpu.matmul %35, %37, %cst_14 {dimension_numbers = #tpu.dot_dimension_numbers<[1], [1], [0], [0], [0, 0, 1, 0], [], []>} : vector<7x16xbf16>, vector<7x16xbf16>, vector<7x7xf32> -> vector<7x7xf32>
    %cst_15 = arith.constant dense<0xFF800000> : vector<7xf32>
    %41 = vector.multi_reduction <maximumf>, %40, %cst_15 [1] : vector<7x7xf32> to vector<7xf32>
    %42 = vector.shape_cast %41 : vector<7xf32> to vector<7x1xf32>
    %43 = vector.broadcast %42 : vector<7x1xf32> to vector<7x7xf32>
    %44 = arith.subf %40, %43 : vector<7x7xf32>
    %45 = math.exp %44 : vector<7x7xf32>
    %cst_16 = arith.constant dense<0.000000e+00> : vector<7xf32>
    %46 = vector.multi_reduction <add>, %45, %cst_16 [1] : vector<7x7xf32> to vector<7xf32>
    %47 = vector.shape_cast %46 : vector<7xf32> to vector<7x1xf32>
    %48 = arith.truncf %45 : vector<7x7xf32> to vector<7x7xbf16>
    %cst_17 = arith.constant dense<0.000000e+00> : vector<7x16xf32>
    %49 = tpu.matmul %48, %39, %cst_17 {dimension_numbers = #tpu.dot_dimension_numbers<[1], [0], [0], [1], [0, 0, 1, 1], [], []>} : vector<7x7xbf16>, vector<7x16xbf16>, vector<7x16xf32> -> vector<7x16xf32>
    %50 = tpu.reciprocal %47 {approx = true} : vector<7x1xf32> -> vector<7x1xf32>
    %51 = vector.broadcast %50 : vector<7x1xf32> to vector<7x16xf32>
    %52 = arith.mulf %49, %51 : vector<7x16xf32>
    %c0_18 = arith.constant 0 : index
    %c16 = arith.constant 16 : index
    %53 = vector.load %arg9[%c0_18, %c16] : memref<7x32xf32, #tpu.memory_space<vmem>>, vector<7x16xf32>
    tpu.vector_store %arg9[%c0_18, %c16], %52 {strides = array<i32>} : memref<7x32xf32, #tpu.memory_space<vmem>>, vector<7x16xf32>,
    %c0_19 = arith.constant 0 : index
    %c0_20 = arith.constant 0 : index
    %54 = vector.load %arg9[%c0_19, %c0_20] : memref<7x32xf32, #tpu.memory_space<vmem>>, vector<7x32xf32>
    %55 = arith.truncf %54 : vector<7x32xf32> to vector<7x32xbf16>
    %c0_21 = arith.constant 0 : index
    %c0_22 = arith.constant 0 : index
    %56 = vector.load %arg4[%c0_21, %c0_22] : memref<32x32xbf16, #tpu.memory_space<vmem>>, vector<32x32xbf16>
    %cst_23 = arith.constant dense<0.000000e+00> : vector<7x32xf32>
    %57 = tpu.matmul %55, %56, %cst_23 {dimension_numbers = #tpu.dot_dimension_numbers<[1], [0], [0], [1], [0, 0, 1, 1], [], []>} : vector<7x32xbf16>, vector<32x32xbf16>, vector<7x32xf32> -> vector<7x32xf32>
    %c0_24 = arith.constant 0 : index
    %c0_25 = arith.constant 0 : index
    %58 = vector.load %arg5[%c0_24, %c0_25] : memref<1x32xf32, #tpu.memory_space<vmem>>, vector<1x32xf32>
    %59 = vector.broadcast %58 : vector<1x32xf32> to vector<7x32xf32>
    %60 = arith.addf %57, %59 : vector<7x32xf32>
    %61 = arith.addf %1, %60 : vector<7x32xf32>
    %cst_26 = arith.constant dense<0.000000e+00> : vector<7xf32>
    %62 = vector.multi_reduction <add>, %61, %cst_26 [1] : vector<7x32xf32> to vector<7xf32>
    %63 = vector.shape_cast %62 : vector<7xf32> to vector<7x1xf32>
    %cst_27 = arith.constant 3.200000e+01 : f32
    %64 = vector.broadcast %cst_27 : f32 to vector<7x1xf32>
    %65 = arith.divf %63, %64 : vector<7x1xf32>
    %66 = vector.broadcast %65 : vector<7x1xf32> to vector<7x32xf32>
    %67 = arith.subf %61, %66 : vector<7x32xf32>
    %68 = arith.mulf %67, %67 : vector<7x32xf32>
    %cst_28 = arith.constant dense<0.000000e+00> : vector<7xf32>
    %69 = vector.multi_reduction <add>, %68, %cst_28 [1] : vector<7x32xf32> to vector<7xf32>
    %70 = vector.shape_cast %69 : vector<7xf32> to vector<7x1xf32>
    %cst_29 = arith.constant 3.200000e+01 : f32
    %71 = vector.broadcast %cst_29 : f32 to vector<7x1xf32>
    %72 = arith.divf %70, %71 : vector<7x1xf32>
    %73 = vector.broadcast %65 : vector<7x1xf32> to vector<7x32xf32>
    %74 = arith.subf %61, %73 : vector<7x32xf32>
    %cst_30 = arith.constant 9.99999974E-6 : f32
    %75 = vector.broadcast %cst_30 : f32 to vector<7x1xf32>
    %76 = arith.addf %72, %75 : vector<7x1xf32>
    %77 = math.rsqrt %76 : vector<7x1xf32>
    %78 = vector.broadcast %77 : vector<7x1xf32> to vector<7x32xf32>
    %79 = arith.mulf %74, %78 : vector<7x32xf32>
    %c0_31 = arith.constant 0 : index
    %c0_32 = arith.constant 0 : index
    %80 = vector.load %arg6[%c0_31, %c0_32] : memref<1x32xf32, #tpu.memory_space<vmem>>, vector<1x32xf32>
    %81 = vector.broadcast %80 : vector<1x32xf32> to vector<7x32xf32>
    %82 = arith.mulf %79, %81 : vector<7x32xf32>
    %c0_33 = arith.constant 0 : index
    %c0_34 = arith.constant 0 : index
    %83 = vector.load %arg7[%c0_33, %c0_34] : memref<1x32xf32, #tpu.memory_space<vmem>>, vector<1x32xf32>
    %84 = vector.broadcast %83 : vector<1x32xf32> to vector<7x32xf32>
    %85 = arith.addf %82, %84 : vector<7x32xf32>
    %c0_35 = arith.constant 0 : index
    %c0_36 = arith.constant 0 : index
    %c0_37 = arith.constant 0 : index
    %86 = vector.load %arg8[%c0_35, %c0_36, %c0_37] : memref<1x7x32xf32, #tpu.memory_space<vmem>>, vector<1x7x32xf32>
    %87 = vector.shape_cast %86 : vector<1x7x32xf32> to vector<7x32xf32>
    %88 = vector.shape_cast %85 : vector<7x32xf32> to vector<1x7x32xf32>
    tpu.vector_store %arg8[%c0_35, %c0_36, %c0_37], %88 {strides = array<i32>} : memref<1x7x32xf32, #tpu.memory_space<vmem>>, vector<1x7x32xf32>,
    return
  }
  func.func @transform_0(%arg0: i32) -> (i32, i32, i32) {
    %c0_i32 = arith.constant 0 : i32
    %c0_i32_0 = arith.constant 0 : i32
    %c0_i32_1 = arith.constant 0 : i32
    return %arg0, %c0_i32, %c0_i32_0 : i32, i32, i32
  }
  func.func @transform_1(%arg0: i32) -> (i32, i32) {
    %c0_i32 = arith.constant 0 : i32
    %c0_i32_0 = arith.constant 0 : i32
    %c0_i32_1 = arith.constant 0 : i32
    return %c0_i32, %c0_i32_0 : i32, i32
  }
  func.func @transform_2(%arg0: i32) -> (i32, i32) {
    %c0_i32 = arith.constant 0 : i32
    %c0_i32_0 = arith.constant 0 : i32
    %c0_i32_1 = arith.constant 0 : i32
    return %c0_i32, %c0_i32_0 : i32, i32
  }
  func.func @transform_3(%arg0: i32) -> (i32, i32) {
    %c0_i32 = arith.constant 0 : i32
    %c0_i32_0 = arith.constant 0 : i32
    %c0_i32_1 = arith.constant 0 : i32
    return %c0_i32, %c0_i32_0 : i32, i32
  }
  func.func @transform_4(%arg0: i32) -> (i32, i32) {
    %c0_i32 = arith.constant 0 : i32
    %c0_i32_0 = arith.constant 0 : i32
    %c0_i32_1 = arith.constant 0 : i32
    return %c0_i32, %c0_i32_0 : i32, i32
  }
  func.func @transform_5(%arg0: i32) -> (i32, i32) {
    %c0_i32 = arith.constant 0 : i32
    %c0_i32_0 = arith.constant 0 : i32
    %c0_i32_1 = arith.constant 0 : i32
    return %c0_i32, %c0_i32_0 : i32, i32
  }
  func.func @transform_6(%arg0: i32) -> (i32, i32) {
    %c0_i32 = arith.constant 0 : i32
    %c0_i32_0 = arith.constant 0 : i32
    %c0_i32_1 = arith.constant 0 : i32
    return %c0_i32, %c0_i32_0 : i32, i32
  }
  func.func @transform_7(%arg0: i32) -> (i32, i32, i32) {
    %c0_i32 = arith.constant 0 : i32
    %c0_i32_0 = arith.constant 0 : i32
    %c0_i32_1 = arith.constant 0 : i32
    return %arg0, %c0_i32, %c0_i32_0 : i32, i32, i32
  }
}

module attributes {stable_mosaic.version = 11 : i64} {
  func.func @_cross_attn_ln_kernel(%arg0: i32, %arg1: memref<1x7x32xf32, #tpu.memory_space<vmem>>, %arg2: memref<1x8x32xf32, #tpu.memory_space<vmem>>, %arg3: memref<32x32xbf16, #tpu.memory_space<vmem>>, %arg4: memref<1x32xf32, #tpu.memory_space<vmem>>, %arg5: memref<32x64xbf16, #tpu.memory_space<vmem>>, %arg6: memref<1x64xf32, #tpu.memory_space<vmem>>, %arg7: memref<32x32xbf16, #tpu.memory_space<vmem>>, %arg8: memref<1x32xf32, #tpu.memory_space<vmem>>, %arg9: memref<1x32xf32, #tpu.memory_space<vmem>>, %arg10: memref<1x32xf32, #tpu.memory_space<vmem>>, %arg11: memref<1x7x32xf32, #tpu.memory_space<vmem>>, %arg12: memref<7x32xf32, #tpu.memory_space<vmem>>) attributes {dimension_semantics = [#tpu.dimension_semantics<parallel>], iteration_bounds = array<i64: 2>, scalar_prefetch = 0 : i64, scratch_operands = 1 : i64, tpu.core_type = #tpu.core_type<tc>, window_params = [{transform_indices = @transform_0, window_bounds = array<i64: 1, 7, 32>}, {transform_indices = @transform_1, window_bounds = array<i64: 1, 8, 32>}, {pipeline_mode = #tpu.pipeline_mode<synchronous>, transform_indices = @transform_2, window_bounds = array<i64: 32, 32>}, {pipeline_mode = #tpu.pipeline_mode<synchronous>, transform_indices = @transform_3, window_bounds = array<i64: 1, 32>}, {pipeline_mode = #tpu.pipeline_mode<synchronous>, transform_indices = @transform_4, window_bounds = array<i64: 32, 64>}, {pipeline_mode = #tpu.pipeline_mode<synchronous>, transform_indices = @transform_5, window_bounds = array<i64: 1, 64>}, {pipeline_mode = #tpu.pipeline_mode<synchronous>, transform_indices = @transform_6, window_bounds = array<i64: 32, 32>}, {pipeline_mode = #tpu.pipeline_mode<synchronous>, transform_indices = @transform_7, window_bounds = array<i64: 1, 32>}, {pipeline_mode = #tpu.pipeline_mode<synchronous>, transform_indices = @transform_8, window_bounds = array<i64: 1, 32>}, {pipeline_mode = #tpu.pipeline_mode<synchronous>, transform_indices = @transform_9, window_bounds = array<i64: 1, 32>}, {transform_indices = @transform_10, window_bounds = array<i64: 1, 7, 32>}]} {
    %c0 = arith.constant 0 : index
    %c0_0 = arith.constant 0 : index
    %c0_1 = arith.constant 0 : index
    %0 = vector.load %arg1[%c0, %c0_0, %c0_1] : memref<1x7x32xf32, #tpu.memory_space<vmem>>, vector<1x7x32xf32>
    %1 = vector.shape_cast %0 : vector<1x7x32xf32> to vector<7x32xf32>
    %c0_2 = arith.constant 0 : index
    %c0_3 = arith.constant 0 : index
    %c0_4 = arith.constant 0 : index
    %2 = vector.load %arg2[%c0_2, %c0_3, %c0_4] : memref<1x8x32xf32, #tpu.memory_space<vmem>>, vector<1x8x32xf32>
    %3 = vector.shape_cast %2 : vector<1x8x32xf32> to vector<8x32xf32>
    %4 = arith.truncf %1 : vector<7x32xf32> to vector<7x32xbf16>
    %c0_5 = arith.constant 0 : index
    %c0_6 = arith.constant 0 : index
    %5 = vector.load %arg3[%c0_5, %c0_6] : memref<32x32xbf16, #tpu.memory_space<vmem>>, vector<32x32xbf16>
    %cst = arith.constant dense<0.000000e+00> : vector<7x32xf32>
    %6 = tpu.matmul %4, %5, %cst {dimension_numbers = #tpu.dot_dimension_numbers<[1], [0], [0], [1], [0, 0, 1, 1], [], []>} : vector<7x32xbf16>, vector<32x32xbf16>, vector<7x32xf32> -> vector<7x32xf32>
    %c0_7 = arith.constant 0 : index
    %c0_8 = arith.constant 0 : index
    %7 = vector.load %arg4[%c0_7, %c0_8] : memref<1x32xf32, #tpu.memory_space<vmem>>, vector<1x32xf32>
    %8 = vector.broadcast %7 : vector<1x32xf32> to vector<7x32xf32>
    %9 = arith.addf %6, %8 : vector<7x32xf32>
    %10 = arith.truncf %3 : vector<8x32xf32> to vector<8x32xbf16>
    %c0_9 = arith.constant 0 : index
    %c0_10 = arith.constant 0 : index
    %11 = vector.load %arg5[%c0_9, %c0_10] : memref<32x64xbf16, #tpu.memory_space<vmem>>, vector<32x64xbf16>
    %cst_11 = arith.constant dense<0.000000e+00> : vector<8x64xf32>
    %12 = tpu.matmul %10, %11, %cst_11 {dimension_numbers = #tpu.dot_dimension_numbers<[1], [0], [0], [1], [0, 0, 1, 1], [], []>} : vector<8x32xbf16>, vector<32x64xbf16>, vector<8x64xf32> -> vector<8x64xf32>
    %c0_12 = arith.constant 0 : index
    %c0_13 = arith.constant 0 : index
    %13 = vector.load %arg6[%c0_12, %c0_13] : memref<1x64xf32, #tpu.memory_space<vmem>>, vector<1x64xf32>
    %14 = vector.broadcast %13 : vector<1x64xf32> to vector<8x64xf32>
    %15 = arith.addf %12, %14 : vector<8x64xf32>
    %16 = vector.extract_strided_slice %9 {offsets = [0, 0], sizes = [7, 16], strides = [1, 1]} : vector<7x32xf32> to vector<7x16xf32>
    %cst_14 = arith.constant 2.500000e-01 : f32
    %17 = vector.broadcast %cst_14 : f32 to vector<7x16xf32>
    %18 = arith.mulf %16, %17 : vector<7x16xf32>
    %19 = arith.truncf %18 : vector<7x16xf32> to vector<7x16xbf16>
    %20 = vector.extract_strided_slice %15 {offsets = [0, 0], sizes = [8, 16], strides = [1, 1]} : vector<8x64xf32> to vector<8x16xf32>
    %21 = arith.truncf %20 : vector<8x16xf32> to vector<8x16xbf16>
    %22 = vector.extract_strided_slice %15 {offsets = [0, 32], sizes = [8, 16], strides = [1, 1]} : vector<8x64xf32> to vector<8x16xf32>
    %23 = arith.truncf %22 : vector<8x16xf32> to vector<8x16xbf16>
    %cst_15 = arith.constant dense<0.000000e+00> : vector<7x8xf32>
    %24 = tpu.matmul %19, %21, %cst_15 {dimension_numbers = #tpu.dot_dimension_numbers<[1], [1], [0], [0], [0, 0, 1, 0], [], []>} : vector<7x16xbf16>, vector<8x16xbf16>, vector<7x8xf32> -> vector<7x8xf32>
    %cst_16 = arith.constant dense<0xFF800000> : vector<7xf32>
    %25 = vector.multi_reduction <maximumf>, %24, %cst_16 [1] : vector<7x8xf32> to vector<7xf32>
    %26 = vector.shape_cast %25 : vector<7xf32> to vector<7x1xf32>
    %27 = vector.broadcast %26 : vector<7x1xf32> to vector<7x8xf32>
    %28 = arith.subf %24, %27 : vector<7x8xf32>
    %29 = math.exp %28 : vector<7x8xf32>
    %cst_17 = arith.constant dense<0.000000e+00> : vector<7xf32>
    %30 = vector.multi_reduction <add>, %29, %cst_17 [1] : vector<7x8xf32> to vector<7xf32>
    %31 = vector.shape_cast %30 : vector<7xf32> to vector<7x1xf32>
    %32 = arith.truncf %29 : vector<7x8xf32> to vector<7x8xbf16>
    %cst_18 = arith.constant dense<0.000000e+00> : vector<7x16xf32>
    %33 = tpu.matmul %32, %23, %cst_18 {dimension_numbers = #tpu.dot_dimension_numbers<[1], [0], [0], [1], [0, 0, 1, 1], [], []>} : vector<7x8xbf16>, vector<8x16xbf16>, vector<7x16xf32> -> vector<7x16xf32>
    %34 = tpu.reciprocal %31 {approx = true} : vector<7x1xf32> -> vector<7x1xf32>
    %35 = vector.broadcast %34 : vector<7x1xf32> to vector<7x16xf32>
    %36 = arith.mulf %33, %35 : vector<7x16xf32>
    %c0_19 = arith.constant 0 : index
    %c0_20 = arith.constant 0 : index
    %37 = vector.load %arg12[%c0_19, %c0_20] : memref<7x32xf32, #tpu.memory_space<vmem>>, vector<7x16xf32>
    tpu.vector_store %arg12[%c0_19, %c0_20], %36 {strides = array<i32>} : memref<7x32xf32, #tpu.memory_space<vmem>>, vector<7x16xf32>,
    %38 = vector.extract_strided_slice %9 {offsets = [0, 16], sizes = [7, 16], strides = [1, 1]} : vector<7x32xf32> to vector<7x16xf32>
    %cst_21 = arith.constant 2.500000e-01 : f32
    %39 = vector.broadcast %cst_21 : f32 to vector<7x16xf32>
    %40 = arith.mulf %38, %39 : vector<7x16xf32>
    %41 = arith.truncf %40 : vector<7x16xf32> to vector<7x16xbf16>
    %42 = vector.extract_strided_slice %15 {offsets = [0, 16], sizes = [8, 16], strides = [1, 1]} : vector<8x64xf32> to vector<8x16xf32>
    %43 = arith.truncf %42 : vector<8x16xf32> to vector<8x16xbf16>
    %44 = vector.extract_strided_slice %15 {offsets = [0, 48], sizes = [8, 16], strides = [1, 1]} : vector<8x64xf32> to vector<8x16xf32>
    %45 = arith.truncf %44 : vector<8x16xf32> to vector<8x16xbf16>
    %cst_22 = arith.constant dense<0.000000e+00> : vector<7x8xf32>
    %46 = tpu.matmul %41, %43, %cst_22 {dimension_numbers = #tpu.dot_dimension_numbers<[1], [1], [0], [0], [0, 0, 1, 0], [], []>} : vector<7x16xbf16>, vector<8x16xbf16>, vector<7x8xf32> -> vector<7x8xf32>
    %cst_23 = arith.constant dense<0xFF800000> : vector<7xf32>
    %47 = vector.multi_reduction <maximumf>, %46, %cst_23 [1] : vector<7x8xf32> to vector<7xf32>
    %48 = vector.shape_cast %47 : vector<7xf32> to vector<7x1xf32>
    %49 = vector.broadcast %48 : vector<7x1xf32> to vector<7x8xf32>
    %50 = arith.subf %46, %49 : vector<7x8xf32>
    %51 = math.exp %50 : vector<7x8xf32>
    %cst_24 = arith.constant dense<0.000000e+00> : vector<7xf32>
    %52 = vector.multi_reduction <add>, %51, %cst_24 [1] : vector<7x8xf32> to vector<7xf32>
    %53 = vector.shape_cast %52 : vector<7xf32> to vector<7x1xf32>
    %54 = arith.truncf %51 : vector<7x8xf32> to vector<7x8xbf16>
    %cst_25 = arith.constant dense<0.000000e+00> : vector<7x16xf32>
    %55 = tpu.matmul %54, %45, %cst_25 {dimension_numbers = #tpu.dot_dimension_numbers<[1], [0], [0], [1], [0, 0, 1, 1], [], []>} : vector<7x8xbf16>, vector<8x16xbf16>, vector<7x16xf32> -> vector<7x16xf32>
    %56 = tpu.reciprocal %53 {approx = true} : vector<7x1xf32> -> vector<7x1xf32>
    %57 = vector.broadcast %56 : vector<7x1xf32> to vector<7x16xf32>
    %58 = arith.mulf %55, %57 : vector<7x16xf32>
    %c0_26 = arith.constant 0 : index
    %c16 = arith.constant 16 : index
    %59 = vector.load %arg12[%c0_26, %c16] : memref<7x32xf32, #tpu.memory_space<vmem>>, vector<7x16xf32>
    tpu.vector_store %arg12[%c0_26, %c16], %58 {strides = array<i32>} : memref<7x32xf32, #tpu.memory_space<vmem>>, vector<7x16xf32>,
    %c0_27 = arith.constant 0 : index
    %c0_28 = arith.constant 0 : index
    %60 = vector.load %arg12[%c0_27, %c0_28] : memref<7x32xf32, #tpu.memory_space<vmem>>, vector<7x32xf32>
    %61 = arith.truncf %60 : vector<7x32xf32> to vector<7x32xbf16>
    %c0_29 = arith.constant 0 : index
    %c0_30 = arith.constant 0 : index
    %62 = vector.load %arg7[%c0_29, %c0_30] : memref<32x32xbf16, #tpu.memory_space<vmem>>, vector<32x32xbf16>
    %cst_31 = arith.constant dense<0.000000e+00> : vector<7x32xf32>
    %63 = tpu.matmul %61, %62, %cst_31 {dimension_numbers = #tpu.dot_dimension_numbers<[1], [0], [0], [1], [0, 0, 1, 1], [], []>} : vector<7x32xbf16>, vector<32x32xbf16>, vector<7x32xf32> -> vector<7x32xf32>
    %c0_32 = arith.constant 0 : index
    %c0_33 = arith.constant 0 : index
    %64 = vector.load %arg8[%c0_32, %c0_33] : memref<1x32xf32, #tpu.memory_space<vmem>>, vector<1x32xf32>
    %65 = vector.broadcast %64 : vector<1x32xf32> to vector<7x32xf32>
    %66 = arith.addf %63, %65 : vector<7x32xf32>
    %67 = arith.addf %1, %66 : vector<7x32xf32>
    %cst_34 = arith.constant dense<0.000000e+00> : vector<7xf32>
    %68 = vector.multi_reduction <add>, %67, %cst_34 [1] : vector<7x32xf32> to vector<7xf32>
    %69 = vector.shape_cast %68 : vector<7xf32> to vector<7x1xf32>
    %cst_35 = arith.constant 3.200000e+01 : f32
    %70 = vector.broadcast %cst_35 : f32 to vector<7x1xf32>
    %71 = arith.divf %69, %70 : vector<7x1xf32>
    %72 = vector.broadcast %71 : vector<7x1xf32> to vector<7x32xf32>
    %73 = arith.subf %67, %72 : vector<7x32xf32>
    %74 = arith.mulf %73, %73 : vector<7x32xf32>
    %cst_36 = arith.constant dense<0.000000e+00> : vector<7xf32>
    %75 = vector.multi_reduction <add>, %74, %cst_36 [1] : vector<7x32xf32> to vector<7xf32>
    %76 = vector.shape_cast %75 : vector<7xf32> to vector<7x1xf32>
    %cst_37 = arith.constant 3.200000e+01 : f32
    %77 = vector.broadcast %cst_37 : f32 to vector<7x1xf32>
    %78 = arith.divf %76, %77 : vector<7x1xf32>
    %79 = vector.broadcast %71 : vector<7x1xf32> to vector<7x32xf32>
    %80 = arith.subf %67, %79 : vector<7x32xf32>
    %cst_38 = arith.constant 9.99999974E-6 : f32
    %81 = vector.broadcast %cst_38 : f32 to vector<7x1xf32>
    %82 = arith.addf %78, %81 : vector<7x1xf32>
    %83 = math.rsqrt %82 : vector<7x1xf32>
    %84 = vector.broadcast %83 : vector<7x1xf32> to vector<7x32xf32>
    %85 = arith.mulf %80, %84 : vector<7x32xf32>
    %c0_39 = arith.constant 0 : index
    %c0_40 = arith.constant 0 : index
    %86 = vector.load %arg9[%c0_39, %c0_40] : memref<1x32xf32, #tpu.memory_space<vmem>>, vector<1x32xf32>
    %87 = vector.broadcast %86 : vector<1x32xf32> to vector<7x32xf32>
    %88 = arith.mulf %85, %87 : vector<7x32xf32>
    %c0_41 = arith.constant 0 : index
    %c0_42 = arith.constant 0 : index
    %89 = vector.load %arg10[%c0_41, %c0_42] : memref<1x32xf32, #tpu.memory_space<vmem>>, vector<1x32xf32>
    %90 = vector.broadcast %89 : vector<1x32xf32> to vector<7x32xf32>
    %91 = arith.addf %88, %90 : vector<7x32xf32>
    %c0_43 = arith.constant 0 : index
    %c0_44 = arith.constant 0 : index
    %c0_45 = arith.constant 0 : index
    %92 = vector.load %arg11[%c0_43, %c0_44, %c0_45] : memref<1x7x32xf32, #tpu.memory_space<vmem>>, vector<1x7x32xf32>
    %93 = vector.shape_cast %92 : vector<1x7x32xf32> to vector<7x32xf32>
    %94 = vector.shape_cast %91 : vector<7x32xf32> to vector<1x7x32xf32>
    tpu.vector_store %arg11[%c0_43, %c0_44, %c0_45], %94 {strides = array<i32>} : memref<1x7x32xf32, #tpu.memory_space<vmem>>, vector<1x7x32xf32>,
    return
  }
  func.func @transform_0(%arg0: i32) -> (i32, i32, i32) {
    %c0_i32 = arith.constant 0 : i32
    %c0_i32_0 = arith.constant 0 : i32
    %c0_i32_1 = arith.constant 0 : i32
    return %arg0, %c0_i32, %c0_i32_0 : i32, i32, i32
  }
  func.func @transform_1(%arg0: i32) -> (i32, i32, i32) {
    %c0_i32 = arith.constant 0 : i32
    %c0_i32_0 = arith.constant 0 : i32
    %c0_i32_1 = arith.constant 0 : i32
    return %arg0, %c0_i32, %c0_i32_0 : i32, i32, i32
  }
  func.func @transform_2(%arg0: i32) -> (i32, i32) {
    %c0_i32 = arith.constant 0 : i32
    %c0_i32_0 = arith.constant 0 : i32
    %c0_i32_1 = arith.constant 0 : i32
    return %c0_i32, %c0_i32_0 : i32, i32
  }
  func.func @transform_3(%arg0: i32) -> (i32, i32) {
    %c0_i32 = arith.constant 0 : i32
    %c0_i32_0 = arith.constant 0 : i32
    %c0_i32_1 = arith.constant 0 : i32
    return %c0_i32, %c0_i32_0 : i32, i32
  }
  func.func @transform_4(%arg0: i32) -> (i32, i32) {
    %c0_i32 = arith.constant 0 : i32
    %c0_i32_0 = arith.constant 0 : i32
    %c0_i32_1 = arith.constant 0 : i32
    return %c0_i32, %c0_i32_0 : i32, i32
  }
  func.func @transform_5(%arg0: i32) -> (i32, i32) {
    %c0_i32 = arith.constant 0 : i32
    %c0_i32_0 = arith.constant 0 : i32
    %c0_i32_1 = arith.constant 0 : i32
    return %c0_i32, %c0_i32_0 : i32, i32
  }
  func.func @transform_6(%arg0: i32) -> (i32, i32) {
    %c0_i32 = arith.constant 0 : i32
    %c0_i32_0 = arith.constant 0 : i32
    %c0_i32_1 = arith.constant 0 : i32
    return %c0_i32, %c0_i32_0 : i32, i32
  }
  func.func @transform_7(%arg0: i32) -> (i32, i32) {
    %c0_i32 = arith.constant 0 : i32
    %c0_i32_0 = arith.constant 0 : i32
    %c0_i32_1 = arith.constant 0 : i32
    return %c0_i32, %c0_i32_0 : i32, i32
  }
  func.func @transform_8(%arg0: i32) -> (i32, i32) {
    %c0_i32 = arith.constant 0 : i32
    %c0_i32_0 = arith.constant 0 : i32
    %c0_i32_1 = arith.constant 0 : i32
    return %c0_i32, %c0_i32_0 : i32, i32
  }
  func.func @transform_9(%arg0: i32) -> (i32, i32) {
    %c0_i32 = arith.constant 0 : i32
    %c0_i32_0 = arith.constant 0 : i32
    %c0_i32_1 = arith.constant 0 : i32
    return %c0_i32, %c0_i32_0 : i32, i32
  }
  func.func @transform_10(%arg0: i32) -> (i32, i32, i32) {
    %c0_i32 = arith.constant 0 : i32
    %c0_i32_0 = arith.constant 0 : i32
    %c0_i32_1 = arith.constant 0 : i32
    return %arg0, %c0_i32, %c0_i32_0 : i32, i32, i32
  }
}

module attributes {stable_mosaic.version = 11 : i64} {
  func.func @_ffn_ln_kernel(%arg0: i32, %arg1: memref<14x32xf32, #tpu.memory_space<vmem>>, %arg2: memref<32x64xbf16, #tpu.memory_space<vmem>>, %arg3: memref<1x64xf32, #tpu.memory_space<vmem>>, %arg4: memref<64x32xbf16, #tpu.memory_space<vmem>>, %arg5: memref<1x32xf32, #tpu.memory_space<vmem>>, %arg6: memref<1x32xf32, #tpu.memory_space<vmem>>, %arg7: memref<1x32xf32, #tpu.memory_space<vmem>>, %arg8: memref<1x32xf32, #tpu.memory_space<vmem>>, %arg9: memref<1x32xf32, #tpu.memory_space<vmem>>, %arg10: memref<14x32xf32, #tpu.memory_space<vmem>>) attributes {dimension_semantics = [#tpu.dimension_semantics<parallel>], iteration_bounds = array<i64: 1>, scalar_prefetch = 0 : i64, scratch_operands = 0 : i64, tpu.core_type = #tpu.core_type<tc>, window_params = [{transform_indices = @transform_0, window_bounds = array<i64: 14, 32>}, {pipeline_mode = #tpu.pipeline_mode<synchronous>, transform_indices = @transform_1, window_bounds = array<i64: 32, 64>}, {pipeline_mode = #tpu.pipeline_mode<synchronous>, transform_indices = @transform_2, window_bounds = array<i64: 1, 64>}, {pipeline_mode = #tpu.pipeline_mode<synchronous>, transform_indices = @transform_3, window_bounds = array<i64: 64, 32>}, {pipeline_mode = #tpu.pipeline_mode<synchronous>, transform_indices = @transform_4, window_bounds = array<i64: 1, 32>}, {pipeline_mode = #tpu.pipeline_mode<synchronous>, transform_indices = @transform_5, window_bounds = array<i64: 1, 32>}, {pipeline_mode = #tpu.pipeline_mode<synchronous>, transform_indices = @transform_6, window_bounds = array<i64: 1, 32>}, {pipeline_mode = #tpu.pipeline_mode<synchronous>, transform_indices = @transform_7, window_bounds = array<i64: 1, 32>}, {pipeline_mode = #tpu.pipeline_mode<synchronous>, transform_indices = @transform_8, window_bounds = array<i64: 1, 32>}, {transform_indices = @transform_9, window_bounds = array<i64: 14, 32>}]} {
    %c0 = arith.constant 0 : index
    %c0_0 = arith.constant 0 : index
    %0 = vector.load %arg1[%c0, %c0_0] : memref<14x32xf32, #tpu.memory_space<vmem>>, vector<14x32xf32>
    %1 = arith.truncf %0 : vector<14x32xf32> to vector<14x32xbf16>
    %c0_1 = arith.constant 0 : index
    %c0_2 = arith.constant 0 : index
    %2 = vector.load %arg2[%c0_1, %c0_2] : memref<32x64xbf16, #tpu.memory_space<vmem>>, vector<32x64xbf16>
    %cst = arith.constant dense<0.000000e+00> : vector<14x64xf32>
    %3 = tpu.matmul %1, %2, %cst {dimension_numbers = #tpu.dot_dimension_numbers<[1], [0], [0], [1], [0, 0, 1, 1], [], []>} : vector<14x32xbf16>, vector<32x64xbf16>, vector<14x64xf32> -> vector<14x64xf32>
    %c0_3 = arith.constant 0 : index
    %c0_4 = arith.constant 0 : index
    %4 = vector.load %arg3[%c0_3, %c0_4] : memref<1x64xf32, #tpu.memory_space<vmem>>, vector<1x64xf32>
    %5 = vector.broadcast %4 : vector<1x64xf32> to vector<14x64xf32>
    %6 = arith.addf %3, %5 : vector<14x64xf32>
    %cst_5 = arith.constant 0.000000e+00 : f32
    %7 = vector.broadcast %cst_5 : f32 to vector<14x64xf32>
    %8 = arith.maximumf %6, %7 : vector<14x64xf32>
    %9 = arith.truncf %8 : vector<14x64xf32> to vector<14x64xbf16>
    %c0_6 = arith.constant 0 : index
    %c0_7 = arith.constant 0 : index
    %10 = vector.load %arg4[%c0_6, %c0_7] : memref<64x32xbf16, #tpu.memory_space<vmem>>, vector<64x32xbf16>
    %cst_8 = arith.constant dense<0.000000e+00> : vector<14x32xf32>
    %11 = tpu.matmul %9, %10, %cst_8 {dimension_numbers = #tpu.dot_dimension_numbers<[1], [0], [0], [1], [0, 0, 1, 1], [], []>} : vector<14x64xbf16>, vector<64x32xbf16>, vector<14x32xf32> -> vector<14x32xf32>
    %c0_9 = arith.constant 0 : index
    %c0_10 = arith.constant 0 : index
    %12 = vector.load %arg5[%c0_9, %c0_10] : memref<1x32xf32, #tpu.memory_space<vmem>>, vector<1x32xf32>
    %13 = vector.broadcast %12 : vector<1x32xf32> to vector<14x32xf32>
    %14 = arith.addf %11, %13 : vector<14x32xf32>
    %15 = arith.addf %0, %14 : vector<14x32xf32>
    %cst_11 = arith.constant dense<0.000000e+00> : vector<14xf32>
    %16 = vector.multi_reduction <add>, %15, %cst_11 [1] : vector<14x32xf32> to vector<14xf32>
    %17 = vector.shape_cast %16 : vector<14xf32> to vector<14x1xf32>
    %cst_12 = arith.constant 3.200000e+01 : f32
    %18 = vector.broadcast %cst_12 : f32 to vector<14x1xf32>
    %19 = arith.divf %17, %18 : vector<14x1xf32>
    %20 = vector.broadcast %19 : vector<14x1xf32> to vector<14x32xf32>
    %21 = arith.subf %15, %20 : vector<14x32xf32>
    %22 = arith.mulf %21, %21 : vector<14x32xf32>
    %cst_13 = arith.constant dense<0.000000e+00> : vector<14xf32>
    %23 = vector.multi_reduction <add>, %22, %cst_13 [1] : vector<14x32xf32> to vector<14xf32>
    %24 = vector.shape_cast %23 : vector<14xf32> to vector<14x1xf32>
    %cst_14 = arith.constant 3.200000e+01 : f32
    %25 = vector.broadcast %cst_14 : f32 to vector<14x1xf32>
    %26 = arith.divf %24, %25 : vector<14x1xf32>
    %27 = vector.broadcast %19 : vector<14x1xf32> to vector<14x32xf32>
    %28 = arith.subf %15, %27 : vector<14x32xf32>
    %cst_15 = arith.constant 9.99999974E-6 : f32
    %29 = vector.broadcast %cst_15 : f32 to vector<14x1xf32>
    %30 = arith.addf %26, %29 : vector<14x1xf32>
    %31 = math.rsqrt %30 : vector<14x1xf32>
    %32 = vector.broadcast %31 : vector<14x1xf32> to vector<14x32xf32>
    %33 = arith.mulf %28, %32 : vector<14x32xf32>
    %c0_16 = arith.constant 0 : index
    %c0_17 = arith.constant 0 : index
    %34 = vector.load %arg6[%c0_16, %c0_17] : memref<1x32xf32, #tpu.memory_space<vmem>>, vector<1x32xf32>
    %35 = vector.broadcast %34 : vector<1x32xf32> to vector<14x32xf32>
    %36 = arith.mulf %33, %35 : vector<14x32xf32>
    %c0_18 = arith.constant 0 : index
    %c0_19 = arith.constant 0 : index
    %37 = vector.load %arg7[%c0_18, %c0_19] : memref<1x32xf32, #tpu.memory_space<vmem>>, vector<1x32xf32>
    %38 = vector.broadcast %37 : vector<1x32xf32> to vector<14x32xf32>
    %39 = arith.addf %36, %38 : vector<14x32xf32>
    %cst_20 = arith.constant dense<0.000000e+00> : vector<14xf32>
    %40 = vector.multi_reduction <add>, %39, %cst_20 [1] : vector<14x32xf32> to vector<14xf32>
    %41 = vector.shape_cast %40 : vector<14xf32> to vector<14x1xf32>
    %cst_21 = arith.constant 3.200000e+01 : f32
    %42 = vector.broadcast %cst_21 : f32 to vector<14x1xf32>
    %43 = arith.divf %41, %42 : vector<14x1xf32>
    %44 = vector.broadcast %43 : vector<14x1xf32> to vector<14x32xf32>
    %45 = arith.subf %39, %44 : vector<14x32xf32>
    %46 = arith.mulf %45, %45 : vector<14x32xf32>
    %cst_22 = arith.constant dense<0.000000e+00> : vector<14xf32>
    %47 = vector.multi_reduction <add>, %46, %cst_22 [1] : vector<14x32xf32> to vector<14xf32>
    %48 = vector.shape_cast %47 : vector<14xf32> to vector<14x1xf32>
    %cst_23 = arith.constant 3.200000e+01 : f32
    %49 = vector.broadcast %cst_23 : f32 to vector<14x1xf32>
    %50 = arith.divf %48, %49 : vector<14x1xf32>
    %51 = vector.broadcast %43 : vector<14x1xf32> to vector<14x32xf32>
    %52 = arith.subf %39, %51 : vector<14x32xf32>
    %cst_24 = arith.constant 9.99999974E-6 : f32
    %53 = vector.broadcast %cst_24 : f32 to vector<14x1xf32>
    %54 = arith.addf %50, %53 : vector<14x1xf32>
    %55 = math.rsqrt %54 : vector<14x1xf32>
    %56 = vector.broadcast %55 : vector<14x1xf32> to vector<14x32xf32>
    %57 = arith.mulf %52, %56 : vector<14x32xf32>
    %c0_25 = arith.constant 0 : index
    %c0_26 = arith.constant 0 : index
    %58 = vector.load %arg8[%c0_25, %c0_26] : memref<1x32xf32, #tpu.memory_space<vmem>>, vector<1x32xf32>
    %59 = vector.broadcast %58 : vector<1x32xf32> to vector<14x32xf32>
    %60 = arith.mulf %57, %59 : vector<14x32xf32>
    %c0_27 = arith.constant 0 : index
    %c0_28 = arith.constant 0 : index
    %61 = vector.load %arg9[%c0_27, %c0_28] : memref<1x32xf32, #tpu.memory_space<vmem>>, vector<1x32xf32>
    %62 = vector.broadcast %61 : vector<1x32xf32> to vector<14x32xf32>
    %63 = arith.addf %60, %62 : vector<14x32xf32>
    %c0_29 = arith.constant 0 : index
    %c0_30 = arith.constant 0 : index
    %64 = vector.load %arg10[%c0_29, %c0_30] : memref<14x32xf32, #tpu.memory_space<vmem>>, vector<14x32xf32>
    tpu.vector_store %arg10[%c0_29, %c0_30], %63 {strides = array<i32>} : memref<14x32xf32, #tpu.memory_space<vmem>>, vector<14x32xf32>,
    return
  }
  func.func @transform_0(%arg0: i32) -> (i32, i32) {
    %c0_i32 = arith.constant 0 : i32
    %c0_i32_0 = arith.constant 0 : i32
    return %arg0, %c0_i32 : i32, i32
  }
  func.func @transform_1(%arg0: i32) -> (i32, i32) {
    %c0_i32 = arith.constant 0 : i32
    %c0_i32_0 = arith.constant 0 : i32
    %c0_i32_1 = arith.constant 0 : i32
    return %c0_i32, %c0_i32_0 : i32, i32
  }
  func.func @transform_2(%arg0: i32) -> (i32, i32) {
    %c0_i32 = arith.constant 0 : i32
    %c0_i32_0 = arith.constant 0 : i32
    %c0_i32_1 = arith.constant 0 : i32
    return %c0_i32, %c0_i32_0 : i32, i32
  }
  func.func @transform_3(%arg0: i32) -> (i32, i32) {
    %c0_i32 = arith.constant 0 : i32
    %c0_i32_0 = arith.constant 0 : i32
    %c0_i32_1 = arith.constant 0 : i32
    return %c0_i32, %c0_i32_0 : i32, i32
  }
  func.func @transform_4(%arg0: i32) -> (i32, i32) {
    %c0_i32 = arith.constant 0 : i32
    %c0_i32_0 = arith.constant 0 : i32
    %c0_i32_1 = arith.constant 0 : i32
    return %c0_i32, %c0_i32_0 : i32, i32
  }
  func.func @transform_5(%arg0: i32) -> (i32, i32) {
    %c0_i32 = arith.constant 0 : i32
    %c0_i32_0 = arith.constant 0 : i32
    %c0_i32_1 = arith.constant 0 : i32
    return %c0_i32, %c0_i32_0 : i32, i32
  }
  func.func @transform_6(%arg0: i32) -> (i32, i32) {
    %c0_i32 = arith.constant 0 : i32
    %c0_i32_0 = arith.constant 0 : i32
    %c0_i32_1 = arith.constant 0 : i32
    return %c0_i32, %c0_i32_0 : i32, i32
  }
  func.func @transform_7(%arg0: i32) -> (i32, i32) {
    %c0_i32 = arith.constant 0 : i32
    %c0_i32_0 = arith.constant 0 : i32
    %c0_i32_1 = arith.constant 0 : i32
    return %c0_i32, %c0_i32_0 : i32, i32
  }
  func.func @transform_8(%arg0: i32) -> (i32, i32) {
    %c0_i32 = arith.constant 0 : i32
    %c0_i32_0 = arith.constant 0 : i32
    %c0_i32_1 = arith.constant 0 : i32
    return %c0_i32, %c0_i32_0 : i32, i32
  }
  func.func @transform_9(%arg0: i32) -> (i32, i32) {
    %c0_i32 = arith.constant 0 : i32
    %c0_i32_0 = arith.constant 0 : i32
    return %arg0, %c0_i32 : i32, i32
  }
}

module attributes {stable_mosaic.version = 11 : i64} {
  func.func @_proj_kernel(%arg0: i32, %arg1: i32, %arg2: memref<14x32xf32, #tpu.memory_space<vmem>>, %arg3: memref<32x128xbf16, #tpu.memory_space<vmem>>, %arg4: memref<1x128xf32, #tpu.memory_space<vmem>>, %arg5: memref<14x128xf32, #tpu.memory_space<vmem>>) attributes {dimension_semantics = [#tpu.dimension_semantics<parallel>, #tpu.dimension_semantics<parallel>], iteration_bounds = array<i64: 1, 1>, scalar_prefetch = 0 : i64, scratch_operands = 0 : i64, tpu.core_type = #tpu.core_type<tc>, window_params = [{transform_indices = @transform_0, window_bounds = array<i64: 14, 32>}, {transform_indices = @transform_1, window_bounds = array<i64: 32, 128>}, {transform_indices = @transform_2, window_bounds = array<i64: 1, 128>}, {transform_indices = @transform_3, window_bounds = array<i64: 14, 128>}]} {
    %c0 = arith.constant 0 : index
    %c0_0 = arith.constant 0 : index
    %0 = vector.load %arg2[%c0, %c0_0] : memref<14x32xf32, #tpu.memory_space<vmem>>, vector<14x32xf32>
    %1 = arith.truncf %0 : vector<14x32xf32> to vector<14x32xbf16>
    %c0_1 = arith.constant 0 : index
    %c0_2 = arith.constant 0 : index
    %2 = vector.load %arg3[%c0_1, %c0_2] : memref<32x128xbf16, #tpu.memory_space<vmem>>, vector<32x128xbf16>
    %cst = arith.constant dense<0.000000e+00> : vector<14x128xf32>
    %3 = tpu.matmul %1, %2, %cst {dimension_numbers = #tpu.dot_dimension_numbers<[1], [0], [0], [1], [0, 0, 1, 1], [], []>} : vector<14x32xbf16>, vector<32x128xbf16>, vector<14x128xf32> -> vector<14x128xf32>
    %c0_3 = arith.constant 0 : index
    %c0_4 = arith.constant 0 : index
    %4 = vector.load %arg4[%c0_3, %c0_4] : memref<1x128xf32, #tpu.memory_space<vmem>>, vector<1x128xf32>
    %5 = vector.broadcast %4 : vector<1x128xf32> to vector<14x128xf32>
    %6 = arith.addf %3, %5 : vector<14x128xf32>
    %c0_5 = arith.constant 0 : index
    %c0_6 = arith.constant 0 : index
    %7 = vector.load %arg5[%c0_5, %c0_6] : memref<14x128xf32, #tpu.memory_space<vmem>>, vector<14x128xf32>
    tpu.vector_store %arg5[%c0_5, %c0_6], %6 {strides = array<i32>} : memref<14x128xf32, #tpu.memory_space<vmem>>, vector<14x128xf32>,
    return
  }
  func.func @transform_0(%arg0: i32, %arg1: i32) -> (i32, i32) {
    %c0_i32 = arith.constant 0 : i32
    %c0_i32_0 = arith.constant 0 : i32
    return %arg0, %c0_i32 : i32, i32
  }
  func.func @transform_1(%arg0: i32, %arg1: i32) -> (i32, i32) {
    %c0_i32 = arith.constant 0 : i32
    %c0_i32_0 = arith.constant 0 : i32
    return %c0_i32, %arg1 : i32, i32
  }
  func.func @transform_2(%arg0: i32, %arg1: i32) -> (i32, i32) {
    %c0_i32 = arith.constant 0 : i32
    %c0_i32_0 = arith.constant 0 : i32
    return %c0_i32, %arg1 : i32, i32
  }
  func.func @transform_3(%arg0: i32, %arg1: i32) -> (i32, i32) {
    %c0_i32 = arith.constant 0 : i32
    return %arg0, %arg1 : i32, i32
  }
}

</mosaic_0001>

<llo_original>
// kernel: translation_transformer_forward.13
$region0: #{translation_transformer_forward.13}
  #allocation0 [shape = 'u32[]', space=smem, size = 0x4, offset = 0x4, fixed_abs, tag = 'smem constant byte address 0x4 - core index']
  #allocation1 [shape = 'u32[72,128]{1,0:T(1,128)}', space=vmem, size = 0x9000, scoped, tag = 'internal scratch']
  #allocation2 [shape = 'f32[8,32]{1,0:T(8,128)}', space=vmem, size = 0x1000, scoped, tag = 'scratch operand']
  %s0 = inlined_call_operand.vmem [shape: f32[2,8,32], index: 0, kind: input, shape index: {}]
  %s1 = inlined_call_operand.vmem [shape: bf16[32,96], index: 1, kind: input, shape index: {}]
  %s2 = inlined_call_operand.vmem [shape: f32[1,96], index: 2, kind: input, shape index: {}]
  %s3 = inlined_call_operand.vmem [shape: bf16[32,32], index: 3, kind: input, shape index: {}]
  %s4 = inlined_call_operand.vmem [shape: f32[1,32], index: 4, kind: input, shape index: {}]
  %s5 = inlined_call_operand.vmem [shape: f32[1,32], index: 5, kind: input, shape index: {}]
  %s6 = inlined_call_operand.vmem [shape: f32[1,32], index: 6, kind: input, shape index: {}]
  %s7 = inlined_call_operand.vmem [shape: f32[2,8,32], index: 7, kind: output, shape index: {}]
  %s8 = sld [smem:[#allocation0]]
  $region61: #{translation_transformer_forward.13} parent=0
    _
  %s10 = ssub.s32 1, %s8
  %s11 = scalar_select 0, %s10, %s8
  loop: start=0, step=1, limit=4
  $region2: #{translation_transformer_forward.13} parent=0 // loop_pre_header
    _
  $region3: #{translation_transformer_forward.13} parent=0 // loop_header
    %s13 = sphi 0, %s17
    %p14 = scmp.ge.s32.totalorder %s13, 4
    %s23 = sphi 0, %s25
    %s26 = sphi 0, %s23
    %s27 = sphi 0, %s26
    %s43 = sphi 0, %s27
    %s47 = sphi 0, %s47
    %s49 = sphi 0, %s47
    %s50 = sphi 0, %s49
    %s64 = sphi 0, %s50
    %s68 = sphi 0, %s68
    %s70 = sphi 0, %s68
    %s71 = sphi 0, %s70
    %s85 = sphi 0, %s71
    %s89 = sphi 0, %s89
    %s91 = sphi 0, %s89
    %s92 = sphi 0, %s91
    %s106 = sphi 0, %s92
    %s110 = sphi 0, %s110
    %s112 = sphi 0, %s110
    %s113 = sphi 0, %s112
    %s127 = sphi 0, %s113
    %s131 = sphi 0, %s131
    %s133 = sphi 0, %s131
    %s134 = sphi 0, %s133
    %s148 = sphi 0, %s134
    %s152 = sphi 0, %s152
    %s154 = sphi 0, %s152
    %s155 = sphi 0, %s154
    %s169 = sphi 0, %s155
    %s175 = sphi 0, %s177
    %s178 = sphi 0, %s175
    %s179 = sphi 0, %s178
    %s195 = sphi 0, %s179
  $region4: #{translation_transformer_forward.13} parent=0 // loop_header_branch
    %16 = sbr.rel (%p14) target = $region8
  $region5: #{translation_transformer_forward.13} parent=0 // loop_body
    %s18 = ssub.s32 %s13, 1
    %s19 = ssub.s32 %s13, 2
    %s20 = sadd.s32 %s13, 1
    %s21 = ssub.s32 %s13, %s20
    %p22 = scmp.eq.s32.totalorder %s21, 0
    %s24 = sadd.s32 %s23, 1
    %s25 = scalar_select %p22, %s23, %s24
    %p28 = pneg %p22
    %p29 = scmp.eq.s32.totalorder %s13, 1
    %p30 = por %p28, %p29
    %p31 = scmp.ne.s32.totalorder %s23, %s26
    %p32 = scmp.eq.s32.totalorder %s13, 0
    %p33 = por %p31, %p32
    %p34 = scmp.ne.s32.totalorder %s23, %s26
    %p35 = scmp.eq.s32.totalorder %s18, 1
    %p36 = por %p34, %p35
    %p37 = scmp.ne.s32.totalorder %s26, %s27
    %p38 = scmp.eq.s32.totalorder %s18, 0
    %p39 = por %p37, %p38
    %p40 = scmp.ne.s32.totalorder %s26, %s27
    %p41 = scmp.eq.s32.totalorder %s19, 1
    %p42 = por %p40, %p41
    %p44 = scmp.ne.s32.totalorder %s27, %s43
    %p45 = scmp.eq.s32.totalorder %s19, 0
    %p46 = por %p44, %p45
    %s48 = sadd.s32 %s47, 1
    %p51 = scmp.eq.s32.totalorder %s13, 1
    %p52 = scmp.ne.s32.totalorder %s47, %s49
    %p53 = scmp.eq.s32.totalorder %s13, 0
    %p54 = por %p52, %p53
    %p55 = scmp.ne.s32.totalorder %s47, %s49
    %p56 = scmp.eq.s32.totalorder %s18, 1
    %p57 = por %p55, %p56
    %p58 = scmp.ne.s32.totalorder %s49, %s50
    %p59 = scmp.eq.s32.totalorder %s18, 0
    %p60 = por %p58, %p59
    %p61 = scmp.ne.s32.totalorder %s49, %s50
    %p62 = scmp.eq.s32.totalorder %s19, 1
    %p63 = por %p61, %p62
    %p65 = scmp.ne.s32.totalorder %s50, %s64
    %p66 = scmp.eq.s32.totalorder %s19, 0
    %p67 = por %p65, %p66
    %s69 = sadd.s32 %s68, 1
    %p72 = scmp.eq.s32.totalorder %s13, 1
    %p73 = scmp.ne.s32.totalorder %s68, %s70
    %p74 = scmp.eq.s32.totalorder %s13, 0
    %p75 = por %p73, %p74
    %p76 = scmp.ne.s32.totalorder %s68, %s70
    %p77 = scmp.eq.s32.totalorder %s18, 1
    %p78 = por %p76, %p77
    %p79 = scmp.ne.s32.totalorder %s70, %s71
    %p80 = scmp.eq.s32.totalorder %s18, 0
    %p81 = por %p79, %p80
    %p82 = scmp.ne.s32.totalorder %s70, %s71
    %p83 = scmp.eq.s32.totalorder %s19, 1
    %p84 = por %p82, %p83
    %p86 = scmp.ne.s32.totalorder %s71, %s85
    %p87 = scmp.eq.s32.totalorder %s19, 0
    %p88 = por %p86, %p87
    %s90 = sadd.s32 %s89, 1
    %p93 = scmp.eq.s32.totalorder %s13, 1
    %p94 = scmp.ne.s32.totalorder %s89, %s91
    %p95 = scmp.eq.s32.totalorder %s13, 0
    %p96 = por %p94, %p95
    %p97 = scmp.ne.s32.totalorder %s89, %s91
    %p98 = scmp.eq.s32.totalorder %s18, 1
    %p99 = por %p97, %p98
    %p100 = scmp.ne.s32.totalorder %s91, %s92
    %p101 = scmp.eq.s32.totalorder %s18, 0
    %p102 = por %p100, %p101
    %p103 = scmp.ne.s32.totalorder %s91, %s92
    %p104 = scmp.eq.s32.totalorder %s19, 1
    %p105 = por %p103, %p104
    %p107 = scmp.ne.s32.totalorder %s92, %s106
    %p108 = scmp.eq.s32.totalorder %s19, 0
    %p109 = por %p107, %p108
    %s111 = sadd.s32 %s110, 1
    %p114 = scmp.eq.s32.totalorder %s13, 1
    %p115 = scmp.ne.s32.totalorder %s110, %s112
    %p116 = scmp.eq.s32.totalorder %s13, 0
    %p117 = por %p115, %p116
    %p118 = scmp.ne.s32.totalorder %s110, %s112
    %p119 = scmp.eq.s32.totalorder %s18, 1
    %p120 = por %p118, %p119
    %p121 = scmp.ne.s32.totalorder %s112, %s113
    %p122 = scmp.eq.s32.totalorder %s18, 0
    %p123 = por %p121, %p122
    %p124 = scmp.ne.s32.totalorder %s112, %s113
    %p125 = scmp.eq.s32.totalorder %s19, 1
    %p126 = por %p124, %p125
    %p128 = scmp.ne.s32.totalorder %s113, %s127
    %p129 = scmp.eq.s32.totalorder %s19, 0
    %p130 = por %p128, %p129
    %s132 = sadd.s32 %s131, 1
    %p135 = scmp.eq.s32.totalorder %s13, 1
    %p136 = scmp.ne.s32.totalorder %s131, %s133
    %p137 = scmp.eq.s32.totalorder %s13, 0
    %p138 = por %p136, %p137
    %p139 = scmp.ne.s32.totalorder %s131, %s133
    %p140 = scmp.eq.s32.totalorder %s18, 1
    %p141 = por %p139, %p140
    %p142 = scmp.ne.s32.totalorder %s133, %s134
    %p143 = scmp.eq.s32.totalorder %s18, 0
    %p144 = por %p142, %p143
    %p145 = scmp.ne.s32.totalorder %s133, %s134
    %p146 = scmp.eq.s32.totalorder %s19, 1
    %p147 = por %p145, %p146
    %p149 = scmp.ne.s32.totalorder %s134, %s148
    %p150 = scmp.eq.s32.totalorder %s19, 0
    %p151 = por %p149, %p150
    %s153 = sadd.s32 %s152, 1
    %p156 = scmp.eq.s32.totalorder %s13, 1
    %p157 = scmp.ne.s32.totalorder %s152, %s154
    %p158 = scmp.eq.s32.totalorder %s13, 0
    %p159 = por %p157, %p158
    %p160 = scmp.ne.s32.totalorder %s152, %s154
    %p161 = scmp.eq.s32.totalorder %s18, 1
    %p162 = por %p160, %p161
    %p163 = scmp.ne.s32.totalorder %s154, %s155
    %p164 = scmp.eq.s32.totalorder %s18, 0
    %p165 = por %p163, %p164
    %p166 = scmp.ne.s32.totalorder %s154, %s155
    %p167 = scmp.eq.s32.totalorder %s19, 1
    %p168 = por %p166, %p167
    %p170 = scmp.ne.s32.totalorder %s155, %s169
    %p171 = scmp.eq.s32.totalorder %s19, 0
    %p172 = por %p170, %p171
    %s173 = ssub.s32 %s13, %s20
    %p174 = scmp.eq.s32.totalorder %s173, 0
    %s176 = sadd.s32 %s175, 1
    %s177 = scalar_select %p174, %s175, %s176
    %p180 = pneg %p174
    %p181 = scmp.eq.s32.totalorder %s13, 1
    %p182 = por %p180, %p181
    %p183 = scmp.ne.s32.totalorder %s175, %s178
    %p184 = scmp.eq.s32.totalorder %s13, 0
    %p185 = por %p183, %p184
    %p186 = scmp.ne.s32.totalorder %s175, %s178
    %p187 = scmp.eq.s32.totalorder %s18, 1
    %p188 = por %p186, %p187
    %p189 = scmp.ne.s32.totalorder %s178, %s179
    %p190 = scmp.eq.s32.totalorder %s18, 0
    %p191 = por %p189, %p190
    %p192 = scmp.ne.s32.totalorder %s178, %s179
    %p193 = scmp.eq.s32.totalorder %s19, 1
    %p194 = por %p192, %p193
    %p196 = scmp.ne.s32.totalorder %s179, %s195
    %p197 = scmp.eq.s32.totalorder %s19, 0
    %p198 = por %p196, %p197
    %p199 = scmp.le.s32.totalorder 1, %s13
    %p200 = scmp.lt.s32.totalorder %s13, 3
    %p201 = pnand %p199, %p200
    %p202 = pneg %p201
    // Predicated region
    $region9: #{translation_transformer_forward.13} parent=5 // pred_check
      _
    $region10: #{translation_transformer_forward.13} parent=5 // pred_check_branch
      %204 = sbr.rel (%p201) target = $region12
    $region11: #{translation_transformer_forward.13} parent=5 // pred_region
      %s205 = ssub.s32 %s13, 1
      // Predicated region
      $region13: #{translation_transformer_forward.13} parent=11 // pred_check
        %p206 = pneg %p60
      $region14: #{translation_transformer_forward.13} parent=11 // pred_check_branch
        %208 = sbr.rel (%p206) target = $region16
      $region15: #{translation_transformer_forward.13} parent=11 // pred_region
        _
      $region16: #{translation_transformer_forward.13} parent=11 // pred_fallthru
        _
      // Predicated region
      $region17: #{translation_transformer_forward.13} parent=11 // pred_check
        %p209 = pneg %p81
      $region18: #{translation_transformer_forward.13} parent=11 // pred_check_branch
        %211 = sbr.rel (%p209) target = $region20
      $region19: #{translation_transformer_forward.13} parent=11 // pred_region
        _
      $region20: #{translation_transformer_forward.13} parent=11 // pred_fallthru
        _
      // Predicated region
      $region21: #{translation_transformer_forward.13} parent=11 // pred_check
        %p212 = pneg %p102
      $region22: #{translation_transformer_forward.13} parent=11 // pred_check_branch
        %214 = sbr.rel (%p212) target = $region24
      $region23: #{translation_transformer_forward.13} parent=11 // pred_region
        _
      $region24: #{translation_transformer_forward.13} parent=11 // pred_fallthru
        _
      // Predicated region
      $region25: #{translation_transformer_forward.13} parent=11 // pred_check
        %p215 = pneg %p123
      $region26: #{translation_transformer_forward.13} parent=11 // pred_check_branch
        %217 = sbr.rel (%p215) target = $region28
      $region27: #{translation_transformer_forward.13} parent=11 // pred_region
        _
      $region28: #{translation_transformer_forward.13} parent=11 // pred_fallthru
        _
      // Predicated region
      $region29: #{translation_transformer_forward.13} parent=11 // pred_check
        %p218 = pneg %p144
      $region30: #{translation_transformer_forward.13} parent=11 // pred_check_branch
        %220 = sbr.rel (%p218) target = $region32
      $region31: #{translation_transformer_forward.13} parent=11 // pred_region
        _
      $region32: #{translation_transformer_forward.13} parent=11 // pred_fallthru
        _
      // Predicated region
      $region33: #{translation_transformer_forward.13} parent=11 // pred_check
        %p221 = pneg %p165
      $region34: #{translation_transformer_forward.13} parent=11 // pred_check_branch
        %223 = sbr.rel (%p221) target = $region36
      $region35: #{translation_transformer_forward.13} parent=11 // pred_region
        _
      $region36: #{translation_transformer_forward.13} parent=11 // pred_fallthru
        _
    $region12: #{translation_transformer_forward.13} parent=5 // pred_fallthru
      _
    %p224 = scmp.lt.s32.totalorder %s13, 2
    // Predicated region
    $region37: #{translation_transformer_forward.13} parent=5 // pred_check
      %p225 = pneg %p224
    $region38: #{translation_transformer_forward.13} parent=5 // pred_check_branch
      %227 = sbr.rel (%p225) target = $region40
    $region39: #{translation_transformer_forward.13} parent=5 // pred_region
      // Predicated region
      $region41: #{translation_transformer_forward.13} parent=39 // pred_check
        %p228 = pneg %p33
      $region42: #{translation_transformer_forward.13} parent=39 // pred_check_branch
        %230 = sbr.rel (%p228) target = $region44
      $region43: #{translation_transformer_forward.13} parent=39 // pred_region
        %p231 = scmp.lt.s32.totalorder %s13, 1
        %s232 = scalar_select %p231, %s13, 1
        %s233 = smul.addr %s232, 8
        %s234 = scalar_lea.vmem %s0, %s233
      $region44: #{translation_transformer_forward.13} parent=39 // pred_fallthru
        _
    $region40: #{translation_transformer_forward.13} parent=5 // pred_fallthru
      _
    %p235 = scmp.le.s32.totalorder 1, %s13
    %p236 = scmp.lt.s32.totalorder %s13, 3
    %p237 = pnand %p235, %p236
    %p238 = pneg %p237
    // Predicated region
    $region45: #{translation_transformer_forward.13} parent=5 // pred_check
      _
    $region46: #{translation_transformer_forward.13} parent=5 // pred_check_branch
      %240 = sbr.rel (%p237) target = $region48
    $region47: #{translation_transformer_forward.13} parent=5 // pred_region
      %s241 = ssub.s32 %s13, 1
      %p242 = scmp.lt.s32.totalorder %s18, 1
      %s243 = scalar_select %p242, %s18, 1
      %s244 = smul.addr %s243, 8
      %s245 = scalar_lea.vmem %s0, %s244
      %p246 = pneg %p39
      %p247 = pneg %p36
      %p248 = pneg %p60
      %p249 = pneg %p57
      %p250 = pneg %p81
      %p251 = pneg %p78
      %p252 = pneg %p102
      %p253 = pneg %p99
      %p254 = pneg %p123
      %p255 = pneg %p120
      %p256 = pneg %p144
      %p257 = pneg %p141
      %p258 = pneg %p165
      %p259 = pneg %p162
      %p260 = pneg %p191
      %p261 = pneg %p188
      %p262 = scmp.lt.s32.totalorder %s18, 1
      %s263 = scalar_select %p262, %s18, 1
      %s264 = smul.addr %s263, 8
      %s265 = scalar_lea.vmem %s7, %s264
      %p266 = scmp.lt.s32.totalorder %s18, 1
      %s267 = scalar_select %p266, %s18, 1
      %s268 = smul.addr %s267, 8
      %s269 = scalar_lea.vmem %s0, %s268
      %p270 = scmp.lt.s32.totalorder %s18, 1
      %s271 = scalar_select %p270, %s18, 1
      %s272 = smul.addr %s271, 8
      %s273 = scalar_lea.vmem %s7, %s272
      %v275 = vld [vmem:[%s269] sm:$0xff]
      %v276 = vpack.c.bf16 %v275, %v275
      %v277 = vld [vmem:[%s1] sm:$0xf]
      %v278 = vld [vmem:[%s1 + $0x4] sm:$0xf]
      %v279 = vld [vmem:[%s1 + $0x8] sm:$0xf]
      %v280 = vld [vmem:[%s1 + $0xc] sm:$0xf]
      %v281 = vld [vmem:[%s2] sm:$0x1]
      %v283 = vperm.slane %v281, 0
      %v289 = vunpack.c.l.b16 %v277
      %v290 = vunpack.c.l.b16 %v278
      %v291 = vunpack.c.l.b16 %v279
      %v292 = vunpack.c.l.b16 %v280
      %v293 = vpack.c.b16 %v290, %v289
      %v294 = vpack.c.b16 %v292, %v291
      %vm297 = vcmask 261120
      %v299 = vsel %vm297, %v276, 0
      %301 = vmatpush.bf16.msra.mxu0 0
      %302 = vmatpush.bf16.msra.mxu0 0
      %303 = vmatpush.bf16.msra.mxu0 0
      %304 = vmatpush.bf16.msra.mxu0 0
      %305 = vmatpush.bf16.msra.mxu0 0
      %306 = vmatpush.bf16.msra.mxu0 0
      %307 = vmatpush.bf16.msra.mxu0 %v294
      %308 = vmatpush.bf16.msra.mxu0 %v293
      %309 = vmatmul.bf16.gmra.mxu0 %v299
      %v310 = vpop.f32.mrf.mxu0
      %v311 = vadd.f32 %v283, %v310
      %v312 = vpop.f32.mrf.mxu0
      %313 = vdwg.mxu0
      %v314 = vmul.f32 %v311, 0.25
      %v315 = vpack.c.bf16 %v314, %v314
      %v316 = vpack.c.bf16 %v311, %v311
      %318 = vrot.lane.b32.xlu0 %v316, 96
      %v319 = vpop.permute.xlu0 %318
      %vm320 = vcmask 130048
      %v322 = vsel %vm320, %v315, 0
      %v325 = vsel %vm320, %v319, 0
      %327 = vmatpush.bf16.xpose.msra.mxu0 0
      %328 = vmatpush.bf16.xpose.msra.mxu0 0
      %329 = vmatpush.bf16.xpose.msra.mxu0 0
      %330 = vmatpush.bf16.xpose.msra.mxu0 0
      %331 = vmatpush.bf16.xpose.msra.mxu0 0
      %332 = vmatpush.bf16.xpose.msra.mxu0 0
      %333 = vmatpush.bf16.xpose.msra.mxu0 0
      %334 = vmatpush.bf16.xpose.msra.mxu0 %v325
      %335 = vmatmul.bf16.gmra.mxu0 %v322
      %v336 = vpop.f32.mrf.mxu0
      %v337 = vadd.f32 0.0, %v336
      %v338 = vpop.f32.mrf.mxu0
      %339 = vdwg.mxu0
      %vm340 = vcmask 64512
      %v341 = vsel %vm340, %v337, -inf
      %342 = vmax.xlane.f32.xlu0 %v341
      %v343 = vpop.xlane.xlu0 %342
      %v344 = vsub.f32 %v337, %v343
      %v345 = vmul.f32 %v344, 1.442695
      %v346 = vpow.pop %v345
      %v347 = vsel %vm340, %v346, 0.0
      %348 = vadd.xlane.f32.xlu0 %v347
      %v349 = vpop.xlane.xlu0 %348
      %v350 = vpack.c.bf16 %v346, %v346
      %351 = vrot.lane.b32.xlu0 %v316, 64
      %v352 = vpop.permute.xlu0 %351
      %v354 = vsel %vm340, %v350, 0
      %vm356 = vcmask 1043456
      %v358 = vsel %vm356, %v352, 0
      %360 = vmatpush.bf16.msra.mxu0 0
      %361 = vmatpush.bf16.msra.mxu0 0
      %362 = vmatpush.bf16.msra.mxu0 0
      %363 = vmatpush.bf16.msra.mxu0 0
      %364 = vmatpush.bf16.msra.mxu0 0
      %365 = vmatpush.bf16.msra.mxu0 0
      %366 = vmatpush.bf16.msra.mxu0 0
      %367 = vmatpush.bf16.msra.mxu0 %v358
      %368 = vmatmul.bf16.gmra.mxu0 %v354
      %v369 = vpop.f32.mrf.mxu0
      %v370 = vadd.f32 0.0, %v369
      %v371 = vpop.f32.mrf.mxu0
      %372 = vdwg.mxu0
      %v373 = vrcp.pop %v349
      %v374 = vmul.f32 %v370, %v373
      %375 = vst.msk [vmem:[#allocation2] sm:$0xff] %vm320, %v374
      %377 = vrot.lane.b32.xlu0 %v315, 112
      %v378 = vpop.permute.xlu0 %377
      %379 = vrot.lane.b32.xlu0 %v316, 80
      %v380 = vpop.permute.xlu0 %379
      %v382 = vsel %vm320, %v378, 0
      %v385 = vsel %vm320, %v380, 0
      %387 = vmatpush.bf16.xpose.msra.mxu0 0
      %388 = vmatpush.bf16.xpose.msra.mxu0 0
      %389 = vmatpush.bf16.xpose.msra.mxu0 0
      %390 = vmatpush.bf16.xpose.msra.mxu0 0
      %391 = vmatpush.bf16.xpose.msra.mxu0 0
      %392 = vmatpush.bf16.xpose.msra.mxu0 0
      %393 = vmatpush.bf16.xpose.msra.mxu0 0
      %394 = vmatpush.bf16.xpose.msra.mxu0 %v385
      %395 = vmatmul.bf16.gmra.mxu0 %v382
      %v396 = vpop.f32.mrf.mxu0
      %v397 = vadd.f32 0.0, %v396
      %v398 = vpop.f32.mrf.mxu0
      %399 = vdwg.mxu0
      %v400 = vsel %vm340, %v397, -inf
      %401 = vmax.xlane.f32.xlu0 %v400
      %v402 = vpop.xlane.xlu0 %401
      %v403 = vsub.f32 %v397, %v402
      %v404 = vmul.f32 %v403, 1.442695
      %v405 = vpow.pop %v404
      %v406 = vsel %vm340, %v405, 0.0
      %407 = vadd.xlane.f32.xlu0 %v406
      %v408 = vpop.xlane.xlu0 %407
      %v409 = vpack.c.bf16 %v405, %v405
      %410 = vrot.lane.b32.xlu0 %v316, 48
      %v411 = vpop.permute.xlu0 %410
      %v413 = vsel %vm340, %v409, 0
      %v416 = vsel %vm356, %v411, 0
      %418 = vmatpush.bf16.msra.mxu0 0
      %419 = vmatpush.bf16.msra.mxu0 0
      %420 = vmatpush.bf16.msra.mxu0 0
      %421 = vmatpush.bf16.msra.mxu0 0
      %422 = vmatpush.bf16.msra.mxu0 0
      %423 = vmatpush.bf16.msra.mxu0 0
      %424 = vmatpush.bf16.msra.mxu0 0
      %425 = vmatpush.bf16.msra.mxu0 %v416
      %426 = vmatmul.bf16.gmra.mxu0 %v413
      %v427 = vpop.f32.mrf.mxu0
      %v428 = vadd.f32 0.0, %v427
      %v429 = vpop.f32.mrf.mxu0
      %430 = vdwg.mxu0
      %v431 = vrcp.pop %v408
      %v432 = vmul.f32 %v428, %v431
      %434 = vrot.lane.b32.xlu0 %v432, 16
      %v435 = vpop.permute.xlu0 %434
      %vm437 = vcmask 261248
      %438 = vst.msk [vmem:[#allocation2] sm:$0xff] %vm437, %v435
      %v439 = vld [vmem:[#allocation2] sm:$0xff]
      %v440 = vpack.c.bf16 %v439, %v439
      %v441 = vld [vmem:[%s3] sm:$0xf]
      %v442 = vld [vmem:[%s3 + $0x4] sm:$0xf]
      %v443 = vld [vmem:[%s3 + $0x8] sm:$0xf]
      %v444 = vld [vmem:[%s3 + $0xc] sm:$0xf]
      %v445 = vld [vmem:[%s4] sm:$0x1]
      %v447 = vperm.slane %v445, 0
      %v453 = vunpack.c.l.b16 %v441
      %v454 = vunpack.c.l.b16 %v442
      %v455 = vunpack.c.l.b16 %v443
      %v456 = vunpack.c.l.b16 %v444
      %v457 = vpack.c.b16 %v454, %v453
      %v458 = vpack.c.b16 %v456, %v455
      %v462 = vsel %vm297, %v440, 0
      %464 = vmatpush.bf16.msra.mxu0 0
      %465 = vmatpush.bf16.msra.mxu0 0
      %466 = vmatpush.bf16.msra.mxu0 0
      %467 = vmatpush.bf16.msra.mxu0 0
      %468 = vmatpush.bf16.msra.mxu0 0
      %469 = vmatpush.bf16.msra.mxu0 0
      %470 = vmatpush.bf16.msra.mxu0 %v458
      %471 = vmatpush.bf16.msra.mxu0 %v457
      %472 = vmatmul.bf16.gmra.mxu0 %v462
      %v473 = vpop.f32.mrf.mxu0
      %v474 = vadd.f32 %v447, %v473
      %v475 = vpop.f32.mrf.mxu0
      %476 = vdwg.mxu0
      %v477 = vadd.f32 %v275, %v474
      %v478 = vsel %vm297, %v477, 0.0
      %479 = vadd.xlane.f32.xlu0 %v478
      %v480 = vpop.xlane.xlu0 %479
      %v481 = vrcp.pop 32.0
      %v482 = vmul.f32 32.0, %v481
      %v483 = vsub.f32 1.0, %v482
      %v484 = vmul.f32 %v481, %v483
      %v485 = vadd.f32 %v481, %v484
      %vm486 = vweird.f32 %v481
      %v487 = vsel %vm486, %v481, %v485
      %v488 = vmul.f32 %v480, %v487
      %v489 = vsub.f32 %v477, %v488
      %v490 = vmul.f32 %v489, %v489
      %v491 = vsel %vm297, %v490, 0.0
      %492 = vadd.xlane.f32.xlu0 %v491
      %v493 = vpop.xlane.xlu0 %492
      %v494 = vmul.f32 %v493, %v487
      %v495 = vadd.f32 %v494, 1e-05
      %v496 = vrsqrt.pop %v495
      %v497 = vmul.f32 %v496, %v495
      %v498 = vmul.f32 %v497, %v496
      %v499 = vmul.f32 0.5, %v498
      %v500 = vsub.f32 1.5, %v499
      %v501 = vmul.f32 %v496, %v500
      %vm502 = vweird.f32 %v495
      %vm503 = vweird.f32 %v496
      %vm504 = vmor %vm502, %vm503
      %v505 = vsel %vm504, %v496, %v501
      %v506 = vmul.f32 %v489, %v505
      %v507 = vld [vmem:[%s5] sm:$0x1]
      %v509 = vperm.slane %v507, 0
      %v511 = vmul.f32 %v506, %v509
      %v512 = vld [vmem:[%s6] sm:$0x1]
      %v514 = vperm.slane %v512, 0
      %v516 = vadd.f32 %v511, %v514
      %517 = vst.msk [vmem:[%s273] sm:$0xff] %vm297, %v516
      %p518 = scmp.lt.s32.totalorder %s18, 1
      %s519 = scalar_select %p518, %s18, 1
      %s520 = smul.addr %s519, 8
      %s521 = scalar_lea.vmem %s7, %s520
      // Predicated region
      $region49: #{translation_transformer_forward.13} parent=47 // pred_check
        %p522 = pneg %p188
      $region50: #{translation_transformer_forward.13} parent=47 // pred_check_branch
        %524 = sbr.rel (%p522) target = $region52
      $region51: #{translation_transformer_forward.13} parent=47 // pred_region
        _
      $region52: #{translation_transformer_forward.13} parent=47 // pred_fallthru
        _
    $region48: #{translation_transformer_forward.13} parent=5 // pred_fallthru
      _
    %p525 = scmp.le.s32.totalorder 2, %s13
    // Predicated region
    $region53: #{translation_transformer_forward.13} parent=5 // pred_check
      %p526 = pneg %p525
    $region54: #{translation_transformer_forward.13} parent=5 // pred_check_branch
      %528 = sbr.rel (%p526) target = $region56
    $region55: #{translation_transformer_forward.13} parent=5 // pred_region
      %s529 = ssub.s32 %s13, 2
      // Predicated region
      $region57: #{translation_transformer_forward.13} parent=55 // pred_check
        %p530 = pneg %p194
      $region58: #{translation_transformer_forward.13} parent=55 // pred_check_branch
        %532 = sbr.rel (%p530) target = $region60
      $region59: #{translation_transformer_forward.13} parent=55 // pred_region
        %p533 = scmp.lt.s32.totalorder %s19, 1
        %s534 = scalar_select %p533, %s19, 1
        %s535 = smul.addr %s534, 8
        %s536 = scalar_lea.vmem %s7, %s535
      $region60: #{translation_transformer_forward.13} parent=55 // pred_fallthru
        _
    $region56: #{translation_transformer_forward.13} parent=5 // pred_fallthru
      _
  $region6: #{translation_transformer_forward.13} parent=0 // loop_footer
    %s17 = sadd.s32 1, %s13
  $region7: #{translation_transformer_forward.13} parent=0 // loop_footer_branch
    %12 = sbr.rel target = $region3
  $region8: #{translation_transformer_forward.13} parent=0 // loop_exit
    _

// kernel: translation_transformer_forward.11
$region0: #{translation_transformer_forward.11}
  #allocation0 [shape = 'u32[]', space=smem, size = 0x4, offset = 0x4, fixed_abs, tag = 'smem constant byte address 0x4 - core index']
  #allocation1 [shape = 'u32[72,128]{1,0:T(1,128)}', space=vmem, size = 0x9000, scoped, tag = 'internal scratch']
  #allocation2 [shape = 'f32[8,32]{1,0:T(8,128)}', space=vmem, size = 0x1000, scoped, tag = 'scratch operand']
  %s0 = inlined_call_operand.vmem [shape: f32[2,8,32], index: 0, kind: input, shape index: {}]
  %s1 = inlined_call_operand.vmem [shape: f32[2,1,32], index: 1, kind: input, shape index: {}]
  %s2 = inlined_call_operand.vmem [shape: bf16[32,96], index: 2, kind: input, shape index: {}]
  %s3 = inlined_call_operand.vmem [shape: f32[1,96], index: 3, kind: input, shape index: {}]
  %s4 = inlined_call_operand.vmem [shape: bf16[32,32], index: 4, kind: input, shape index: {}]
  %s5 = inlined_call_operand.vmem [shape: f32[1,32], index: 5, kind: input, shape index: {}]
  %s6 = inlined_call_operand.vmem [shape: f32[1,32], index: 6, kind: input, shape index: {}]
  %s7 = inlined_call_operand.vmem [shape: f32[1,32], index: 7, kind: input, shape index: {}]
  %s8 = inlined_call_operand.vmem [shape: f32[2,8,32], index: 8, kind: output, shape index: {}]
  %s9 = sld [smem:[#allocation0]]
  $region65: #{translation_transformer_forward.11} parent=0
    _
  %s11 = ssub.s32 1, %s9
  %s12 = scalar_select 0, %s11, %s9
  loop: start=0, step=1, limit=4
  $region2: #{translation_transformer_forward.11} parent=0 // loop_pre_header
    _
  $region3: #{translation_transformer_forward.11} parent=0 // loop_header
    %s14 = sphi 0, %s18
    %p15 = scmp.ge.s32.totalorder %s14, 4
    %s24 = sphi 0, %s26
    %s27 = sphi 0, %s24
    %s28 = sphi 0, %s27
    %s44 = sphi 0, %s28
    %s50 = sphi 0, %s52
    %s53 = sphi 0, %s50
    %s54 = sphi 0, %s53
    %s70 = sphi 0, %s54
    %s74 = sphi 0, %s74
    %s76 = sphi 0, %s74
    %s77 = sphi 0, %s76
    %s91 = sphi 0, %s77
    %s95 = sphi 0, %s95
    %s97 = sphi 0, %s95
    %s98 = sphi 0, %s97
    %s112 = sphi 0, %s98
    %s116 = sphi 0, %s116
    %s118 = sphi 0, %s116
    %s119 = sphi 0, %s118
    %s133 = sphi 0, %s119
    %s137 = sphi 0, %s137
    %s139 = sphi 0, %s137
    %s140 = sphi 0, %s139
    %s154 = sphi 0, %s140
    %s158 = sphi 0, %s158
    %s160 = sphi 0, %s158
    %s161 = sphi 0, %s160
    %s175 = sphi 0, %s161
    %s179 = sphi 0, %s179
    %s181 = sphi 0, %s179
    %s182 = sphi 0, %s181
    %s196 = sphi 0, %s182
    %s202 = sphi 0, %s204
    %s205 = sphi 0, %s202
    %s206 = sphi 0, %s205
    %s222 = sphi 0, %s206
  $region4: #{translation_transformer_forward.11} parent=0 // loop_header_branch
    %17 = sbr.rel (%p15) target = $region8
  $region5: #{translation_transformer_forward.11} parent=0 // loop_body
    %s19 = ssub.s32 %s14, 1
    %s20 = ssub.s32 %s14, 2
    %s21 = sadd.s32 %s14, 1
    %s22 = ssub.s32 %s14, %s21
    %p23 = scmp.eq.s32.totalorder %s22, 0
    %s25 = sadd.s32 %s24, 1
    %s26 = scalar_select %p23, %s24, %s25
    %p29 = pneg %p23
    %p30 = scmp.eq.s32.totalorder %s14, 1
    %p31 = por %p29, %p30
    %p32 = scmp.ne.s32.totalorder %s24, %s27
    %p33 = scmp.eq.s32.totalorder %s14, 0
    %p34 = por %p32, %p33
    %p35 = scmp.ne.s32.totalorder %s24, %s27
    %p36 = scmp.eq.s32.totalorder %s19, 1
    %p37 = por %p35, %p36
    %p38 = scmp.ne.s32.totalorder %s27, %s28
    %p39 = scmp.eq.s32.totalorder %s19, 0
    %p40 = por %p38, %p39
    %p41 = scmp.ne.s32.totalorder %s27, %s28
    %p42 = scmp.eq.s32.totalorder %s20, 1
    %p43 = por %p41, %p42
    %p45 = scmp.ne.s32.totalorder %s28, %s44
    %p46 = scmp.eq.s32.totalorder %s20, 0
    %p47 = por %p45, %p46
    %s48 = ssub.s32 %s14, %s21
    %p49 = scmp.eq.s32.totalorder %s48, 0
    %s51 = sadd.s32 %s50, 1
    %s52 = scalar_select %p49, %s50, %s51
    %p55 = pneg %p49
    %p56 = scmp.eq.s32.totalorder %s14, 1
    %p57 = por %p55, %p56
    %p58 = scmp.ne.s32.totalorder %s50, %s53
    %p59 = scmp.eq.s32.totalorder %s14, 0
    %p60 = por %p58, %p59
    %p61 = scmp.ne.s32.totalorder %s50, %s53
    %p62 = scmp.eq.s32.totalorder %s19, 1
    %p63 = por %p61, %p62
    %p64 = scmp.ne.s32.totalorder %s53, %s54
    %p65 = scmp.eq.s32.totalorder %s19, 0
    %p66 = por %p64, %p65
    %p67 = scmp.ne.s32.totalorder %s53, %s54
    %p68 = scmp.eq.s32.totalorder %s20, 1
    %p69 = por %p67, %p68
    %p71 = scmp.ne.s32.totalorder %s54, %s70
    %p72 = scmp.eq.s32.totalorder %s20, 0
    %p73 = por %p71, %p72
    %s75 = sadd.s32 %s74, 1
    %p78 = scmp.eq.s32.totalorder %s14, 1
    %p79 = scmp.ne.s32.totalorder %s74, %s76
    %p80 = scmp.eq.s32.totalorder %s14, 0
    %p81 = por %p79, %p80
    %p82 = scmp.ne.s32.totalorder %s74, %s76
    %p83 = scmp.eq.s32.totalorder %s19, 1
    %p84 = por %p82, %p83
    %p85 = scmp.ne.s32.totalorder %s76, %s77
    %p86 = scmp.eq.s32.totalorder %s19, 0
    %p87 = por %p85, %p86
    %p88 = scmp.ne.s32.totalorder %s76, %s77
    %p89 = scmp.eq.s32.totalorder %s20, 1
    %p90 = por %p88, %p89
    %p92 = scmp.ne.s32.totalorder %s77, %s91
    %p93 = scmp.eq.s32.totalorder %s20, 0
    %p94 = por %p92, %p93
    %s96 = sadd.s32 %s95, 1
    %p99 = scmp.eq.s32.totalorder %s14, 1
    %p100 = scmp.ne.s32.totalorder %s95, %s97
    %p101 = scmp.eq.s32.totalorder %s14, 0
    %p102 = por %p100, %p101
    %p103 = scmp.ne.s32.totalorder %s95, %s97
    %p104 = scmp.eq.s32.totalorder %s19, 1
    %p105 = por %p103, %p104
    %p106 = scmp.ne.s32.totalorder %s97, %s98
    %p107 = scmp.eq.s32.totalorder %s19, 0
    %p108 = por %p106, %p107
    %p109 = scmp.ne.s32.totalorder %s97, %s98
    %p110 = scmp.eq.s32.totalorder %s20, 1
    %p111 = por %p109, %p110
    %p113 = scmp.ne.s32.totalorder %s98, %s112
    %p114 = scmp.eq.s32.totalorder %s20, 0
    %p115 = por %p113, %p114
    %s117 = sadd.s32 %s116, 1
    %p120 = scmp.eq.s32.totalorder %s14, 1
    %p121 = scmp.ne.s32.totalorder %s116, %s118
    %p122 = scmp.eq.s32.totalorder %s14, 0
    %p123 = por %p121, %p122
    %p124 = scmp.ne.s32.totalorder %s116, %s118
    %p125 = scmp.eq.s32.totalorder %s19, 1
    %p126 = por %p124, %p125
    %p127 = scmp.ne.s32.totalorder %s118, %s119
    %p128 = scmp.eq.s32.totalorder %s19, 0
    %p129 = por %p127, %p128
    %p130 = scmp.ne.s32.totalorder %s118, %s119
    %p131 = scmp.eq.s32.totalorder %s20, 1
    %p132 = por %p130, %p131
    %p134 = scmp.ne.s32.totalorder %s119, %s133
    %p135 = scmp.eq.s32.totalorder %s20, 0
    %p136 = por %p134, %p135
    %s138 = sadd.s32 %s137, 1
    %p141 = scmp.eq.s32.totalorder %s14, 1
    %p142 = scmp.ne.s32.totalorder %s137, %s139
    %p143 = scmp.eq.s32.totalorder %s14, 0
    %p144 = por %p142, %p143
    %p145 = scmp.ne.s32.totalorder %s137, %s139
    %p146 = scmp.eq.s32.totalorder %s19, 1
    %p147 = por %p145, %p146
    %p148 = scmp.ne.s32.totalorder %s139, %s140
    %p149 = scmp.eq.s32.totalorder %s19, 0
    %p150 = por %p148, %p149
    %p151 = scmp.ne.s32.totalorder %s139, %s140
    %p152 = scmp.eq.s32.totalorder %s20, 1
    %p153 = por %p151, %p152
    %p155 = scmp.ne.s32.totalorder %s140, %s154
    %p156 = scmp.eq.s32.totalorder %s20, 0
    %p157 = por %p155, %p156
    %s159 = sadd.s32 %s158, 1
    %p162 = scmp.eq.s32.totalorder %s14, 1
    %p163 = scmp.ne.s32.totalorder %s158, %s160
    %p164 = scmp.eq.s32.totalorder %s14, 0
    %p165 = por %p163, %p164
    %p166 = scmp.ne.s32.totalorder %s158, %s160
    %p167 = scmp.eq.s32.totalorder %s19, 1
    %p168 = por %p166, %p167
    %p169 = scmp.ne.s32.totalorder %s160, %s161
    %p170 = scmp.eq.s32.totalorder %s19, 0
    %p171 = por %p169, %p170
    %p172 = scmp.ne.s32.totalorder %s160, %s161
    %p173 = scmp.eq.s32.totalorder %s20, 1
    %p174 = por %p172, %p173
    %p176 = scmp.ne.s32.totalorder %s161, %s175
    %p177 = scmp.eq.s32.totalorder %s20, 0
    %p178 = por %p176, %p177
    %s180 = sadd.s32 %s179, 1
    %p183 = scmp.eq.s32.totalorder %s14, 1
    %p184 = scmp.ne.s32.totalorder %s179, %s181
    %p185 = scmp.eq.s32.totalorder %s14, 0
    %p186 = por %p184, %p185
    %p187 = scmp.ne.s32.totalorder %s179, %s181
    %p188 = scmp.eq.s32.totalorder %s19, 1
    %p189 = por %p187, %p188
    %p190 = scmp.ne.s32.totalorder %s181, %s182
    %p191 = scmp.eq.s32.totalorder %s19, 0
    %p192 = por %p190, %p191
    %p193 = scmp.ne.s32.totalorder %s181, %s182
    %p194 = scmp.eq.s32.totalorder %s20, 1
    %p195 = por %p193, %p194
    %p197 = scmp.ne.s32.totalorder %s182, %s196
    %p198 = scmp.eq.s32.totalorder %s20, 0
    %p199 = por %p197, %p198
    %s200 = ssub.s32 %s14, %s21
    %p201 = scmp.eq.s32.totalorder %s200, 0
    %s203 = sadd.s32 %s202, 1
    %s204 = scalar_select %p201, %s202, %s203
    %p207 = pneg %p201
    %p208 = scmp.eq.s32.totalorder %s14, 1
    %p209 = por %p207, %p208
    %p210 = scmp.ne.s32.totalorder %s202, %s205
    %p211 = scmp.eq.s32.totalorder %s14, 0
    %p212 = por %p210, %p211
    %p213 = scmp.ne.s32.totalorder %s202, %s205
    %p214 = scmp.eq.s32.totalorder %s19, 1
    %p215 = por %p213, %p214
    %p216 = scmp.ne.s32.totalorder %s205, %s206
    %p217 = scmp.eq.s32.totalorder %s19, 0
    %p218 = por %p216, %p217
    %p219 = scmp.ne.s32.totalorder %s205, %s206
    %p220 = scmp.eq.s32.totalorder %s20, 1
    %p221 = por %p219, %p220
    %p223 = scmp.ne.s32.totalorder %s206, %s222
    %p224 = scmp.eq.s32.totalorder %s20, 0
    %p225 = por %p223, %p224
    %p226 = scmp.le.s32.totalorder 1, %s14
    %p227 = scmp.lt.s32.totalorder %s14, 3
    %p228 = pnand %p226, %p227
    %p229 = pneg %p228
    // Predicated region
    $region9: #{translation_transformer_forward.11} parent=5 // pred_check
      _
    $region10: #{translation_transformer_forward.11} parent=5 // pred_check_branch
      %231 = sbr.rel (%p228) target = $region12
    $region11: #{translation_transformer_forward.11} parent=5 // pred_region
      %s232 = ssub.s32 %s14, 1
      // Predicated region
      $region13: #{translation_transformer_forward.11} parent=11 // pred_check
        %p233 = pneg %p87
      $region14: #{translation_transformer_forward.11} parent=11 // pred_check_branch
        %235 = sbr.rel (%p233) target = $region16
      $region15: #{translation_transformer_forward.11} parent=11 // pred_region
        _
      $region16: #{translation_transformer_forward.11} parent=11 // pred_fallthru
        _
      // Predicated region
      $region17: #{translation_transformer_forward.11} parent=11 // pred_check
        %p236 = pneg %p108
      $region18: #{translation_transformer_forward.11} parent=11 // pred_check_branch
        %238 = sbr.rel (%p236) target = $region20
      $region19: #{translation_transformer_forward.11} parent=11 // pred_region
        _
      $region20: #{translation_transformer_forward.11} parent=11 // pred_fallthru
        _
      // Predicated region
      $region21: #{translation_transformer_forward.11} parent=11 // pred_check
        %p239 = pneg %p129
      $region22: #{translation_transformer_forward.11} parent=11 // pred_check_branch
        %241 = sbr.rel (%p239) target = $region24
      $region23: #{translation_transformer_forward.11} parent=11 // pred_region
        _
      $region24: #{translation_transformer_forward.11} parent=11 // pred_fallthru
        _
      // Predicated region
      $region25: #{translation_transformer_forward.11} parent=11 // pred_check
        %p242 = pneg %p150
      $region26: #{translation_transformer_forward.11} parent=11 // pred_check_branch
        %244 = sbr.rel (%p242) target = $region28
      $region27: #{translation_transformer_forward.11} parent=11 // pred_region
        _
      $region28: #{translation_transformer_forward.11} parent=11 // pred_fallthru
        _
      // Predicated region
      $region29: #{translation_transformer_forward.11} parent=11 // pred_check
        %p245 = pneg %p171
      $region30: #{translation_transformer_forward.11} parent=11 // pred_check_branch
        %247 = sbr.rel (%p245) target = $region32
      $region31: #{translation_transformer_forward.11} parent=11 // pred_region
        _
      $region32: #{translation_transformer_forward.11} parent=11 // pred_fallthru
        _
      // Predicated region
      $region33: #{translation_transformer_forward.11} parent=11 // pred_check
        %p248 = pneg %p192
      $region34: #{translation_transformer_forward.11} parent=11 // pred_check_branch
        %250 = sbr.rel (%p248) target = $region36
      $region35: #{translation_transformer_forward.11} parent=11 // pred_region
        _
      $region36: #{translation_transformer_forward.11} parent=11 // pred_fallthru
        _
    $region12: #{translation_transformer_forward.11} parent=5 // pred_fallthru
      _
    %p251 = scmp.lt.s32.totalorder %s14, 2
    // Predicated region
    $region37: #{translation_transformer_forward.11} parent=5 // pred_check
      %p252 = pneg %p251
    $region38: #{translation_transformer_forward.11} parent=5 // pred_check_branch
      %254 = sbr.rel (%p252) target = $region40
    $region39: #{translation_transformer_forward.11} parent=5 // pred_region
      // Predicated region
      $region41: #{translation_transformer_forward.11} parent=39 // pred_check
        %p255 = pneg %p34
      $region42: #{translation_transformer_forward.11} parent=39 // pred_check_branch
        %257 = sbr.rel (%p255) target = $region44
      $region43: #{translation_transformer_forward.11} parent=39 // pred_region
        %p258 = scmp.lt.s32.totalorder %s14, 1
        %s259 = scalar_select %p258, %s14, 1
        %s260 = smul.addr %s259, 8
        %s261 = scalar_lea.vmem %s0, %s260
      $region44: #{translation_transformer_forward.11} parent=39 // pred_fallthru
        _
      // Predicated region
      $region45: #{translation_transformer_forward.11} parent=39 // pred_check
        %p262 = pneg %p60
      $region46: #{translation_transformer_forward.11} parent=39 // pred_check_branch
        %264 = sbr.rel (%p262) target = $region48
      $region47: #{translation_transformer_forward.11} parent=39 // pred_region
        %p265 = scmp.lt.s32.totalorder %s14, 1
        %s266 = scalar_select %p265, %s14, 1
        %s267 = scalar_lea.vmem %s1, %s266
      $region48: #{translation_transformer_forward.11} parent=39 // pred_fallthru
        _
    $region40: #{translation_transformer_forward.11} parent=5 // pred_fallthru
      _
    %p268 = scmp.le.s32.totalorder 1, %s14
    %p269 = scmp.lt.s32.totalorder %s14, 3
    %p270 = pnand %p268, %p269
    %p271 = pneg %p270
    // Predicated region
    $region49: #{translation_transformer_forward.11} parent=5 // pred_check
      _
    $region50: #{translation_transformer_forward.11} parent=5 // pred_check_branch
      %273 = sbr.rel (%p270) target = $region52
    $region51: #{translation_transformer_forward.11} parent=5 // pred_region
      %s274 = ssub.s32 %s14, 1
      %p275 = scmp.lt.s32.totalorder %s19, 1
      %s276 = scalar_select %p275, %s19, 1
      %s277 = smul.addr %s276, 8
      %s278 = scalar_lea.vmem %s0, %s277
      %p279 = pneg %p40
      %p280 = pneg %p37
      %p281 = scmp.lt.s32.totalorder %s19, 1
      %s282 = scalar_select %p281, %s19, 1
      %s283 = scalar_lea.vmem %s1, %s282
      %p284 = pneg %p66
      %p285 = pneg %p63
      %p286 = pneg %p87
      %p287 = pneg %p84
      %p288 = pneg %p108
      %p289 = pneg %p105
      %p290 = pneg %p129
      %p291 = pneg %p126
      %p292 = pneg %p150
      %p293 = pneg %p147
      %p294 = pneg %p171
      %p295 = pneg %p168
      %p296 = pneg %p192
      %p297 = pneg %p189
      %p298 = pneg %p218
      %p299 = pneg %p215
      %p300 = scmp.lt.s32.totalorder %s19, 1
      %s301 = scalar_select %p300, %s19, 1
      %s302 = smul.addr %s301, 8
      %s303 = scalar_lea.vmem %s8, %s302
      %p304 = scmp.lt.s32.totalorder %s19, 1
      %s305 = scalar_select %p304, %s19, 1
      %s306 = smul.addr %s305, 8
      %s307 = scalar_lea.vmem %s0, %s306
      %p308 = scmp.lt.s32.totalorder %s19, 1
      %s309 = scalar_select %p308, %s19, 1
      %s310 = scalar_lea.vmem %s1, %s309
      %p311 = scmp.lt.s32.totalorder %s19, 1
      %s312 = scalar_select %p311, %s19, 1
      %s313 = smul.addr %s312, 8
      %s314 = scalar_lea.vmem %s8, %s313
      %v316 = vld [vmem:[%s307] sm:$0xff]
      %v317 = vmul.f32 %v316, 5.656854
      %v318 = vld [vmem:[%s310] sm:$0x1]
      %v320 = vperm.slane %v318, 0
      %v322 = vadd.f32 %v317, %v320
      %v323 = vpack.c.bf16 %v322, %v322
      %v324 = vld [vmem:[%s2] sm:$0xf]
      %v325 = vld [vmem:[%s2 + $0x4] sm:$0xf]
      %v326 = vld [vmem:[%s2 + $0x8] sm:$0xf]
      %v327 = vld [vmem:[%s2 + $0xc] sm:$0xf]
      %v328 = vld [vmem:[%s3] sm:$0x1]
      %v330 = vperm.slane %v328, 0
      %v336 = vunpack.c.l.b16 %v324
      %v337 = vunpack.c.l.b16 %v325
      %v338 = vunpack.c.l.b16 %v326
      %v339 = vunpack.c.l.b16 %v327
      %v340 = vpack.c.b16 %v337, %v336
      %v341 = vpack.c.b16 %v339, %v338
      %vm344 = vcmask 261120
      %v346 = vsel %vm344, %v323, 0
      %348 = vmatpush.bf16.msra.mxu0 0
      %349 = vmatpush.bf16.msra.mxu0 0
      %350 = vmatpush.bf16.msra.mxu0 0
      %351 = vmatpush.bf16.msra.mxu0 0
      %352 = vmatpush.bf16.msra.mxu0 0
      %353 = vmatpush.bf16.msra.mxu0 0
      %354 = vmatpush.bf16.msra.mxu0 %v341
      %355 = vmatpush.bf16.msra.mxu0 %v340
      %356 = vmatmul.bf16.gmra.mxu0 %v346
      %v357 = vpop.f32.mrf.mxu0
      %v358 = vadd.f32 %v330, %v357
      %v359 = vpop.f32.mrf.mxu0
      %360 = vdwg.mxu0
      %v361 = vmul.f32 %v358, 0.25
      %v362 = vpack.c.bf16 %v361, %v361
      %v363 = vpack.c.bf16 %v358, %v358
      %365 = vrot.lane.b32.xlu0 %v363, 96
      %v366 = vpop.permute.xlu0 %365
      %vm367 = vcmask 130048
      %v369 = vsel %vm367, %v362, 0
      %v372 = vsel %vm367, %v366, 0
      %374 = vmatpush.bf16.xpose.msra.mxu0 0
      %375 = vmatpush.bf16.xpose.msra.mxu0 0
      %376 = vmatpush.bf16.xpose.msra.mxu0 0
      %377 = vmatpush.bf16.xpose.msra.mxu0 0
      %378 = vmatpush.bf16.xpose.msra.mxu0 0
      %379 = vmatpush.bf16.xpose.msra.mxu0 0
      %380 = vmatpush.bf16.xpose.msra.mxu0 0
      %381 = vmatpush.bf16.xpose.msra.mxu0 %v372
      %382 = vmatmul.bf16.gmra.mxu0 %v369
      %v383 = vpop.f32.mrf.mxu0
      %v384 = vadd.f32 0.0, %v383
      %v385 = vpop.f32.mrf.mxu0
      %386 = vdwg.mxu0
      %vm387 = vcmask 64512
      %v388 = vsel %vm387, %v384, -inf
      %389 = vmax.xlane.f32.xlu0 %v388
      %v390 = vpop.xlane.xlu0 %389
      %v391 = vsub.f32 %v384, %v390
      %v392 = vmul.f32 %v391, 1.442695
      %v393 = vpow.pop %v392
      %v394 = vsel %vm387, %v393, 0.0
      %395 = vadd.xlane.f32.xlu0 %v394
      %v396 = vpop.xlane.xlu0 %395
      %v397 = vpack.c.bf16 %v393, %v393
      %398 = vrot.lane.b32.xlu0 %v363, 64
      %v399 = vpop.permute.xlu0 %398
      %v401 = vsel %vm387, %v397, 0
      %vm403 = vcmask 1043456
      %v405 = vsel %vm403, %v399, 0
      %407 = vmatpush.bf16.msra.mxu0 0
      %408 = vmatpush.bf16.msra.mxu0 0
      %409 = vmatpush.bf16.msra.mxu0 0
      %410 = vmatpush.bf16.msra.mxu0 0
      %411 = vmatpush.bf16.msra.mxu0 0
      %412 = vmatpush.bf16.msra.mxu0 0
      %413 = vmatpush.bf16.msra.mxu0 0
      %414 = vmatpush.bf16.msra.mxu0 %v405
      %415 = vmatmul.bf16.gmra.mxu0 %v401
      %v416 = vpop.f32.mrf.mxu0
      %v417 = vadd.f32 0.0, %v416
      %v418 = vpop.f32.mrf.mxu0
      %419 = vdwg.mxu0
      %v420 = vrcp.pop %v396
      %v421 = vmul.f32 %v417, %v420
      %422 = vst.msk [vmem:[#allocation2] sm:$0xff] %vm367, %v421
      %424 = vrot.lane.b32.xlu0 %v362, 112
      %v425 = vpop.permute.xlu0 %424
      %426 = vrot.lane.b32.xlu0 %v363, 80
      %v427 = vpop.permute.xlu0 %426
      %v429 = vsel %vm367, %v425, 0
      %v432 = vsel %vm367, %v427, 0
      %434 = vmatpush.bf16.xpose.msra.mxu0 0
      %435 = vmatpush.bf16.xpose.msra.mxu0 0
      %436 = vmatpush.bf16.xpose.msra.mxu0 0
      %437 = vmatpush.bf16.xpose.msra.mxu0 0
      %438 = vmatpush.bf16.xpose.msra.mxu0 0
      %439 = vmatpush.bf16.xpose.msra.mxu0 0
      %440 = vmatpush.bf16.xpose.msra.mxu0 0
      %441 = vmatpush.bf16.xpose.msra.mxu0 %v432
      %442 = vmatmul.bf16.gmra.mxu0 %v429
      %v443 = vpop.f32.mrf.mxu0
      %v444 = vadd.f32 0.0, %v443
      %v445 = vpop.f32.mrf.mxu0
      %446 = vdwg.mxu0
      %v447 = vsel %vm387, %v444, -inf
      %448 = vmax.xlane.f32.xlu0 %v447
      %v449 = vpop.xlane.xlu0 %448
      %v450 = vsub.f32 %v444, %v449
      %v451 = vmul.f32 %v450, 1.442695
      %v452 = vpow.pop %v451
      %v453 = vsel %vm387, %v452, 0.0
      %454 = vadd.xlane.f32.xlu0 %v453
      %v455 = vpop.xlane.xlu0 %454
      %v456 = vpack.c.bf16 %v452, %v452
      %457 = vrot.lane.b32.xlu0 %v363, 48
      %v458 = vpop.permute.xlu0 %457
      %v460 = vsel %vm387, %v456, 0
      %v463 = vsel %vm403, %v458, 0
      %465 = vmatpush.bf16.msra.mxu0 0
      %466 = vmatpush.bf16.msra.mxu0 0
      %467 = vmatpush.bf16.msra.mxu0 0
      %468 = vmatpush.bf16.msra.mxu0 0
      %469 = vmatpush.bf16.msra.mxu0 0
      %470 = vmatpush.bf16.msra.mxu0 0
      %471 = vmatpush.bf16.msra.mxu0 0
      %472 = vmatpush.bf16.msra.mxu0 %v463
      %473 = vmatmul.bf16.gmra.mxu0 %v460
      %v474 = vpop.f32.mrf.mxu0
      %v475 = vadd.f32 0.0, %v474
      %v476 = vpop.f32.mrf.mxu0
      %477 = vdwg.mxu0
      %v478 = vrcp.pop %v455
      %v479 = vmul.f32 %v475, %v478
      %481 = vrot.lane.b32.xlu0 %v479, 16
      %v482 = vpop.permute.xlu0 %481
      %vm484 = vcmask 261248
      %485 = vst.msk [vmem:[#allocation2] sm:$0xff] %vm484, %v482
      %v486 = vld [vmem:[#allocation2] sm:$0xff]
      %v487 = vpack.c.bf16 %v486, %v486
      %v488 = vld [vmem:[%s4] sm:$0xf]
      %v489 = vld [vmem:[%s4 + $0x4] sm:$0xf]
      %v490 = vld [vmem:[%s4 + $0x8] sm:$0xf]
      %v491 = vld [vmem:[%s4 + $0xc] sm:$0xf]
      %v492 = vld [vmem:[%s5] sm:$0x1]
      %v494 = vperm.slane %v492, 0
      %v500 = vunpack.c.l.b16 %v488
      %v501 = vunpack.c.l.b16 %v489
      %v502 = vunpack.c.l.b16 %v490
      %v503 = vunpack.c.l.b16 %v491
      %v504 = vpack.c.b16 %v501, %v500
      %v505 = vpack.c.b16 %v503, %v502
      %v509 = vsel %vm344, %v487, 0
      %511 = vmatpush.bf16.msra.mxu0 0
      %512 = vmatpush.bf16.msra.mxu0 0
      %513 = vmatpush.bf16.msra.mxu0 0
      %514 = vmatpush.bf16.msra.mxu0 0
      %515 = vmatpush.bf16.msra.mxu0 0
      %516 = vmatpush.bf16.msra.mxu0 0
      %517 = vmatpush.bf16.msra.mxu0 %v505
      %518 = vmatpush.bf16.msra.mxu0 %v504
      %519 = vmatmul.bf16.gmra.mxu0 %v509
      %v520 = vpop.f32.mrf.mxu0
      %v521 = vadd.f32 %v494, %v520
      %v522 = vpop.f32.mrf.mxu0
      %523 = vdwg.mxu0
      %v524 = vadd.f32 %v322, %v521
      %v525 = vsel %vm344, %v524, 0.0
      %526 = vadd.xlane.f32.xlu0 %v525
      %v527 = vpop.xlane.xlu0 %526
      %v528 = vrcp.pop 32.0
      %v529 = vmul.f32 32.0, %v528
      %v530 = vsub.f32 1.0, %v529
      %v531 = vmul.f32 %v528, %v530
      %v532 = vadd.f32 %v528, %v531
      %vm533 = vweird.f32 %v528
      %v534 = vsel %vm533, %v528, %v532
      %v535 = vmul.f32 %v527, %v534
      %v536 = vsub.f32 %v524, %v535
      %v537 = vmul.f32 %v536, %v536
      %v538 = vsel %vm344, %v537, 0.0
      %539 = vadd.xlane.f32.xlu0 %v538
      %v540 = vpop.xlane.xlu0 %539
      %v541 = vmul.f32 %v540, %v534
      %v542 = vadd.f32 %v541, 1e-05
      %v543 = vrsqrt.pop %v542
      %v544 = vmul.f32 %v543, %v542
      %v545 = vmul.f32 %v544, %v543
      %v546 = vmul.f32 0.5, %v545
      %v547 = vsub.f32 1.5, %v546
      %v548 = vmul.f32 %v543, %v547
      %vm549 = vweird.f32 %v542
      %vm550 = vweird.f32 %v543
      %vm551 = vmor %vm549, %vm550
      %v552 = vsel %vm551, %v543, %v548
      %v553 = vmul.f32 %v536, %v552
      %v554 = vld [vmem:[%s6] sm:$0x1]
      %v556 = vperm.slane %v554, 0
      %v558 = vmul.f32 %v553, %v556
      %v559 = vld [vmem:[%s7] sm:$0x1]
      %v561 = vperm.slane %v559, 0
      %v563 = vadd.f32 %v558, %v561
      %564 = vst.msk [vmem:[%s314] sm:$0xff] %vm344, %v563
      %p565 = scmp.lt.s32.totalorder %s19, 1
      %s566 = scalar_select %p565, %s19, 1
      %s567 = smul.addr %s566, 8
      %s568 = scalar_lea.vmem %s8, %s567
      // Predicated region
      $region53: #{translation_transformer_forward.11} parent=51 // pred_check
        %p569 = pneg %p215
      $region54: #{translation_transformer_forward.11} parent=51 // pred_check_branch
        %571 = sbr.rel (%p569) target = $region56
      $region55: #{translation_transformer_forward.11} parent=51 // pred_region
        _
      $region56: #{translation_transformer_forward.11} parent=51 // pred_fallthru
        _
    $region52: #{translation_transformer_forward.11} parent=5 // pred_fallthru
      _
    %p572 = scmp.le.s32.totalorder 2, %s14
    // Predicated region
    $region57: #{translation_transformer_forward.11} parent=5 // pred_check
      %p573 = pneg %p572
    $region58: #{translation_transformer_forward.11} parent=5 // pred_check_branch
      %575 = sbr.rel (%p573) target = $region60
    $region59: #{translation_transformer_forward.11} parent=5 // pred_region
      %s576 = ssub.s32 %s14, 2
      // Predicated region
      $region61: #{translation_transformer_forward.11} parent=59 // pred_check
        %p577 = pneg %p221
      $region62: #{translation_transformer_forward.11} parent=59 // pred_check_branch
        %579 = sbr.rel (%p577) target = $region64
      $region63: #{translation_transformer_forward.11} parent=59 // pred_region
        %p580 = scmp.lt.s32.totalorder %s20, 1
        %s581 = scalar_select %p580, %s20, 1
        %s582 = smul.addr %s581, 8
        %s583 = scalar_lea.vmem %s8, %s582
      $region64: #{translation_transformer_forward.11} parent=59 // pred_fallthru
        _
    $region60: #{translation_transformer_forward.11} parent=5 // pred_fallthru
      _
  $region6: #{translation_transformer_forward.11} parent=0 // loop_footer
    %s18 = sadd.s32 1, %s14
  $region7: #{translation_transformer_forward.11} parent=0 // loop_footer_branch
    %13 = sbr.rel target = $region3
  $region8: #{translation_transformer_forward.11} parent=0 // loop_exit
    _

// kernel: translation_transformer_forward.15
$region0: #{translation_transformer_forward.15}
  #allocation0 [shape = 'u32[]', space=smem, size = 0x4, offset = 0x4, fixed_abs, tag = 'smem constant byte address 0x4 - core index']
  #allocation1 [shape = 'u32[72,128]{1,0:T(1,128)}', space=vmem, size = 0x9000, scoped, tag = 'internal scratch']
  #allocation2 [shape = 'f32[7,32]{1,0:T(8,128)}', space=vmem, size = 0x1000, scoped, tag = 'scratch operand']
  %s0 = inlined_call_operand.vmem [shape: f32[2,7,32], index: 0, kind: input, shape index: {}]
  %s1 = inlined_call_operand.vmem [shape: f32[2,1,32], index: 1, kind: input, shape index: {}]
  %s2 = inlined_call_operand.vmem [shape: bf16[32,96], index: 2, kind: input, shape index: {}]
  %s3 = inlined_call_operand.vmem [shape: f32[1,96], index: 3, kind: input, shape index: {}]
  %s4 = inlined_call_operand.vmem [shape: bf16[32,32], index: 4, kind: input, shape index: {}]
  %s5 = inlined_call_operand.vmem [shape: f32[1,32], index: 5, kind: input, shape index: {}]
  %s6 = inlined_call_operand.vmem [shape: f32[1,32], index: 6, kind: input, shape index: {}]
  %s7 = inlined_call_operand.vmem [shape: f32[1,32], index: 7, kind: input, shape index: {}]
  %s8 = inlined_call_operand.vmem [shape: f32[2,7,32], index: 8, kind: output, shape index: {}]
  %s9 = sld [smem:[#allocation0]]
  $region65: #{translation_transformer_forward.15} parent=0
    _
  %s11 = ssub.s32 1, %s9
  %s12 = scalar_select 0, %s11, %s9
  loop: start=0, step=1, limit=4
  $region2: #{translation_transformer_forward.15} parent=0 // loop_pre_header
    _
  $region3: #{translation_transformer_forward.15} parent=0 // loop_header
    %s14 = sphi 0, %s18
    %p15 = scmp.ge.s32.totalorder %s14, 4
    %s24 = sphi 0, %s26
    %s27 = sphi 0, %s24
    %s28 = sphi 0, %s27
    %s44 = sphi 0, %s28
    %s50 = sphi 0, %s52
    %s53 = sphi 0, %s50
    %s54 = sphi 0, %s53
    %s70 = sphi 0, %s54
    %s74 = sphi 0, %s74
    %s76 = sphi 0, %s74
    %s77 = sphi 0, %s76
    %s91 = sphi 0, %s77
    %s95 = sphi 0, %s95
    %s97 = sphi 0, %s95
    %s98 = sphi 0, %s97
    %s112 = sphi 0, %s98
    %s116 = sphi 0, %s116
    %s118 = sphi 0, %s116
    %s119 = sphi 0, %s118
    %s133 = sphi 0, %s119
    %s137 = sphi 0, %s137
    %s139 = sphi 0, %s137
    %s140 = sphi 0, %s139
    %s154 = sphi 0, %s140
    %s158 = sphi 0, %s158
    %s160 = sphi 0, %s158
    %s161 = sphi 0, %s160
    %s175 = sphi 0, %s161
    %s179 = sphi 0, %s179
    %s181 = sphi 0, %s179
    %s182 = sphi 0, %s181
    %s196 = sphi 0, %s182
    %s202 = sphi 0, %s204
    %s205 = sphi 0, %s202
    %s206 = sphi 0, %s205
    %s222 = sphi 0, %s206
  $region4: #{translation_transformer_forward.15} parent=0 // loop_header_branch
    %17 = sbr.rel (%p15) target = $region8
  $region5: #{translation_transformer_forward.15} parent=0 // loop_body
    %s19 = ssub.s32 %s14, 1
    %s20 = ssub.s32 %s14, 2
    %s21 = sadd.s32 %s14, 1
    %s22 = ssub.s32 %s14, %s21
    %p23 = scmp.eq.s32.totalorder %s22, 0
    %s25 = sadd.s32 %s24, 1
    %s26 = scalar_select %p23, %s24, %s25
    %p29 = pneg %p23
    %p30 = scmp.eq.s32.totalorder %s14, 1
    %p31 = por %p29, %p30
    %p32 = scmp.ne.s32.totalorder %s24, %s27
    %p33 = scmp.eq.s32.totalorder %s14, 0
    %p34 = por %p32, %p33
    %p35 = scmp.ne.s32.totalorder %s24, %s27
    %p36 = scmp.eq.s32.totalorder %s19, 1
    %p37 = por %p35, %p36
    %p38 = scmp.ne.s32.totalorder %s27, %s28
    %p39 = scmp.eq.s32.totalorder %s19, 0
    %p40 = por %p38, %p39
    %p41 = scmp.ne.s32.totalorder %s27, %s28
    %p42 = scmp.eq.s32.totalorder %s20, 1
    %p43 = por %p41, %p42
    %p45 = scmp.ne.s32.totalorder %s28, %s44
    %p46 = scmp.eq.s32.totalorder %s20, 0
    %p47 = por %p45, %p46
    %s48 = ssub.s32 %s14, %s21
    %p49 = scmp.eq.s32.totalorder %s48, 0
    %s51 = sadd.s32 %s50, 1
    %s52 = scalar_select %p49, %s50, %s51
    %p55 = pneg %p49
    %p56 = scmp.eq.s32.totalorder %s14, 1
    %p57 = por %p55, %p56
    %p58 = scmp.ne.s32.totalorder %s50, %s53
    %p59 = scmp.eq.s32.totalorder %s14, 0
    %p60 = por %p58, %p59
    %p61 = scmp.ne.s32.totalorder %s50, %s53
    %p62 = scmp.eq.s32.totalorder %s19, 1
    %p63 = por %p61, %p62
    %p64 = scmp.ne.s32.totalorder %s53, %s54
    %p65 = scmp.eq.s32.totalorder %s19, 0
    %p66 = por %p64, %p65
    %p67 = scmp.ne.s32.totalorder %s53, %s54
    %p68 = scmp.eq.s32.totalorder %s20, 1
    %p69 = por %p67, %p68
    %p71 = scmp.ne.s32.totalorder %s54, %s70
    %p72 = scmp.eq.s32.totalorder %s20, 0
    %p73 = por %p71, %p72
    %s75 = sadd.s32 %s74, 1
    %p78 = scmp.eq.s32.totalorder %s14, 1
    %p79 = scmp.ne.s32.totalorder %s74, %s76
    %p80 = scmp.eq.s32.totalorder %s14, 0
    %p81 = por %p79, %p80
    %p82 = scmp.ne.s32.totalorder %s74, %s76
    %p83 = scmp.eq.s32.totalorder %s19, 1
    %p84 = por %p82, %p83
    %p85 = scmp.ne.s32.totalorder %s76, %s77
    %p86 = scmp.eq.s32.totalorder %s19, 0
    %p87 = por %p85, %p86
    %p88 = scmp.ne.s32.totalorder %s76, %s77
    %p89 = scmp.eq.s32.totalorder %s20, 1
    %p90 = por %p88, %p89
    %p92 = scmp.ne.s32.totalorder %s77, %s91
    %p93 = scmp.eq.s32.totalorder %s20, 0
    %p94 = por %p92, %p93
    %s96 = sadd.s32 %s95, 1
    %p99 = scmp.eq.s32.totalorder %s14, 1
    %p100 = scmp.ne.s32.totalorder %s95, %s97
    %p101 = scmp.eq.s32.totalorder %s14, 0
    %p102 = por %p100, %p101
    %p103 = scmp.ne.s32.totalorder %s95, %s97
    %p104 = scmp.eq.s32.totalorder %s19, 1
    %p105 = por %p103, %p104
    %p106 = scmp.ne.s32.totalorder %s97, %s98
    %p107 = scmp.eq.s32.totalorder %s19, 0
    %p108 = por %p106, %p107
    %p109 = scmp.ne.s32.totalorder %s97, %s98
    %p110 = scmp.eq.s32.totalorder %s20, 1
    %p111 = por %p109, %p110
    %p113 = scmp.ne.s32.totalorder %s98, %s112
    %p114 = scmp.eq.s32.totalorder %s20, 0
    %p115 = por %p113, %p114
    %s117 = sadd.s32 %s116, 1
    %p120 = scmp.eq.s32.totalorder %s14, 1
    %p121 = scmp.ne.s32.totalorder %s116, %s118
    %p122 = scmp.eq.s32.totalorder %s14, 0
    %p123 = por %p121, %p122
    %p124 = scmp.ne.s32.totalorder %s116, %s118
    %p125 = scmp.eq.s32.totalorder %s19, 1
    %p126 = por %p124, %p125
    %p127 = scmp.ne.s32.totalorder %s118, %s119
    %p128 = scmp.eq.s32.totalorder %s19, 0
    %p129 = por %p127, %p128
    %p130 = scmp.ne.s32.totalorder %s118, %s119
    %p131 = scmp.eq.s32.totalorder %s20, 1
    %p132 = por %p130, %p131
    %p134 = scmp.ne.s32.totalorder %s119, %s133
    %p135 = scmp.eq.s32.totalorder %s20, 0
    %p136 = por %p134, %p135
    %s138 = sadd.s32 %s137, 1
    %p141 = scmp.eq.s32.totalorder %s14, 1
    %p142 = scmp.ne.s32.totalorder %s137, %s139
    %p143 = scmp.eq.s32.totalorder %s14, 0
    %p144 = por %p142, %p143
    %p145 = scmp.ne.s32.totalorder %s137, %s139
    %p146 = scmp.eq.s32.totalorder %s19, 1
    %p147 = por %p145, %p146
    %p148 = scmp.ne.s32.totalorder %s139, %s140
    %p149 = scmp.eq.s32.totalorder %s19, 0
    %p150 = por %p148, %p149
    %p151 = scmp.ne.s32.totalorder %s139, %s140
    %p152 = scmp.eq.s32.totalorder %s20, 1
    %p153 = por %p151, %p152
    %p155 = scmp.ne.s32.totalorder %s140, %s154
    %p156 = scmp.eq.s32.totalorder %s20, 0
    %p157 = por %p155, %p156
    %s159 = sadd.s32 %s158, 1
    %p162 = scmp.eq.s32.totalorder %s14, 1
    %p163 = scmp.ne.s32.totalorder %s158, %s160
    %p164 = scmp.eq.s32.totalorder %s14, 0
    %p165 = por %p163, %p164
    %p166 = scmp.ne.s32.totalorder %s158, %s160
    %p167 = scmp.eq.s32.totalorder %s19, 1
    %p168 = por %p166, %p167
    %p169 = scmp.ne.s32.totalorder %s160, %s161
    %p170 = scmp.eq.s32.totalorder %s19, 0
    %p171 = por %p169, %p170
    %p172 = scmp.ne.s32.totalorder %s160, %s161
    %p173 = scmp.eq.s32.totalorder %s20, 1
    %p174 = por %p172, %p173
    %p176 = scmp.ne.s32.totalorder %s161, %s175
    %p177 = scmp.eq.s32.totalorder %s20, 0
    %p178 = por %p176, %p177
    %s180 = sadd.s32 %s179, 1
    %p183 = scmp.eq.s32.totalorder %s14, 1
    %p184 = scmp.ne.s32.totalorder %s179, %s181
    %p185 = scmp.eq.s32.totalorder %s14, 0
    %p186 = por %p184, %p185
    %p187 = scmp.ne.s32.totalorder %s179, %s181
    %p188 = scmp.eq.s32.totalorder %s19, 1
    %p189 = por %p187, %p188
    %p190 = scmp.ne.s32.totalorder %s181, %s182
    %p191 = scmp.eq.s32.totalorder %s19, 0
    %p192 = por %p190, %p191
    %p193 = scmp.ne.s32.totalorder %s181, %s182
    %p194 = scmp.eq.s32.totalorder %s20, 1
    %p195 = por %p193, %p194
    %p197 = scmp.ne.s32.totalorder %s182, %s196
    %p198 = scmp.eq.s32.totalorder %s20, 0
    %p199 = por %p197, %p198
    %s200 = ssub.s32 %s14, %s21
    %p201 = scmp.eq.s32.totalorder %s200, 0
    %s203 = sadd.s32 %s202, 1
    %s204 = scalar_select %p201, %s202, %s203
    %p207 = pneg %p201
    %p208 = scmp.eq.s32.totalorder %s14, 1
    %p209 = por %p207, %p208
    %p210 = scmp.ne.s32.totalorder %s202, %s205
    %p211 = scmp.eq.s32.totalorder %s14, 0
    %p212 = por %p210, %p211
    %p213 = scmp.ne.s32.totalorder %s202, %s205
    %p214 = scmp.eq.s32.totalorder %s19, 1
    %p215 = por %p213, %p214
    %p216 = scmp.ne.s32.totalorder %s205, %s206
    %p217 = scmp.eq.s32.totalorder %s19, 0
    %p218 = por %p216, %p217
    %p219 = scmp.ne.s32.totalorder %s205, %s206
    %p220 = scmp.eq.s32.totalorder %s20, 1
    %p221 = por %p219, %p220
    %p223 = scmp.ne.s32.totalorder %s206, %s222
    %p224 = scmp.eq.s32.totalorder %s20, 0
    %p225 = por %p223, %p224
    %p226 = scmp.le.s32.totalorder 1, %s14
    %p227 = scmp.lt.s32.totalorder %s14, 3
    %p228 = pnand %p226, %p227
    %p229 = pneg %p228
    // Predicated region
    $region9: #{translation_transformer_forward.15} parent=5 // pred_check
      _
    $region10: #{translation_transformer_forward.15} parent=5 // pred_check_branch
      %231 = sbr.rel (%p228) target = $region12
    $region11: #{translation_transformer_forward.15} parent=5 // pred_region
      %s232 = ssub.s32 %s14, 1
      // Predicated region
      $region13: #{translation_transformer_forward.15} parent=11 // pred_check
        %p233 = pneg %p87
      $region14: #{translation_transformer_forward.15} parent=11 // pred_check_branch
        %235 = sbr.rel (%p233) target = $region16
      $region15: #{translation_transformer_forward.15} parent=11 // pred_region
        _
      $region16: #{translation_transformer_forward.15} parent=11 // pred_fallthru
        _
      // Predicated region
      $region17: #{translation_transformer_forward.15} parent=11 // pred_check
        %p236 = pneg %p108
      $region18: #{translation_transformer_forward.15} parent=11 // pred_check_branch
        %238 = sbr.rel (%p236) target = $region20
      $region19: #{translation_transformer_forward.15} parent=11 // pred_region
        _
      $region20: #{translation_transformer_forward.15} parent=11 // pred_fallthru
        _
      // Predicated region
      $region21: #{translation_transformer_forward.15} parent=11 // pred_check
        %p239 = pneg %p129
      $region22: #{translation_transformer_forward.15} parent=11 // pred_check_branch
        %241 = sbr.rel (%p239) target = $region24
      $region23: #{translation_transformer_forward.15} parent=11 // pred_region
        _
      $region24: #{translation_transformer_forward.15} parent=11 // pred_fallthru
        _
      // Predicated region
      $region25: #{translation_transformer_forward.15} parent=11 // pred_check
        %p242 = pneg %p150
      $region26: #{translation_transformer_forward.15} parent=11 // pred_check_branch
        %244 = sbr.rel (%p242) target = $region28
      $region27: #{translation_transformer_forward.15} parent=11 // pred_region
        _
      $region28: #{translation_transformer_forward.15} parent=11 // pred_fallthru
        _
      // Predicated region
      $region29: #{translation_transformer_forward.15} parent=11 // pred_check
        %p245 = pneg %p171
      $region30: #{translation_transformer_forward.15} parent=11 // pred_check_branch
        %247 = sbr.rel (%p245) target = $region32
      $region31: #{translation_transformer_forward.15} parent=11 // pred_region
        _
      $region32: #{translation_transformer_forward.15} parent=11 // pred_fallthru
        _
      // Predicated region
      $region33: #{translation_transformer_forward.15} parent=11 // pred_check
        %p248 = pneg %p192
      $region34: #{translation_transformer_forward.15} parent=11 // pred_check_branch
        %250 = sbr.rel (%p248) target = $region36
      $region35: #{translation_transformer_forward.15} parent=11 // pred_region
        _
      $region36: #{translation_transformer_forward.15} parent=11 // pred_fallthru
        _
    $region12: #{translation_transformer_forward.15} parent=5 // pred_fallthru
      _
    %p251 = scmp.lt.s32.totalorder %s14, 2
    // Predicated region
    $region37: #{translation_transformer_forward.15} parent=5 // pred_check
      %p252 = pneg %p251
    $region38: #{translation_transformer_forward.15} parent=5 // pred_check_branch
      %254 = sbr.rel (%p252) target = $region40
    $region39: #{translation_transformer_forward.15} parent=5 // pred_region
      // Predicated region
      $region41: #{translation_transformer_forward.15} parent=39 // pred_check
        %p255 = pneg %p34
      $region42: #{translation_transformer_forward.15} parent=39 // pred_check_branch
        %257 = sbr.rel (%p255) target = $region44
      $region43: #{translation_transformer_forward.15} parent=39 // pred_region
        %p258 = scmp.lt.s32.totalorder %s14, 1
        %s259 = scalar_select %p258, %s14, 1
        %s260 = smul.addr %s259, 8
        %s261 = scalar_lea.vmem %s0, %s260
      $region44: #{translation_transformer_forward.15} parent=39 // pred_fallthru
        _
      // Predicated region
      $region45: #{translation_transformer_forward.15} parent=39 // pred_check
        %p262 = pneg %p60
      $region46: #{translation_transformer_forward.15} parent=39 // pred_check_branch
        %264 = sbr.rel (%p262) target = $region48
      $region47: #{translation_transformer_forward.15} parent=39 // pred_region
        %p265 = scmp.lt.s32.totalorder %s14, 1
        %s266 = scalar_select %p265, %s14, 1
        %s267 = scalar_lea.vmem %s1, %s266
      $region48: #{translation_transformer_forward.15} parent=39 // pred_fallthru
        _
    $region40: #{translation_transformer_forward.15} parent=5 // pred_fallthru
      _
    %p268 = scmp.le.s32.totalorder 1, %s14
    %p269 = scmp.lt.s32.totalorder %s14, 3
    %p270 = pnand %p268, %p269
    %p271 = pneg %p270
    // Predicated region
    $region49: #{translation_transformer_forward.15} parent=5 // pred_check
      _
    $region50: #{translation_transformer_forward.15} parent=5 // pred_check_branch
      %273 = sbr.rel (%p270) target = $region52
    $region51: #{translation_transformer_forward.15} parent=5 // pred_region
      %s274 = ssub.s32 %s14, 1
      %p275 = scmp.lt.s32.totalorder %s19, 1
      %s276 = scalar_select %p275, %s19, 1
      %s277 = smul.addr %s276, 8
      %s278 = scalar_lea.vmem %s0, %s277
      %p279 = pneg %p40
      %p280 = pneg %p37
      %p281 = scmp.lt.s32.totalorder %s19, 1
      %s282 = scalar_select %p281, %s19, 1
      %s283 = scalar_lea.vmem %s1, %s282
      %p284 = pneg %p66
      %p285 = pneg %p63
      %p286 = pneg %p87
      %p287 = pneg %p84
      %p288 = pneg %p108
      %p289 = pneg %p105
      %p290 = pneg %p129
      %p291 = pneg %p126
      %p292 = pneg %p150
      %p293 = pneg %p147
      %p294 = pneg %p171
      %p295 = pneg %p168
      %p296 = pneg %p192
      %p297 = pneg %p189
      %p298 = pneg %p218
      %p299 = pneg %p215
      %p300 = scmp.lt.s32.totalorder %s19, 1
      %s301 = scalar_select %p300, %s19, 1
      %s302 = smul.addr %s301, 8
      %s303 = scalar_lea.vmem %s8, %s302
      %p304 = scmp.lt.s32.totalorder %s19, 1
      %s305 = scalar_select %p304, %s19, 1
      %s306 = smul.addr %s305, 8
      %s307 = scalar_lea.vmem %s0, %s306
      %p308 = scmp.lt.s32.totalorder %s19, 1
      %s309 = scalar_select %p308, %s19, 1
      %s310 = scalar_lea.vmem %s1, %s309
      %p311 = scmp.lt.s32.totalorder %s19, 1
      %s312 = scalar_select %p311, %s19, 1
      %s313 = smul.addr %s312, 8
      %s314 = scalar_lea.vmem %s8, %s313
      %v316 = vld [vmem:[%s307] sm:$0x7f]
      %v317 = vmul.f32 %v316, 5.656854
      %v318 = vld [vmem:[%s310] sm:$0x1]
      %v320 = vperm.slane %v318, 0
      %v322 = vadd.f32 %v317, %v320
      %v323 = vpack.c.bf16 %v322, %v322
      %v324 = vld [vmem:[%s2] sm:$0xf]
      %v325 = vld [vmem:[%s2 + $0x4] sm:$0xf]
      %v326 = vld [vmem:[%s2 + $0x8] sm:$0xf]
      %v327 = vld [vmem:[%s2 + $0xc] sm:$0xf]
      %v328 = vld [vmem:[%s3] sm:$0x1]
      %v330 = vperm.slane %v328, 0
      %v336 = vunpack.c.l.b16 %v324
      %v337 = vunpack.c.l.b16 %v325
      %v338 = vunpack.c.l.b16 %v326
      %v339 = vunpack.c.l.b16 %v327
      %v340 = vpack.c.b16 %v337, %v336
      %v341 = vpack.c.b16 %v339, %v338
      %vm344 = vcmask 261120
      %v346 = vsel %vm344, %v323, 0
      %348 = vmatpush.bf16.msra.mxu0 0
      %349 = vmatpush.bf16.msra.mxu0 0
      %350 = vmatpush.bf16.msra.mxu0 0
      %351 = vmatpush.bf16.msra.mxu0 0
      %352 = vmatpush.bf16.msra.mxu0 0
      %353 = vmatpush.bf16.msra.mxu0 0
      %354 = vmatpush.bf16.msra.mxu0 %v341
      %355 = vmatpush.bf16.msra.mxu0 %v340
      %356 = vmatmul.bf16.gmra.mxu0 %v346
      %v357 = vpop.f32.mrf.mxu0
      %v358 = vadd.f32 %v330, %v357
      %v359 = vpop.f32.mrf.mxu0
      %360 = vdwg.mxu0
      %v361 = vmul.f32 %v358, 0.25
      %v362 = vpack.c.bf16 %v361, %v361
      %v363 = vpack.c.bf16 %v358, %v358
      %365 = vrot.lane.b32.xlu0 %v363, 96
      %v366 = vpop.permute.xlu0 %365
      %vm367 = vcmask 130048
      %v369 = vsel %vm367, %v362, 0
      %v372 = vsel %vm367, %v366, 0
      %374 = vmatpush.bf16.xpose.msra.mxu0 0
      %375 = vmatpush.bf16.xpose.msra.mxu0 0
      %376 = vmatpush.bf16.xpose.msra.mxu0 0
      %377 = vmatpush.bf16.xpose.msra.mxu0 0
      %378 = vmatpush.bf16.xpose.msra.mxu0 0
      %379 = vmatpush.bf16.xpose.msra.mxu0 0
      %380 = vmatpush.bf16.xpose.msra.mxu0 0
      %381 = vmatpush.bf16.xpose.msra.mxu0 %v372
      %382 = vmatmul.bf16.gmra.mxu0 %v369
      %v383 = vpop.f32.mrf.mxu0
      %v384 = vadd.f32 0.0, %v383
      %v385 = vpop.f32.mrf.mxu0
      %386 = vdwg.mxu0
      %vm387 = vcmask 55296
      %v388 = vsel %vm387, %v384, -inf
      %389 = vmax.xlane.f32.xlu0 %v388
      %v390 = vpop.xlane.xlu0 %389
      %v391 = vsub.f32 %v384, %v390
      %v392 = vmul.f32 %v391, 1.442695
      %v393 = vpow.pop %v392
      %v394 = vsel %vm387, %v393, 0.0
      %395 = vadd.xlane.f32.xlu0 %v394
      %v396 = vpop.xlane.xlu0 %395
      %v397 = vpack.c.bf16 %v393, %v393
      %398 = vrot.lane.b32.xlu0 %v363, 64
      %v399 = vpop.permute.xlu0 %398
      %vm400 = vcmask 56320
      %v402 = vsel %vm400, %v397, 0
      %vm404 = vcmask 1042432
      %vm405 = vcmask 1043456
      %v406 = vsel %vm404, 4294967295, 65535
      %v407 = vsel %vm405, %v406, 0
      %v409 = vand.u32 %v399, %v407
      %411 = vmatpush.bf16.msra.mxu0 0
      %412 = vmatpush.bf16.msra.mxu0 0
      %413 = vmatpush.bf16.msra.mxu0 0
      %414 = vmatpush.bf16.msra.mxu0 0
      %415 = vmatpush.bf16.msra.mxu0 0
      %416 = vmatpush.bf16.msra.mxu0 0
      %417 = vmatpush.bf16.msra.mxu0 0
      %418 = vmatpush.bf16.msra.mxu0 %v409
      %419 = vmatmul.bf16.gmra.mxu0 %v402
      %v420 = vpop.f32.mrf.mxu0
      %v421 = vadd.f32 0.0, %v420
      %v422 = vpop.f32.mrf.mxu0
      %423 = vdwg.mxu0
      %v424 = vrcp.pop %v396
      %v425 = vmul.f32 %v421, %v424
      %vm426 = vcmask 129024
      %427 = vst.msk [vmem:[#allocation2] sm:$0x7f] %vm426, %v425
      %429 = vrot.lane.b32.xlu0 %v362, 112
      %v430 = vpop.permute.xlu0 %429
      %431 = vrot.lane.b32.xlu0 %v363, 80
      %v432 = vpop.permute.xlu0 %431
      %v434 = vsel %vm367, %v430, 0
      %v437 = vsel %vm367, %v432, 0
      %439 = vmatpush.bf16.xpose.msra.mxu0 0
      %440 = vmatpush.bf16.xpose.msra.mxu0 0
      %441 = vmatpush.bf16.xpose.msra.mxu0 0
      %442 = vmatpush.bf16.xpose.msra.mxu0 0
      %443 = vmatpush.bf16.xpose.msra.mxu0 0
      %444 = vmatpush.bf16.xpose.msra.mxu0 0
      %445 = vmatpush.bf16.xpose.msra.mxu0 0
      %446 = vmatpush.bf16.xpose.msra.mxu0 %v437
      %447 = vmatmul.bf16.gmra.mxu0 %v434
      %v448 = vpop.f32.mrf.mxu0
      %v449 = vadd.f32 0.0, %v448
      %v450 = vpop.f32.mrf.mxu0
      %451 = vdwg.mxu0
      %v452 = vsel %vm387, %v449, -inf
      %453 = vmax.xlane.f32.xlu0 %v452
      %v454 = vpop.xlane.xlu0 %453
      %v455 = vsub.f32 %v449, %v454
      %v456 = vmul.f32 %v455, 1.442695
      %v457 = vpow.pop %v456
      %v458 = vsel %vm387, %v457, 0.0
      %459 = vadd.xlane.f32.xlu0 %v458
      %v460 = vpop.xlane.xlu0 %459
      %v461 = vpack.c.bf16 %v457, %v457
      %462 = vrot.lane.b32.xlu0 %v363, 48
      %v463 = vpop.permute.xlu0 %462
      %v465 = vsel %vm400, %v461, 0
      %v468 = vand.u32 %v463, %v407
      %470 = vmatpush.bf16.msra.mxu0 0
      %471 = vmatpush.bf16.msra.mxu0 0
      %472 = vmatpush.bf16.msra.mxu0 0
      %473 = vmatpush.bf16.msra.mxu0 0
      %474 = vmatpush.bf16.msra.mxu0 0
      %475 = vmatpush.bf16.msra.mxu0 0
      %476 = vmatpush.bf16.msra.mxu0 0
      %477 = vmatpush.bf16.msra.mxu0 %v468
      %478 = vmatmul.bf16.gmra.mxu0 %v465
      %v479 = vpop.f32.mrf.mxu0
      %v480 = vadd.f32 0.0, %v479
      %v481 = vpop.f32.mrf.mxu0
      %482 = vdwg.mxu0
      %v483 = vrcp.pop %v460
      %v484 = vmul.f32 %v480, %v483
      %486 = vrot.lane.b32.xlu0 %v484, 16
      %v487 = vpop.permute.xlu0 %486
      %vm489 = vcmask 260224
      %490 = vst.msk [vmem:[#allocation2] sm:$0x7f] %vm489, %v487
      %v491 = vld [vmem:[#allocation2] sm:$0x7f]
      %v492 = vpack.c.bf16 %v491, %v491
      %v493 = vld [vmem:[%s4] sm:$0xf]
      %v494 = vld [vmem:[%s4 + $0x4] sm:$0xf]
      %v495 = vld [vmem:[%s4 + $0x8] sm:$0xf]
      %v496 = vld [vmem:[%s4 + $0xc] sm:$0xf]
      %v497 = vld [vmem:[%s5] sm:$0x1]
      %v499 = vperm.slane %v497, 0
      %v505 = vunpack.c.l.b16 %v493
      %v506 = vunpack.c.l.b16 %v494
      %v507 = vunpack.c.l.b16 %v495
      %v508 = vunpack.c.l.b16 %v496
      %v509 = vpack.c.b16 %v506, %v505
      %v510 = vpack.c.b16 %v508, %v507
      %v514 = vsel %vm344, %v492, 0
      %516 = vmatpush.bf16.msra.mxu0 0
      %517 = vmatpush.bf16.msra.mxu0 0
      %518 = vmatpush.bf16.msra.mxu0 0
      %519 = vmatpush.bf16.msra.mxu0 0
      %520 = vmatpush.bf16.msra.mxu0 0
      %521 = vmatpush.bf16.msra.mxu0 0
      %522 = vmatpush.bf16.msra.mxu0 %v510
      %523 = vmatpush.bf16.msra.mxu0 %v509
      %524 = vmatmul.bf16.gmra.mxu0 %v514
      %v525 = vpop.f32.mrf.mxu0
      %v526 = vadd.f32 %v499, %v525
      %v527 = vpop.f32.mrf.mxu0
      %528 = vdwg.mxu0
      %v529 = vadd.f32 %v322, %v526
      %vm530 = vcmask 260096
      %v531 = vsel %vm530, %v529, 0.0
      %532 = vadd.xlane.f32.xlu0 %v531
      %v533 = vpop.xlane.xlu0 %532
      %v534 = vrcp.pop 32.0
      %v535 = vmul.f32 32.0, %v534
      %v536 = vsub.f32 1.0, %v535
      %v537 = vmul.f32 %v534, %v536
      %v538 = vadd.f32 %v534, %v537
      %vm539 = vweird.f32 %v534
      %v540 = vsel %vm539, %v534, %v538
      %v541 = vmul.f32 %v533, %v540
      %v542 = vsub.f32 %v529, %v541
      %v543 = vmul.f32 %v542, %v542
      %v544 = vsel %vm530, %v543, 0.0
      %545 = vadd.xlane.f32.xlu0 %v544
      %v546 = vpop.xlane.xlu0 %545
      %v547 = vmul.f32 %v546, %v540
      %v548 = vadd.f32 %v547, 1e-05
      %v549 = vrsqrt.pop %v548
      %v550 = vmul.f32 %v549, %v548
      %v551 = vmul.f32 %v550, %v549
      %v552 = vmul.f32 0.5, %v551
      %v553 = vsub.f32 1.5, %v552
      %v554 = vmul.f32 %v549, %v553
      %vm555 = vweird.f32 %v548
      %vm556 = vweird.f32 %v549
      %vm557 = vmor %vm555, %vm556
      %v558 = vsel %vm557, %v549, %v554
      %v559 = vmul.f32 %v542, %v558
      %v560 = vld [vmem:[%s6] sm:$0x1]
      %v562 = vperm.slane %v560, 0
      %v564 = vmul.f32 %v559, %v562
      %v565 = vld [vmem:[%s7] sm:$0x1]
      %v567 = vperm.slane %v565, 0
      %v569 = vadd.f32 %v564, %v567
      %570 = vst.msk [vmem:[%s314] sm:$0x7f] %vm530, %v569
      %p571 = scmp.lt.s32.totalorder %s19, 1
      %s572 = scalar_select %p571, %s19, 1
      %s573 = smul.addr %s572, 8
      %s574 = scalar_lea.vmem %s8, %s573
      // Predicated region
      $region53: #{translation_transformer_forward.15} parent=51 // pred_check
        %p575 = pneg %p215
      $region54: #{translation_transformer_forward.15} parent=51 // pred_check_branch
        %577 = sbr.rel (%p575) target = $region56
      $region55: #{translation_transformer_forward.15} parent=51 // pred_region
        _
      $region56: #{translation_transformer_forward.15} parent=51 // pred_fallthru
        _
    $region52: #{translation_transformer_forward.15} parent=5 // pred_fallthru
      _
    %p578 = scmp.le.s32.totalorder 2, %s14
    // Predicated region
    $region57: #{translation_transformer_forward.15} parent=5 // pred_check
      %p579 = pneg %p578
    $region58: #{translation_transformer_forward.15} parent=5 // pred_check_branch
      %581 = sbr.rel (%p579) target = $region60
    $region59: #{translation_transformer_forward.15} parent=5 // pred_region
      %s582 = ssub.s32 %s14, 2
      // Predicated region
      $region61: #{translation_transformer_forward.15} parent=59 // pred_check
        %p583 = pneg %p221
      $region62: #{translation_transformer_forward.15} parent=59 // pred_check_branch
        %585 = sbr.rel (%p583) target = $region64
      $region63: #{translation_transformer_forward.15} parent=59 // pred_region
        %p586 = scmp.lt.s32.totalorder %s20, 1
        %s587 = scalar_select %p586, %s20, 1
        %s588 = smul.addr %s587, 8
        %s589 = scalar_lea.vmem %s8, %s588
      $region64: #{translation_transformer_forward.15} parent=59 // pred_fallthru
        _
    $region60: #{translation_transformer_forward.15} parent=5 // pred_fallthru
      _
  $region6: #{translation_transformer_forward.15} parent=0 // loop_footer
    %s18 = sadd.s32 1, %s14
  $region7: #{translation_transformer_forward.15} parent=0 // loop_footer_branch
    %13 = sbr.rel target = $region3
  $region8: #{translation_transformer_forward.15} parent=0 // loop_exit
    _

// kernel: translation_transformer_forward.12
$region0: #{translation_transformer_forward.12}
  #allocation0 [shape = 'u32[]', space=smem, size = 0x4, offset = 0x4, fixed_abs, tag = 'smem constant byte address 0x4 - core index']
  #allocation1 [shape = 'u32[72,128]{1,0:T(1,128)}', space=vmem, size = 0x9000, scoped, tag = 'internal scratch']
  %s0 = inlined_call_operand.vmem [shape: f32[16,32], index: 0, kind: input, shape index: {}]
  %s1 = inlined_call_operand.vmem [shape: bf16[32,64], index: 1, kind: input, shape index: {}]
  %s2 = inlined_call_operand.vmem [shape: f32[1,64], index: 2, kind: input, shape index: {}]
  %s3 = inlined_call_operand.vmem [shape: bf16[64,32], index: 3, kind: input, shape index: {}]
  %s4 = inlined_call_operand.vmem [shape: f32[1,32], index: 4, kind: input, shape index: {}]
  %s5 = inlined_call_operand.vmem [shape: f32[1,32], index: 5, kind: input, shape index: {}]
  %s6 = inlined_call_operand.vmem [shape: f32[1,32], index: 6, kind: input, shape index: {}]
  %s7 = inlined_call_operand.vmem [shape: f32[16,32], index: 7, kind: output, shape index: {}]
  %s8 = sld [smem:[#allocation0]]
  $region38: #{translation_transformer_forward.12} parent=0
    _
  %s10 = ssub.s32 1, %s8
  %s11 = scalar_select 0, %s10, %s8
  // Predicated region
  $region2: #{translation_transformer_forward.12} parent=0 // pred_check
    _
  $region3: #{translation_transformer_forward.12} parent=0 // pred_check_branch
    %13 = sbr.rel (0) target = $region5
  $region4: #{translation_transformer_forward.12} parent=0 // pred_region
    _
  $region5: #{translation_transformer_forward.12} parent=0 // pred_fallthru
    _
  // Predicated region
  $region6: #{translation_transformer_forward.12} parent=0 // pred_check
    _
  $region7: #{translation_transformer_forward.12} parent=0 // pred_check_branch
    %15 = sbr.rel (0) target = $region9
  $region8: #{translation_transformer_forward.12} parent=0 // pred_region
    _
  $region9: #{translation_transformer_forward.12} parent=0 // pred_fallthru
    _
  // Predicated region
  $region10: #{translation_transformer_forward.12} parent=0 // pred_check
    _
  $region11: #{translation_transformer_forward.12} parent=0 // pred_check_branch
    %17 = sbr.rel (0) target = $region13
  $region12: #{translation_transformer_forward.12} parent=0 // pred_region
    _
  $region13: #{translation_transformer_forward.12} parent=0 // pred_fallthru
    _
  // Predicated region
  $region14: #{translation_transformer_forward.12} parent=0 // pred_check
    _
  $region15: #{translation_transformer_forward.12} parent=0 // pred_check_branch
    %19 = sbr.rel (0) target = $region17
  $region16: #{translation_transformer_forward.12} parent=0 // pred_region
    _
  $region17: #{translation_transformer_forward.12} parent=0 // pred_fallthru
    _
  // Predicated region
  $region18: #{translation_transformer_forward.12} parent=0 // pred_check
    _
  $region19: #{translation_transformer_forward.12} parent=0 // pred_check_branch
    %21 = sbr.rel (0) target = $region21
  $region20: #{translation_transformer_forward.12} parent=0 // pred_region
    _
  $region21: #{translation_transformer_forward.12} parent=0 // pred_fallthru
    _
  // Predicated region
  $region22: #{translation_transformer_forward.12} parent=0 // pred_check
    _
  $region23: #{translation_transformer_forward.12} parent=0 // pred_check_branch
    %23 = sbr.rel (0) target = $region25
  $region24: #{translation_transformer_forward.12} parent=0 // pred_region
    _
  $region25: #{translation_transformer_forward.12} parent=0 // pred_fallthru
    _
  // Predicated region
  $region26: #{translation_transformer_forward.12} parent=0 // pred_check
    _
  $region27: #{translation_transformer_forward.12} parent=0 // pred_check_branch
    %25 = sbr.rel (0) target = $region29
  $region28: #{translation_transformer_forward.12} parent=0 // pred_region
    _
  $region29: #{translation_transformer_forward.12} parent=0 // pred_fallthru
    _
  %v27 = vld [vmem:[%s0] sm:$0xff]
  %v28 = vld [vmem:[%s0 + $0x8] sm:$0xff]
  %v29 = vpack.c.bf16 %v28, %v27
  %v30 = vld [vmem:[%s1] sm:$0xf]
  %v31 = vld [vmem:[%s1 + $0x4] sm:$0xf]
  %v32 = vld [vmem:[%s1 + $0x8] sm:$0xf]
  %v33 = vld [vmem:[%s1 + $0xc] sm:$0xf]
  %v34 = vld [vmem:[%s2] sm:$0x1]
  %v36 = vperm.slane %v34, 0
  %v42 = vunpack.c.l.b16 %v30
  %v43 = vunpack.c.l.b16 %v31
  %v44 = vunpack.c.l.b16 %v32
  %v45 = vunpack.c.l.b16 %v33
  %v46 = vpack.c.b16 %v43, %v42
  %v47 = vpack.c.b16 %v45, %v44
  %vm50 = vcmask 261120
  %v52 = vsel %vm50, %v29, 0
  %54 = vmatpush.bf16.msra.mxu0 0
  %55 = vmatpush.bf16.msra.mxu0 0
  %56 = vmatpush.bf16.msra.mxu0 0
  %57 = vmatpush.bf16.msra.mxu0 0
  %58 = vmatpush.bf16.msra.mxu0 0
  %59 = vmatpush.bf16.msra.mxu0 0
  %60 = vmatpush.bf16.msra.mxu0 %v47
  %61 = vmatpush.bf16.msra.mxu0 %v46
  %62 = vmatmul.bf16.gmra.mxu0 %v52
  %v63 = vpop.f32.mrf.mxu0
  %v64 = vadd.f32 %v36, %v63
  %v65 = vpop.f32.mrf.mxu0
  %v66 = vadd.f32 %v36, %v65
  %67 = vdwg.mxu0
  %v68 = vmax.f32 %v64, 0.0
  %v69 = vmax.f32 %v66, 0.0
  %v70 = vpack.c.bf16 %v69, %v68
  %v71 = vld [vmem:[%s3] sm:$0xf]
  %v72 = vld [vmem:[%s3 + $0x4] sm:$0xf]
  %v73 = vld [vmem:[%s3 + $0x8] sm:$0xf]
  %v74 = vld [vmem:[%s3 + $0xc] sm:$0xf]
  %v75 = vld [vmem:[%s3 + $0x10] sm:$0xf]
  %v76 = vld [vmem:[%s3 + $0x14] sm:$0xf]
  %v77 = vld [vmem:[%s3 + $0x18] sm:$0xf]
  %v78 = vld [vmem:[%s3 + $0x1c] sm:$0xf]
  %v79 = vld [vmem:[%s4] sm:$0x1]
  %v81 = vperm.slane %v79, 0
  %v91 = vunpack.c.l.b16 %v71
  %v92 = vunpack.c.l.b16 %v72
  %v93 = vunpack.c.l.b16 %v73
  %v94 = vunpack.c.l.b16 %v74
  %v95 = vunpack.c.l.b16 %v75
  %v96 = vunpack.c.l.b16 %v76
  %v97 = vunpack.c.l.b16 %v77
  %v98 = vunpack.c.l.b16 %v78
  %v99 = vpack.c.b16 %v92, %v91
  %v100 = vpack.c.b16 %v94, %v93
  %v101 = vpack.c.b16 %v96, %v95
  %v102 = vpack.c.b16 %v98, %v97
  %vm107 = vcmask 523264
  %v109 = vsel %vm107, %v70, 0
  %111 = vmatpush.bf16.msra.mxu0 0
  %112 = vmatpush.bf16.msra.mxu0 0
  %113 = vmatpush.bf16.msra.mxu0 0
  %114 = vmatpush.bf16.msra.mxu0 0
  %115 = vmatpush.bf16.msra.mxu0 %v102
  %116 = vmatpush.bf16.msra.mxu0 %v101
  %117 = vmatpush.bf16.msra.mxu0 %v100
  %118 = vmatpush.bf16.msra.mxu0 %v99
  %119 = vmatmul.bf16.gmra.mxu0 %v109
  %v120 = vpop.f32.mrf.mxu0
  %v121 = vadd.f32 %v81, %v120
  %v122 = vpop.f32.mrf.mxu0
  %v123 = vadd.f32 %v81, %v122
  %124 = vdwg.mxu0
  %v125 = vadd.f32 %v27, %v121
  %v126 = vadd.f32 %v28, %v123
  %v127 = vsel %vm50, %v125, 0.0
  %128 = vadd.xlane.f32.xlu0 %v127
  %v129 = vpop.xlane.xlu0 %128
  %v130 = vsel %vm50, %v126, 0.0
  %131 = vadd.xlane.f32.xlu0 %v130
  %v132 = vpop.xlane.xlu0 %131
  %v133 = vrcp.pop 32.0
  %v134 = vmul.f32 32.0, %v133
  %v135 = vsub.f32 1.0, %v134
  %v136 = vmul.f32 %v133, %v135
  %v137 = vadd.f32 %v133, %v136
  %vm138 = vweird.f32 %v133
  %v139 = vsel %vm138, %v133, %v137
  %v140 = vmul.f32 %v129, %v139
  %v141 = vmul.f32 %v132, %v139
  %v142 = vsub.f32 %v125, %v140
  %v143 = vsub.f32 %v126, %v141
  %v144 = vmul.f32 %v142, %v142
  %v145 = vmul.f32 %v143, %v143
  %v146 = vsel %vm50, %v144, 0.0
  %147 = vadd.xlane.f32.xlu0 %v146
  %v148 = vpop.xlane.xlu0 %147
  %v149 = vsel %vm50, %v145, 0.0
  %150 = vadd.xlane.f32.xlu0 %v149
  %v151 = vpop.xlane.xlu0 %150
  %v152 = vmul.f32 %v148, %v139
  %v153 = vmul.f32 %v151, %v139
  %v154 = vadd.f32 %v152, 1e-05
  %v155 = vadd.f32 %v153, 1e-05
  %v156 = vrsqrt.pop %v154
  %v157 = vmul.f32 %v156, %v154
  %v158 = vmul.f32 %v157, %v156
  %v159 = vmul.f32 0.5, %v158
  %v160 = vsub.f32 1.5, %v159
  %v161 = vmul.f32 %v156, %v160
  %vm162 = vweird.f32 %v154
  %vm163 = vweird.f32 %v156
  %vm164 = vmor %vm162, %vm163
  %v165 = vsel %vm164, %v156, %v161
  %v166 = vrsqrt.pop %v155
  %v167 = vmul.f32 %v166, %v155
  %v168 = vmul.f32 %v167, %v166
  %v169 = vmul.f32 0.5, %v168
  %v170 = vsub.f32 1.5, %v169
  %v171 = vmul.f32 %v166, %v170
  %vm172 = vweird.f32 %v155
  %vm173 = vweird.f32 %v166
  %vm174 = vmor %vm172, %vm173
  %v175 = vsel %vm174, %v166, %v171
  %v176 = vmul.f32 %v142, %v165
  %v177 = vmul.f32 %v143, %v175
  %v178 = vld [vmem:[%s5] sm:$0x1]
  %v180 = vperm.slane %v178, 0
  %v182 = vmul.f32 %v176, %v180
  %v183 = vmul.f32 %v177, %v180
  %v184 = vld [vmem:[%s6] sm:$0x1]
  %v186 = vperm.slane %v184, 0
  %v188 = vadd.f32 %v182, %v186
  %v189 = vadd.f32 %v183, %v186
  %190 = vst.msk [vmem:[%s7] sm:$0xff] %vm50, %v188
  %191 = vst.msk [vmem:[%s7 + $0x8] sm:$0xff] %vm50, %v189
  // Predicated region
  $region30: #{translation_transformer_forward.12} parent=0 // pred_check
    _
  $region31: #{translation_transformer_forward.12} parent=0 // pred_check_branch
    %193 = sbr.rel (0) target = $region33
  $region32: #{translation_transformer_forward.12} parent=0 // pred_region
    _
  $region33: #{translation_transformer_forward.12} parent=0 // pred_fallthru
    _
  // Predicated region
  $region34: #{translation_transformer_forward.12} parent=0 // pred_check
    _
  $region35: #{translation_transformer_forward.12} parent=0 // pred_check_branch
    %195 = sbr.rel (0) target = $region37
  $region36: #{translation_transformer_forward.12} parent=0 // pred_region
    _
  $region37: #{translation_transformer_forward.12} parent=0 // pred_fallthru
    _

// kernel: translation_transformer_forward.17
$region0: #{translation_transformer_forward.17}
  #allocation0 [shape = 'u32[]', space=smem, size = 0x4, offset = 0x4, fixed_abs, tag = 'smem constant byte address 0x4 - core index']
  #allocation1 [shape = 'u32[72,128]{1,0:T(1,128)}', space=vmem, size = 0x9000, scoped, tag = 'internal scratch']
  %s0 = inlined_call_operand.vmem [shape: f32[14,32], index: 0, kind: input, shape index: {}]
  %s1 = inlined_call_operand.vmem [shape: bf16[32,64], index: 1, kind: input, shape index: {}]
  %s2 = inlined_call_operand.vmem [shape: f32[1,64], index: 2, kind: input, shape index: {}]
  %s3 = inlined_call_operand.vmem [shape: bf16[64,32], index: 3, kind: input, shape index: {}]
  %s4 = inlined_call_operand.vmem [shape: f32[1,32], index: 4, kind: input, shape index: {}]
  %s5 = inlined_call_operand.hbm [shape: f32[1,32], index: 5, kind: input, shape index: {}]
  %s6 = inlined_call_operand.hbm [shape: f32[1,32], index: 6, kind: input, shape index: {}]
  %s7 = inlined_call_operand.vmem [shape: f32[14,32], index: 7, kind: output, shape index: {}]
  %s8 = sld [smem:[#allocation0]]
  $region46: #{translation_transformer_forward.17} parent=0
    _
  %s10 = ssub.s32 1, %s8
  %s11 = scalar_select 0, %s10, %s8
  $region1: #{translation_transformer_forward.17} parent=0
    #allocation2 [shape = 'u8[512]{0}', space=vmem, size = 0x400, scoped, tag = 'input window, operand 5, single buffered']
    #allocation3 [shape = 's32[1]{0}', space=sflag, size = 0x4, scoped, tag = 'scoped memory for translation_transformer_forward.17']
    #allocation4 [shape = 'u8[512]{0}', space=vmem, size = 0x400, scoped, tag = 'input window, operand 6, single buffered']
    #allocation5 [shape = 's32[1]{0}', space=sflag, size = 0x4, scoped, tag = 'scoped memory for translation_transformer_forward.17']
    %12 = vsyncpa [#allocation3], 0
    %13 = vsyncpa [#allocation5], 0
    // Predicated region
    $region2: #{translation_transformer_forward.17} parent=1 // pred_check
      _
    $region3: #{translation_transformer_forward.17} parent=1 // pred_check_branch
      %15 = sbr.rel (0) target = $region5
    $region4: #{translation_transformer_forward.17} parent=1 // pred_region
      _
    $region5: #{translation_transformer_forward.17} parent=1 // pred_fallthru
      _
    // Predicated region
    $region6: #{translation_transformer_forward.17} parent=1 // pred_check
      _
    $region7: #{translation_transformer_forward.17} parent=1 // pred_check_branch
      %17 = sbr.rel (0) target = $region9
    $region8: #{translation_transformer_forward.17} parent=1 // pred_region
      _
    $region9: #{translation_transformer_forward.17} parent=1 // pred_fallthru
      _
    // Predicated region
    $region10: #{translation_transformer_forward.17} parent=1 // pred_check
      _
    $region11: #{translation_transformer_forward.17} parent=1 // pred_check_branch
      %19 = sbr.rel (0) target = $region13
    $region12: #{translation_transformer_forward.17} parent=1 // pred_region
      _
    $region13: #{translation_transformer_forward.17} parent=1 // pred_fallthru
      _
    // Predicated region
    $region14: #{translation_transformer_forward.17} parent=1 // pred_check
      _
    $region15: #{translation_transformer_forward.17} parent=1 // pred_check_branch
      %21 = sbr.rel (0) target = $region17
    $region16: #{translation_transformer_forward.17} parent=1 // pred_region
      _
    $region17: #{translation_transformer_forward.17} parent=1 // pred_fallthru
      _
    // Predicated region
    $region18: #{translation_transformer_forward.17} parent=1 // pred_check
      _
    $region19: #{translation_transformer_forward.17} parent=1 // pred_check_branch
      %23 = sbr.rel (0) target = $region21
    $region20: #{translation_transformer_forward.17} parent=1 // pred_region
      _
    $region21: #{translation_transformer_forward.17} parent=1 // pred_fallthru
      _
    // Predicated region
    $region22: #{translation_transformer_forward.17} parent=1 // pred_check
      _
    $region23: #{translation_transformer_forward.17} parent=1 // pred_check_branch
      %25 = sbr.rel (0) target = $region25
    $region24: #{translation_transformer_forward.17} parent=1 // pred_region
      %27 = vsyncadd [#allocation3], 0
      %s29 = sshll.u32 %s5, 4
      %s30 = int_to_ptr.hbm [resolvable:$true] %s29
      %s31 = sshll.u32 [#allocation2], 4
      %s32 = int_to_ptr.vmem [resolvable:$true] %s31
      %34 = dma.hbm_to_vmem [thread:$0]  %s30, 16, %s32, [#allocation3]
    $region25: #{translation_transformer_forward.17} parent=1 // pred_fallthru
      _
    // Predicated region
    $region26: #{translation_transformer_forward.17} parent=1 // pred_check
      _
    $region27: #{translation_transformer_forward.17} parent=1 // pred_check_branch
      %36 = sbr.rel (0) target = $region29
    $region28: #{translation_transformer_forward.17} parent=1 // pred_region
      %38 = vsyncadd [#allocation5], 0
      %s40 = sshll.u32 %s6, 4
      %s41 = int_to_ptr.hbm [resolvable:$true] %s40
      %s42 = sshll.u32 [#allocation4], 4
      %s43 = int_to_ptr.vmem [resolvable:$true] %s42
      %45 = dma.hbm_to_vmem [thread:$0]  %s41, 16, %s43, [#allocation5]
    $region29: #{translation_transformer_forward.17} parent=1 // pred_fallthru
      _
    // Predicated region
    $region30: #{translation_transformer_forward.17} parent=1 // pred_check
      _
    $region31: #{translation_transformer_forward.17} parent=1 // pred_check_branch
      %47 = sbr.rel (0) target = $region33
    $region32: #{translation_transformer_forward.17} parent=1 // pred_region
      %49 = dma.done [#allocation3], 16
    $region33: #{translation_transformer_forward.17} parent=1 // pred_fallthru
      _
    // Predicated region
    $region34: #{translation_transformer_forward.17} parent=1 // pred_check
      _
    $region35: #{translation_transformer_forward.17} parent=1 // pred_check_branch
      %51 = sbr.rel (0) target = $region37
    $region36: #{translation_transformer_forward.17} parent=1 // pred_region
      %53 = dma.done [#allocation5], 16
    $region37: #{translation_transformer_forward.17} parent=1 // pred_fallthru
      _
    %v55 = vld [vmem:[%s0] sm:$0xff]
    %v56 = vld [vmem:[%s0 + $0x8] sm:$0x3f]
    %v57 = vpack.c.bf16 %v56, %v55
    %v58 = vld [vmem:[%s1] sm:$0xf]
    %v59 = vld [vmem:[%s1 + $0x4] sm:$0xf]
    %v60 = vld [vmem:[%s1 + $0x8] sm:$0xf]
    %v61 = vld [vmem:[%s1 + $0xc] sm:$0xf]
    %v62 = vld [vmem:[%s2] sm:$0x1]
    %v64 = vperm.slane %v62, 0
    %v70 = vunpack.c.l.b16 %v58
    %v71 = vunpack.c.l.b16 %v59
    %v72 = vunpack.c.l.b16 %v60
    %v73 = vunpack.c.l.b16 %v61
    %v74 = vpack.c.b16 %v71, %v70
    %v75 = vpack.c.b16 %v73, %v72
    %vm78 = vcmask 261120
    %v80 = vsel %vm78, %v57, 0
    %82 = vmatpush.bf16.msra.mxu0 0
    %83 = vmatpush.bf16.msra.mxu0 0
    %84 = vmatpush.bf16.msra.mxu0 0
    %85 = vmatpush.bf16.msra.mxu0 0
    %86 = vmatpush.bf16.msra.mxu0 0
    %87 = vmatpush.bf16.msra.mxu0 0
    %88 = vmatpush.bf16.msra.mxu0 %v75
    %89 = vmatpush.bf16.msra.mxu0 %v74
    %90 = vmatmul.bf16.gmra.mxu0 %v80
    %v91 = vpop.f32.mrf.mxu0
    %v92 = vadd.f32 %v64, %v91
    %v93 = vpop.f32.mrf.mxu0
    %v94 = vadd.f32 %v64, %v93
    %95 = vdwg.mxu0
    %v96 = vmax.f32 %v92, 0.0
    %v97 = vmax.f32 %v94, 0.0
    %v98 = vpack.c.bf16 %v97, %v96
    %v99 = vld [vmem:[%s3] sm:$0xf]
    %v100 = vld [vmem:[%s3 + $0x4] sm:$0xf]
    %v101 = vld [vmem:[%s3 + $0x8] sm:$0xf]
    %v102 = vld [vmem:[%s3 + $0xc] sm:$0xf]
    %v103 = vld [vmem:[%s3 + $0x10] sm:$0xf]
    %v104 = vld [vmem:[%s3 + $0x14] sm:$0xf]
    %v105 = vld [vmem:[%s3 + $0x18] sm:$0xf]
    %v106 = vld [vmem:[%s3 + $0x1c] sm:$0xf]
    %v107 = vld [vmem:[%s4] sm:$0x1]
    %v109 = vperm.slane %v107, 0
    %v119 = vunpack.c.l.b16 %v99
    %v120 = vunpack.c.l.b16 %v100
    %v121 = vunpack.c.l.b16 %v101
    %v122 = vunpack.c.l.b16 %v102
    %v123 = vunpack.c.l.b16 %v103
    %v124 = vunpack.c.l.b16 %v104
    %v125 = vunpack.c.l.b16 %v105
    %v126 = vunpack.c.l.b16 %v106
    %v127 = vpack.c.b16 %v120, %v119
    %v128 = vpack.c.b16 %v122, %v121
    %v129 = vpack.c.b16 %v124, %v123
    %v130 = vpack.c.b16 %v126, %v125
    %vm135 = vcmask 523264
    %v137 = vsel %vm135, %v98, 0
    %139 = vmatpush.bf16.msra.mxu0 0
    %140 = vmatpush.bf16.msra.mxu0 0
    %141 = vmatpush.bf16.msra.mxu0 0
    %142 = vmatpush.bf16.msra.mxu0 0
    %143 = vmatpush.bf16.msra.mxu0 %v130
    %144 = vmatpush.bf16.msra.mxu0 %v129
    %145 = vmatpush.bf16.msra.mxu0 %v128
    %146 = vmatpush.bf16.msra.mxu0 %v127
    %147 = vmatmul.bf16.gmra.mxu0 %v137
    %v148 = vpop.f32.mrf.mxu0
    %v149 = vadd.f32 %v109, %v148
    %v150 = vpop.f32.mrf.mxu0
    %v151 = vadd.f32 %v109, %v150
    %152 = vdwg.mxu0
    %v153 = vadd.f32 %v55, %v149
    %v154 = vadd.f32 %v56, %v151
    %v155 = vsel %vm78, %v153, 0.0
    %156 = vadd.xlane.f32.xlu0 %v155
    %v157 = vpop.xlane.xlu0 %156
    %vm158 = vcmask 259072
    %v159 = vsel %vm158, %v154, 0.0
    %160 = vadd.xlane.f32.xlu0 %v159
    %v161 = vpop.xlane.xlu0 %160
    %v162 = vrcp.pop 32.0
    %v163 = vmul.f32 32.0, %v162
    %v164 = vsub.f32 1.0, %v163
    %v165 = vmul.f32 %v162, %v164
    %v166 = vadd.f32 %v162, %v165
    %vm167 = vweird.f32 %v162
    %v168 = vsel %vm167, %v162, %v166
    %v169 = vmul.f32 %v157, %v168
    %v170 = vmul.f32 %v161, %v168
    %v171 = vsub.f32 %v153, %v169
    %v172 = vsub.f32 %v154, %v170
    %v173 = vmul.f32 %v171, %v171
    %v174 = vmul.f32 %v172, %v172
    %v175 = vsel %vm78, %v173, 0.0
    %176 = vadd.xlane.f32.xlu0 %v175
    %v177 = vpop.xlane.xlu0 %176
    %v178 = vsel %vm158, %v174, 0.0
    %179 = vadd.xlane.f32.xlu0 %v178
    %v180 = vpop.xlane.xlu0 %179
    %v181 = vmul.f32 %v177, %v168
    %v182 = vmul.f32 %v180, %v168
    %v183 = vadd.f32 %v181, 1e-05
    %v184 = vadd.f32 %v182, 1e-05
    %v185 = vrsqrt.pop %v183
    %v186 = vmul.f32 %v185, %v183
    %v187 = vmul.f32 %v186, %v185
    %v188 = vmul.f32 0.5, %v187
    %v189 = vsub.f32 1.5, %v188
    %v190 = vmul.f32 %v185, %v189
    %vm191 = vweird.f32 %v183
    %vm192 = vweird.f32 %v185
    %vm193 = vmor %vm191, %vm192
    %v194 = vsel %vm193, %v185, %v190
    %v195 = vrsqrt.pop %v184
    %v196 = vmul.f32 %v195, %v184
    %v197 = vmul.f32 %v196, %v195
    %v198 = vmul.f32 0.5, %v197
    %v199 = vsub.f32 1.5, %v198
    %v200 = vmul.f32 %v195, %v199
    %vm201 = vweird.f32 %v184
    %vm202 = vweird.f32 %v195
    %vm203 = vmor %vm201, %vm202
    %v204 = vsel %vm203, %v195, %v200
    %v205 = vmul.f32 %v171, %v194
    %v206 = vmul.f32 %v172, %v204
    %v207 = vld [vmem:[#allocation2] sm:$0x1]
    %v209 = vperm.slane %v207, 0
    %v211 = vmul.f32 %v205, %v209
    %v212 = vmul.f32 %v206, %v209
    %v213 = vld [vmem:[#allocation4] sm:$0x1]
    %v215 = vperm.slane %v213, 0
    %v217 = vadd.f32 %v211, %v215
    %v218 = vadd.f32 %v212, %v215
    %219 = vst.msk [vmem:[%s7] sm:$0xff] %vm78, %v217
    %220 = vst.msk [vmem:[%s7 + $0x8] sm:$0x3f] %vm158, %v218
    // Predicated region
    $region38: #{translation_transformer_forward.17} parent=1 // pred_check
      _
    $region39: #{translation_transformer_forward.17} parent=1 // pred_check_branch
      %222 = sbr.rel (0) target = $region41
    $region40: #{translation_transformer_forward.17} parent=1 // pred_region
      _
    $region41: #{translation_transformer_forward.17} parent=1 // pred_fallthru
      _
    // Predicated region
    $region42: #{translation_transformer_forward.17} parent=1 // pred_check
      _
    $region43: #{translation_transformer_forward.17} parent=1 // pred_check_branch
      %224 = sbr.rel (0) target = $region45
    $region44: #{translation_transformer_forward.17} parent=1 // pred_region
      _
    $region45: #{translation_transformer_forward.17} parent=1 // pred_fallthru
      _
    %225 = vsyncpa [#allocation3], 1
    %226 = vsyncpa [#allocation5], 1

// kernel: translation_transformer_forward.14
$region0: #{translation_transformer_forward.14}
  #allocation0 [shape = 'u32[]', space=smem, size = 0x4, offset = 0x4, fixed_abs, tag = 'smem constant byte address 0x4 - core index']
  #allocation1 [shape = 'u32[72,128]{1,0:T(1,128)}', space=vmem, size = 0x9000, scoped, tag = 'internal scratch']
  %s0 = inlined_call_operand.vmem [shape: f32[16,32], index: 0, kind: input, shape index: {}]
  %s1 = inlined_call_operand.vmem [shape: bf16[32,64], index: 1, kind: input, shape index: {}]
  %s2 = inlined_call_operand.vmem [shape: f32[1,64], index: 2, kind: input, shape index: {}]
  %s3 = inlined_call_operand.vmem [shape: bf16[64,32], index: 3, kind: input, shape index: {}]
  %s4 = inlined_call_operand.vmem [shape: f32[1,32], index: 4, kind: input, shape index: {}]
  %s5 = inlined_call_operand.vmem [shape: f32[1,32], index: 5, kind: input, shape index: {}]
  %s6 = inlined_call_operand.vmem [shape: f32[1,32], index: 6, kind: input, shape index: {}]
  %s7 = inlined_call_operand.vmem [shape: f32[1,32], index: 7, kind: input, shape index: {}]
  %s8 = inlined_call_operand.vmem [shape: f32[1,32], index: 8, kind: input, shape index: {}]
  %s9 = inlined_call_operand.vmem [shape: f32[16,32], index: 9, kind: output, shape index: {}]
  %s10 = sld [smem:[#allocation0]]
  $region46: #{translation_transformer_forward.14} parent=0
    _
  %s12 = ssub.s32 1, %s10
  %s13 = scalar_select 0, %s12, %s10
  // Predicated region
  $region2: #{translation_transformer_forward.14} parent=0 // pred_check
    _
  $region3: #{translation_transformer_forward.14} parent=0 // pred_check_branch
    %15 = sbr.rel (0) target = $region5
  $region4: #{translation_transformer_forward.14} parent=0 // pred_region
    _
  $region5: #{translation_transformer_forward.14} parent=0 // pred_fallthru
    _
  // Predicated region
  $region6: #{translation_transformer_forward.14} parent=0 // pred_check
    _
  $region7: #{translation_transformer_forward.14} parent=0 // pred_check_branch
    %17 = sbr.rel (0) target = $region9
  $region8: #{translation_transformer_forward.14} parent=0 // pred_region
    _
  $region9: #{translation_transformer_forward.14} parent=0 // pred_fallthru
    _
  // Predicated region
  $region10: #{translation_transformer_forward.14} parent=0 // pred_check
    _
  $region11: #{translation_transformer_forward.14} parent=0 // pred_check_branch
    %19 = sbr.rel (0) target = $region13
  $region12: #{translation_transformer_forward.14} parent=0 // pred_region
    _
  $region13: #{translation_transformer_forward.14} parent=0 // pred_fallthru
    _
  // Predicated region
  $region14: #{translation_transformer_forward.14} parent=0 // pred_check
    _
  $region15: #{translation_transformer_forward.14} parent=0 // pred_check_branch
    %21 = sbr.rel (0) target = $region17
  $region16: #{translation_transformer_forward.14} parent=0 // pred_region
    _
  $region17: #{translation_transformer_forward.14} parent=0 // pred_fallthru
    _
  // Predicated region
  $region18: #{translation_transformer_forward.14} parent=0 // pred_check
    _
  $region19: #{translation_transformer_forward.14} parent=0 // pred_check_branch
    %23 = sbr.rel (0) target = $region21
  $region20: #{translation_transformer_forward.14} parent=0 // pred_region
    _
  $region21: #{translation_transformer_forward.14} parent=0 // pred_fallthru
    _
  // Predicated region
  $region22: #{translation_transformer_forward.14} parent=0 // pred_check
    _
  $region23: #{translation_transformer_forward.14} parent=0 // pred_check_branch
    %25 = sbr.rel (0) target = $region25
  $region24: #{translation_transformer_forward.14} parent=0 // pred_region
    _
  $region25: #{translation_transformer_forward.14} parent=0 // pred_fallthru
    _
  // Predicated region
  $region26: #{translation_transformer_forward.14} parent=0 // pred_check
    _
  $region27: #{translation_transformer_forward.14} parent=0 // pred_check_branch
    %27 = sbr.rel (0) target = $region29
  $region28: #{translation_transformer_forward.14} parent=0 // pred_region
    _
  $region29: #{translation_transformer_forward.14} parent=0 // pred_fallthru
    _
  // Predicated region
  $region30: #{translation_transformer_forward.14} parent=0 // pred_check
    _
  $region31: #{translation_transformer_forward.14} parent=0 // pred_check_branch
    %29 = sbr.rel (0) target = $region33
  $region32: #{translation_transformer_forward.14} parent=0 // pred_region
    _
  $region33: #{translation_transformer_forward.14} parent=0 // pred_fallthru
    _
  // Predicated region
  $region34: #{translation_transformer_forward.14} parent=0 // pred_check
    _
  $region35: #{translation_transformer_forward.14} parent=0 // pred_check_branch
    %31 = sbr.rel (0) target = $region37
  $region36: #{translation_transformer_forward.14} parent=0 // pred_region
    _
  $region37: #{translation_transformer_forward.14} parent=0 // pred_fallthru
    _
  %v33 = vld [vmem:[%s0] sm:$0xff]
  %v34 = vld [vmem:[%s0 + $0x8] sm:$0xff]
  %v35 = vpack.c.bf16 %v34, %v33
  %v36 = vld [vmem:[%s1] sm:$0xf]
  %v37 = vld [vmem:[%s1 + $0x4] sm:$0xf]
  %v38 = vld [vmem:[%s1 + $0x8] sm:$0xf]
  %v39 = vld [vmem:[%s1 + $0xc] sm:$0xf]
  %v40 = vld [vmem:[%s2] sm:$0x1]
  %v42 = vperm.slane %v40, 0
  %v48 = vunpack.c.l.b16 %v36
  %v49 = vunpack.c.l.b16 %v37
  %v50 = vunpack.c.l.b16 %v38
  %v51 = vunpack.c.l.b16 %v39
  %v52 = vpack.c.b16 %v49, %v48
  %v53 = vpack.c.b16 %v51, %v50
  %vm56 = vcmask 261120
  %v58 = vsel %vm56, %v35, 0
  %60 = vmatpush.bf16.msra.mxu0 0
  %61 = vmatpush.bf16.msra.mxu0 0
  %62 = vmatpush.bf16.msra.mxu0 0
  %63 = vmatpush.bf16.msra.mxu0 0
  %64 = vmatpush.bf16.msra.mxu0 0
  %65 = vmatpush.bf16.msra.mxu0 0
  %66 = vmatpush.bf16.msra.mxu0 %v53
  %67 = vmatpush.bf16.msra.mxu0 %v52
  %68 = vmatmul.bf16.gmra.mxu0 %v58
  %v69 = vpop.f32.mrf.mxu0
  %v70 = vadd.f32 %v42, %v69
  %v71 = vpop.f32.mrf.mxu0
  %v72 = vadd.f32 %v42, %v71
  %73 = vdwg.mxu0
  %v74 = vmax.f32 %v70, 0.0
  %v75 = vmax.f32 %v72, 0.0
  %v76 = vpack.c.bf16 %v75, %v74
  %v77 = vld [vmem:[%s3] sm:$0xf]
  %v78 = vld [vmem:[%s3 + $0x4] sm:$0xf]
  %v79 = vld [vmem:[%s3 + $0x8] sm:$0xf]
  %v80 = vld [vmem:[%s3 + $0xc] sm:$0xf]
  %v81 = vld [vmem:[%s3 + $0x10] sm:$0xf]
  %v82 = vld [vmem:[%s3 + $0x14] sm:$0xf]
  %v83 = vld [vmem:[%s3 + $0x18] sm:$0xf]
  %v84 = vld [vmem:[%s3 + $0x1c] sm:$0xf]
  %v85 = vld [vmem:[%s4] sm:$0x1]
  %v87 = vperm.slane %v85, 0
  %v97 = vunpack.c.l.b16 %v77
  %v98 = vunpack.c.l.b16 %v78
  %v99 = vunpack.c.l.b16 %v79
  %v100 = vunpack.c.l.b16 %v80
  %v101 = vunpack.c.l.b16 %v81
  %v102 = vunpack.c.l.b16 %v82
  %v103 = vunpack.c.l.b16 %v83
  %v104 = vunpack.c.l.b16 %v84
  %v105 = vpack.c.b16 %v98, %v97
  %v106 = vpack.c.b16 %v100, %v99
  %v107 = vpack.c.b16 %v102, %v101
  %v108 = vpack.c.b16 %v104, %v103
  %vm113 = vcmask 523264
  %v115 = vsel %vm113, %v76, 0
  %117 = vmatpush.bf16.msra.mxu0 0
  %118 = vmatpush.bf16.msra.mxu0 0
  %119 = vmatpush.bf16.msra.mxu0 0
  %120 = vmatpush.bf16.msra.mxu0 0
  %121 = vmatpush.bf16.msra.mxu0 %v108
  %122 = vmatpush.bf16.msra.mxu0 %v107
  %123 = vmatpush.bf16.msra.mxu0 %v106
  %124 = vmatpush.bf16.msra.mxu0 %v105
  %125 = vmatmul.bf16.gmra.mxu0 %v115
  %v126 = vpop.f32.mrf.mxu0
  %v127 = vadd.f32 %v87, %v126
  %v128 = vpop.f32.mrf.mxu0
  %v129 = vadd.f32 %v87, %v128
  %130 = vdwg.mxu0
  %v131 = vadd.f32 %v33, %v127
  %v132 = vadd.f32 %v34, %v129
  %v133 = vsel %vm56, %v131, 0.0
  %134 = vadd.xlane.f32.xlu0 %v133
  %v135 = vpop.xlane.xlu0 %134
  %v136 = vsel %vm56, %v132, 0.0
  %137 = vadd.xlane.f32.xlu0 %v136
  %v138 = vpop.xlane.xlu0 %137
  %v139 = vrcp.pop 32.0
  %v140 = vmul.f32 32.0, %v139
  %v141 = vsub.f32 1.0, %v140
  %v142 = vmul.f32 %v139, %v141
  %v143 = vadd.f32 %v139, %v142
  %vm144 = vweird.f32 %v139
  %v145 = vsel %vm144, %v139, %v143
  %v146 = vmul.f32 %v135, %v145
  %v147 = vmul.f32 %v138, %v145
  %v148 = vsub.f32 %v131, %v146
  %v149 = vsub.f32 %v132, %v147
  %v150 = vmul.f32 %v148, %v148
  %v151 = vmul.f32 %v149, %v149
  %v152 = vsel %vm56, %v150, 0.0
  %153 = vadd.xlane.f32.xlu0 %v152
  %v154 = vpop.xlane.xlu0 %153
  %v155 = vsel %vm56, %v151, 0.0
  %156 = vadd.xlane.f32.xlu0 %v155
  %v157 = vpop.xlane.xlu0 %156
  %v158 = vmul.f32 %v154, %v145
  %v159 = vmul.f32 %v157, %v145
  %v160 = vadd.f32 %v158, 1e-05
  %v161 = vadd.f32 %v159, 1e-05
  %v162 = vrsqrt.pop %v160
  %v163 = vmul.f32 %v162, %v160
  %v164 = vmul.f32 %v163, %v162
  %v165 = vmul.f32 0.5, %v164
  %v166 = vsub.f32 1.5, %v165
  %v167 = vmul.f32 %v162, %v166
  %vm168 = vweird.f32 %v160
  %vm169 = vweird.f32 %v162
  %vm170 = vmor %vm168, %vm169
  %v171 = vsel %vm170, %v162, %v167
  %v172 = vrsqrt.pop %v161
  %v173 = vmul.f32 %v172, %v161
  %v174 = vmul.f32 %v173, %v172
  %v175 = vmul.f32 0.5, %v174
  %v176 = vsub.f32 1.5, %v175
  %v177 = vmul.f32 %v172, %v176
  %vm178 = vweird.f32 %v161
  %vm179 = vweird.f32 %v172
  %vm180 = vmor %vm178, %vm179
  %v181 = vsel %vm180, %v172, %v177
  %v182 = vmul.f32 %v148, %v171
  %v183 = vmul.f32 %v149, %v181
  %v184 = vld [vmem:[%s5] sm:$0x1]
  %v186 = vperm.slane %v184, 0
  %v188 = vmul.f32 %v182, %v186
  %v189 = vmul.f32 %v183, %v186
  %v190 = vld [vmem:[%s6] sm:$0x1]
  %v192 = vperm.slane %v190, 0
  %v194 = vadd.f32 %v188, %v192
  %v195 = vadd.f32 %v189, %v192
  %v196 = vsel %vm56, %v194, 0.0
  %197 = vadd.xlane.f32.xlu0 %v196
  %v198 = vpop.xlane.xlu0 %197
  %v199 = vsel %vm56, %v195, 0.0
  %200 = vadd.xlane.f32.xlu0 %v199
  %v201 = vpop.xlane.xlu0 %200
  %v202 = vmul.f32 %v198, %v145
  %v203 = vmul.f32 %v201, %v145
  %v204 = vsub.f32 %v194, %v202
  %v205 = vsub.f32 %v195, %v203
  %v206 = vmul.f32 %v204, %v204
  %v207 = vmul.f32 %v205, %v205
  %v208 = vsel %vm56, %v206, 0.0
  %209 = vadd.xlane.f32.xlu0 %v208
  %v210 = vpop.xlane.xlu0 %209
  %v211 = vsel %vm56, %v207, 0.0
  %212 = vadd.xlane.f32.xlu0 %v211
  %v213 = vpop.xlane.xlu0 %212
  %v214 = vmul.f32 %v210, %v145
  %v215 = vmul.f32 %v213, %v145
  %v216 = vadd.f32 %v214, 1e-05
  %v217 = vadd.f32 %v215, 1e-05
  %v218 = vrsqrt.pop %v216
  %v219 = vmul.f32 %v218, %v216
  %v220 = vmul.f32 %v219, %v218
  %v221 = vmul.f32 0.5, %v220
  %v222 = vsub.f32 1.5, %v221
  %v223 = vmul.f32 %v218, %v222
  %vm224 = vweird.f32 %v216
  %vm225 = vweird.f32 %v218
  %vm226 = vmor %vm224, %vm225
  %v227 = vsel %vm226, %v218, %v223
  %v228 = vrsqrt.pop %v217
  %v229 = vmul.f32 %v228, %v217
  %v230 = vmul.f32 %v229, %v228
  %v231 = vmul.f32 0.5, %v230
  %v232 = vsub.f32 1.5, %v231
  %v233 = vmul.f32 %v228, %v232
  %vm234 = vweird.f32 %v217
  %vm235 = vweird.f32 %v228
  %vm236 = vmor %vm234, %vm235
  %v237 = vsel %vm236, %v228, %v233
  %v238 = vmul.f32 %v204, %v227
  %v239 = vmul.f32 %v205, %v237
  %v240 = vld [vmem:[%s7] sm:$0x1]
  %v242 = vperm.slane %v240, 0
  %v244 = vmul.f32 %v238, %v242
  %v245 = vmul.f32 %v239, %v242
  %v246 = vld [vmem:[%s8] sm:$0x1]
  %v248 = vperm.slane %v246, 0
  %v250 = vadd.f32 %v244, %v248
  %v251 = vadd.f32 %v245, %v248
  %252 = vst.msk [vmem:[%s9] sm:$0xff] %vm56, %v250
  %253 = vst.msk [vmem:[%s9 + $0x8] sm:$0xff] %vm56, %v251
  // Predicated region
  $region38: #{translation_transformer_forward.14} parent=0 // pred_check
    _
  $region39: #{translation_transformer_forward.14} parent=0 // pred_check_branch
    %255 = sbr.rel (0) target = $region41
  $region40: #{translation_transformer_forward.14} parent=0 // pred_region
    _
  $region41: #{translation_transformer_forward.14} parent=0 // pred_fallthru
    _
  // Predicated region
  $region42: #{translation_transformer_forward.14} parent=0 // pred_check
    _
  $region43: #{translation_transformer_forward.14} parent=0 // pred_check_branch
    %257 = sbr.rel (0) target = $region45
  $region44: #{translation_transformer_forward.14} parent=0 // pred_region
    _
  $region45: #{translation_transformer_forward.14} parent=0 // pred_fallthru
    _

// kernel: translation_transformer_forward.16
$region0: #{translation_transformer_forward.16}
  #allocation0 [shape = 'u32[]', space=smem, size = 0x4, offset = 0x4, fixed_abs, tag = 'smem constant byte address 0x4 - core index']
  #allocation1 [shape = 'u32[72,128]{1,0:T(1,128)}', space=vmem, size = 0x9000, scoped, tag = 'internal scratch']
  #allocation2 [shape = 'f32[7,32]{1,0:T(8,128)}', space=vmem, size = 0x1000, scoped, tag = 'scratch operand']
  %s0 = inlined_call_operand.vmem [shape: f32[2,7,32], index: 0, kind: input, shape index: {}]
  %s1 = inlined_call_operand.vmem [shape: f32[2,8,32], index: 1, kind: input, shape index: {}]
  %s2 = inlined_call_operand.vmem [shape: bf16[32,32], index: 2, kind: input, shape index: {}]
  %s3 = inlined_call_operand.vmem [shape: f32[1,32], index: 3, kind: input, shape index: {}]
  %s4 = inlined_call_operand.vmem [shape: bf16[32,64], index: 4, kind: input, shape index: {}]
  %s5 = inlined_call_operand.vmem [shape: f32[1,64], index: 5, kind: input, shape index: {}]
  %s6 = inlined_call_operand.vmem [shape: bf16[32,32], index: 6, kind: input, shape index: {}]
  %s7 = inlined_call_operand.vmem [shape: f32[1,32], index: 7, kind: input, shape index: {}]
  %s8 = inlined_call_operand.vmem [shape: f32[1,32], index: 8, kind: input, shape index: {}]
  %s9 = inlined_call_operand.vmem [shape: f32[1,32], index: 9, kind: input, shape index: {}]
  %s10 = inlined_call_operand.vmem [shape: f32[2,7,32], index: 10, kind: output, shape index: {}]
  %s11 = sld [smem:[#allocation0]]
  $region73: #{translation_transformer_forward.16} parent=0
    _
  %s13 = ssub.s32 1, %s11
  %s14 = scalar_select 0, %s13, %s11
  loop: start=0, step=1, limit=4
  $region2: #{translation_transformer_forward.16} parent=0 // loop_pre_header
    _
  $region3: #{translation_transformer_forward.16} parent=0 // loop_header
    %s16 = sphi 0, %s20
    %p17 = scmp.ge.s32.totalorder %s16, 4
    %s26 = sphi 0, %s28
    %s29 = sphi 0, %s26
    %s30 = sphi 0, %s29
    %s46 = sphi 0, %s30
    %s52 = sphi 0, %s54
    %s55 = sphi 0, %s52
    %s56 = sphi 0, %s55
    %s72 = sphi 0, %s56
    %s76 = sphi 0, %s76
    %s78 = sphi 0, %s76
    %s79 = sphi 0, %s78
    %s93 = sphi 0, %s79
    %s97 = sphi 0, %s97
    %s99 = sphi 0, %s97
    %s100 = sphi 0, %s99
    %s114 = sphi 0, %s100
    %s118 = sphi 0, %s118
    %s120 = sphi 0, %s118
    %s121 = sphi 0, %s120
    %s135 = sphi 0, %s121
    %s139 = sphi 0, %s139
    %s141 = sphi 0, %s139
    %s142 = sphi 0, %s141
    %s156 = sphi 0, %s142
    %s160 = sphi 0, %s160
    %s162 = sphi 0, %s160
    %s163 = sphi 0, %s162
    %s177 = sphi 0, %s163
    %s181 = sphi 0, %s181
    %s183 = sphi 0, %s181
    %s184 = sphi 0, %s183
    %s198 = sphi 0, %s184
    %s202 = sphi 0, %s202
    %s204 = sphi 0, %s202
    %s205 = sphi 0, %s204
    %s219 = sphi 0, %s205
    %s223 = sphi 0, %s223
    %s225 = sphi 0, %s223
    %s226 = sphi 0, %s225
    %s240 = sphi 0, %s226
    %s246 = sphi 0, %s248
    %s249 = sphi 0, %s246
    %s250 = sphi 0, %s249
    %s266 = sphi 0, %s250
  $region4: #{translation_transformer_forward.16} parent=0 // loop_header_branch
    %19 = sbr.rel (%p17) target = $region8
  $region5: #{translation_transformer_forward.16} parent=0 // loop_body
    %s21 = ssub.s32 %s16, 1
    %s22 = ssub.s32 %s16, 2
    %s23 = sadd.s32 %s16, 1
    %s24 = ssub.s32 %s16, %s23
    %p25 = scmp.eq.s32.totalorder %s24, 0
    %s27 = sadd.s32 %s26, 1
    %s28 = scalar_select %p25, %s26, %s27
    %p31 = pneg %p25
    %p32 = scmp.eq.s32.totalorder %s16, 1
    %p33 = por %p31, %p32
    %p34 = scmp.ne.s32.totalorder %s26, %s29
    %p35 = scmp.eq.s32.totalorder %s16, 0
    %p36 = por %p34, %p35
    %p37 = scmp.ne.s32.totalorder %s26, %s29
    %p38 = scmp.eq.s32.totalorder %s21, 1
    %p39 = por %p37, %p38
    %p40 = scmp.ne.s32.totalorder %s29, %s30
    %p41 = scmp.eq.s32.totalorder %s21, 0
    %p42 = por %p40, %p41
    %p43 = scmp.ne.s32.totalorder %s29, %s30
    %p44 = scmp.eq.s32.totalorder %s22, 1
    %p45 = por %p43, %p44
    %p47 = scmp.ne.s32.totalorder %s30, %s46
    %p48 = scmp.eq.s32.totalorder %s22, 0
    %p49 = por %p47, %p48
    %s50 = ssub.s32 %s16, %s23
    %p51 = scmp.eq.s32.totalorder %s50, 0
    %s53 = sadd.s32 %s52, 1
    %s54 = scalar_select %p51, %s52, %s53
    %p57 = pneg %p51
    %p58 = scmp.eq.s32.totalorder %s16, 1
    %p59 = por %p57, %p58
    %p60 = scmp.ne.s32.totalorder %s52, %s55
    %p61 = scmp.eq.s32.totalorder %s16, 0
    %p62 = por %p60, %p61
    %p63 = scmp.ne.s32.totalorder %s52, %s55
    %p64 = scmp.eq.s32.totalorder %s21, 1
    %p65 = por %p63, %p64
    %p66 = scmp.ne.s32.totalorder %s55, %s56
    %p67 = scmp.eq.s32.totalorder %s21, 0
    %p68 = por %p66, %p67
    %p69 = scmp.ne.s32.totalorder %s55, %s56
    %p70 = scmp.eq.s32.totalorder %s22, 1
    %p71 = por %p69, %p70
    %p73 = scmp.ne.s32.totalorder %s56, %s72
    %p74 = scmp.eq.s32.totalorder %s22, 0
    %p75 = por %p73, %p74
    %s77 = sadd.s32 %s76, 1
    %p80 = scmp.eq.s32.totalorder %s16, 1
    %p81 = scmp.ne.s32.totalorder %s76, %s78
    %p82 = scmp.eq.s32.totalorder %s16, 0
    %p83 = por %p81, %p82
    %p84 = scmp.ne.s32.totalorder %s76, %s78
    %p85 = scmp.eq.s32.totalorder %s21, 1
    %p86 = por %p84, %p85
    %p87 = scmp.ne.s32.totalorder %s78, %s79
    %p88 = scmp.eq.s32.totalorder %s21, 0
    %p89 = por %p87, %p88
    %p90 = scmp.ne.s32.totalorder %s78, %s79
    %p91 = scmp.eq.s32.totalorder %s22, 1
    %p92 = por %p90, %p91
    %p94 = scmp.ne.s32.totalorder %s79, %s93
    %p95 = scmp.eq.s32.totalorder %s22, 0
    %p96 = por %p94, %p95
    %s98 = sadd.s32 %s97, 1
    %p101 = scmp.eq.s32.totalorder %s16, 1
    %p102 = scmp.ne.s32.totalorder %s97, %s99
    %p103 = scmp.eq.s32.totalorder %s16, 0
    %p104 = por %p102, %p103
    %p105 = scmp.ne.s32.totalorder %s97, %s99
    %p106 = scmp.eq.s32.totalorder %s21, 1
    %p107 = por %p105, %p106
    %p108 = scmp.ne.s32.totalorder %s99, %s100
    %p109 = scmp.eq.s32.totalorder %s21, 0
    %p110 = por %p108, %p109
    %p111 = scmp.ne.s32.totalorder %s99, %s100
    %p112 = scmp.eq.s32.totalorder %s22, 1
    %p113 = por %p111, %p112
    %p115 = scmp.ne.s32.totalorder %s100, %s114
    %p116 = scmp.eq.s32.totalorder %s22, 0
    %p117 = por %p115, %p116
    %s119 = sadd.s32 %s118, 1
    %p122 = scmp.eq.s32.totalorder %s16, 1
    %p123 = scmp.ne.s32.totalorder %s118, %s120
    %p124 = scmp.eq.s32.totalorder %s16, 0
    %p125 = por %p123, %p124
    %p126 = scmp.ne.s32.totalorder %s118, %s120
    %p127 = scmp.eq.s32.totalorder %s21, 1
    %p128 = por %p126, %p127
    %p129 = scmp.ne.s32.totalorder %s120, %s121
    %p130 = scmp.eq.s32.totalorder %s21, 0
    %p131 = por %p129, %p130
    %p132 = scmp.ne.s32.totalorder %s120, %s121
    %p133 = scmp.eq.s32.totalorder %s22, 1
    %p134 = por %p132, %p133
    %p136 = scmp.ne.s32.totalorder %s121, %s135
    %p137 = scmp.eq.s32.totalorder %s22, 0
    %p138 = por %p136, %p137
    %s140 = sadd.s32 %s139, 1
    %p143 = scmp.eq.s32.totalorder %s16, 1
    %p144 = scmp.ne.s32.totalorder %s139, %s141
    %p145 = scmp.eq.s32.totalorder %s16, 0
    %p146 = por %p144, %p145
    %p147 = scmp.ne.s32.totalorder %s139, %s141
    %p148 = scmp.eq.s32.totalorder %s21, 1
    %p149 = por %p147, %p148
    %p150 = scmp.ne.s32.totalorder %s141, %s142
    %p151 = scmp.eq.s32.totalorder %s21, 0
    %p152 = por %p150, %p151
    %p153 = scmp.ne.s32.totalorder %s141, %s142
    %p154 = scmp.eq.s32.totalorder %s22, 1
    %p155 = por %p153, %p154
    %p157 = scmp.ne.s32.totalorder %s142, %s156
    %p158 = scmp.eq.s32.totalorder %s22, 0
    %p159 = por %p157, %p158
    %s161 = sadd.s32 %s160, 1
    %p164 = scmp.eq.s32.totalorder %s16, 1
    %p165 = scmp.ne.s32.totalorder %s160, %s162
    %p166 = scmp.eq.s32.totalorder %s16, 0
    %p167 = por %p165, %p166
    %p168 = scmp.ne.s32.totalorder %s160, %s162
    %p169 = scmp.eq.s32.totalorder %s21, 1
    %p170 = por %p168, %p169
    %p171 = scmp.ne.s32.totalorder %s162, %s163
    %p172 = scmp.eq.s32.totalorder %s21, 0
    %p173 = por %p171, %p172
    %p174 = scmp.ne.s32.totalorder %s162, %s163
    %p175 = scmp.eq.s32.totalorder %s22, 1
    %p176 = por %p174, %p175
    %p178 = scmp.ne.s32.totalorder %s163, %s177
    %p179 = scmp.eq.s32.totalorder %s22, 0
    %p180 = por %p178, %p179
    %s182 = sadd.s32 %s181, 1
    %p185 = scmp.eq.s32.totalorder %s16, 1
    %p186 = scmp.ne.s32.totalorder %s181, %s183
    %p187 = scmp.eq.s32.totalorder %s16, 0
    %p188 = por %p186, %p187
    %p189 = scmp.ne.s32.totalorder %s181, %s183
    %p190 = scmp.eq.s32.totalorder %s21, 1
    %p191 = por %p189, %p190
    %p192 = scmp.ne.s32.totalorder %s183, %s184
    %p193 = scmp.eq.s32.totalorder %s21, 0
    %p194 = por %p192, %p193
    %p195 = scmp.ne.s32.totalorder %s183, %s184
    %p196 = scmp.eq.s32.totalorder %s22, 1
    %p197 = por %p195, %p196
    %p199 = scmp.ne.s32.totalorder %s184, %s198
    %p200 = scmp.eq.s32.totalorder %s22, 0
    %p201 = por %p199, %p200
    %s203 = sadd.s32 %s202, 1
    %p206 = scmp.eq.s32.totalorder %s16, 1
    %p207 = scmp.ne.s32.totalorder %s202, %s204
    %p208 = scmp.eq.s32.totalorder %s16, 0
    %p209 = por %p207, %p208
    %p210 = scmp.ne.s32.totalorder %s202, %s204
    %p211 = scmp.eq.s32.totalorder %s21, 1
    %p212 = por %p210, %p211
    %p213 = scmp.ne.s32.totalorder %s204, %s205
    %p214 = scmp.eq.s32.totalorder %s21, 0
    %p215 = por %p213, %p214
    %p216 = scmp.ne.s32.totalorder %s204, %s205
    %p217 = scmp.eq.s32.totalorder %s22, 1
    %p218 = por %p216, %p217
    %p220 = scmp.ne.s32.totalorder %s205, %s219
    %p221 = scmp.eq.s32.totalorder %s22, 0
    %p222 = por %p220, %p221
    %s224 = sadd.s32 %s223, 1
    %p227 = scmp.eq.s32.totalorder %s16, 1
    %p228 = scmp.ne.s32.totalorder %s223, %s225
    %p229 = scmp.eq.s32.totalorder %s16, 0
    %p230 = por %p228, %p229
    %p231 = scmp.ne.s32.totalorder %s223, %s225
    %p232 = scmp.eq.s32.totalorder %s21, 1
    %p233 = por %p231, %p232
    %p234 = scmp.ne.s32.totalorder %s225, %s226
    %p235 = scmp.eq.s32.totalorder %s21, 0
    %p236 = por %p234, %p235
    %p237 = scmp.ne.s32.totalorder %s225, %s226
    %p238 = scmp.eq.s32.totalorder %s22, 1
    %p239 = por %p237, %p238
    %p241 = scmp.ne.s32.totalorder %s226, %s240
    %p242 = scmp.eq.s32.totalorder %s22, 0
    %p243 = por %p241, %p242
    %s244 = ssub.s32 %s16, %s23
    %p245 = scmp.eq.s32.totalorder %s244, 0
    %s247 = sadd.s32 %s246, 1
    %s248 = scalar_select %p245, %s246, %s247
    %p251 = pneg %p245
    %p252 = scmp.eq.s32.totalorder %s16, 1
    %p253 = por %p251, %p252
    %p254 = scmp.ne.s32.totalorder %s246, %s249
    %p255 = scmp.eq.s32.totalorder %s16, 0
    %p256 = por %p254, %p255
    %p257 = scmp.ne.s32.totalorder %s246, %s249
    %p258 = scmp.eq.s32.totalorder %s21, 1
    %p259 = por %p257, %p258
    %p260 = scmp.ne.s32.totalorder %s249, %s250
    %p261 = scmp.eq.s32.totalorder %s21, 0
    %p262 = por %p260, %p261
    %p263 = scmp.ne.s32.totalorder %s249, %s250
    %p264 = scmp.eq.s32.totalorder %s22, 1
    %p265 = por %p263, %p264
    %p267 = scmp.ne.s32.totalorder %s250, %s266
    %p268 = scmp.eq.s32.totalorder %s22, 0
    %p269 = por %p267, %p268
    %p270 = scmp.le.s32.totalorder 1, %s16
    %p271 = scmp.lt.s32.totalorder %s16, 3
    %p272 = pnand %p270, %p271
    %p273 = pneg %p272
    // Predicated region
    $region9: #{translation_transformer_forward.16} parent=5 // pred_check
      _
    $region10: #{translation_transformer_forward.16} parent=5 // pred_check_branch
      %275 = sbr.rel (%p272) target = $region12
    $region11: #{translation_transformer_forward.16} parent=5 // pred_region
      %s276 = ssub.s32 %s16, 1
      // Predicated region
      $region13: #{translation_transformer_forward.16} parent=11 // pred_check
        %p277 = pneg %p89
      $region14: #{translation_transformer_forward.16} parent=11 // pred_check_branch
        %279 = sbr.rel (%p277) target = $region16
      $region15: #{translation_transformer_forward.16} parent=11 // pred_region
        _
      $region16: #{translation_transformer_forward.16} parent=11 // pred_fallthru
        _
      // Predicated region
      $region17: #{translation_transformer_forward.16} parent=11 // pred_check
        %p280 = pneg %p110
      $region18: #{translation_transformer_forward.16} parent=11 // pred_check_branch
        %282 = sbr.rel (%p280) target = $region20
      $region19: #{translation_transformer_forward.16} parent=11 // pred_region
        _
      $region20: #{translation_transformer_forward.16} parent=11 // pred_fallthru
        _
      // Predicated region
      $region21: #{translation_transformer_forward.16} parent=11 // pred_check
        %p283 = pneg %p131
      $region22: #{translation_transformer_forward.16} parent=11 // pred_check_branch
        %285 = sbr.rel (%p283) target = $region24
      $region23: #{translation_transformer_forward.16} parent=11 // pred_region
        _
      $region24: #{translation_transformer_forward.16} parent=11 // pred_fallthru
        _
      // Predicated region
      $region25: #{translation_transformer_forward.16} parent=11 // pred_check
        %p286 = pneg %p152
      $region26: #{translation_transformer_forward.16} parent=11 // pred_check_branch
        %288 = sbr.rel (%p286) target = $region28
      $region27: #{translation_transformer_forward.16} parent=11 // pred_region
        _
      $region28: #{translation_transformer_forward.16} parent=11 // pred_fallthru
        _
      // Predicated region
      $region29: #{translation_transformer_forward.16} parent=11 // pred_check
        %p289 = pneg %p173
      $region30: #{translation_transformer_forward.16} parent=11 // pred_check_branch
        %291 = sbr.rel (%p289) target = $region32
      $region31: #{translation_transformer_forward.16} parent=11 // pred_region
        _
      $region32: #{translation_transformer_forward.16} parent=11 // pred_fallthru
        _
      // Predicated region
      $region33: #{translation_transformer_forward.16} parent=11 // pred_check
        %p292 = pneg %p194
      $region34: #{translation_transformer_forward.16} parent=11 // pred_check_branch
        %294 = sbr.rel (%p292) target = $region36
      $region35: #{translation_transformer_forward.16} parent=11 // pred_region
        _
      $region36: #{translation_transformer_forward.16} parent=11 // pred_fallthru
        _
      // Predicated region
      $region37: #{translation_transformer_forward.16} parent=11 // pred_check
        %p295 = pneg %p215
      $region38: #{translation_transformer_forward.16} parent=11 // pred_check_branch
        %297 = sbr.rel (%p295) target = $region40
      $region39: #{translation_transformer_forward.16} parent=11 // pred_region
        _
      $region40: #{translation_transformer_forward.16} parent=11 // pred_fallthru
        _
      // Predicated region
      $region41: #{translation_transformer_forward.16} parent=11 // pred_check
        %p298 = pneg %p236
      $region42: #{translation_transformer_forward.16} parent=11 // pred_check_branch
        %300 = sbr.rel (%p298) target = $region44
      $region43: #{translation_transformer_forward.16} parent=11 // pred_region
        _
      $region44: #{translation_transformer_forward.16} parent=11 // pred_fallthru
        _
    $region12: #{translation_transformer_forward.16} parent=5 // pred_fallthru
      _
    %p301 = scmp.lt.s32.totalorder %s16, 2
    // Predicated region
    $region45: #{translation_transformer_forward.16} parent=5 // pred_check
      %p302 = pneg %p301
    $region46: #{translation_transformer_forward.16} parent=5 // pred_check_branch
      %304 = sbr.rel (%p302) target = $region48
    $region47: #{translation_transformer_forward.16} parent=5 // pred_region
      // Predicated region
      $region49: #{translation_transformer_forward.16} parent=47 // pred_check
        %p305 = pneg %p36
      $region50: #{translation_transformer_forward.16} parent=47 // pred_check_branch
        %307 = sbr.rel (%p305) target = $region52
      $region51: #{translation_transformer_forward.16} parent=47 // pred_region
        %p308 = scmp.lt.s32.totalorder %s16, 1
        %s309 = scalar_select %p308, %s16, 1
        %s310 = smul.addr %s309, 8
        %s311 = scalar_lea.vmem %s0, %s310
      $region52: #{translation_transformer_forward.16} parent=47 // pred_fallthru
        _
      // Predicated region
      $region53: #{translation_transformer_forward.16} parent=47 // pred_check
        %p312 = pneg %p62
      $region54: #{translation_transformer_forward.16} parent=47 // pred_check_branch
        %314 = sbr.rel (%p312) target = $region56
      $region55: #{translation_transformer_forward.16} parent=47 // pred_region
        %p315 = scmp.lt.s32.totalorder %s16, 1
        %s316 = scalar_select %p315, %s16, 1
        %s317 = smul.addr %s316, 8
        %s318 = scalar_lea.vmem %s1, %s317
      $region56: #{translation_transformer_forward.16} parent=47 // pred_fallthru
        _
    $region48: #{translation_transformer_forward.16} parent=5 // pred_fallthru
      _
    %p319 = scmp.le.s32.totalorder 1, %s16
    %p320 = scmp.lt.s32.totalorder %s16, 3
    %p321 = pnand %p319, %p320
    %p322 = pneg %p321
    // Predicated region
    $region57: #{translation_transformer_forward.16} parent=5 // pred_check
      _
    $region58: #{translation_transformer_forward.16} parent=5 // pred_check_branch
      %324 = sbr.rel (%p321) target = $region60
    $region59: #{translation_transformer_forward.16} parent=5 // pred_region
      %s325 = ssub.s32 %s16, 1
      %p326 = scmp.lt.s32.totalorder %s21, 1
      %s327 = scalar_select %p326, %s21, 1
      %s328 = smul.addr %s327, 8
      %s329 = scalar_lea.vmem %s0, %s328
      %p330 = pneg %p42
      %p331 = pneg %p39
      %p332 = scmp.lt.s32.totalorder %s21, 1
      %s333 = scalar_select %p332, %s21, 1
      %s334 = smul.addr %s333, 8
      %s335 = scalar_lea.vmem %s1, %s334
      %p336 = pneg %p68
      %p337 = pneg %p65
      %p338 = pneg %p89
      %p339 = pneg %p86
      %p340 = pneg %p110
      %p341 = pneg %p107
      %p342 = pneg %p131
      %p343 = pneg %p128
      %p344 = pneg %p152
      %p345 = pneg %p149
      %p346 = pneg %p173
      %p347 = pneg %p170
      %p348 = pneg %p194
      %p349 = pneg %p191
      %p350 = pneg %p215
      %p351 = pneg %p212
      %p352 = pneg %p236
      %p353 = pneg %p233
      %p354 = pneg %p262
      %p355 = pneg %p259
      %p356 = scmp.lt.s32.totalorder %s21, 1
      %s357 = scalar_select %p356, %s21, 1
      %s358 = smul.addr %s357, 8
      %s359 = scalar_lea.vmem %s10, %s358
      %p360 = scmp.lt.s32.totalorder %s21, 1
      %s361 = scalar_select %p360, %s21, 1
      %s362 = smul.addr %s361, 8
      %s363 = scalar_lea.vmem %s0, %s362
      %p364 = scmp.lt.s32.totalorder %s21, 1
      %s365 = scalar_select %p364, %s21, 1
      %s366 = smul.addr %s365, 8
      %s367 = scalar_lea.vmem %s1, %s366
      %p368 = scmp.lt.s32.totalorder %s21, 1
      %s369 = scalar_select %p368, %s21, 1
      %s370 = smul.addr %s369, 8
      %s371 = scalar_lea.vmem %s10, %s370
      %v373 = vld [vmem:[%s363] sm:$0x7f]
      %v374 = vld [vmem:[%s367] sm:$0xff]
      %v375 = vpack.c.bf16 %v373, %v373
      %v376 = vld [vmem:[%s2] sm:$0xf]
      %v377 = vld [vmem:[%s2 + $0x4] sm:$0xf]
      %v378 = vld [vmem:[%s2 + $0x8] sm:$0xf]
      %v379 = vld [vmem:[%s2 + $0xc] sm:$0xf]
      %v380 = vld [vmem:[%s3] sm:$0x1]
      %v382 = vperm.slane %v380, 0
      %v388 = vunpack.c.l.b16 %v376
      %v389 = vunpack.c.l.b16 %v377
      %v390 = vunpack.c.l.b16 %v378
      %v391 = vunpack.c.l.b16 %v379
      %v392 = vpack.c.b16 %v389, %v388
      %v393 = vpack.c.b16 %v391, %v390
      %vm396 = vcmask 261120
      %v398 = vsel %vm396, %v375, 0
      %400 = vmatpush.bf16.msra.mxu0 0
      %401 = vmatpush.bf16.msra.mxu0 0
      %402 = vmatpush.bf16.msra.mxu0 0
      %403 = vmatpush.bf16.msra.mxu0 0
      %404 = vmatpush.bf16.msra.mxu0 0
      %405 = vmatpush.bf16.msra.mxu0 0
      %406 = vmatpush.bf16.msra.mxu0 %v393
      %407 = vmatpush.bf16.msra.mxu0 %v392
      %408 = vmatmul.bf16.gmra.mxu0 %v398
      %v409 = vpop.f32.mrf.mxu0
      %v410 = vadd.f32 %v382, %v409
      %v411 = vpop.f32.mrf.mxu0
      %412 = vdwg.mxu0
      %v413 = vpack.c.bf16 %v374, %v374
      %v414 = vld [vmem:[%s4] sm:$0xf]
      %v415 = vld [vmem:[%s4 + $0x4] sm:$0xf]
      %v416 = vld [vmem:[%s4 + $0x8] sm:$0xf]
      %v417 = vld [vmem:[%s4 + $0xc] sm:$0xf]
      %v418 = vld [vmem:[%s5] sm:$0x1]
      %v420 = vperm.slane %v418, 0
      %v426 = vunpack.c.l.b16 %v414
      %v427 = vunpack.c.l.b16 %v415
      %v428 = vunpack.c.l.b16 %v416
      %v429 = vunpack.c.l.b16 %v417
      %v430 = vpack.c.b16 %v427, %v426
      %v431 = vpack.c.b16 %v429, %v428
      %v435 = vsel %vm396, %v413, 0
      %437 = vmatpush.bf16.msra.mxu0 0
      %438 = vmatpush.bf16.msra.mxu0 0
      %439 = vmatpush.bf16.msra.mxu0 0
      %440 = vmatpush.bf16.msra.mxu0 0
      %441 = vmatpush.bf16.msra.mxu0 0
      %442 = vmatpush.bf16.msra.mxu0 0
      %443 = vmatpush.bf16.msra.mxu0 %v431
      %444 = vmatpush.bf16.msra.mxu0 %v430
      %445 = vmatmul.bf16.gmra.mxu0 %v435
      %v446 = vpop.f32.mrf.mxu0
      %v447 = vadd.f32 %v420, %v446
      %v448 = vpop.f32.mrf.mxu0
      %449 = vdwg.mxu0
      %v450 = vmul.f32 %v410, 0.25
      %v451 = vpack.c.bf16 %v450, %v450
      %v452 = vpack.c.bf16 %v447, %v447
      %vm453 = vcmask 130048
      %v455 = vsel %vm453, %v451, 0
      %v458 = vsel %vm453, %v452, 0
      %460 = vmatpush.bf16.xpose.msra.mxu0 0
      %461 = vmatpush.bf16.xpose.msra.mxu0 0
      %462 = vmatpush.bf16.xpose.msra.mxu0 0
      %463 = vmatpush.bf16.xpose.msra.mxu0 0
      %464 = vmatpush.bf16.xpose.msra.mxu0 0
      %465 = vmatpush.bf16.xpose.msra.mxu0 0
      %466 = vmatpush.bf16.xpose.msra.mxu0 0
      %467 = vmatpush.bf16.xpose.msra.mxu0 %v458
      %468 = vmatmul.bf16.gmra.mxu0 %v455
      %v469 = vpop.f32.mrf.mxu0
      %v470 = vadd.f32 0.0, %v469
      %v471 = vpop.f32.mrf.mxu0
      %472 = vdwg.mxu0
      %vm473 = vcmask 63488
      %v474 = vsel %vm473, %v470, -inf
      %475 = vmax.xlane.f32.xlu0 %v474
      %v476 = vpop.xlane.xlu0 %475
      %v477 = vsub.f32 %v470, %v476
      %v478 = vmul.f32 %v477, 1.442695
      %v479 = vpow.pop %v478
      %v480 = vsel %vm473, %v479, 0.0
      %481 = vadd.xlane.f32.xlu0 %v480
      %v482 = vpop.xlane.xlu0 %481
      %v483 = vpack.c.bf16 %v479, %v479
      %485 = vrot.lane.b32.xlu0 %v452, 96
      %v486 = vpop.permute.xlu0 %485
      %vm487 = vcmask 64512
      %v489 = vsel %vm487, %v483, 0
      %vm491 = vcmask 1043456
      %v493 = vsel %vm491, %v486, 0
      %495 = vmatpush.bf16.msra.mxu0 0
      %496 = vmatpush.bf16.msra.mxu0 0
      %497 = vmatpush.bf16.msra.mxu0 0
      %498 = vmatpush.bf16.msra.mxu0 0
      %499 = vmatpush.bf16.msra.mxu0 0
      %500 = vmatpush.bf16.msra.mxu0 0
      %501 = vmatpush.bf16.msra.mxu0 0
      %502 = vmatpush.bf16.msra.mxu0 %v493
      %503 = vmatmul.bf16.gmra.mxu0 %v489
      %v504 = vpop.f32.mrf.mxu0
      %v505 = vadd.f32 0.0, %v504
      %v506 = vpop.f32.mrf.mxu0
      %507 = vdwg.mxu0
      %v508 = vrcp.pop %v482
      %v509 = vmul.f32 %v505, %v508
      %vm510 = vcmask 129024
      %511 = vst.msk [vmem:[#allocation2] sm:$0x7f] %vm510, %v509
      %513 = vrot.lane.b32.xlu0 %v451, 112
      %v514 = vpop.permute.xlu0 %513
      %515 = vrot.lane.b32.xlu0 %v452, 112
      %v516 = vpop.permute.xlu0 %515
      %v518 = vsel %vm453, %v514, 0
      %v521 = vsel %vm453, %v516, 0
      %523 = vmatpush.bf16.xpose.msra.mxu0 0
      %524 = vmatpush.bf16.xpose.msra.mxu0 0
      %525 = vmatpush.bf16.xpose.msra.mxu0 0
      %526 = vmatpush.bf16.xpose.msra.mxu0 0
      %527 = vmatpush.bf16.xpose.msra.mxu0 0
      %528 = vmatpush.bf16.xpose.msra.mxu0 0
      %529 = vmatpush.bf16.xpose.msra.mxu0 0
      %530 = vmatpush.bf16.xpose.msra.mxu0 %v521
      %531 = vmatmul.bf16.gmra.mxu0 %v518
      %v532 = vpop.f32.mrf.mxu0
      %v533 = vadd.f32 0.0, %v532
      %v534 = vpop.f32.mrf.mxu0
      %535 = vdwg.mxu0
      %v536 = vsel %vm473, %v533, -inf
      %537 = vmax.xlane.f32.xlu0 %v536
      %v538 = vpop.xlane.xlu0 %537
      %v539 = vsub.f32 %v533, %v538
      %v540 = vmul.f32 %v539, 1.442695
      %v541 = vpow.pop %v540
      %v542 = vsel %vm473, %v541, 0.0
      %543 = vadd.xlane.f32.xlu0 %v542
      %v544 = vpop.xlane.xlu0 %543
      %v545 = vpack.c.bf16 %v541, %v541
      %546 = vrot.lane.b32.xlu0 %v452, 80
      %v547 = vpop.permute.xlu0 %546
      %v549 = vsel %vm487, %v545, 0
      %v552 = vsel %vm491, %v547, 0
      %554 = vmatpush.bf16.msra.mxu0 0
      %555 = vmatpush.bf16.msra.mxu0 0
      %556 = vmatpush.bf16.msra.mxu0 0
      %557 = vmatpush.bf16.msra.mxu0 0
      %558 = vmatpush.bf16.msra.mxu0 0
      %559 = vmatpush.bf16.msra.mxu0 0
      %560 = vmatpush.bf16.msra.mxu0 0
      %561 = vmatpush.bf16.msra.mxu0 %v552
      %562 = vmatmul.bf16.gmra.mxu0 %v549
      %v563 = vpop.f32.mrf.mxu0
      %v564 = vadd.f32 0.0, %v563
      %v565 = vpop.f32.mrf.mxu0
      %566 = vdwg.mxu0
      %v567 = vrcp.pop %v544
      %v568 = vmul.f32 %v564, %v567
      %570 = vrot.lane.b32.xlu0 %v568, 16
      %v571 = vpop.permute.xlu0 %570
      %vm573 = vcmask 260224
      %574 = vst.msk [vmem:[#allocation2] sm:$0x7f] %vm573, %v571
      %v575 = vld [vmem:[#allocation2] sm:$0x7f]
      %v576 = vpack.c.bf16 %v575, %v575
      %v577 = vld [vmem:[%s6] sm:$0xf]
      %v578 = vld [vmem:[%s6 + $0x4] sm:$0xf]
      %v579 = vld [vmem:[%s6 + $0x8] sm:$0xf]
      %v580 = vld [vmem:[%s6 + $0xc] sm:$0xf]
      %v581 = vld [vmem:[%s7] sm:$0x1]
      %v583 = vperm.slane %v581, 0
      %v589 = vunpack.c.l.b16 %v577
      %v590 = vunpack.c.l.b16 %v578
      %v591 = vunpack.c.l.b16 %v579
      %v592 = vunpack.c.l.b16 %v580
      %v593 = vpack.c.b16 %v590, %v589
      %v594 = vpack.c.b16 %v592, %v591
      %v598 = vsel %vm396, %v576, 0
      %600 = vmatpush.bf16.msra.mxu0 0
      %601 = vmatpush.bf16.msra.mxu0 0
      %602 = vmatpush.bf16.msra.mxu0 0
      %603 = vmatpush.bf16.msra.mxu0 0
      %604 = vmatpush.bf16.msra.mxu0 0
      %605 = vmatpush.bf16.msra.mxu0 0
      %606 = vmatpush.bf16.msra.mxu0 %v594
      %607 = vmatpush.bf16.msra.mxu0 %v593
      %608 = vmatmul.bf16.gmra.mxu0 %v598
      %v609 = vpop.f32.mrf.mxu0
      %v610 = vadd.f32 %v583, %v609
      %v611 = vpop.f32.mrf.mxu0
      %612 = vdwg.mxu0
      %v613 = vadd.f32 %v373, %v610
      %vm614 = vcmask 260096
      %v615 = vsel %vm614, %v613, 0.0
      %616 = vadd.xlane.f32.xlu0 %v615
      %v617 = vpop.xlane.xlu0 %616
      %v618 = vrcp.pop 32.0
      %v619 = vmul.f32 32.0, %v618
      %v620 = vsub.f32 1.0, %v619
      %v621 = vmul.f32 %v618, %v620
      %v622 = vadd.f32 %v618, %v621
      %vm623 = vweird.f32 %v618
      %v624 = vsel %vm623, %v618, %v622
      %v625 = vmul.f32 %v617, %v624
      %v626 = vsub.f32 %v613, %v625
      %v627 = vmul.f32 %v626, %v626
      %v628 = vsel %vm614, %v627, 0.0
      %629 = vadd.xlane.f32.xlu0 %v628
      %v630 = vpop.xlane.xlu0 %629
      %v631 = vmul.f32 %v630, %v624
      %v632 = vadd.f32 %v631, 1e-05
      %v633 = vrsqrt.pop %v632
      %v634 = vmul.f32 %v633, %v632
      %v635 = vmul.f32 %v634, %v633
      %v636 = vmul.f32 0.5, %v635
      %v637 = vsub.f32 1.5, %v636
      %v638 = vmul.f32 %v633, %v637
      %vm639 = vweird.f32 %v632
      %vm640 = vweird.f32 %v633
      %vm641 = vmor %vm639, %vm640
      %v642 = vsel %vm641, %v633, %v638
      %v643 = vmul.f32 %v626, %v642
      %v644 = vld [vmem:[%s8] sm:$0x1]
      %v646 = vperm.slane %v644, 0
      %v648 = vmul.f32 %v643, %v646
      %v649 = vld [vmem:[%s9] sm:$0x1]
      %v651 = vperm.slane %v649, 0
      %v653 = vadd.f32 %v648, %v651
      %654 = vst.msk [vmem:[%s371] sm:$0x7f] %vm614, %v653
      %p655 = scmp.lt.s32.totalorder %s21, 1
      %s656 = scalar_select %p655, %s21, 1
      %s657 = smul.addr %s656, 8
      %s658 = scalar_lea.vmem %s10, %s657
      // Predicated region
      $region61: #{translation_transformer_forward.16} parent=59 // pred_check
        %p659 = pneg %p259
      $region62: #{translation_transformer_forward.16} parent=59 // pred_check_branch
        %661 = sbr.rel (%p659) target = $region64
      $region63: #{translation_transformer_forward.16} parent=59 // pred_region
        _
      $region64: #{translation_transformer_forward.16} parent=59 // pred_fallthru
        _
    $region60: #{translation_transformer_forward.16} parent=5 // pred_fallthru
      _
    %p662 = scmp.le.s32.totalorder 2, %s16
    // Predicated region
    $region65: #{translation_transformer_forward.16} parent=5 // pred_check
      %p663 = pneg %p662
    $region66: #{translation_transformer_forward.16} parent=5 // pred_check_branch
      %665 = sbr.rel (%p663) target = $region68
    $region67: #{translation_transformer_forward.16} parent=5 // pred_region
      %s666 = ssub.s32 %s16, 2
      // Predicated region
      $region69: #{translation_transformer_forward.16} parent=67 // pred_check
        %p667 = pneg %p265
      $region70: #{translation_transformer_forward.16} parent=67 // pred_check_branch
        %669 = sbr.rel (%p667) target = $region72
      $region71: #{translation_transformer_forward.16} parent=67 // pred_region
        %p670 = scmp.lt.s32.totalorder %s22, 1
        %s671 = scalar_select %p670, %s22, 1
        %s672 = smul.addr %s671, 8
        %s673 = scalar_lea.vmem %s10, %s672
      $region72: #{translation_transformer_forward.16} parent=67 // pred_fallthru
        _
    $region68: #{translation_transformer_forward.16} parent=5 // pred_fallthru
      _
  $region6: #{translation_transformer_forward.16} parent=0 // loop_footer
    %s20 = sadd.s32 1, %s16
  $region7: #{translation_transformer_forward.16} parent=0 // loop_footer_branch
    %15 = sbr.rel target = $region3
  $region8: #{translation_transformer_forward.16} parent=0 // loop_exit
    _

// kernel: translation_transformer_forward.18
$region0: #{translation_transformer_forward.18}
  #allocation0 [shape = 'u32[]', space=smem, size = 0x4, offset = 0x4, fixed_abs, tag = 'smem constant byte address 0x4 - core index']
  #allocation1 [shape = 'u32[72,128]{1,0:T(1,128)}', space=vmem, size = 0x9000, scoped, tag = 'internal scratch']
  #allocation2 [shape = 'f32[7,32]{1,0:T(8,128)}', space=vmem, size = 0x1000, scoped, tag = 'scratch operand']
  %s0 = inlined_call_operand.vmem [shape: f32[2,7,32], index: 0, kind: input, shape index: {}]
  %s1 = inlined_call_operand.vmem [shape: bf16[32,96], index: 1, kind: input, shape index: {}]
  %s2 = inlined_call_operand.hbm [shape: f32[1,96], index: 2, kind: input, shape index: {}]
  %s3 = inlined_call_operand.vmem [shape: bf16[32,32], index: 3, kind: input, shape index: {}]
  %s4 = inlined_call_operand.hbm [shape: f32[1,32], index: 4, kind: input, shape index: {}]
  %s5 = inlined_call_operand.hbm [shape: f32[1,32], index: 5, kind: input, shape index: {}]
  %s6 = inlined_call_operand.hbm [shape: f32[1,32], index: 6, kind: input, shape index: {}]
  %s7 = inlined_call_operand.vmem [shape: f32[2,7,32], index: 7, kind: output, shape index: {}]
  %s8 = sld [smem:[#allocation0]]
  $region77: #{translation_transformer_forward.18} parent=0
    _
  %s10 = ssub.s32 1, %s8
  %s11 = scalar_select 0, %s10, %s8
  $region1: #{translation_transformer_forward.18} parent=0
    #allocation3 [shape = 'u8[512]{0}', space=vmem, size = 0x400, scoped, tag = 'input window, operand 2, single buffered']
    #allocation4 [shape = 's32[2]{0}', space=sflag, size = 0x8, scoped, tag = 'scoped memory for translation_transformer_forward.18']
    #allocation5 [shape = 'u8[512]{0}', space=vmem, size = 0x400, scoped, tag = 'input window, operand 4, single buffered']
    #allocation6 [shape = 's32[1]{0}', space=sflag, size = 0x4, scoped, tag = 'scoped memory for translation_transformer_forward.18']
    #allocation7 [shape = 'u8[512]{0}', space=vmem, size = 0x400, scoped, tag = 'input window, operand 5, single buffered']
    #allocation8 [shape = 'u8[512]{0}', space=vmem, size = 0x400, scoped, tag = 'input window, operand 6, single buffered']
    #allocation9 [shape = 's32[1]{0}', space=sflag, size = 0x4, scoped, tag = 'scoped memory for translation_transformer_forward.18']
    %12 = vsyncpa [#allocation4], 0
    %13 = vsyncpa [#allocation6], 0
    %14 = vsyncpa [#allocation9], 0
    loop: start=0, step=1, limit=4
    $region2: #{translation_transformer_forward.18} parent=1 // loop_pre_header
      _
    $region3: #{translation_transformer_forward.18} parent=1 // loop_header
      %s16 = sphi 0, %s20
      %p17 = scmp.ge.s32.totalorder %s16, 4
      %s26 = sphi 0, %s28
      %s29 = sphi 0, %s26
      %s30 = sphi 0, %s29
      %s46 = sphi 0, %s30
      %s50 = sphi 0, %s50
      %s52 = sphi 0, %s50
      %s53 = sphi 0, %s52
      %s67 = sphi 0, %s53
      %s71 = sphi 0, %s71
      %s73 = sphi 0, %s71
      %s74 = sphi 0, %s73
      %s88 = sphi 0, %s74
      %s92 = sphi 0, %s92
      %s94 = sphi 0, %s92
      %s95 = sphi 0, %s94
      %s109 = sphi 0, %s95
      %s113 = sphi 0, %s113
      %s115 = sphi 0, %s113
      %s116 = sphi 0, %s115
      %s130 = sphi 0, %s116
      %s134 = sphi 0, %s134
      %s136 = sphi 0, %s134
      %s137 = sphi 0, %s136
      %s151 = sphi 0, %s137
      %s155 = sphi 0, %s155
      %s157 = sphi 0, %s155
      %s158 = sphi 0, %s157
      %s172 = sphi 0, %s158
      %s178 = sphi 0, %s180
      %s181 = sphi 0, %s178
      %s182 = sphi 0, %s181
      %s198 = sphi 0, %s182
    $region4: #{translation_transformer_forward.18} parent=1 // loop_header_branch
      %19 = sbr.rel (%p17) target = $region8
    $region5: #{translation_transformer_forward.18} parent=1 // loop_body
      %s21 = ssub.s32 %s16, 1
      %s22 = ssub.s32 %s16, 2
      %s23 = sadd.s32 %s16, 1
      %s24 = ssub.s32 %s16, %s23
      %p25 = scmp.eq.s32.totalorder %s24, 0
      %s27 = sadd.s32 %s26, 1
      %s28 = scalar_select %p25, %s26, %s27
      %p31 = pneg %p25
      %p32 = scmp.eq.s32.totalorder %s16, 1
      %p33 = por %p31, %p32
      %p34 = scmp.ne.s32.totalorder %s26, %s29
      %p35 = scmp.eq.s32.totalorder %s16, 0
      %p36 = por %p34, %p35
      %p37 = scmp.ne.s32.totalorder %s26, %s29
      %p38 = scmp.eq.s32.totalorder %s21, 1
      %p39 = por %p37, %p38
      %p40 = scmp.ne.s32.totalorder %s29, %s30
      %p41 = scmp.eq.s32.totalorder %s21, 0
      %p42 = por %p40, %p41
      %p43 = scmp.ne.s32.totalorder %s29, %s30
      %p44 = scmp.eq.s32.totalorder %s22, 1
      %p45 = por %p43, %p44
      %p47 = scmp.ne.s32.totalorder %s30, %s46
      %p48 = scmp.eq.s32.totalorder %s22, 0
      %p49 = por %p47, %p48
      %s51 = sadd.s32 %s50, 1
      %p54 = scmp.eq.s32.totalorder %s16, 1
      %p55 = scmp.ne.s32.totalorder %s50, %s52
      %p56 = scmp.eq.s32.totalorder %s16, 0
      %p57 = por %p55, %p56
      %p58 = scmp.ne.s32.totalorder %s50, %s52
      %p59 = scmp.eq.s32.totalorder %s21, 1
      %p60 = por %p58, %p59
      %p61 = scmp.ne.s32.totalorder %s52, %s53
      %p62 = scmp.eq.s32.totalorder %s21, 0
      %p63 = por %p61, %p62
      %p64 = scmp.ne.s32.totalorder %s52, %s53
      %p65 = scmp.eq.s32.totalorder %s22, 1
      %p66 = por %p64, %p65
      %p68 = scmp.ne.s32.totalorder %s53, %s67
      %p69 = scmp.eq.s32.totalorder %s22, 0
      %p70 = por %p68, %p69
      %s72 = sadd.s32 %s71, 1
      %p75 = scmp.eq.s32.totalorder %s16, 1
      %p76 = scmp.ne.s32.totalorder %s71, %s73
      %p77 = scmp.eq.s32.totalorder %s16, 0
      %p78 = por %p76, %p77
      %p79 = scmp.ne.s32.totalorder %s71, %s73
      %p80 = scmp.eq.s32.totalorder %s21, 1
      %p81 = por %p79, %p80
      %p82 = scmp.ne.s32.totalorder %s73, %s74
      %p83 = scmp.eq.s32.totalorder %s21, 0
      %p84 = por %p82, %p83
      %p85 = scmp.ne.s32.totalorder %s73, %s74
      %p86 = scmp.eq.s32.totalorder %s22, 1
      %p87 = por %p85, %p86
      %p89 = scmp.ne.s32.totalorder %s74, %s88
      %p90 = scmp.eq.s32.totalorder %s22, 0
      %p91 = por %p89, %p90
      %s93 = sadd.s32 %s92, 1
      %p96 = scmp.eq.s32.totalorder %s16, 1
      %p97 = scmp.ne.s32.totalorder %s92, %s94
      %p98 = scmp.eq.s32.totalorder %s16, 0
      %p99 = por %p97, %p98
      %p100 = scmp.ne.s32.totalorder %s92, %s94
      %p101 = scmp.eq.s32.totalorder %s21, 1
      %p102 = por %p100, %p101
      %p103 = scmp.ne.s32.totalorder %s94, %s95
      %p104 = scmp.eq.s32.totalorder %s21, 0
      %p105 = por %p103, %p104
      %p106 = scmp.ne.s32.totalorder %s94, %s95
      %p107 = scmp.eq.s32.totalorder %s22, 1
      %p108 = por %p106, %p107
      %p110 = scmp.ne.s32.totalorder %s95, %s109
      %p111 = scmp.eq.s32.totalorder %s22, 0
      %p112 = por %p110, %p111
      %s114 = sadd.s32 %s113, 1
      %p117 = scmp.eq.s32.totalorder %s16, 1
      %p118 = scmp.ne.s32.totalorder %s113, %s115
      %p119 = scmp.eq.s32.totalorder %s16, 0
      %p120 = por %p118, %p119
      %p121 = scmp.ne.s32.totalorder %s113, %s115
      %p122 = scmp.eq.s32.totalorder %s21, 1
      %p123 = por %p121, %p122
      %p124 = scmp.ne.s32.totalorder %s115, %s116
      %p125 = scmp.eq.s32.totalorder %s21, 0
      %p126 = por %p124, %p125
      %p127 = scmp.ne.s32.totalorder %s115, %s116
      %p128 = scmp.eq.s32.totalorder %s22, 1
      %p129 = por %p127, %p128
      %p131 = scmp.ne.s32.totalorder %s116, %s130
      %p132 = scmp.eq.s32.totalorder %s22, 0
      %p133 = por %p131, %p132
      %s135 = sadd.s32 %s134, 1
      %p138 = scmp.eq.s32.totalorder %s16, 1
      %p139 = scmp.ne.s32.totalorder %s134, %s136
      %p140 = scmp.eq.s32.totalorder %s16, 0
      %p141 = por %p139, %p140
      %p142 = scmp.ne.s32.totalorder %s134, %s136
      %p143 = scmp.eq.s32.totalorder %s21, 1
      %p144 = por %p142, %p143
      %p145 = scmp.ne.s32.totalorder %s136, %s137
      %p146 = scmp.eq.s32.totalorder %s21, 0
      %p147 = por %p145, %p146
      %p148 = scmp.ne.s32.totalorder %s136, %s137
      %p149 = scmp.eq.s32.totalorder %s22, 1
      %p150 = por %p148, %p149
      %p152 = scmp.ne.s32.totalorder %s137, %s151
      %p153 = scmp.eq.s32.totalorder %s22, 0
      %p154 = por %p152, %p153
      %s156 = sadd.s32 %s155, 1
      %p159 = scmp.eq.s32.totalorder %s16, 1
      %p160 = scmp.ne.s32.totalorder %s155, %s157
      %p161 = scmp.eq.s32.totalorder %s16, 0
      %p162 = por %p160, %p161
      %p163 = scmp.ne.s32.totalorder %s155, %s157
      %p164 = scmp.eq.s32.totalorder %s21, 1
      %p165 = por %p163, %p164
      %p166 = scmp.ne.s32.totalorder %s157, %s158
      %p167 = scmp.eq.s32.totalorder %s21, 0
      %p168 = por %p166, %p167
      %p169 = scmp.ne.s32.totalorder %s157, %s158
      %p170 = scmp.eq.s32.totalorder %s22, 1
      %p171 = por %p169, %p170
      %p173 = scmp.ne.s32.totalorder %s158, %s172
      %p174 = scmp.eq.s32.totalorder %s22, 0
      %p175 = por %p173, %p174
      %s176 = ssub.s32 %s16, %s23
      %p177 = scmp.eq.s32.totalorder %s176, 0
      %s179 = sadd.s32 %s178, 1
      %s180 = scalar_select %p177, %s178, %s179
      %p183 = pneg %p177
      %p184 = scmp.eq.s32.totalorder %s16, 1
      %p185 = por %p183, %p184
      %p186 = scmp.ne.s32.totalorder %s178, %s181
      %p187 = scmp.eq.s32.totalorder %s16, 0
      %p188 = por %p186, %p187
      %p189 = scmp.ne.s32.totalorder %s178, %s181
      %p190 = scmp.eq.s32.totalorder %s21, 1
      %p191 = por %p189, %p190
      %p192 = scmp.ne.s32.totalorder %s181, %s182
      %p193 = scmp.eq.s32.totalorder %s21, 0
      %p194 = por %p192, %p193
      %p195 = scmp.ne.s32.totalorder %s181, %s182
      %p196 = scmp.eq.s32.totalorder %s22, 1
      %p197 = por %p195, %p196
      %p199 = scmp.ne.s32.totalorder %s182, %s198
      %p200 = scmp.eq.s32.totalorder %s22, 0
      %p201 = por %p199, %p200
      %p202 = scmp.le.s32.totalorder 1, %s16
      %p203 = scmp.lt.s32.totalorder %s16, 3
      %p204 = pnand %p202, %p203
      %p205 = pneg %p204
      // Predicated region
      $region9: #{translation_transformer_forward.18} parent=5 // pred_check
        _
      $region10: #{translation_transformer_forward.18} parent=5 // pred_check_branch
        %207 = sbr.rel (%p204) target = $region12
      $region11: #{translation_transformer_forward.18} parent=5 // pred_region
        %s208 = ssub.s32 %s16, 1
        // Predicated region
        $region13: #{translation_transformer_forward.18} parent=11 // pred_check
          %p209 = pneg %p63
        $region14: #{translation_transformer_forward.18} parent=11 // pred_check_branch
          %211 = sbr.rel (%p209) target = $region16
        $region15: #{translation_transformer_forward.18} parent=11 // pred_region
          _
        $region16: #{translation_transformer_forward.18} parent=11 // pred_fallthru
          _
        // Predicated region
        $region17: #{translation_transformer_forward.18} parent=11 // pred_check
          %p212 = pneg %p84
        $region18: #{translation_transformer_forward.18} parent=11 // pred_check_branch
          %214 = sbr.rel (%p212) target = $region20
        $region19: #{translation_transformer_forward.18} parent=11 // pred_region
          %216 = vsyncadd [#allocation4], 0
          %s218 = sshll.u32 %s2, 4
          %s219 = int_to_ptr.hbm [resolvable:$true] %s218
          %s220 = sshll.u32 [#allocation3], 4
          %s221 = int_to_ptr.vmem [resolvable:$true] %s220
          %223 = dma.hbm_to_vmem [thread:$0]  %s219, 16, %s221, [#allocation4]
        $region20: #{translation_transformer_forward.18} parent=11 // pred_fallthru
          _
        // Predicated region
        $region21: #{translation_transformer_forward.18} parent=11 // pred_check
          %p224 = pneg %p105
        $region22: #{translation_transformer_forward.18} parent=11 // pred_check_branch
          %226 = sbr.rel (%p224) target = $region24
        $region23: #{translation_transformer_forward.18} parent=11 // pred_region
          _
        $region24: #{translation_transformer_forward.18} parent=11 // pred_fallthru
          _
        // Predicated region
        $region25: #{translation_transformer_forward.18} parent=11 // pred_check
          %p227 = pneg %p126
        $region26: #{translation_transformer_forward.18} parent=11 // pred_check_branch
          %229 = sbr.rel (%p227) target = $region28
        $region27: #{translation_transformer_forward.18} parent=11 // pred_region
          %231 = vsyncadd [#allocation6], 0
          %s233 = sshll.u32 %s4, 4
          %s234 = int_to_ptr.hbm [resolvable:$true] %s233
          %s235 = sshll.u32 [#allocation5], 4
          %s236 = int_to_ptr.vmem [resolvable:$true] %s235
          %238 = dma.hbm_to_vmem [thread:$0]  %s234, 16, %s236, [#allocation6]
        $region28: #{translation_transformer_forward.18} parent=11 // pred_fallthru
          _
        // Predicated region
        $region29: #{translation_transformer_forward.18} parent=11 // pred_check
          %p239 = pneg %p147
        $region30: #{translation_transformer_forward.18} parent=11 // pred_check_branch
          %241 = sbr.rel (%p239) target = $region32
        $region31: #{translation_transformer_forward.18} parent=11 // pred_region
          %243 = vsyncadd [#allocation6], 0
          %s245 = sshll.u32 %s5, 4
          %s246 = int_to_ptr.hbm [resolvable:$true] %s245
          %s247 = sshll.u32 [#allocation7], 4
          %s248 = int_to_ptr.vmem [resolvable:$true] %s247
          %250 = dma.hbm_to_vmem [thread:$0]  %s246, 16, %s248, [#allocation6]
        $region32: #{translation_transformer_forward.18} parent=11 // pred_fallthru
          _
        // Predicated region
        $region33: #{translation_transformer_forward.18} parent=11 // pred_check
          %p251 = pneg %p168
        $region34: #{translation_transformer_forward.18} parent=11 // pred_check_branch
          %253 = sbr.rel (%p251) target = $region36
        $region35: #{translation_transformer_forward.18} parent=11 // pred_region
          %255 = vsyncadd [#allocation9], 0
          %s257 = sshll.u32 %s6, 4
          %s258 = int_to_ptr.hbm [resolvable:$true] %s257
          %s259 = sshll.u32 [#allocation8], 4
          %s260 = int_to_ptr.vmem [resolvable:$true] %s259
          %262 = dma.hbm_to_vmem [thread:$0]  %s258, 16, %s260, [#allocation9]
        $region36: #{translation_transformer_forward.18} parent=11 // pred_fallthru
          _
      $region12: #{translation_transformer_forward.18} parent=5 // pred_fallthru
        _
      %p263 = scmp.lt.s32.totalorder %s16, 2
      // Predicated region
      $region37: #{translation_transformer_forward.18} parent=5 // pred_check
        %p264 = pneg %p263
      $region38: #{translation_transformer_forward.18} parent=5 // pred_check_branch
        %266 = sbr.rel (%p264) target = $region40
      $region39: #{translation_transformer_forward.18} parent=5 // pred_region
        // Predicated region
        $region41: #{translation_transformer_forward.18} parent=39 // pred_check
          %p267 = pneg %p36
        $region42: #{translation_transformer_forward.18} parent=39 // pred_check_branch
          %269 = sbr.rel (%p267) target = $region44
        $region43: #{translation_transformer_forward.18} parent=39 // pred_region
          %p270 = scmp.lt.s32.totalorder %s16, 1
          %s271 = scalar_select %p270, %s16, 1
          %s272 = smul.addr %s271, 8
          %s273 = scalar_lea.vmem %s0, %s272
        $region44: #{translation_transformer_forward.18} parent=39 // pred_fallthru
          _
      $region40: #{translation_transformer_forward.18} parent=5 // pred_fallthru
        _
      %p274 = scmp.le.s32.totalorder 1, %s16
      %p275 = scmp.lt.s32.totalorder %s16, 3
      %p276 = pnand %p274, %p275
      %p277 = pneg %p276
      // Predicated region
      $region45: #{translation_transformer_forward.18} parent=5 // pred_check
        _
      $region46: #{translation_transformer_forward.18} parent=5 // pred_check_branch
        %279 = sbr.rel (%p276) target = $region48
      $region47: #{translation_transformer_forward.18} parent=5 // pred_region
        %s280 = ssub.s32 %s16, 1
        // Predicated region
        $region49: #{translation_transformer_forward.18} parent=47 // pred_check
          %p281 = pneg %p84
        $region50: #{translation_transformer_forward.18} parent=47 // pred_check_branch
          %283 = sbr.rel (%p281) target = $region52
        $region51: #{translation_transformer_forward.18} parent=47 // pred_region
          %285 = dma.done [#allocation4], 16
        $region52: #{translation_transformer_forward.18} parent=47 // pred_fallthru
          _
        // Predicated region
        $region53: #{translation_transformer_forward.18} parent=47 // pred_check
          %p286 = pneg %p126
        $region54: #{translation_transformer_forward.18} parent=47 // pred_check_branch
          %288 = sbr.rel (%p286) target = $region56
        $region55: #{translation_transformer_forward.18} parent=47 // pred_region
          %290 = dma.done [#allocation6], 16
        $region56: #{translation_transformer_forward.18} parent=47 // pred_fallthru
          _
        // Predicated region
        $region57: #{translation_transformer_forward.18} parent=47 // pred_check
          %p291 = pneg %p147
        $region58: #{translation_transformer_forward.18} parent=47 // pred_check_branch
          %293 = sbr.rel (%p291) target = $region60
        $region59: #{translation_transformer_forward.18} parent=47 // pred_region
          %295 = dma.done [#allocation6], 16
        $region60: #{translation_transformer_forward.18} parent=47 // pred_fallthru
          _
        // Predicated region
        $region61: #{translation_transformer_forward.18} parent=47 // pred_check
          %p296 = pneg %p168
        $region62: #{translation_transformer_forward.18} parent=47 // pred_check_branch
          %298 = sbr.rel (%p296) target = $region64
        $region63: #{translation_transformer_forward.18} parent=47 // pred_region
          %300 = dma.done [#allocation9], 16
        $region64: #{translation_transformer_forward.18} parent=47 // pred_fallthru
          _
        %p301 = scmp.lt.s32.totalorder %s21, 1
        %s302 = scalar_select %p301, %s21, 1
        %s303 = smul.addr %s302, 8
        %s304 = scalar_lea.vmem %s0, %s303
        %p305 = pneg %p42
        %p306 = pneg %p39
        %p307 = pneg %p63
        %p308 = pneg %p60
        %p309 = pneg %p84
        %p310 = pneg %p81
        %p311 = pneg %p105
        %p312 = pneg %p102
        %p313 = pneg %p126
        %p314 = pneg %p123
        %p315 = pneg %p147
        %p316 = pneg %p144
        %p317 = pneg %p168
        %p318 = pneg %p165
        %p319 = pneg %p194
        %p320 = pneg %p191
        %p321 = scmp.lt.s32.totalorder %s21, 1
        %s322 = scalar_select %p321, %s21, 1
        %s323 = smul.addr %s322, 8
        %s324 = scalar_lea.vmem %s7, %s323
        %p325 = scmp.lt.s32.totalorder %s21, 1
        %s326 = scalar_select %p325, %s21, 1
        %s327 = smul.addr %s326, 8
        %s328 = scalar_lea.vmem %s0, %s327
        %p329 = scmp.lt.s32.totalorder %s21, 1
        %s330 = scalar_select %p329, %s21, 1
        %s331 = smul.addr %s330, 8
        %s332 = scalar_lea.vmem %s7, %s331
        %v334 = vld [vmem:[%s328] sm:$0x7f]
        %v335 = vpack.c.bf16 %v334, %v334
        %v336 = vld [vmem:[%s1] sm:$0xf]
        %v337 = vld [vmem:[%s1 + $0x4] sm:$0xf]
        %v338 = vld [vmem:[%s1 + $0x8] sm:$0xf]
        %v339 = vld [vmem:[%s1 + $0xc] sm:$0xf]
        %v340 = vld [vmem:[#allocation3] sm:$0x1]
        %v342 = vperm.slane %v340, 0
        %v348 = vunpack.c.l.b16 %v336
        %v349 = vunpack.c.l.b16 %v337
        %v350 = vunpack.c.l.b16 %v338
        %v351 = vunpack.c.l.b16 %v339
        %v352 = vpack.c.b16 %v349, %v348
        %v353 = vpack.c.b16 %v351, %v350
        %vm356 = vcmask 261120
        %v358 = vsel %vm356, %v335, 0
        %360 = vmatpush.bf16.msra.mxu0 0
        %361 = vmatpush.bf16.msra.mxu0 0
        %362 = vmatpush.bf16.msra.mxu0 0
        %363 = vmatpush.bf16.msra.mxu0 0
        %364 = vmatpush.bf16.msra.mxu0 0
        %365 = vmatpush.bf16.msra.mxu0 0
        %366 = vmatpush.bf16.msra.mxu0 %v353
        %367 = vmatpush.bf16.msra.mxu0 %v352
        %368 = vmatmul.bf16.gmra.mxu0 %v358
        %v369 = vpop.f32.mrf.mxu0
        %v370 = vadd.f32 %v342, %v369
        %v371 = vpop.f32.mrf.mxu0
        %372 = vdwg.mxu0
        %v373 = vmul.f32 %v370, 0.25
        %v374 = vpack.c.bf16 %v373, %v373
        %v375 = vpack.c.bf16 %v370, %v370
        %377 = vrot.lane.b32.xlu0 %v375, 96
        %v378 = vpop.permute.xlu0 %377
        %vm379 = vcmask 130048
        %v381 = vsel %vm379, %v374, 0
        %v384 = vsel %vm379, %v378, 0
        %386 = vmatpush.bf16.xpose.msra.mxu0 0
        %387 = vmatpush.bf16.xpose.msra.mxu0 0
        %388 = vmatpush.bf16.xpose.msra.mxu0 0
        %389 = vmatpush.bf16.xpose.msra.mxu0 0
        %390 = vmatpush.bf16.xpose.msra.mxu0 0
        %391 = vmatpush.bf16.xpose.msra.mxu0 0
        %392 = vmatpush.bf16.xpose.msra.mxu0 0
        %393 = vmatpush.bf16.xpose.msra.mxu0 %v384
        %394 = vmatmul.bf16.gmra.mxu0 %v381
        %v395 = vpop.f32.mrf.mxu0
        %v396 = vadd.f32 0.0, %v395
        %v397 = vpop.f32.mrf.mxu0
        %398 = vdwg.mxu0
        %vm399 = vcmask 55296
        %v400 = vsel %vm399, %v396, -inf
        %401 = vmax.xlane.f32.xlu0 %v400
        %v402 = vpop.xlane.xlu0 %401
        %v403 = vsub.f32 %v396, %v402
        %v404 = vmul.f32 %v403, 1.442695
        %v405 = vpow.pop %v404
        %v406 = vsel %vm399, %v405, 0.0
        %407 = vadd.xlane.f32.xlu0 %v406
        %v408 = vpop.xlane.xlu0 %407
        %v409 = vpack.c.bf16 %v405, %v405
        %410 = vrot.lane.b32.xlu0 %v375, 64
        %v411 = vpop.permute.xlu0 %410
        %vm412 = vcmask 56320
        %v414 = vsel %vm412, %v409, 0
        %vm416 = vcmask 1042432
        %vm417 = vcmask 1043456
        %v418 = vsel %vm416, 4294967295, 65535
        %v419 = vsel %vm417, %v418, 0
        %v421 = vand.u32 %v411, %v419
        %423 = vmatpush.bf16.msra.mxu0 0
        %424 = vmatpush.bf16.msra.mxu0 0
        %425 = vmatpush.bf16.msra.mxu0 0
        %426 = vmatpush.bf16.msra.mxu0 0
        %427 = vmatpush.bf16.msra.mxu0 0
        %428 = vmatpush.bf16.msra.mxu0 0
        %429 = vmatpush.bf16.msra.mxu0 0
        %430 = vmatpush.bf16.msra.mxu0 %v421
        %431 = vmatmul.bf16.gmra.mxu0 %v414
        %v432 = vpop.f32.mrf.mxu0
        %v433 = vadd.f32 0.0, %v432
        %v434 = vpop.f32.mrf.mxu0
        %435 = vdwg.mxu0
        %v436 = vrcp.pop %v408
        %v437 = vmul.f32 %v433, %v436
        %vm438 = vcmask 129024
        %439 = vst.msk [vmem:[#allocation2] sm:$0x7f] %vm438, %v437
        %441 = vrot.lane.b32.xlu0 %v374, 112
        %v442 = vpop.permute.xlu0 %441
        %443 = vrot.lane.b32.xlu0 %v375, 80
        %v444 = vpop.permute.xlu0 %443
        %v446 = vsel %vm379, %v442, 0
        %v449 = vsel %vm379, %v444, 0
        %451 = vmatpush.bf16.xpose.msra.mxu0 0
        %452 = vmatpush.bf16.xpose.msra.mxu0 0
        %453 = vmatpush.bf16.xpose.msra.mxu0 0
        %454 = vmatpush.bf16.xpose.msra.mxu0 0
        %455 = vmatpush.bf16.xpose.msra.mxu0 0
        %456 = vmatpush.bf16.xpose.msra.mxu0 0
        %457 = vmatpush.bf16.xpose.msra.mxu0 0
        %458 = vmatpush.bf16.xpose.msra.mxu0 %v449
        %459 = vmatmul.bf16.gmra.mxu0 %v446
        %v460 = vpop.f32.mrf.mxu0
        %v461 = vadd.f32 0.0, %v460
        %v462 = vpop.f32.mrf.mxu0
        %463 = vdwg.mxu0
        %v464 = vsel %vm399, %v461, -inf
        %465 = vmax.xlane.f32.xlu0 %v464
        %v466 = vpop.xlane.xlu0 %465
        %v467 = vsub.f32 %v461, %v466
        %v468 = vmul.f32 %v467, 1.442695
        %v469 = vpow.pop %v468
        %v470 = vsel %vm399, %v469, 0.0
        %471 = vadd.xlane.f32.xlu0 %v470
        %v472 = vpop.xlane.xlu0 %471
        %v473 = vpack.c.bf16 %v469, %v469
        %474 = vrot.lane.b32.xlu0 %v375, 48
        %v475 = vpop.permute.xlu0 %474
        %v477 = vsel %vm412, %v473, 0
        %v480 = vand.u32 %v475, %v419
        %482 = vmatpush.bf16.msra.mxu0 0
        %483 = vmatpush.bf16.msra.mxu0 0
        %484 = vmatpush.bf16.msra.mxu0 0
        %485 = vmatpush.bf16.msra.mxu0 0
        %486 = vmatpush.bf16.msra.mxu0 0
        %487 = vmatpush.bf16.msra.mxu0 0
        %488 = vmatpush.bf16.msra.mxu0 0
        %489 = vmatpush.bf16.msra.mxu0 %v480
        %490 = vmatmul.bf16.gmra.mxu0 %v477
        %v491 = vpop.f32.mrf.mxu0
        %v492 = vadd.f32 0.0, %v491
        %v493 = vpop.f32.mrf.mxu0
        %494 = vdwg.mxu0
        %v495 = vrcp.pop %v472
        %v496 = vmul.f32 %v492, %v495
        %498 = vrot.lane.b32.xlu0 %v496, 16
        %v499 = vpop.permute.xlu0 %498
        %vm501 = vcmask 260224
        %502 = vst.msk [vmem:[#allocation2] sm:$0x7f] %vm501, %v499
        %v503 = vld [vmem:[#allocation2] sm:$0x7f]
        %v504 = vpack.c.bf16 %v503, %v503
        %v505 = vld [vmem:[%s3] sm:$0xf]
        %v506 = vld [vmem:[%s3 + $0x4] sm:$0xf]
        %v507 = vld [vmem:[%s3 + $0x8] sm:$0xf]
        %v508 = vld [vmem:[%s3 + $0xc] sm:$0xf]
        %v509 = vld [vmem:[#allocation5] sm:$0x1]
        %v511 = vperm.slane %v509, 0
        %v517 = vunpack.c.l.b16 %v505
        %v518 = vunpack.c.l.b16 %v506
        %v519 = vunpack.c.l.b16 %v507
        %v520 = vunpack.c.l.b16 %v508
        %v521 = vpack.c.b16 %v518, %v517
        %v522 = vpack.c.b16 %v520, %v519
        %v526 = vsel %vm356, %v504, 0
        %528 = vmatpush.bf16.msra.mxu0 0
        %529 = vmatpush.bf16.msra.mxu0 0
        %530 = vmatpush.bf16.msra.mxu0 0
        %531 = vmatpush.bf16.msra.mxu0 0
        %532 = vmatpush.bf16.msra.mxu0 0
        %533 = vmatpush.bf16.msra.mxu0 0
        %534 = vmatpush.bf16.msra.mxu0 %v522
        %535 = vmatpush.bf16.msra.mxu0 %v521
        %536 = vmatmul.bf16.gmra.mxu0 %v526
        %v537 = vpop.f32.mrf.mxu0
        %v538 = vadd.f32 %v511, %v537
        %v539 = vpop.f32.mrf.mxu0
        %540 = vdwg.mxu0
        %v541 = vadd.f32 %v334, %v538
        %vm542 = vcmask 260096
        %v543 = vsel %vm542, %v541, 0.0
        %544 = vadd.xlane.f32.xlu0 %v543
        %v545 = vpop.xlane.xlu0 %544
        %v546 = vrcp.pop 32.0
        %v547 = vmul.f32 32.0, %v546
        %v548 = vsub.f32 1.0, %v547
        %v549 = vmul.f32 %v546, %v548
        %v550 = vadd.f32 %v546, %v549
        %vm551 = vweird.f32 %v546
        %v552 = vsel %vm551, %v546, %v550
        %v553 = vmul.f32 %v545, %v552
        %v554 = vsub.f32 %v541, %v553
        %v555 = vmul.f32 %v554, %v554
        %v556 = vsel %vm542, %v555, 0.0
        %557 = vadd.xlane.f32.xlu0 %v556
        %v558 = vpop.xlane.xlu0 %557
        %v559 = vmul.f32 %v558, %v552
        %v560 = vadd.f32 %v559, 1e-05
        %v561 = vrsqrt.pop %v560
        %v562 = vmul.f32 %v561, %v560
        %v563 = vmul.f32 %v562, %v561
        %v564 = vmul.f32 0.5, %v563
        %v565 = vsub.f32 1.5, %v564
        %v566 = vmul.f32 %v561, %v565
        %vm567 = vweird.f32 %v560
        %vm568 = vweird.f32 %v561
        %vm569 = vmor %vm567, %vm568
        %v570 = vsel %vm569, %v561, %v566
        %v571 = vmul.f32 %v554, %v570
        %v572 = vld [vmem:[#allocation7] sm:$0x1]
        %v574 = vperm.slane %v572, 0
        %v576 = vmul.f32 %v571, %v574
        %v577 = vld [vmem:[#allocation8] sm:$0x1]
        %v579 = vperm.slane %v577, 0
        %v581 = vadd.f32 %v576, %v579
        %582 = vst.msk [vmem:[%s332] sm:$0x7f] %vm542, %v581
        %p583 = scmp.lt.s32.totalorder %s21, 1
        %s584 = scalar_select %p583, %s21, 1
        %s585 = smul.addr %s584, 8
        %s586 = scalar_lea.vmem %s7, %s585
        // Predicated region
        $region65: #{translation_transformer_forward.18} parent=47 // pred_check
          %p587 = pneg %p191
        $region66: #{translation_transformer_forward.18} parent=47 // pred_check_branch
          %589 = sbr.rel (%p587) target = $region68
        $region67: #{translation_transformer_forward.18} parent=47 // pred_region
          _
        $region68: #{translation_transformer_forward.18} parent=47 // pred_fallthru
          _
      $region48: #{translation_transformer_forward.18} parent=5 // pred_fallthru
        _
      %p590 = scmp.le.s32.totalorder 2, %s16
      // Predicated region
      $region69: #{translation_transformer_forward.18} parent=5 // pred_check
        %p591 = pneg %p590
      $region70: #{translation_transformer_forward.18} parent=5 // pred_check_branch
        %593 = sbr.rel (%p591) target = $region72
      $region71: #{translation_transformer_forward.18} parent=5 // pred_region
        %s594 = ssub.s32 %s16, 2
        // Predicated region
        $region73: #{translation_transformer_forward.18} parent=71 // pred_check
          %p595 = pneg %p197
        $region74: #{translation_transformer_forward.18} parent=71 // pred_check_branch
          %597 = sbr.rel (%p595) target = $region76
        $region75: #{translation_transformer_forward.18} parent=71 // pred_region
          %p598 = scmp.lt.s32.totalorder %s22, 1
          %s599 = scalar_select %p598, %s22, 1
          %s600 = smul.addr %s599, 8
          %s601 = scalar_lea.vmem %s7, %s600
        $region76: #{translation_transformer_forward.18} parent=71 // pred_fallthru
          _
      $region72: #{translation_transformer_forward.18} parent=5 // pred_fallthru
        _
    $region6: #{translation_transformer_forward.18} parent=1 // loop_footer
      %s20 = sadd.s32 1, %s16
    $region7: #{translation_transformer_forward.18} parent=1 // loop_footer_branch
      %15 = sbr.rel target = $region3
    $region8: #{translation_transformer_forward.18} parent=1 // loop_exit
      _
    %602 = vsyncpa [#allocation4], 1
    %s603 = scalar_lea.sflag [#allocation4], 1
    %604 = vsyncpa %s603, 1
    %605 = vsyncpa [#allocation6], 1
    %606 = vsyncpa [#allocation9], 1

// kernel: translation_transformer_forward.21
$region0: #{translation_transformer_forward.21}
  #allocation0 [shape = 'u32[]', space=smem, size = 0x4, offset = 0x4, fixed_abs, tag = 'smem constant byte address 0x4 - core index']
  #allocation1 [shape = 'u32[72,128]{1,0:T(1,128)}', space=vmem, size = 0x9000, scoped, tag = 'internal scratch']
  %s0 = inlined_call_operand.vmem [shape: f32[14,32], index: 0, kind: input, shape index: {}]
  %s1 = inlined_call_operand.vmem [shape: bf16[32,128], index: 1, kind: input, shape index: {}]
  %s2 = inlined_call_operand.vmem [shape: f32[1,128], index: 2, kind: input, shape index: {}]
  %s3 = inlined_call_operand.vmem [shape: f32[14,128], index: 3, kind: output, shape index: {}]
  %s4 = sld [smem:[#allocation0]]
  $region22: #{translation_transformer_forward.21} parent=0
    _
  %s6 = ssub.s32 1, %s4
  %s7 = scalar_select 0, %s6, %s4
  // Predicated region
  $region2: #{translation_transformer_forward.21} parent=0 // pred_check
    _
  $region3: #{translation_transformer_forward.21} parent=0 // pred_check_branch
    %9 = sbr.rel (0) target = $region5
  $region4: #{translation_transformer_forward.21} parent=0 // pred_region
    _
  $region5: #{translation_transformer_forward.21} parent=0 // pred_fallthru
    _
  // Predicated region
  $region6: #{translation_transformer_forward.21} parent=0 // pred_check
    _
  $region7: #{translation_transformer_forward.21} parent=0 // pred_check_branch
    %11 = sbr.rel (0) target = $region9
  $region8: #{translation_transformer_forward.21} parent=0 // pred_region
    _
  $region9: #{translation_transformer_forward.21} parent=0 // pred_fallthru
    _
  // Predicated region
  $region10: #{translation_transformer_forward.21} parent=0 // pred_check
    _
  $region11: #{translation_transformer_forward.21} parent=0 // pred_check_branch
    %13 = sbr.rel (0) target = $region13
  $region12: #{translation_transformer_forward.21} parent=0 // pred_region
    _
  $region13: #{translation_transformer_forward.21} parent=0 // pred_fallthru
    _
  %v15 = vld [vmem:[%s0] sm:$0xff]
  %v16 = vld [vmem:[%s0 + $0x8] sm:$0x3f]
  %v17 = vpack.c.bf16 %v16, %v15
  %v18 = vld [vmem:[%s1] sm:$0xf]
  %v19 = vld [vmem:[%s1 + $0x4] sm:$0xf]
  %v20 = vld [vmem:[%s1 + $0x8] sm:$0xf]
  %v21 = vld [vmem:[%s1 + $0xc] sm:$0xf]
  %v22 = vld [vmem:[%s2] sm:$0x1]
  %v24 = vperm.slane %v22, 0
  %v30 = vunpack.c.l.b16 %v18
  %v31 = vunpack.c.l.b16 %v19
  %v32 = vunpack.c.l.b16 %v20
  %v33 = vunpack.c.l.b16 %v21
  %v34 = vpack.c.b16 %v31, %v30
  %v35 = vpack.c.b16 %v33, %v32
  %vm38 = vcmask 261120
  %v40 = vsel %vm38, %v17, 0
  %42 = vmatpush.bf16.msra.mxu0 0
  %43 = vmatpush.bf16.msra.mxu0 0
  %44 = vmatpush.bf16.msra.mxu0 0
  %45 = vmatpush.bf16.msra.mxu0 0
  %46 = vmatpush.bf16.msra.mxu0 0
  %47 = vmatpush.bf16.msra.mxu0 0
  %48 = vmatpush.bf16.msra.mxu0 %v35
  %49 = vmatpush.bf16.msra.mxu0 %v34
  %50 = vmatmul.bf16.gmra.mxu0 %v40
  %v51 = vpop.f32.mrf.mxu0
  %v52 = vadd.f32 %v24, %v51
  %v53 = vpop.f32.mrf.mxu0
  %v54 = vadd.f32 %v24, %v53
  %55 = vdwg.mxu0
  %56 = vst [vmem:[%s3] sm:$0xff] %v52
  %57 = vst [vmem:[%s3 + $0x8] sm:$0x3f] %v54
  // Predicated region
  $region14: #{translation_transformer_forward.21} parent=0 // pred_check
    _
  $region15: #{translation_transformer_forward.21} parent=0 // pred_check_branch
    %59 = sbr.rel (0) target = $region17
  $region16: #{translation_transformer_forward.21} parent=0 // pred_region
    _
  $region17: #{translation_transformer_forward.21} parent=0 // pred_fallthru
    _
  // Predicated region
  $region18: #{translation_transformer_forward.21} parent=0 // pred_check
    _
  $region19: #{translation_transformer_forward.21} parent=0 // pred_check_branch
    %61 = sbr.rel (0) target = $region21
  $region20: #{translation_transformer_forward.21} parent=0 // pred_region
    _
  $region21: #{translation_transformer_forward.21} parent=0 // pred_fallthru
    _

// kernel: translation_transformer_forward.19
$region0: #{translation_transformer_forward.19}
  #allocation0 [shape = 'u32[]', space=smem, size = 0x4, offset = 0x4, fixed_abs, tag = 'smem constant byte address 0x4 - core index']
  #allocation1 [shape = 'u32[72,128]{1,0:T(1,128)}', space=vmem, size = 0x9000, scoped, tag = 'internal scratch']
  #allocation2 [shape = 'f32[7,32]{1,0:T(8,128)}', space=vmem, size = 0x1000, scoped, tag = 'scratch operand']
  %s0 = inlined_call_operand.vmem [shape: f32[2,7,32], index: 0, kind: input, shape index: {}]
  %s1 = inlined_call_operand.vmem [shape: f32[2,8,32], index: 1, kind: input, shape index: {}]
  %s2 = inlined_call_operand.vmem [shape: bf16[32,32], index: 2, kind: input, shape index: {}]
  %s3 = inlined_call_operand.hbm [shape: f32[1,32], index: 3, kind: input, shape index: {}]
  %s4 = inlined_call_operand.vmem [shape: bf16[32,64], index: 4, kind: input, shape index: {}]
  %s5 = inlined_call_operand.hbm [shape: f32[1,64], index: 5, kind: input, shape index: {}]
  %s6 = inlined_call_operand.vmem [shape: bf16[32,32], index: 6, kind: input, shape index: {}]
  %s7 = inlined_call_operand.hbm [shape: f32[1,32], index: 7, kind: input, shape index: {}]
  %s8 = inlined_call_operand.hbm [shape: f32[1,32], index: 8, kind: input, shape index: {}]
  %s9 = inlined_call_operand.hbm [shape: f32[1,32], index: 9, kind: input, shape index: {}]
  %s10 = inlined_call_operand.vmem [shape: f32[2,7,32], index: 10, kind: output, shape index: {}]
  %s11 = sld [smem:[#allocation0]]
  $region93: #{translation_transformer_forward.19} parent=0
    _
  %s13 = ssub.s32 1, %s11
  %s14 = scalar_select 0, %s13, %s11
  $region1: #{translation_transformer_forward.19} parent=0
    #allocation3 [shape = 'u8[512]{0}', space=vmem, size = 0x400, scoped, tag = 'input window, operand 3, single buffered']
    #allocation4 [shape = 's32[2]{0}', space=sflag, size = 0x8, scoped, tag = 'scoped memory for translation_transformer_forward.19']
    #allocation5 [shape = 'u8[512]{0}', space=vmem, size = 0x400, scoped, tag = 'input window, operand 5, single buffered']
    #allocation6 [shape = 's32[1]{0}', space=sflag, size = 0x4, scoped, tag = 'scoped memory for translation_transformer_forward.19']
    #allocation7 [shape = 'u8[512]{0}', space=vmem, size = 0x400, scoped, tag = 'input window, operand 7, single buffered']
    #allocation8 [shape = 'u8[512]{0}', space=vmem, size = 0x400, scoped, tag = 'input window, operand 8, single buffered']
    #allocation9 [shape = 's32[1]{0}', space=sflag, size = 0x4, scoped, tag = 'scoped memory for translation_transformer_forward.19']
    #allocation10 [shape = 'u8[512]{0}', space=vmem, size = 0x400, scoped, tag = 'input window, operand 9, single buffered']
    %15 = vsyncpa [#allocation4], 0
    %16 = vsyncpa [#allocation6], 0
    %17 = vsyncpa [#allocation9], 0
    loop: start=0, step=1, limit=4
    $region2: #{translation_transformer_forward.19} parent=1 // loop_pre_header
      _
    $region3: #{translation_transformer_forward.19} parent=1 // loop_header
      %s19 = sphi 0, %s23
      %p20 = scmp.ge.s32.totalorder %s19, 4
      %s29 = sphi 0, %s31
      %s32 = sphi 0, %s29
      %s33 = sphi 0, %s32
      %s49 = sphi 0, %s33
      %s55 = sphi 0, %s57
      %s58 = sphi 0, %s55
      %s59 = sphi 0, %s58
      %s75 = sphi 0, %s59
      %s79 = sphi 0, %s79
      %s81 = sphi 0, %s79
      %s82 = sphi 0, %s81
      %s96 = sphi 0, %s82
      %s100 = sphi 0, %s100
      %s102 = sphi 0, %s100
      %s103 = sphi 0, %s102
      %s117 = sphi 0, %s103
      %s121 = sphi 0, %s121
      %s123 = sphi 0, %s121
      %s124 = sphi 0, %s123
      %s138 = sphi 0, %s124
      %s142 = sphi 0, %s142
      %s144 = sphi 0, %s142
      %s145 = sphi 0, %s144
      %s159 = sphi 0, %s145
      %s163 = sphi 0, %s163
      %s165 = sphi 0, %s163
      %s166 = sphi 0, %s165
      %s180 = sphi 0, %s166
      %s184 = sphi 0, %s184
      %s186 = sphi 0, %s184
      %s187 = sphi 0, %s186
      %s201 = sphi 0, %s187
      %s205 = sphi 0, %s205
      %s207 = sphi 0, %s205
      %s208 = sphi 0, %s207
      %s222 = sphi 0, %s208
      %s226 = sphi 0, %s226
      %s228 = sphi 0, %s226
      %s229 = sphi 0, %s228
      %s243 = sphi 0, %s229
      %s249 = sphi 0, %s251
      %s252 = sphi 0, %s249
      %s253 = sphi 0, %s252
      %s269 = sphi 0, %s253
    $region4: #{translation_transformer_forward.19} parent=1 // loop_header_branch
      %22 = sbr.rel (%p20) target = $region8
    $region5: #{translation_transformer_forward.19} parent=1 // loop_body
      %s24 = ssub.s32 %s19, 1
      %s25 = ssub.s32 %s19, 2
      %s26 = sadd.s32 %s19, 1
      %s27 = ssub.s32 %s19, %s26
      %p28 = scmp.eq.s32.totalorder %s27, 0
      %s30 = sadd.s32 %s29, 1
      %s31 = scalar_select %p28, %s29, %s30
      %p34 = pneg %p28
      %p35 = scmp.eq.s32.totalorder %s19, 1
      %p36 = por %p34, %p35
      %p37 = scmp.ne.s32.totalorder %s29, %s32
      %p38 = scmp.eq.s32.totalorder %s19, 0
      %p39 = por %p37, %p38
      %p40 = scmp.ne.s32.totalorder %s29, %s32
      %p41 = scmp.eq.s32.totalorder %s24, 1
      %p42 = por %p40, %p41
      %p43 = scmp.ne.s32.totalorder %s32, %s33
      %p44 = scmp.eq.s32.totalorder %s24, 0
      %p45 = por %p43, %p44
      %p46 = scmp.ne.s32.totalorder %s32, %s33
      %p47 = scmp.eq.s32.totalorder %s25, 1
      %p48 = por %p46, %p47
      %p50 = scmp.ne.s32.totalorder %s33, %s49
      %p51 = scmp.eq.s32.totalorder %s25, 0
      %p52 = por %p50, %p51
      %s53 = ssub.s32 %s19, %s26
      %p54 = scmp.eq.s32.totalorder %s53, 0
      %s56 = sadd.s32 %s55, 1
      %s57 = scalar_select %p54, %s55, %s56
      %p60 = pneg %p54
      %p61 = scmp.eq.s32.totalorder %s19, 1
      %p62 = por %p60, %p61
      %p63 = scmp.ne.s32.totalorder %s55, %s58
      %p64 = scmp.eq.s32.totalorder %s19, 0
      %p65 = por %p63, %p64
      %p66 = scmp.ne.s32.totalorder %s55, %s58
      %p67 = scmp.eq.s32.totalorder %s24, 1
      %p68 = por %p66, %p67
      %p69 = scmp.ne.s32.totalorder %s58, %s59
      %p70 = scmp.eq.s32.totalorder %s24, 0
      %p71 = por %p69, %p70
      %p72 = scmp.ne.s32.totalorder %s58, %s59
      %p73 = scmp.eq.s32.totalorder %s25, 1
      %p74 = por %p72, %p73
      %p76 = scmp.ne.s32.totalorder %s59, %s75
      %p77 = scmp.eq.s32.totalorder %s25, 0
      %p78 = por %p76, %p77
      %s80 = sadd.s32 %s79, 1
      %p83 = scmp.eq.s32.totalorder %s19, 1
      %p84 = scmp.ne.s32.totalorder %s79, %s81
      %p85 = scmp.eq.s32.totalorder %s19, 0
      %p86 = por %p84, %p85
      %p87 = scmp.ne.s32.totalorder %s79, %s81
      %p88 = scmp.eq.s32.totalorder %s24, 1
      %p89 = por %p87, %p88
      %p90 = scmp.ne.s32.totalorder %s81, %s82
      %p91 = scmp.eq.s32.totalorder %s24, 0
      %p92 = por %p90, %p91
      %p93 = scmp.ne.s32.totalorder %s81, %s82
      %p94 = scmp.eq.s32.totalorder %s25, 1
      %p95 = por %p93, %p94
      %p97 = scmp.ne.s32.totalorder %s82, %s96
      %p98 = scmp.eq.s32.totalorder %s25, 0
      %p99 = por %p97, %p98
      %s101 = sadd.s32 %s100, 1
      %p104 = scmp.eq.s32.totalorder %s19, 1
      %p105 = scmp.ne.s32.totalorder %s100, %s102
      %p106 = scmp.eq.s32.totalorder %s19, 0
      %p107 = por %p105, %p106
      %p108 = scmp.ne.s32.totalorder %s100, %s102
      %p109 = scmp.eq.s32.totalorder %s24, 1
      %p110 = por %p108, %p109
      %p111 = scmp.ne.s32.totalorder %s102, %s103
      %p112 = scmp.eq.s32.totalorder %s24, 0
      %p113 = por %p111, %p112
      %p114 = scmp.ne.s32.totalorder %s102, %s103
      %p115 = scmp.eq.s32.totalorder %s25, 1
      %p116 = por %p114, %p115
      %p118 = scmp.ne.s32.totalorder %s103, %s117
      %p119 = scmp.eq.s32.totalorder %s25, 0
      %p120 = por %p118, %p119
      %s122 = sadd.s32 %s121, 1
      %p125 = scmp.eq.s32.totalorder %s19, 1
      %p126 = scmp.ne.s32.totalorder %s121, %s123
      %p127 = scmp.eq.s32.totalorder %s19, 0
      %p128 = por %p126, %p127
      %p129 = scmp.ne.s32.totalorder %s121, %s123
      %p130 = scmp.eq.s32.totalorder %s24, 1
      %p131 = por %p129, %p130
      %p132 = scmp.ne.s32.totalorder %s123, %s124
      %p133 = scmp.eq.s32.totalorder %s24, 0
      %p134 = por %p132, %p133
      %p135 = scmp.ne.s32.totalorder %s123, %s124
      %p136 = scmp.eq.s32.totalorder %s25, 1
      %p137 = por %p135, %p136
      %p139 = scmp.ne.s32.totalorder %s124, %s138
      %p140 = scmp.eq.s32.totalorder %s25, 0
      %p141 = por %p139, %p140
      %s143 = sadd.s32 %s142, 1
      %p146 = scmp.eq.s32.totalorder %s19, 1
      %p147 = scmp.ne.s32.totalorder %s142, %s144
      %p148 = scmp.eq.s32.totalorder %s19, 0
      %p149 = por %p147, %p148
      %p150 = scmp.ne.s32.totalorder %s142, %s144
      %p151 = scmp.eq.s32.totalorder %s24, 1
      %p152 = por %p150, %p151
      %p153 = scmp.ne.s32.totalorder %s144, %s145
      %p154 = scmp.eq.s32.totalorder %s24, 0
      %p155 = por %p153, %p154
      %p156 = scmp.ne.s32.totalorder %s144, %s145
      %p157 = scmp.eq.s32.totalorder %s25, 1
      %p158 = por %p156, %p157
      %p160 = scmp.ne.s32.totalorder %s145, %s159
      %p161 = scmp.eq.s32.totalorder %s25, 0
      %p162 = por %p160, %p161
      %s164 = sadd.s32 %s163, 1
      %p167 = scmp.eq.s32.totalorder %s19, 1
      %p168 = scmp.ne.s32.totalorder %s163, %s165
      %p169 = scmp.eq.s32.totalorder %s19, 0
      %p170 = por %p168, %p169
      %p171 = scmp.ne.s32.totalorder %s163, %s165
      %p172 = scmp.eq.s32.totalorder %s24, 1
      %p173 = por %p171, %p172
      %p174 = scmp.ne.s32.totalorder %s165, %s166
      %p175 = scmp.eq.s32.totalorder %s24, 0
      %p176 = por %p174, %p175
      %p177 = scmp.ne.s32.totalorder %s165, %s166
      %p178 = scmp.eq.s32.totalorder %s25, 1
      %p179 = por %p177, %p178
      %p181 = scmp.ne.s32.totalorder %s166, %s180
      %p182 = scmp.eq.s32.totalorder %s25, 0
      %p183 = por %p181, %p182
      %s185 = sadd.s32 %s184, 1
      %p188 = scmp.eq.s32.totalorder %s19, 1
      %p189 = scmp.ne.s32.totalorder %s184, %s186
      %p190 = scmp.eq.s32.totalorder %s19, 0
      %p191 = por %p189, %p190
      %p192 = scmp.ne.s32.totalorder %s184, %s186
      %p193 = scmp.eq.s32.totalorder %s24, 1
      %p194 = por %p192, %p193
      %p195 = scmp.ne.s32.totalorder %s186, %s187
      %p196 = scmp.eq.s32.totalorder %s24, 0
      %p197 = por %p195, %p196
      %p198 = scmp.ne.s32.totalorder %s186, %s187
      %p199 = scmp.eq.s32.totalorder %s25, 1
      %p200 = por %p198, %p199
      %p202 = scmp.ne.s32.totalorder %s187, %s201
      %p203 = scmp.eq.s32.totalorder %s25, 0
      %p204 = por %p202, %p203
      %s206 = sadd.s32 %s205, 1
      %p209 = scmp.eq.s32.totalorder %s19, 1
      %p210 = scmp.ne.s32.totalorder %s205, %s207
      %p211 = scmp.eq.s32.totalorder %s19, 0
      %p212 = por %p210, %p211
      %p213 = scmp.ne.s32.totalorder %s205, %s207
      %p214 = scmp.eq.s32.totalorder %s24, 1
      %p215 = por %p213, %p214
      %p216 = scmp.ne.s32.totalorder %s207, %s208
      %p217 = scmp.eq.s32.totalorder %s24, 0
      %p218 = por %p216, %p217
      %p219 = scmp.ne.s32.totalorder %s207, %s208
      %p220 = scmp.eq.s32.totalorder %s25, 1
      %p221 = por %p219, %p220
      %p223 = scmp.ne.s32.totalorder %s208, %s222
      %p224 = scmp.eq.s32.totalorder %s25, 0
      %p225 = por %p223, %p224
      %s227 = sadd.s32 %s226, 1
      %p230 = scmp.eq.s32.totalorder %s19, 1
      %p231 = scmp.ne.s32.totalorder %s226, %s228
      %p232 = scmp.eq.s32.totalorder %s19, 0
      %p233 = por %p231, %p232
      %p234 = scmp.ne.s32.totalorder %s226, %s228
      %p235 = scmp.eq.s32.totalorder %s24, 1
      %p236 = por %p234, %p235
      %p237 = scmp.ne.s32.totalorder %s228, %s229
      %p238 = scmp.eq.s32.totalorder %s24, 0
      %p239 = por %p237, %p238
      %p240 = scmp.ne.s32.totalorder %s228, %s229
      %p241 = scmp.eq.s32.totalorder %s25, 1
      %p242 = por %p240, %p241
      %p244 = scmp.ne.s32.totalorder %s229, %s243
      %p245 = scmp.eq.s32.totalorder %s25, 0
      %p246 = por %p244, %p245
      %s247 = ssub.s32 %s19, %s26
      %p248 = scmp.eq.s32.totalorder %s247, 0
      %s250 = sadd.s32 %s249, 1
      %s251 = scalar_select %p248, %s249, %s250
      %p254 = pneg %p248
      %p255 = scmp.eq.s32.totalorder %s19, 1
      %p256 = por %p254, %p255
      %p257 = scmp.ne.s32.totalorder %s249, %s252
      %p258 = scmp.eq.s32.totalorder %s19, 0
      %p259 = por %p257, %p258
      %p260 = scmp.ne.s32.totalorder %s249, %s252
      %p261 = scmp.eq.s32.totalorder %s24, 1
      %p262 = por %p260, %p261
      %p263 = scmp.ne.s32.totalorder %s252, %s253
      %p264 = scmp.eq.s32.totalorder %s24, 0
      %p265 = por %p263, %p264
      %p266 = scmp.ne.s32.totalorder %s252, %s253
      %p267 = scmp.eq.s32.totalorder %s25, 1
      %p268 = por %p266, %p267
      %p270 = scmp.ne.s32.totalorder %s253, %s269
      %p271 = scmp.eq.s32.totalorder %s25, 0
      %p272 = por %p270, %p271
      %p273 = scmp.le.s32.totalorder 1, %s19
      %p274 = scmp.lt.s32.totalorder %s19, 3
      %p275 = pnand %p273, %p274
      %p276 = pneg %p275
      // Predicated region
      $region9: #{translation_transformer_forward.19} parent=5 // pred_check
        _
      $region10: #{translation_transformer_forward.19} parent=5 // pred_check_branch
        %278 = sbr.rel (%p275) target = $region12
      $region11: #{translation_transformer_forward.19} parent=5 // pred_region
        %s279 = ssub.s32 %s19, 1
        // Predicated region
        $region13: #{translation_transformer_forward.19} parent=11 // pred_check
          %p280 = pneg %p92
        $region14: #{translation_transformer_forward.19} parent=11 // pred_check_branch
          %282 = sbr.rel (%p280) target = $region16
        $region15: #{translation_transformer_forward.19} parent=11 // pred_region
          _
        $region16: #{translation_transformer_forward.19} parent=11 // pred_fallthru
          _
        // Predicated region
        $region17: #{translation_transformer_forward.19} parent=11 // pred_check
          %p283 = pneg %p113
        $region18: #{translation_transformer_forward.19} parent=11 // pred_check_branch
          %285 = sbr.rel (%p283) target = $region20
        $region19: #{translation_transformer_forward.19} parent=11 // pred_region
          %287 = vsyncadd [#allocation4], 0
          %s289 = sshll.u32 %s3, 4
          %s290 = int_to_ptr.hbm [resolvable:$true] %s289
          %s291 = sshll.u32 [#allocation3], 4
          %s292 = int_to_ptr.vmem [resolvable:$true] %s291
          %294 = dma.hbm_to_vmem [thread:$0]  %s290, 16, %s292, [#allocation4]
        $region20: #{translation_transformer_forward.19} parent=11 // pred_fallthru
          _
        // Predicated region
        $region21: #{translation_transformer_forward.19} parent=11 // pred_check
          %p295 = pneg %p134
        $region22: #{translation_transformer_forward.19} parent=11 // pred_check_branch
          %297 = sbr.rel (%p295) target = $region24
        $region23: #{translation_transformer_forward.19} parent=11 // pred_region
          _
        $region24: #{translation_transformer_forward.19} parent=11 // pred_fallthru
          _
        // Predicated region
        $region25: #{translation_transformer_forward.19} parent=11 // pred_check
          %p298 = pneg %p155
        $region26: #{translation_transformer_forward.19} parent=11 // pred_check_branch
          %300 = sbr.rel (%p298) target = $region28
        $region27: #{translation_transformer_forward.19} parent=11 // pred_region
          %302 = vsyncadd [#allocation6], 0
          %s304 = sshll.u32 %s5, 4
          %s305 = int_to_ptr.hbm [resolvable:$true] %s304
          %s306 = sshll.u32 [#allocation5], 4
          %s307 = int_to_ptr.vmem [resolvable:$true] %s306
          %309 = dma.hbm_to_vmem [thread:$0]  %s305, 16, %s307, [#allocation6]
        $region28: #{translation_transformer_forward.19} parent=11 // pred_fallthru
          _
        // Predicated region
        $region29: #{translation_transformer_forward.19} parent=11 // pred_check
          %p310 = pneg %p176
        $region30: #{translation_transformer_forward.19} parent=11 // pred_check_branch
          %312 = sbr.rel (%p310) target = $region32
        $region31: #{translation_transformer_forward.19} parent=11 // pred_region
          _
        $region32: #{translation_transformer_forward.19} parent=11 // pred_fallthru
          _
        // Predicated region
        $region33: #{translation_transformer_forward.19} parent=11 // pred_check
          %p313 = pneg %p197
        $region34: #{translation_transformer_forward.19} parent=11 // pred_check_branch
          %315 = sbr.rel (%p313) target = $region36
        $region35: #{translation_transformer_forward.19} parent=11 // pred_region
          %317 = vsyncadd [#allocation6], 0
          %s319 = sshll.u32 %s7, 4
          %s320 = int_to_ptr.hbm [resolvable:$true] %s319
          %s321 = sshll.u32 [#allocation7], 4
          %s322 = int_to_ptr.vmem [resolvable:$true] %s321
          %324 = dma.hbm_to_vmem [thread:$0]  %s320, 16, %s322, [#allocation6]
        $region36: #{translation_transformer_forward.19} parent=11 // pred_fallthru
          _
        // Predicated region
        $region37: #{translation_transformer_forward.19} parent=11 // pred_check
          %p325 = pneg %p218
        $region38: #{translation_transformer_forward.19} parent=11 // pred_check_branch
          %327 = sbr.rel (%p325) target = $region40
        $region39: #{translation_transformer_forward.19} parent=11 // pred_region
          %329 = vsyncadd [#allocation9], 0
          %s331 = sshll.u32 %s8, 4
          %s332 = int_to_ptr.hbm [resolvable:$true] %s331
          %s333 = sshll.u32 [#allocation8], 4
          %s334 = int_to_ptr.vmem [resolvable:$true] %s333
          %336 = dma.hbm_to_vmem [thread:$0]  %s332, 16, %s334, [#allocation9]
        $region40: #{translation_transformer_forward.19} parent=11 // pred_fallthru
          _
        // Predicated region
        $region41: #{translation_transformer_forward.19} parent=11 // pred_check
          %p337 = pneg %p239
        $region42: #{translation_transformer_forward.19} parent=11 // pred_check_branch
          %339 = sbr.rel (%p337) target = $region44
        $region43: #{translation_transformer_forward.19} parent=11 // pred_region
          %341 = vsyncadd [#allocation9], 0
          %s343 = sshll.u32 %s9, 4
          %s344 = int_to_ptr.hbm [resolvable:$true] %s343
          %s345 = sshll.u32 [#allocation10], 4
          %s346 = int_to_ptr.vmem [resolvable:$true] %s345
          %348 = dma.hbm_to_vmem [thread:$0]  %s344, 16, %s346, [#allocation9]
        $region44: #{translation_transformer_forward.19} parent=11 // pred_fallthru
          _
      $region12: #{translation_transformer_forward.19} parent=5 // pred_fallthru
        _
      %p349 = scmp.lt.s32.totalorder %s19, 2
      // Predicated region
      $region45: #{translation_transformer_forward.19} parent=5 // pred_check
        %p350 = pneg %p349
      $region46: #{translation_transformer_forward.19} parent=5 // pred_check_branch
        %352 = sbr.rel (%p350) target = $region48
      $region47: #{translation_transformer_forward.19} parent=5 // pred_region
        // Predicated region
        $region49: #{translation_transformer_forward.19} parent=47 // pred_check
          %p353 = pneg %p39
        $region50: #{translation_transformer_forward.19} parent=47 // pred_check_branch
          %355 = sbr.rel (%p353) target = $region52
        $region51: #{translation_transformer_forward.19} parent=47 // pred_region
          %p356 = scmp.lt.s32.totalorder %s19, 1
          %s357 = scalar_select %p356, %s19, 1
          %s358 = smul.addr %s357, 8
          %s359 = scalar_lea.vmem %s0, %s358
        $region52: #{translation_transformer_forward.19} parent=47 // pred_fallthru
          _
        // Predicated region
        $region53: #{translation_transformer_forward.19} parent=47 // pred_check
          %p360 = pneg %p65
        $region54: #{translation_transformer_forward.19} parent=47 // pred_check_branch
          %362 = sbr.rel (%p360) target = $region56
        $region55: #{translation_transformer_forward.19} parent=47 // pred_region
          %p363 = scmp.lt.s32.totalorder %s19, 1
          %s364 = scalar_select %p363, %s19, 1
          %s365 = smul.addr %s364, 8
          %s366 = scalar_lea.vmem %s1, %s365
        $region56: #{translation_transformer_forward.19} parent=47 // pred_fallthru
          _
      $region48: #{translation_transformer_forward.19} parent=5 // pred_fallthru
        _
      %p367 = scmp.le.s32.totalorder 1, %s19
      %p368 = scmp.lt.s32.totalorder %s19, 3
      %p369 = pnand %p367, %p368
      %p370 = pneg %p369
      // Predicated region
      $region57: #{translation_transformer_forward.19} parent=5 // pred_check
        _
      $region58: #{translation_transformer_forward.19} parent=5 // pred_check_branch
        %372 = sbr.rel (%p369) target = $region60
      $region59: #{translation_transformer_forward.19} parent=5 // pred_region
        %s373 = ssub.s32 %s19, 1
        // Predicated region
        $region61: #{translation_transformer_forward.19} parent=59 // pred_check
          %p374 = pneg %p113
        $region62: #{translation_transformer_forward.19} parent=59 // pred_check_branch
          %376 = sbr.rel (%p374) target = $region64
        $region63: #{translation_transformer_forward.19} parent=59 // pred_region
          %378 = dma.done [#allocation4], 16
        $region64: #{translation_transformer_forward.19} parent=59 // pred_fallthru
          _
        // Predicated region
        $region65: #{translation_transformer_forward.19} parent=59 // pred_check
          %p379 = pneg %p155
        $region66: #{translation_transformer_forward.19} parent=59 // pred_check_branch
          %381 = sbr.rel (%p379) target = $region68
        $region67: #{translation_transformer_forward.19} parent=59 // pred_region
          %383 = dma.done [#allocation6], 16
        $region68: #{translation_transformer_forward.19} parent=59 // pred_fallthru
          _
        // Predicated region
        $region69: #{translation_transformer_forward.19} parent=59 // pred_check
          %p384 = pneg %p197
        $region70: #{translation_transformer_forward.19} parent=59 // pred_check_branch
          %386 = sbr.rel (%p384) target = $region72
        $region71: #{translation_transformer_forward.19} parent=59 // pred_region
          %388 = dma.done [#allocation6], 16
        $region72: #{translation_transformer_forward.19} parent=59 // pred_fallthru
          _
        // Predicated region
        $region73: #{translation_transformer_forward.19} parent=59 // pred_check
          %p389 = pneg %p218
        $region74: #{translation_transformer_forward.19} parent=59 // pred_check_branch
          %391 = sbr.rel (%p389) target = $region76
        $region75: #{translation_transformer_forward.19} parent=59 // pred_region
          %393 = dma.done [#allocation9], 16
        $region76: #{translation_transformer_forward.19} parent=59 // pred_fallthru
          _
        // Predicated region
        $region77: #{translation_transformer_forward.19} parent=59 // pred_check
          %p394 = pneg %p239
        $region78: #{translation_transformer_forward.19} parent=59 // pred_check_branch
          %396 = sbr.rel (%p394) target = $region80
        $region79: #{translation_transformer_forward.19} parent=59 // pred_region
          %398 = dma.done [#allocation9], 16
        $region80: #{translation_transformer_forward.19} parent=59 // pred_fallthru
          _
        %p399 = scmp.lt.s32.totalorder %s24, 1
        %s400 = scalar_select %p399, %s24, 1
        %s401 = smul.addr %s400, 8
        %s402 = scalar_lea.vmem %s0, %s401
        %p403 = pneg %p45
        %p404 = pneg %p42
        %p405 = scmp.lt.s32.totalorder %s24, 1
        %s406 = scalar_select %p405, %s24, 1
        %s407 = smul.addr %s406, 8
        %s408 = scalar_lea.vmem %s1, %s407
        %p409 = pneg %p71
        %p410 = pneg %p68
        %p411 = pneg %p92
        %p412 = pneg %p89
        %p413 = pneg %p113
        %p414 = pneg %p110
        %p415 = pneg %p134
        %p416 = pneg %p131
        %p417 = pneg %p155
        %p418 = pneg %p152
        %p419 = pneg %p176
        %p420 = pneg %p173
        %p421 = pneg %p197
        %p422 = pneg %p194
        %p423 = pneg %p218
        %p424 = pneg %p215
        %p425 = pneg %p239
        %p426 = pneg %p236
        %p427 = pneg %p265
        %p428 = pneg %p262
        %p429 = scmp.lt.s32.totalorder %s24, 1
        %s430 = scalar_select %p429, %s24, 1
        %s431 = smul.addr %s430, 8
        %s432 = scalar_lea.vmem %s10, %s431
        %p433 = scmp.lt.s32.totalorder %s24, 1
        %s434 = scalar_select %p433, %s24, 1
        %s435 = smul.addr %s434, 8
        %s436 = scalar_lea.vmem %s0, %s435
        %p437 = scmp.lt.s32.totalorder %s24, 1
        %s438 = scalar_select %p437, %s24, 1
        %s439 = smul.addr %s438, 8
        %s440 = scalar_lea.vmem %s1, %s439
        %p441 = scmp.lt.s32.totalorder %s24, 1
        %s442 = scalar_select %p441, %s24, 1
        %s443 = smul.addr %s442, 8
        %s444 = scalar_lea.vmem %s10, %s443
        %v446 = vld [vmem:[%s436] sm:$0x7f]
        %v447 = vld [vmem:[%s440] sm:$0xff]
        %v448 = vpack.c.bf16 %v446, %v446
        %v449 = vld [vmem:[%s2] sm:$0xf]
        %v450 = vld [vmem:[%s2 + $0x4] sm:$0xf]
        %v451 = vld [vmem:[%s2 + $0x8] sm:$0xf]
        %v452 = vld [vmem:[%s2 + $0xc] sm:$0xf]
        %v453 = vld [vmem:[#allocation3] sm:$0x1]
        %v455 = vperm.slane %v453, 0
        %v461 = vunpack.c.l.b16 %v449
        %v462 = vunpack.c.l.b16 %v450
        %v463 = vunpack.c.l.b16 %v451
        %v464 = vunpack.c.l.b16 %v452
        %v465 = vpack.c.b16 %v462, %v461
        %v466 = vpack.c.b16 %v464, %v463
        %vm469 = vcmask 261120
        %v471 = vsel %vm469, %v448, 0
        %473 = vmatpush.bf16.msra.mxu0 0
        %474 = vmatpush.bf16.msra.mxu0 0
        %475 = vmatpush.bf16.msra.mxu0 0
        %476 = vmatpush.bf16.msra.mxu0 0
        %477 = vmatpush.bf16.msra.mxu0 0
        %478 = vmatpush.bf16.msra.mxu0 0
        %479 = vmatpush.bf16.msra.mxu0 %v466
        %480 = vmatpush.bf16.msra.mxu0 %v465
        %481 = vmatmul.bf16.gmra.mxu0 %v471
        %v482 = vpop.f32.mrf.mxu0
        %v483 = vadd.f32 %v455, %v482
        %v484 = vpop.f32.mrf.mxu0
        %485 = vdwg.mxu0
        %v486 = vpack.c.bf16 %v447, %v447
        %v487 = vld [vmem:[%s4] sm:$0xf]
        %v488 = vld [vmem:[%s4 + $0x4] sm:$0xf]
        %v489 = vld [vmem:[%s4 + $0x8] sm:$0xf]
        %v490 = vld [vmem:[%s4 + $0xc] sm:$0xf]
        %v491 = vld [vmem:[#allocation5] sm:$0x1]
        %v493 = vperm.slane %v491, 0
        %v499 = vunpack.c.l.b16 %v487
        %v500 = vunpack.c.l.b16 %v488
        %v501 = vunpack.c.l.b16 %v489
        %v502 = vunpack.c.l.b16 %v490
        %v503 = vpack.c.b16 %v500, %v499
        %v504 = vpack.c.b16 %v502, %v501
        %v508 = vsel %vm469, %v486, 0
        %510 = vmatpush.bf16.msra.mxu0 0
        %511 = vmatpush.bf16.msra.mxu0 0
        %512 = vmatpush.bf16.msra.mxu0 0
        %513 = vmatpush.bf16.msra.mxu0 0
        %514 = vmatpush.bf16.msra.mxu0 0
        %515 = vmatpush.bf16.msra.mxu0 0
        %516 = vmatpush.bf16.msra.mxu0 %v504
        %517 = vmatpush.bf16.msra.mxu0 %v503
        %518 = vmatmul.bf16.gmra.mxu0 %v508
        %v519 = vpop.f32.mrf.mxu0
        %v520 = vadd.f32 %v493, %v519
        %v521 = vpop.f32.mrf.mxu0
        %522 = vdwg.mxu0
        %v523 = vmul.f32 %v483, 0.25
        %v524 = vpack.c.bf16 %v523, %v523
        %v525 = vpack.c.bf16 %v520, %v520
        %vm526 = vcmask 130048
        %v528 = vsel %vm526, %v524, 0
        %v531 = vsel %vm526, %v525, 0
        %533 = vmatpush.bf16.xpose.msra.mxu0 0
        %534 = vmatpush.bf16.xpose.msra.mxu0 0
        %535 = vmatpush.bf16.xpose.msra.mxu0 0
        %536 = vmatpush.bf16.xpose.msra.mxu0 0
        %537 = vmatpush.bf16.xpose.msra.mxu0 0
        %538 = vmatpush.bf16.xpose.msra.mxu0 0
        %539 = vmatpush.bf16.xpose.msra.mxu0 0
        %540 = vmatpush.bf16.xpose.msra.mxu0 %v531
        %541 = vmatmul.bf16.gmra.mxu0 %v528
        %v542 = vpop.f32.mrf.mxu0
        %v543 = vadd.f32 0.0, %v542
        %v544 = vpop.f32.mrf.mxu0
        %545 = vdwg.mxu0
        %vm546 = vcmask 63488
        %v547 = vsel %vm546, %v543, -inf
        %548 = vmax.xlane.f32.xlu0 %v547
        %v549 = vpop.xlane.xlu0 %548
        %v550 = vsub.f32 %v543, %v549
        %v551 = vmul.f32 %v550, 1.442695
        %v552 = vpow.pop %v551
        %v553 = vsel %vm546, %v552, 0.0
        %554 = vadd.xlane.f32.xlu0 %v553
        %v555 = vpop.xlane.xlu0 %554
        %v556 = vpack.c.bf16 %v552, %v552
        %558 = vrot.lane.b32.xlu0 %v525, 96
        %v559 = vpop.permute.xlu0 %558
        %vm560 = vcmask 64512
        %v562 = vsel %vm560, %v556, 0
        %vm564 = vcmask 1043456
        %v566 = vsel %vm564, %v559, 0
        %568 = vmatpush.bf16.msra.mxu0 0
        %569 = vmatpush.bf16.msra.mxu0 0
        %570 = vmatpush.bf16.msra.mxu0 0
        %571 = vmatpush.bf16.msra.mxu0 0
        %572 = vmatpush.bf16.msra.mxu0 0
        %573 = vmatpush.bf16.msra.mxu0 0
        %574 = vmatpush.bf16.msra.mxu0 0
        %575 = vmatpush.bf16.msra.mxu0 %v566
        %576 = vmatmul.bf16.gmra.mxu0 %v562
        %v577 = vpop.f32.mrf.mxu0
        %v578 = vadd.f32 0.0, %v577
        %v579 = vpop.f32.mrf.mxu0
        %580 = vdwg.mxu0
        %v581 = vrcp.pop %v555
        %v582 = vmul.f32 %v578, %v581
        %vm583 = vcmask 129024
        %584 = vst.msk [vmem:[#allocation2] sm:$0x7f] %vm583, %v582
        %586 = vrot.lane.b32.xlu0 %v524, 112
        %v587 = vpop.permute.xlu0 %586
        %588 = vrot.lane.b32.xlu0 %v525, 112
        %v589 = vpop.permute.xlu0 %588
        %v591 = vsel %vm526, %v587, 0
        %v594 = vsel %vm526, %v589, 0
        %596 = vmatpush.bf16.xpose.msra.mxu0 0
        %597 = vmatpush.bf16.xpose.msra.mxu0 0
        %598 = vmatpush.bf16.xpose.msra.mxu0 0
        %599 = vmatpush.bf16.xpose.msra.mxu0 0
        %600 = vmatpush.bf16.xpose.msra.mxu0 0
        %601 = vmatpush.bf16.xpose.msra.mxu0 0
        %602 = vmatpush.bf16.xpose.msra.mxu0 0
        %603 = vmatpush.bf16.xpose.msra.mxu0 %v594
        %604 = vmatmul.bf16.gmra.mxu0 %v591
        %v605 = vpop.f32.mrf.mxu0
        %v606 = vadd.f32 0.0, %v605
        %v607 = vpop.f32.mrf.mxu0
        %608 = vdwg.mxu0
        %v609 = vsel %vm546, %v606, -inf
        %610 = vmax.xlane.f32.xlu0 %v609
        %v611 = vpop.xlane.xlu0 %610
        %v612 = vsub.f32 %v606, %v611
        %v613 = vmul.f32 %v612, 1.442695
        %v614 = vpow.pop %v613
        %v615 = vsel %vm546, %v614, 0.0
        %616 = vadd.xlane.f32.xlu0 %v615
        %v617 = vpop.xlane.xlu0 %616
        %v618 = vpack.c.bf16 %v614, %v614
        %619 = vrot.lane.b32.xlu0 %v525, 80
        %v620 = vpop.permute.xlu0 %619
        %v622 = vsel %vm560, %v618, 0
        %v625 = vsel %vm564, %v620, 0
        %627 = vmatpush.bf16.msra.mxu0 0
        %628 = vmatpush.bf16.msra.mxu0 0
        %629 = vmatpush.bf16.msra.mxu0 0
        %630 = vmatpush.bf16.msra.mxu0 0
        %631 = vmatpush.bf16.msra.mxu0 0
        %632 = vmatpush.bf16.msra.mxu0 0
        %633 = vmatpush.bf16.msra.mxu0 0
        %634 = vmatpush.bf16.msra.mxu0 %v625
        %635 = vmatmul.bf16.gmra.mxu0 %v622
        %v636 = vpop.f32.mrf.mxu0
        %v637 = vadd.f32 0.0, %v636
        %v638 = vpop.f32.mrf.mxu0
        %639 = vdwg.mxu0
        %v640 = vrcp.pop %v617
        %v641 = vmul.f32 %v637, %v640
        %643 = vrot.lane.b32.xlu0 %v641, 16
        %v644 = vpop.permute.xlu0 %643
        %vm646 = vcmask 260224
        %647 = vst.msk [vmem:[#allocation2] sm:$0x7f] %vm646, %v644
        %v648 = vld [vmem:[#allocation2] sm:$0x7f]
        %v649 = vpack.c.bf16 %v648, %v648
        %v650 = vld [vmem:[%s6] sm:$0xf]
        %v651 = vld [vmem:[%s6 + $0x4] sm:$0xf]
        %v652 = vld [vmem:[%s6 + $0x8] sm:$0xf]
        %v653 = vld [vmem:[%s6 + $0xc] sm:$0xf]
        %v654 = vld [vmem:[#allocation7] sm:$0x1]
        %v656 = vperm.slane %v654, 0
        %v662 = vunpack.c.l.b16 %v650
        %v663 = vunpack.c.l.b16 %v651
        %v664 = vunpack.c.l.b16 %v652
        %v665 = vunpack.c.l.b16 %v653
        %v666 = vpack.c.b16 %v663, %v662
        %v667 = vpack.c.b16 %v665, %v664
        %v671 = vsel %vm469, %v649, 0
        %673 = vmatpush.bf16.msra.mxu0 0
        %674 = vmatpush.bf16.msra.mxu0 0
        %675 = vmatpush.bf16.msra.mxu0 0
        %676 = vmatpush.bf16.msra.mxu0 0
        %677 = vmatpush.bf16.msra.mxu0 0
        %678 = vmatpush.bf16.msra.mxu0 0
        %679 = vmatpush.bf16.msra.mxu0 %v667
        %680 = vmatpush.bf16.msra.mxu0 %v666
        %681 = vmatmul.bf16.gmra.mxu0 %v671
        %v682 = vpop.f32.mrf.mxu0
        %v683 = vadd.f32 %v656, %v682
        %v684 = vpop.f32.mrf.mxu0
        %685 = vdwg.mxu0
        %v686 = vadd.f32 %v446, %v683
        %vm687 = vcmask 260096
        %v688 = vsel %vm687, %v686, 0.0
        %689 = vadd.xlane.f32.xlu0 %v688
        %v690 = vpop.xlane.xlu0 %689
        %v691 = vrcp.pop 32.0
        %v692 = vmul.f32 32.0, %v691
        %v693 = vsub.f32 1.0, %v692
        %v694 = vmul.f32 %v691, %v693
        %v695 = vadd.f32 %v691, %v694
        %vm696 = vweird.f32 %v691
        %v697 = vsel %vm696, %v691, %v695
        %v698 = vmul.f32 %v690, %v697
        %v699 = vsub.f32 %v686, %v698
        %v700 = vmul.f32 %v699, %v699
        %v701 = vsel %vm687, %v700, 0.0
        %702 = vadd.xlane.f32.xlu0 %v701
        %v703 = vpop.xlane.xlu0 %702
        %v704 = vmul.f32 %v703, %v697
        %v705 = vadd.f32 %v704, 1e-05
        %v706 = vrsqrt.pop %v705
        %v707 = vmul.f32 %v706, %v705
        %v708 = vmul.f32 %v707, %v706
        %v709 = vmul.f32 0.5, %v708
        %v710 = vsub.f32 1.5, %v709
        %v711 = vmul.f32 %v706, %v710
        %vm712 = vweird.f32 %v705
        %vm713 = vweird.f32 %v706
        %vm714 = vmor %vm712, %vm713
        %v715 = vsel %vm714, %v706, %v711
        %v716 = vmul.f32 %v699, %v715
        %v717 = vld [vmem:[#allocation8] sm:$0x1]
        %v719 = vperm.slane %v717, 0
        %v721 = vmul.f32 %v716, %v719
        %v722 = vld [vmem:[#allocation10] sm:$0x1]
        %v724 = vperm.slane %v722, 0
        %v726 = vadd.f32 %v721, %v724
        %727 = vst.msk [vmem:[%s444] sm:$0x7f] %vm687, %v726
        %p728 = scmp.lt.s32.totalorder %s24, 1
        %s729 = scalar_select %p728, %s24, 1
        %s730 = smul.addr %s729, 8
        %s731 = scalar_lea.vmem %s10, %s730
        // Predicated region
        $region81: #{translation_transformer_forward.19} parent=59 // pred_check
          %p732 = pneg %p262
        $region82: #{translation_transformer_forward.19} parent=59 // pred_check_branch
          %734 = sbr.rel (%p732) target = $region84
        $region83: #{translation_transformer_forward.19} parent=59 // pred_region
          _
        $region84: #{translation_transformer_forward.19} parent=59 // pred_fallthru
          _
      $region60: #{translation_transformer_forward.19} parent=5 // pred_fallthru
        _
      %p735 = scmp.le.s32.totalorder 2, %s19
      // Predicated region
      $region85: #{translation_transformer_forward.19} parent=5 // pred_check
        %p736 = pneg %p735
      $region86: #{translation_transformer_forward.19} parent=5 // pred_check_branch
        %738 = sbr.rel (%p736) target = $region88
      $region87: #{translation_transformer_forward.19} parent=5 // pred_region
        %s739 = ssub.s32 %s19, 2
        // Predicated region
        $region89: #{translation_transformer_forward.19} parent=87 // pred_check
          %p740 = pneg %p268
        $region90: #{translation_transformer_forward.19} parent=87 // pred_check_branch
          %742 = sbr.rel (%p740) target = $region92
        $region91: #{translation_transformer_forward.19} parent=87 // pred_region
          %p743 = scmp.lt.s32.totalorder %s25, 1
          %s744 = scalar_select %p743, %s25, 1
          %s745 = smul.addr %s744, 8
          %s746 = scalar_lea.vmem %s10, %s745
        $region92: #{translation_transformer_forward.19} parent=87 // pred_fallthru
          _
      $region88: #{translation_transformer_forward.19} parent=5 // pred_fallthru
        _
    $region6: #{translation_transformer_forward.19} parent=1 // loop_footer
      %s23 = sadd.s32 1, %s19
    $region7: #{translation_transformer_forward.19} parent=1 // loop_footer_branch
      %18 = sbr.rel target = $region3
    $region8: #{translation_transformer_forward.19} parent=1 // loop_exit
      _
    %747 = vsyncpa [#allocation4], 1
    %s748 = scalar_lea.sflag [#allocation4], 1
    %749 = vsyncpa %s748, 1
    %750 = vsyncpa [#allocation6], 1
    %751 = vsyncpa [#allocation9], 1

// kernel: translation_transformer_forward.20
$region0: #{translation_transformer_forward.20}
  #allocation0 [shape = 'u32[]', space=smem, size = 0x4, offset = 0x4, fixed_abs, tag = 'smem constant byte address 0x4 - core index']
  #allocation1 [shape = 'u32[72,128]{1,0:T(1,128)}', space=vmem, size = 0x9000, scoped, tag = 'internal scratch']
  %s0 = inlined_call_operand.vmem [shape: f32[14,32], index: 0, kind: input, shape index: {}]
  %s1 = inlined_call_operand.vmem [shape: bf16[32,64], index: 1, kind: input, shape index: {}]
  %s2 = inlined_call_operand.vmem [shape: f32[1,64], index: 2, kind: input, shape index: {}]
  %s3 = inlined_call_operand.vmem [shape: bf16[64,32], index: 3, kind: input, shape index: {}]
  %s4 = inlined_call_operand.vmem [shape: f32[1,32], index: 4, kind: input, shape index: {}]
  %s5 = inlined_call_operand.vmem [shape: f32[1,32], index: 5, kind: input, shape index: {}]
  %s6 = inlined_call_operand.vmem [shape: f32[1,32], index: 6, kind: input, shape index: {}]
  %s7 = inlined_call_operand.vmem [shape: f32[1,32], index: 7, kind: input, shape index: {}]
  %s8 = inlined_call_operand.vmem [shape: f32[1,32], index: 8, kind: input, shape index: {}]
  %s9 = inlined_call_operand.vmem [shape: f32[14,32], index: 9, kind: output, shape index: {}]
  %s10 = sld [smem:[#allocation0]]
  $region46: #{translation_transformer_forward.20} parent=0
    _
  %s12 = ssub.s32 1, %s10
  %s13 = scalar_select 0, %s12, %s10
  // Predicated region
  $region2: #{translation_transformer_forward.20} parent=0 // pred_check
    _
  $region3: #{translation_transformer_forward.20} parent=0 // pred_check_branch
    %15 = sbr.rel (0) target = $region5
  $region4: #{translation_transformer_forward.20} parent=0 // pred_region
    _
  $region5: #{translation_transformer_forward.20} parent=0 // pred_fallthru
    _
  // Predicated region
  $region6: #{translation_transformer_forward.20} parent=0 // pred_check
    _
  $region7: #{translation_transformer_forward.20} parent=0 // pred_check_branch
    %17 = sbr.rel (0) target = $region9
  $region8: #{translation_transformer_forward.20} parent=0 // pred_region
    _
  $region9: #{translation_transformer_forward.20} parent=0 // pred_fallthru
    _
  // Predicated region
  $region10: #{translation_transformer_forward.20} parent=0 // pred_check
    _
  $region11: #{translation_transformer_forward.20} parent=0 // pred_check_branch
    %19 = sbr.rel (0) target = $region13
  $region12: #{translation_transformer_forward.20} parent=0 // pred_region
    _
  $region13: #{translation_transformer_forward.20} parent=0 // pred_fallthru
    _
  // Predicated region
  $region14: #{translation_transformer_forward.20} parent=0 // pred_check
    _
  $region15: #{translation_transformer_forward.20} parent=0 // pred_check_branch
    %21 = sbr.rel (0) target = $region17
  $region16: #{translation_transformer_forward.20} parent=0 // pred_region
    _
  $region17: #{translation_transformer_forward.20} parent=0 // pred_fallthru
    _
  // Predicated region
  $region18: #{translation_transformer_forward.20} parent=0 // pred_check
    _
  $region19: #{translation_transformer_forward.20} parent=0 // pred_check_branch
    %23 = sbr.rel (0) target = $region21
  $region20: #{translation_transformer_forward.20} parent=0 // pred_region
    _
  $region21: #{translation_transformer_forward.20} parent=0 // pred_fallthru
    _
  // Predicated region
  $region22: #{translation_transformer_forward.20} parent=0 // pred_check
    _
  $region23: #{translation_transformer_forward.20} parent=0 // pred_check_branch
    %25 = sbr.rel (0) target = $region25
  $region24: #{translation_transformer_forward.20} parent=0 // pred_region
    _
  $region25: #{translation_transformer_forward.20} parent=0 // pred_fallthru
    _
  // Predicated region
  $region26: #{translation_transformer_forward.20} parent=0 // pred_check
    _
  $region27: #{translation_transformer_forward.20} parent=0 // pred_check_branch
    %27 = sbr.rel (0) target = $region29
  $region28: #{translation_transformer_forward.20} parent=0 // pred_region
    _
  $region29: #{translation_transformer_forward.20} parent=0 // pred_fallthru
    _
  // Predicated region
  $region30: #{translation_transformer_forward.20} parent=0 // pred_check
    _
  $region31: #{translation_transformer_forward.20} parent=0 // pred_check_branch
    %29 = sbr.rel (0) target = $region33
  $region32: #{translation_transformer_forward.20} parent=0 // pred_region
    _
  $region33: #{translation_transformer_forward.20} parent=0 // pred_fallthru
    _
  // Predicated region
  $region34: #{translation_transformer_forward.20} parent=0 // pred_check
    _
  $region35: #{translation_transformer_forward.20} parent=0 // pred_check_branch
    %31 = sbr.rel (0) target = $region37
  $region36: #{translation_transformer_forward.20} parent=0 // pred_region
    _
  $region37: #{translation_transformer_forward.20} parent=0 // pred_fallthru
    _
  %v33 = vld [vmem:[%s0] sm:$0xff]
  %v34 = vld [vmem:[%s0 + $0x8] sm:$0x3f]
  %v35 = vpack.c.bf16 %v34, %v33
  %v36 = vld [vmem:[%s1] sm:$0xf]
  %v37 = vld [vmem:[%s1 + $0x4] sm:$0xf]
  %v38 = vld [vmem:[%s1 + $0x8] sm:$0xf]
  %v39 = vld [vmem:[%s1 + $0xc] sm:$0xf]
  %v40 = vld [vmem:[%s2] sm:$0x1]
  %v42 = vperm.slane %v40, 0
  %v48 = vunpack.c.l.b16 %v36
  %v49 = vunpack.c.l.b16 %v37
  %v50 = vunpack.c.l.b16 %v38
  %v51 = vunpack.c.l.b16 %v39
  %v52 = vpack.c.b16 %v49, %v48
  %v53 = vpack.c.b16 %v51, %v50
  %vm56 = vcmask 261120
  %v58 = vsel %vm56, %v35, 0
  %60 = vmatpush.bf16.msra.mxu0 0
  %61 = vmatpush.bf16.msra.mxu0 0
  %62 = vmatpush.bf16.msra.mxu0 0
  %63 = vmatpush.bf16.msra.mxu0 0
  %64 = vmatpush.bf16.msra.mxu0 0
  %65 = vmatpush.bf16.msra.mxu0 0
  %66 = vmatpush.bf16.msra.mxu0 %v53
  %67 = vmatpush.bf16.msra.mxu0 %v52
  %68 = vmatmul.bf16.gmra.mxu0 %v58
  %v69 = vpop.f32.mrf.mxu0
  %v70 = vadd.f32 %v42, %v69
  %v71 = vpop.f32.mrf.mxu0
  %v72 = vadd.f32 %v42, %v71
  %73 = vdwg.mxu0
  %v74 = vmax.f32 %v70, 0.0
  %v75 = vmax.f32 %v72, 0.0
  %v76 = vpack.c.bf16 %v75, %v74
  %v77 = vld [vmem:[%s3] sm:$0xf]
  %v78 = vld [vmem:[%s3 + $0x4] sm:$0xf]
  %v79 = vld [vmem:[%s3 + $0x8] sm:$0xf]
  %v80 = vld [vmem:[%s3 + $0xc] sm:$0xf]
  %v81 = vld [vmem:[%s3 + $0x10] sm:$0xf]
  %v82 = vld [vmem:[%s3 + $0x14] sm:$0xf]
  %v83 = vld [vmem:[%s3 + $0x18] sm:$0xf]
  %v84 = vld [vmem:[%s3 + $0x1c] sm:$0xf]
  %v85 = vld [vmem:[%s4] sm:$0x1]
  %v87 = vperm.slane %v85, 0
  %v97 = vunpack.c.l.b16 %v77
  %v98 = vunpack.c.l.b16 %v78
  %v99 = vunpack.c.l.b16 %v79
  %v100 = vunpack.c.l.b16 %v80
  %v101 = vunpack.c.l.b16 %v81
  %v102 = vunpack.c.l.b16 %v82
  %v103 = vunpack.c.l.b16 %v83
  %v104 = vunpack.c.l.b16 %v84
  %v105 = vpack.c.b16 %v98, %v97
  %v106 = vpack.c.b16 %v100, %v99
  %v107 = vpack.c.b16 %v102, %v101
  %v108 = vpack.c.b16 %v104, %v103
  %vm113 = vcmask 523264
  %v115 = vsel %vm113, %v76, 0
  %117 = vmatpush.bf16.msra.mxu0 0
  %118 = vmatpush.bf16.msra.mxu0 0
  %119 = vmatpush.bf16.msra.mxu0 0
  %120 = vmatpush.bf16.msra.mxu0 0
  %121 = vmatpush.bf16.msra.mxu0 %v108
  %122 = vmatpush.bf16.msra.mxu0 %v107
  %123 = vmatpush.bf16.msra.mxu0 %v106
  %124 = vmatpush.bf16.msra.mxu0 %v105
  %125 = vmatmul.bf16.gmra.mxu0 %v115
  %v126 = vpop.f32.mrf.mxu0
  %v127 = vadd.f32 %v87, %v126
  %v128 = vpop.f32.mrf.mxu0
  %v129 = vadd.f32 %v87, %v128
  %130 = vdwg.mxu0
  %v131 = vadd.f32 %v33, %v127
  %v132 = vadd.f32 %v34, %v129
  %v133 = vsel %vm56, %v131, 0.0
  %134 = vadd.xlane.f32.xlu0 %v133
  %v135 = vpop.xlane.xlu0 %134
  %vm136 = vcmask 259072
  %v137 = vsel %vm136, %v132, 0.0
  %138 = vadd.xlane.f32.xlu0 %v137
  %v139 = vpop.xlane.xlu0 %138
  %v140 = vrcp.pop 32.0
  %v141 = vmul.f32 32.0, %v140
  %v142 = vsub.f32 1.0, %v141
  %v143 = vmul.f32 %v140, %v142
  %v144 = vadd.f32 %v140, %v143
  %vm145 = vweird.f32 %v140
  %v146 = vsel %vm145, %v140, %v144
  %v147 = vmul.f32 %v135, %v146
  %v148 = vmul.f32 %v139, %v146
  %v149 = vsub.f32 %v131, %v147
  %v150 = vsub.f32 %v132, %v148
  %v151 = vmul.f32 %v149, %v149
  %v152 = vmul.f32 %v150, %v150
  %v153 = vsel %vm56, %v151, 0.0
  %154 = vadd.xlane.f32.xlu0 %v153
  %v155 = vpop.xlane.xlu0 %154
  %v156 = vsel %vm136, %v152, 0.0
  %157 = vadd.xlane.f32.xlu0 %v156
  %v158 = vpop.xlane.xlu0 %157
  %v159 = vmul.f32 %v155, %v146
  %v160 = vmul.f32 %v158, %v146
  %v161 = vadd.f32 %v159, 1e-05
  %v162 = vadd.f32 %v160, 1e-05
  %v163 = vrsqrt.pop %v161
  %v164 = vmul.f32 %v163, %v161
  %v165 = vmul.f32 %v164, %v163
  %v166 = vmul.f32 0.5, %v165
  %v167 = vsub.f32 1.5, %v166
  %v168 = vmul.f32 %v163, %v167
  %vm169 = vweird.f32 %v161
  %vm170 = vweird.f32 %v163
  %vm171 = vmor %vm169, %vm170
  %v172 = vsel %vm171, %v163, %v168
  %v173 = vrsqrt.pop %v162
  %v174 = vmul.f32 %v173, %v162
  %v175 = vmul.f32 %v174, %v173
  %v176 = vmul.f32 0.5, %v175
  %v177 = vsub.f32 1.5, %v176
  %v178 = vmul.f32 %v173, %v177
  %vm179 = vweird.f32 %v162
  %vm180 = vweird.f32 %v173
  %vm181 = vmor %vm179, %vm180
  %v182 = vsel %vm181, %v173, %v178
  %v183 = vmul.f32 %v149, %v172
  %v184 = vmul.f32 %v150, %v182
  %v185 = vld [vmem:[%s5] sm:$0x1]
  %v187 = vperm.slane %v185, 0
  %v189 = vmul.f32 %v183, %v187
  %v190 = vmul.f32 %v184, %v187
  %v191 = vld [vmem:[%s6] sm:$0x1]
  %v193 = vperm.slane %v191, 0
  %v195 = vadd.f32 %v189, %v193
  %v196 = vadd.f32 %v190, %v193
  %v197 = vsel %vm56, %v195, 0.0
  %198 = vadd.xlane.f32.xlu0 %v197
  %v199 = vpop.xlane.xlu0 %198
  %v200 = vsel %vm136, %v196, 0.0
  %201 = vadd.xlane.f32.xlu0 %v200
  %v202 = vpop.xlane.xlu0 %201
  %v203 = vmul.f32 %v199, %v146
  %v204 = vmul.f32 %v202, %v146
  %v205 = vsub.f32 %v195, %v203
  %v206 = vsub.f32 %v196, %v204
  %v207 = vmul.f32 %v205, %v205
  %v208 = vmul.f32 %v206, %v206
  %v209 = vsel %vm56, %v207, 0.0
  %210 = vadd.xlane.f32.xlu0 %v209
  %v211 = vpop.xlane.xlu0 %210
  %v212 = vsel %vm136, %v208, 0.0
  %213 = vadd.xlane.f32.xlu0 %v212
  %v214 = vpop.xlane.xlu0 %213
  %v215 = vmul.f32 %v211, %v146
  %v216 = vmul.f32 %v214, %v146
  %v217 = vadd.f32 %v215, 1e-05
  %v218 = vadd.f32 %v216, 1e-05
  %v219 = vrsqrt.pop %v217
  %v220 = vmul.f32 %v219, %v217
  %v221 = vmul.f32 %v220, %v219
  %v222 = vmul.f32 0.5, %v221
  %v223 = vsub.f32 1.5, %v222
  %v224 = vmul.f32 %v219, %v223
  %vm225 = vweird.f32 %v217
  %vm226 = vweird.f32 %v219
  %vm227 = vmor %vm225, %vm226
  %v228 = vsel %vm227, %v219, %v224
  %v229 = vrsqrt.pop %v218
  %v230 = vmul.f32 %v229, %v218
  %v231 = vmul.f32 %v230, %v229
  %v232 = vmul.f32 0.5, %v231
  %v233 = vsub.f32 1.5, %v232
  %v234 = vmul.f32 %v229, %v233
  %vm235 = vweird.f32 %v218
  %vm236 = vweird.f32 %v229
  %vm237 = vmor %vm235, %vm236
  %v238 = vsel %vm237, %v229, %v234
  %v239 = vmul.f32 %v205, %v228
  %v240 = vmul.f32 %v206, %v238
  %v241 = vld [vmem:[%s7] sm:$0x1]
  %v243 = vperm.slane %v241, 0
  %v245 = vmul.f32 %v239, %v243
  %v246 = vmul.f32 %v240, %v243
  %v247 = vld [vmem:[%s8] sm:$0x1]
  %v249 = vperm.slane %v247, 0
  %v251 = vadd.f32 %v245, %v249
  %v252 = vadd.f32 %v246, %v249
  %253 = vst.msk [vmem:[%s9] sm:$0xff] %vm56, %v251
  %254 = vst.msk [vmem:[%s9 + $0x8] sm:$0x3f] %vm136, %v252
  // Predicated region
  $region38: #{translation_transformer_forward.20} parent=0 // pred_check
    _
  $region39: #{translation_transformer_forward.20} parent=0 // pred_check_branch
    %256 = sbr.rel (0) target = $region41
  $region40: #{translation_transformer_forward.20} parent=0 // pred_region
    _
  $region41: #{translation_transformer_forward.20} parent=0 // pred_fallthru
    _
  // Predicated region
  $region42: #{translation_transformer_forward.20} parent=0 // pred_check
    _
  $region43: #{translation_transformer_forward.20} parent=0 // pred_check_branch
    %258 = sbr.rel (0) target = $region45
  $region44: #{translation_transformer_forward.20} parent=0 // pred_region
    _
  $region45: #{translation_transformer_forward.20} parent=0 // pred_fallthru
    _

</llo_original>
